<compile_context>
chip_gen: v7x
topology: tpu7x:2x2x1
jax: 0.10.0
libtpu: 0.0.40
codegen_flags: <defaults>
</compile_context>

<pallas_src>
import math

import jax
import jax.numpy as jnp
from jax.experimental import pallas as pl
from jax.experimental.pallas import tpu as pltpu


def make_transformer_block(embed_size, heads, seq_len, ffn_size, ffn_tile):
    H = heads
    E = embed_size
    D = E // H
    S = seq_len
    F = ffn_size
    TF = ffn_tile
    assert H * D == E
    assert F % TF == 0
    NF = F // TF
    scale = 1.0 / math.sqrt(E)          # PyTorch: softmax(energy / embed_size**0.5)
    neg_inf_scaled = -1e20 * scale      # masked_fill(-1e20) happens BEFORE the scaling
    eps = 1e-5                          # nn.LayerNorm default

    def layer_norm(z, g, b):
        mu = jnp.mean(z, axis=-1, keepdims=True)
        var = jnp.mean((z - mu) ** 2, axis=-1, keepdims=True)
        return (z - mu) * jax.lax.rsqrt(var + eps) * g + b

    def kernel(v_ref, k_ref, q_ref, mask_ref,
               wv_ref, wk_ref, wq_ref, wfc_ref, bfc_ref,
               g1_ref, be1_ref, w1_ref, b1_ref, w2_ref, b2_ref,
               g2_ref, be2_ref,
               out_ref,
               attn_s, x_s, xb_s, acc_s):
        f = pl.program_id(1)

        # ---- phase 1 (first F-tile): attention + residual + norm1, init FFN accumulator
        @pl.when(f == 0)
        def _attention():
            q_f32 = q_ref[0]                                   # (S, E) f32 (residual path)
            v_bf = v_ref[0].astype(jnp.bfloat16)
            k_bf = k_ref[0].astype(jnp.bfloat16)
            q_bf = (q_f32 * scale).astype(jnp.bfloat16)        # scale folded into Q

            # Fused per-head projections: block-diagonal (E, E) weights -> one matmul each.
            vp = jnp.dot(v_bf, wv_ref[...], preferred_element_type=jnp.float32)
            kp = jnp.dot(k_bf, wk_ref[...], preferred_element_type=jnp.float32)
            qp = jnp.dot(q_bf, wq_ref[...], preferred_element_type=jnp.float32)
            vp_bf = vp.astype(jnp.bfloat16)                    # cast once, slice per head
            kp_bf = kp.astype(jnp.bfloat16)
            qp_bf = qp.astype(jnp.bfloat16)

            # Mask bias on the key axis, pre-scaled; computed once per grid step.
            neg_bias = jnp.where(mask_ref[...] == 0.0, neg_inf_scaled, 0.0)   # (1, S)

            for h in range(H):                                 # static head loop
                sl = slice(h * D, (h + 1) * D)
                qh = qp_bf[:, sl]
                kh = kp_bf[:, sl]
                vh = vp_bf[:, sl]
                energy = jax.lax.dot_general(                  # (S, S), no explicit .T
                    qh, kh, (((1,), (1,)), ((), ())),
                    preferred_element_type=jnp.float32)
                logits = energy + neg_bias
                logits = logits - jnp.max(logits, axis=-1, keepdims=True)
                p = jnp.exp(logits)
                denom = jnp.sum(p, axis=-1, keepdims=True)
                p = p * pl.reciprocal(denom, approx=True)      # EUP, not VALU division
                attn_s[:, sl] = jnp.dot(p.astype(jnp.bfloat16), vh,
                                        preferred_element_type=jnp.float32)

            attn = jnp.dot(attn_s[...].astype(jnp.bfloat16), wfc_ref[...],
                           preferred_element_type=jnp.float32) + bfc_ref[...]
            # TODO(synk): nn.Dropout is identity in eval mode; stochastic dropout not implemented.
            x = layer_norm(attn + q_f32, g1_ref[...], be1_ref[...])
            x_s[...] = x                                       # f32 residual copy
            xb_s[...] = x.astype(jnp.bfloat16)                 # bf16 MXU copy (cast once)
            acc_s[...] = jnp.zeros_like(acc_s)

        # ---- every grid step: one F-tile of the feed-forward network
        hid = jnp.dot(xb_s[...], w1_ref[...], preferred_element_type=jnp.float32)
        hid = jnp.maximum(hid + b1_ref[...], 0.0)
        acc_s[...] += jnp.dot(hid.astype(jnp.bfloat16), w2_ref[...],
                              preferred_element_type=jnp.float32)

        # ---- last F-tile: second bias, residual, norm2, write lane-dense output
        @pl.when(f == NF - 1)
        def _finalize():
            ff = acc_s[...] + b2_ref[...]
            out_ref[0] = layer_norm(ff + x_s[...], g2_ref[...], be2_ref[...])

    def call(value, key, query, mask, params):
        N = query.shape[0]

        def const(shape):
            return pl.BlockSpec(shape, lambda n, f, _s=shape: tuple(0 for _ in _s))

        per_batch = pl.BlockSpec((1, S, E), lambda n, f: (n, 0, 0))
        in_specs = [
            per_batch, per_batch, per_batch,                 # value, key, query
            const((1, S)),                                   # key mask
            const((E, E)), const((E, E)), const((E, E)),     # block-diag Wv/Wk/Wq (bf16)
            const((E, E)), const((1, E)),                    # Wfc (bf16), bfc
            const((1, E)), const((1, E)),                    # norm1 gamma / beta
            pl.BlockSpec((E, TF), lambda n, f: (0, f)),      # W1 F-tile (bf16)
            pl.BlockSpec((1, TF), lambda n, f: (0, f)),      # b1 F-tile
            pl.BlockSpec((TF, E), lambda n, f: (f, 0)),      # W2 F-tile (bf16)
            const((1, E)),                                   # b2
            const((1, E)), const((1, E)),                    # norm2 gamma / beta
        ]

        flops = N * (8 * S * E * E + 4 * S * S * E + 4 * S * E * F)
        transcendentals = N * (H * S * S + H * S + 4 * S)
        bytes_accessed = (4 * (4 * N * S * E + S + 7 * E + F)      # f32 acts / biases / out
                          + 2 * (4 * E * E + 2 * E * F))           # bf16 weights
        cost = pl.CostEstimate(flops=int(flops),
                               transcendentals=int(transcendentals),
                               bytes_accessed=int(bytes_accessed))

        return pl.pallas_call(
            kernel,
            out_shape=jax.ShapeDtypeStruct((N, S, E), jnp.float32),
            grid_spec=pltpu.PrefetchScalarGridSpec(
                num_scalar_prefetch=0,
                grid=(N, NF),
                in_specs=in_specs,
                out_specs=pl.BlockSpec((1, S, E), lambda n, f: (n, 0, 0)),
                scratch_shapes=[pltpu.VMEM((S, E), jnp.float32),    # head-output slab
                                pltpu.VMEM((S, E), jnp.float32),    # x (post-norm1, f32)
                                pltpu.VMEM((S, E), jnp.bfloat16),   # x (post-norm1, bf16)
                                pltpu.VMEM((S, E), jnp.float32)]),  # FFN accumulator
            compiler_params=pltpu.CompilerParams(
                dimension_semantics=("parallel", "arbitrary"),
                vmem_limit_bytes=48 * 1024 * 1024),
            cost_estimate=cost,
        )(value, key, query, mask,
          params["wv"], params["wk"], params["wq"],
          params["wfc"], params["bfc"],
          params["g1"], params["be1"],
          params["w1"], params["b1"], params["w2"], params["b2"],
          params["g2"], params["be2"])

    return call


def reference_forward(value, key, query, mask, p, embed_size, heads):
    """Pure-JAX f32 transcription of the PyTorch forward (eval mode)."""
    N, S, E = query.shape
    H, D = heads, embed_size // heads

    def proj(x, W):                      # nn.Linear(head_dim, head_dim, bias=False)
        return x.reshape(N, S, H, D) @ W.T

    V = proj(value, p["Wv"])
    K = proj(key, p["Wk"])
    Q = proj(query, p["Wq"])
    energy = jnp.einsum("nqhd,nkhd->nhqk", Q, K)
    energy = jnp.where(mask[None, None, :, :] == 0.0, -1e20, energy)
    attn = jax.nn.softmax(energy / math.sqrt(E), axis=3)
    out = jnp.einsum("nhqk,nkhd->nqhd", attn, V).reshape(N, S, E)
    attention = out @ p["Wfc"].T + p["bfc"][0]

    def layer_norm(z, g, b):
        mu = jnp.mean(z, axis=-1, keepdims=True)
        var = jnp.mean((z - mu) ** 2, axis=-1, keepdims=True)
        return (z - mu) / jnp.sqrt(var + 1e-5) * g[0] + b[0]

    x = layer_norm(attention + query, p["g1"], p["be1"])
    hid = jnp.maximum(x @ p["W1"].T + p["b1"][0], 0.0)
    ff = hid @ p["W2"].T + p["b2"][0]
    return layer_norm(ff + x, p["g2"], p["be2"])


if __name__ == "__main__":
    # Small, lane-aligned shapes consistent with the module (embed % heads == 0;
    # E and S multiples of 128 so every block is lane/sublane dense).
    N, S, E, H = 2, 128, 128, 8
    D = E // H
    FE = 4                               # forward_expansion
    F = FE * E
    TF = 256                             # FFN hidden tile -> F // TF = 2 grid steps

    key0 = jax.random.PRNGKey(0)
    ks = jax.random.split(key0, 16)

    value = jax.random.normal(ks[0], (N, S, E), jnp.float32)
    key_in = jax.random.normal(ks[1], (N, S, E), jnp.float32)
    query = jax.random.normal(ks[2], (N, S, E), jnp.float32)
    ids = jax.random.randint(ks[3], (1, S), 0, 3)
    mask = (ids != 0).astype(jnp.float32)        # (1, S), masks the K axis

    def w(k, shape, std=0.05):
        return std * jax.random.normal(k, shape, jnp.float32)

    # PyTorch-layout parameters (used by the f32 reference).
    P = {
        "Wv": w(ks[4], (D, D)), "Wk": w(ks[5], (D, D)), "Wq": w(ks[6], (D, D)),
        "Wfc": w(ks[7], (E, E)), "bfc": w(ks[8], (1, E)),
        "g1": jnp.ones((1, E), jnp.float32), "be1": jnp.zeros((1, E), jnp.float32),
        "W1": w(ks[9], (F, E)), "b1": w(ks[10], (1, F)),
        "W2": w(ks[11], (E, F)), "b2": w(ks[12], (1, E)),
        "g2": jnp.ones((1, E), jnp.float32), "be2": jnp.zeros((1, E), jnp.float32),
    }

    # Kernel-side params: (in, out) layout, bf16 MXU operands, and block-diagonal
    # per-head projection weights so each projection is one E-wide matmul.
    def bdiag(Wt):                       # (D, D) torch (out,in) -> (E, E) (in,out)
        return jnp.kron(jnp.eye(H, dtype=jnp.float32), Wt.T)

    kparams = {
        "wv": bdiag(P["Wv"]).astype(jnp.bfloat16),
        "wk": bdiag(P["Wk"]).astype(jnp.bfloat16),
        "wq": bdiag(P["Wq"]).astype(jnp.bfloat16),
        "wfc": P["Wfc"].T.astype(jnp.bfloat16),
        "bfc": P["bfc"],
        "g1": P["g1"], "be1": P["be1"],
        "w1": P["W1"].T.astype(jnp.bfloat16), "b1": P["b1"],
        "w2": P["W2"].T.astype(jnp.bfloat16), "b2": P["b2"],
        "g2": P["g2"], "be2": P["be2"],
    }

    block = make_transformer_block(E, H, S, F, TF)
    out = jax.block_until_ready(block(value, key_in, query, mask, kparams))

    with jax.default_matmul_precision("highest"):
        ref = jax.block_until_ready(
            reference_forward(value, key_in, query, mask, P, E, H))

    assert out.shape == (N, S, E)
    err = jnp.max(jnp.abs(out - ref))
    # bf16 MXU inputs + approx reciprocal vs. f32 reference -> loose tolerance.
    assert jnp.allclose(out, ref, atol=5e-2, rtol=5e-2), f"max abs err = {err}"
    print("KERNEL_OK")
</pallas_src>

<mosaic_0001>
module attributes {stable_mosaic.version = 11 : i64} {
  func.func @kernel(%arg0: i32, %arg1: i32, %arg2: memref<1x128x128xf32, #tpu.memory_space<vmem>>, %arg3: memref<1x128x128xf32, #tpu.memory_space<vmem>>, %arg4: memref<1x128x128xf32, #tpu.memory_space<vmem>>, %arg5: memref<1x128xf32, #tpu.memory_space<vmem>>, %arg6: memref<128x128xbf16, #tpu.memory_space<vmem>>, %arg7: memref<128x128xbf16, #tpu.memory_space<vmem>>, %arg8: memref<128x128xbf16, #tpu.memory_space<vmem>>, %arg9: memref<128x128xbf16, #tpu.memory_space<vmem>>, %arg10: memref<1x128xf32, #tpu.memory_space<vmem>>, %arg11: memref<1x128xf32, #tpu.memory_space<vmem>>, %arg12: memref<1x128xf32, #tpu.memory_space<vmem>>, %arg13: memref<128x256xbf16, #tpu.memory_space<vmem>>, %arg14: memref<1x256xf32, #tpu.memory_space<vmem>>, %arg15: memref<256x128xbf16, #tpu.memory_space<vmem>>, %arg16: memref<1x128xf32, #tpu.memory_space<vmem>>, %arg17: memref<1x128xf32, #tpu.memory_space<vmem>>, %arg18: memref<1x128xf32, #tpu.memory_space<vmem>>, %arg19: memref<1x128x128xf32, #tpu.memory_space<vmem>>, %arg20: memref<128x128xf32, #tpu.memory_space<vmem>>, %arg21: memref<128x128xf32, #tpu.memory_space<vmem>>, %arg22: memref<128x128xbf16, #tpu.memory_space<vmem>>, %arg23: memref<128x128xf32, #tpu.memory_space<vmem>>) attributes {dimension_semantics = [#tpu.dimension_semantics<parallel>, #tpu.dimension_semantics<arbitrary>], iteration_bounds = array<i64: 2, 2>, scalar_prefetch = 0 : i64, scratch_operands = 4 : i64, tpu.core_type = #tpu.core_type<tc>, window_params = [{transform_indices = @transform_0, window_bounds = array<i64: 1, 128, 128>}, {transform_indices = @transform_1, window_bounds = array<i64: 1, 128, 128>}, {transform_indices = @transform_2, window_bounds = array<i64: 1, 128, 128>}, {pipeline_mode = #tpu.pipeline_mode<synchronous>, transform_indices = @transform_3, window_bounds = array<i64: 1, 128>}, {pipeline_mode = #tpu.pipeline_mode<synchronous>, transform_indices = @transform_4, window_bounds = array<i64: 128, 128>}, {pipeline_mode = #tpu.pipeline_mode<synchronous>, transform_indices = @transform_5, window_bounds = array<i64: 128, 128>}, {pipeline_mode = #tpu.pipeline_mode<synchronous>, transform_indices = @transform_6, window_bounds = array<i64: 128, 128>}, {pipeline_mode = #tpu.pipeline_mode<synchronous>, transform_indices = @transform_7, window_bounds = array<i64: 128, 128>}, {pipeline_mode = #tpu.pipeline_mode<synchronous>, transform_indices = @transform_8, window_bounds = array<i64: 1, 128>}, {pipeline_mode = #tpu.pipeline_mode<synchronous>, transform_indices = @transform_9, window_bounds = array<i64: 1, 128>}, {pipeline_mode = #tpu.pipeline_mode<synchronous>, transform_indices = @transform_10, window_bounds = array<i64: 1, 128>}, {transform_indices = @transform_11, window_bounds = array<i64: 128, 256>}, {transform_indices = @transform_12, window_bounds = array<i64: 1, 256>}, {transform_indices = @transform_13, window_bounds = array<i64: 256, 128>}, {pipeline_mode = #tpu.pipeline_mode<synchronous>, transform_indices = @transform_14, window_bounds = array<i64: 1, 128>}, {pipeline_mode = #tpu.pipeline_mode<synchronous>, transform_indices = @transform_15, window_bounds = array<i64: 1, 128>}, {pipeline_mode = #tpu.pipeline_mode<synchronous>, transform_indices = @transform_16, window_bounds = array<i64: 1, 128>}, {transform_indices = @transform_17, window_bounds = array<i64: 1, 128, 128>}]} {
    %c0_i32 = arith.constant 0 : i32
    %0 = arith.cmpi eq, %arg1, %c0_i32 : i32
    %1 = arith.extui %0 : i1 to i32
    %c0_i32_0 = arith.constant 0 : i32
    %2 = arith.cmpi ne, %1, %c0_i32_0 : i32
    scf.if %2 {
      %c0_15 = arith.constant 0 : index
      %c0_16 = arith.constant 0 : index
      %c0_17 = arith.constant 0 : index
      %20 = vector.load %arg4[%c0_15, %c0_16, %c0_17] : memref<1x128x128xf32, #tpu.memory_space<vmem>>, vector<1x128x128xf32>
      %21 = vector.shape_cast %20 : vector<1x128x128xf32> to vector<128x128xf32>
      %c0_18 = arith.constant 0 : index
      %c0_19 = arith.constant 0 : index
      %c0_20 = arith.constant 0 : index
      %22 = vector.load %arg2[%c0_18, %c0_19, %c0_20] : memref<1x128x128xf32, #tpu.memory_space<vmem>>, vector<1x128x128xf32>
      %23 = vector.shape_cast %22 : vector<1x128x128xf32> to vector<128x128xf32>
      %24 = arith.truncf %23 : vector<128x128xf32> to vector<128x128xbf16>
      %c0_21 = arith.constant 0 : index
      %c0_22 = arith.constant 0 : index
      %c0_23 = arith.constant 0 : index
      %25 = vector.load %arg3[%c0_21, %c0_22, %c0_23] : memref<1x128x128xf32, #tpu.memory_space<vmem>>, vector<1x128x128xf32>
      %26 = vector.shape_cast %25 : vector<1x128x128xf32> to vector<128x128xf32>
      %27 = arith.truncf %26 : vector<128x128xf32> to vector<128x128xbf16>
      %cst_24 = arith.constant 0.0883883461 : f32
      %28 = vector.broadcast %cst_24 : f32 to vector<128x128xf32>
      %29 = arith.mulf %21, %28 : vector<128x128xf32>
      %30 = arith.truncf %29 : vector<128x128xf32> to vector<128x128xbf16>
      %c0_25 = arith.constant 0 : index
      %c0_26 = arith.constant 0 : index
      %31 = vector.load %arg6[%c0_25, %c0_26] : memref<128x128xbf16, #tpu.memory_space<vmem>>, vector<128x128xbf16>
      %cst_27 = arith.constant dense<0.000000e+00> : vector<128x128xf32>
      %32 = tpu.matmul %24, %31, %cst_27 {dimension_numbers = #tpu.dot_dimension_numbers<[1], [0], [0], [1], [0, 0, 1, 1], [], []>} : vector<128x128xbf16>, vector<128x128xbf16>, vector<128x128xf32> -> vector<128x128xf32>
      %c0_28 = arith.constant 0 : index
      %c0_29 = arith.constant 0 : index
      %33 = vector.load %arg7[%c0_28, %c0_29] : memref<128x128xbf16, #tpu.memory_space<vmem>>, vector<128x128xbf16>
      %cst_30 = arith.constant dense<0.000000e+00> : vector<128x128xf32>
      %34 = tpu.matmul %27, %33, %cst_30 {dimension_numbers = #tpu.dot_dimension_numbers<[1], [0], [0], [1], [0, 0, 1, 1], [], []>} : vector<128x128xbf16>, vector<128x128xbf16>, vector<128x128xf32> -> vector<128x128xf32>
      %c0_31 = arith.constant 0 : index
      %c0_32 = arith.constant 0 : index
      %35 = vector.load %arg8[%c0_31, %c0_32] : memref<128x128xbf16, #tpu.memory_space<vmem>>, vector<128x128xbf16>
      %cst_33 = arith.constant dense<0.000000e+00> : vector<128x128xf32>
      %36 = tpu.matmul %30, %35, %cst_33 {dimension_numbers = #tpu.dot_dimension_numbers<[1], [0], [0], [1], [0, 0, 1, 1], [], []>} : vector<128x128xbf16>, vector<128x128xbf16>, vector<128x128xf32> -> vector<128x128xf32>
      %37 = arith.truncf %32 : vector<128x128xf32> to vector<128x128xbf16>
      %38 = arith.truncf %34 : vector<128x128xf32> to vector<128x128xbf16>
      %39 = arith.truncf %36 : vector<128x128xf32> to vector<128x128xbf16>
      %c0_34 = arith.constant 0 : index
      %c0_35 = arith.constant 0 : index
      %40 = vector.load %arg5[%c0_34, %c0_35] : memref<1x128xf32, #tpu.memory_space<vmem>>, vector<1x128xf32>
      %cst_36 = arith.constant 0.000000e+00 : f32
      %41 = vector.broadcast %cst_36 : f32 to vector<1x128xf32>
      %42 = arith.cmpf oeq, %40, %41 : vector<1x128xf32>
      %cst_37 = arith.constant -8.83883489E+18 : f32
      %cst_38 = arith.constant 0.000000e+00 : f32
      %43 = vector.broadcast %cst_37 : f32 to vector<1x128xf32>
      %44 = vector.broadcast %cst_38 : f32 to vector<1x128xf32>
      %45 = arith.select %42, %43, %44 : vector<1x128xi1>, vector<1x128xf32>
      %46 = vector.extract_strided_slice %39 {offsets = [0, 0], sizes = [128, 16], strides = [1, 1]} : vector<128x128xbf16> to vector<128x16xbf16>
      %47 = vector.extract_strided_slice %38 {offsets = [0, 0], sizes = [128, 16], strides = [1, 1]} : vector<128x128xbf16> to vector<128x16xbf16>
      %48 = vector.extract_strided_slice %37 {offsets = [0, 0], sizes = [128, 16], strides = [1, 1]} : vector<128x128xbf16> to vector<128x16xbf16>
      %cst_39 = arith.constant dense<0.000000e+00> : vector<128x128xf32>
      %49 = tpu.matmul %46, %47, %cst_39 {dimension_numbers = #tpu.dot_dimension_numbers<[1], [1], [0], [0], [0, 0, 1, 0], [], []>} : vector<128x16xbf16>, vector<128x16xbf16>, vector<128x128xf32> -> vector<128x128xf32>
      %50 = vector.broadcast %45 : vector<1x128xf32> to vector<128x128xf32>
      %51 = arith.addf %49, %50 : vector<128x128xf32>
      %cst_40 = arith.constant dense<0xFF800000> : vector<128xf32>
      %52 = vector.multi_reduction <maximumf>, %51, %cst_40 [1] : vector<128x128xf32> to vector<128xf32>
      %53 = vector.shape_cast %52 : vector<128xf32> to vector<128x1xf32>
      %54 = vector.broadcast %53 : vector<128x1xf32> to vector<128x128xf32>
      %55 = arith.subf %51, %54 : vector<128x128xf32>
      %56 = math.exp %55 : vector<128x128xf32>
      %cst_41 = arith.constant dense<0.000000e+00> : vector<128xf32>
      %57 = vector.multi_reduction <add>, %56, %cst_41 [1] : vector<128x128xf32> to vector<128xf32>
      %58 = vector.shape_cast %57 : vector<128xf32> to vector<128x1xf32>
      %59 = tpu.reciprocal %58 {approx = true} : vector<128x1xf32> -> vector<128x1xf32>
      %60 = vector.broadcast %59 : vector<128x1xf32> to vector<128x128xf32>
      %61 = arith.mulf %56, %60 : vector<128x128xf32>
      %62 = arith.truncf %61 : vector<128x128xf32> to vector<128x128xbf16>
      %cst_42 = arith.constant dense<0.000000e+00> : vector<128x16xf32>
      %63 = tpu.matmul %62, %48, %cst_42 {dimension_numbers = #tpu.dot_dimension_numbers<[1], [0], [0], [1], [0, 0, 1, 1], [], []>} : vector<128x128xbf16>, vector<128x16xbf16>, vector<128x16xf32> -> vector<128x16xf32>
      %c0_43 = arith.constant 0 : index
      %c0_44 = arith.constant 0 : index
      %64 = vector.load %arg20[%c0_43, %c0_44] : memref<128x128xf32, #tpu.memory_space<vmem>>, vector<128x16xf32>
      tpu.vector_store %arg20[%c0_43, %c0_44], %63 {strides = array<i32>} : memref<128x128xf32, #tpu.memory_space<vmem>>, vector<128x16xf32>,
      %65 = vector.extract_strided_slice %39 {offsets = [0, 16], sizes = [128, 16], strides = [1, 1]} : vector<128x128xbf16> to vector<128x16xbf16>
      %66 = vector.extract_strided_slice %38 {offsets = [0, 16], sizes = [128, 16], strides = [1, 1]} : vector<128x128xbf16> to vector<128x16xbf16>
      %67 = vector.extract_strided_slice %37 {offsets = [0, 16], sizes = [128, 16], strides = [1, 1]} : vector<128x128xbf16> to vector<128x16xbf16>
      %cst_45 = arith.constant dense<0.000000e+00> : vector<128x128xf32>
      %68 = tpu.matmul %65, %66, %cst_45 {dimension_numbers = #tpu.dot_dimension_numbers<[1], [1], [0], [0], [0, 0, 1, 0], [], []>} : vector<128x16xbf16>, vector<128x16xbf16>, vector<128x128xf32> -> vector<128x128xf32>
      %69 = vector.broadcast %45 : vector<1x128xf32> to vector<128x128xf32>
      %70 = arith.addf %68, %69 : vector<128x128xf32>
      %cst_46 = arith.constant dense<0xFF800000> : vector<128xf32>
      %71 = vector.multi_reduction <maximumf>, %70, %cst_46 [1] : vector<128x128xf32> to vector<128xf32>
      %72 = vector.shape_cast %71 : vector<128xf32> to vector<128x1xf32>
      %73 = vector.broadcast %72 : vector<128x1xf32> to vector<128x128xf32>
      %74 = arith.subf %70, %73 : vector<128x128xf32>
      %75 = math.exp %74 : vector<128x128xf32>
      %cst_47 = arith.constant dense<0.000000e+00> : vector<128xf32>
      %76 = vector.multi_reduction <add>, %75, %cst_47 [1] : vector<128x128xf32> to vector<128xf32>
      %77 = vector.shape_cast %76 : vector<128xf32> to vector<128x1xf32>
      %78 = tpu.reciprocal %77 {approx = true} : vector<128x1xf32> -> vector<128x1xf32>
      %79 = vector.broadcast %78 : vector<128x1xf32> to vector<128x128xf32>
      %80 = arith.mulf %75, %79 : vector<128x128xf32>
      %81 = arith.truncf %80 : vector<128x128xf32> to vector<128x128xbf16>
      %cst_48 = arith.constant dense<0.000000e+00> : vector<128x16xf32>
      %82 = tpu.matmul %81, %67, %cst_48 {dimension_numbers = #tpu.dot_dimension_numbers<[1], [0], [0], [1], [0, 0, 1, 1], [], []>} : vector<128x128xbf16>, vector<128x16xbf16>, vector<128x16xf32> -> vector<128x16xf32>
      %c0_49 = arith.constant 0 : index
      %c16 = arith.constant 16 : index
      %83 = vector.load %arg20[%c0_49, %c16] : memref<128x128xf32, #tpu.memory_space<vmem>>, vector<128x16xf32>
      tpu.vector_store %arg20[%c0_49, %c16], %82 {strides = array<i32>} : memref<128x128xf32, #tpu.memory_space<vmem>>, vector<128x16xf32>,
      %84 = vector.extract_strided_slice %39 {offsets = [0, 32], sizes = [128, 16], strides = [1, 1]} : vector<128x128xbf16> to vector<128x16xbf16>
      %85 = vector.extract_strided_slice %38 {offsets = [0, 32], sizes = [128, 16], strides = [1, 1]} : vector<128x128xbf16> to vector<128x16xbf16>
      %86 = vector.extract_strided_slice %37 {offsets = [0, 32], sizes = [128, 16], strides = [1, 1]} : vector<128x128xbf16> to vector<128x16xbf16>
      %cst_50 = arith.constant dense<0.000000e+00> : vector<128x128xf32>
      %87 = tpu.matmul %84, %85, %cst_50 {dimension_numbers = #tpu.dot_dimension_numbers<[1], [1], [0], [0], [0, 0, 1, 0], [], []>} : vector<128x16xbf16>, vector<128x16xbf16>, vector<128x128xf32> -> vector<128x128xf32>
      %88 = vector.broadcast %45 : vector<1x128xf32> to vector<128x128xf32>
      %89 = arith.addf %87, %88 : vector<128x128xf32>
      %cst_51 = arith.constant dense<0xFF800000> : vector<128xf32>
      %90 = vector.multi_reduction <maximumf>, %89, %cst_51 [1] : vector<128x128xf32> to vector<128xf32>
      %91 = vector.shape_cast %90 : vector<128xf32> to vector<128x1xf32>
      %92 = vector.broadcast %91 : vector<128x1xf32> to vector<128x128xf32>
      %93 = arith.subf %89, %92 : vector<128x128xf32>
      %94 = math.exp %93 : vector<128x128xf32>
      %cst_52 = arith.constant dense<0.000000e+00> : vector<128xf32>
      %95 = vector.multi_reduction <add>, %94, %cst_52 [1] : vector<128x128xf32> to vector<128xf32>
      %96 = vector.shape_cast %95 : vector<128xf32> to vector<128x1xf32>
      %97 = tpu.reciprocal %96 {approx = true} : vector<128x1xf32> -> vector<128x1xf32>
      %98 = vector.broadcast %97 : vector<128x1xf32> to vector<128x128xf32>
      %99 = arith.mulf %94, %98 : vector<128x128xf32>
      %100 = arith.truncf %99 : vector<128x128xf32> to vector<128x128xbf16>
      %cst_53 = arith.constant dense<0.000000e+00> : vector<128x16xf32>
      %101 = tpu.matmul %100, %86, %cst_53 {dimension_numbers = #tpu.dot_dimension_numbers<[1], [0], [0], [1], [0, 0, 1, 1], [], []>} : vector<128x128xbf16>, vector<128x16xbf16>, vector<128x16xf32> -> vector<128x16xf32>
      %c0_54 = arith.constant 0 : index
      %c32 = arith.constant 32 : index
      %102 = vector.load %arg20[%c0_54, %c32] : memref<128x128xf32, #tpu.memory_space<vmem>>, vector<128x16xf32>
      tpu.vector_store %arg20[%c0_54, %c32], %101 {strides = array<i32>} : memref<128x128xf32, #tpu.memory_space<vmem>>, vector<128x16xf32>,
      %103 = vector.extract_strided_slice %39 {offsets = [0, 48], sizes = [128, 16], strides = [1, 1]} : vector<128x128xbf16> to vector<128x16xbf16>
      %104 = vector.extract_strided_slice %38 {offsets = [0, 48], sizes = [128, 16], strides = [1, 1]} : vector<128x128xbf16> to vector<128x16xbf16>
      %105 = vector.extract_strided_slice %37 {offsets = [0, 48], sizes = [128, 16], strides = [1, 1]} : vector<128x128xbf16> to vector<128x16xbf16>
      %cst_55 = arith.constant dense<0.000000e+00> : vector<128x128xf32>
      %106 = tpu.matmul %103, %104, %cst_55 {dimension_numbers = #tpu.dot_dimension_numbers<[1], [1], [0], [0], [0, 0, 1, 0], [], []>} : vector<128x16xbf16>, vector<128x16xbf16>, vector<128x128xf32> -> vector<128x128xf32>
      %107 = vector.broadcast %45 : vector<1x128xf32> to vector<128x128xf32>
      %108 = arith.addf %106, %107 : vector<128x128xf32>
      %cst_56 = arith.constant dense<0xFF800000> : vector<128xf32>
      %109 = vector.multi_reduction <maximumf>, %108, %cst_56 [1] : vector<128x128xf32> to vector<128xf32>
      %110 = vector.shape_cast %109 : vector<128xf32> to vector<128x1xf32>
      %111 = vector.broadcast %110 : vector<128x1xf32> to vector<128x128xf32>
      %112 = arith.subf %108, %111 : vector<128x128xf32>
      %113 = math.exp %112 : vector<128x128xf32>
      %cst_57 = arith.constant dense<0.000000e+00> : vector<128xf32>
      %114 = vector.multi_reduction <add>, %113, %cst_57 [1] : vector<128x128xf32> to vector<128xf32>
      %115 = vector.shape_cast %114 : vector<128xf32> to vector<128x1xf32>
      %116 = tpu.reciprocal %115 {approx = true} : vector<128x1xf32> -> vector<128x1xf32>
      %117 = vector.broadcast %116 : vector<128x1xf32> to vector<128x128xf32>
      %118 = arith.mulf %113, %117 : vector<128x128xf32>
      %119 = arith.truncf %118 : vector<128x128xf32> to vector<128x128xbf16>
      %cst_58 = arith.constant dense<0.000000e+00> : vector<128x16xf32>
      %120 = tpu.matmul %119, %105, %cst_58 {dimension_numbers = #tpu.dot_dimension_numbers<[1], [0], [0], [1], [0, 0, 1, 1], [], []>} : vector<128x128xbf16>, vector<128x16xbf16>, vector<128x16xf32> -> vector<128x16xf32>
      %c0_59 = arith.constant 0 : index
      %c48 = arith.constant 48 : index
      %121 = vector.load %arg20[%c0_59, %c48] : memref<128x128xf32, #tpu.memory_space<vmem>>, vector<128x16xf32>
      tpu.vector_store %arg20[%c0_59, %c48], %120 {strides = array<i32>} : memref<128x128xf32, #tpu.memory_space<vmem>>, vector<128x16xf32>,
      %122 = vector.extract_strided_slice %39 {offsets = [0, 64], sizes = [128, 16], strides = [1, 1]} : vector<128x128xbf16> to vector<128x16xbf16>
      %123 = vector.extract_strided_slice %38 {offsets = [0, 64], sizes = [128, 16], strides = [1, 1]} : vector<128x128xbf16> to vector<128x16xbf16>
      %124 = vector.extract_strided_slice %37 {offsets = [0, 64], sizes = [128, 16], strides = [1, 1]} : vector<128x128xbf16> to vector<128x16xbf16>
      %cst_60 = arith.constant dense<0.000000e+00> : vector<128x128xf32>
      %125 = tpu.matmul %122, %123, %cst_60 {dimension_numbers = #tpu.dot_dimension_numbers<[1], [1], [0], [0], [0, 0, 1, 0], [], []>} : vector<128x16xbf16>, vector<128x16xbf16>, vector<128x128xf32> -> vector<128x128xf32>
      %126 = vector.broadcast %45 : vector<1x128xf32> to vector<128x128xf32>
      %127 = arith.addf %125, %126 : vector<128x128xf32>
      %cst_61 = arith.constant dense<0xFF800000> : vector<128xf32>
      %128 = vector.multi_reduction <maximumf>, %127, %cst_61 [1] : vector<128x128xf32> to vector<128xf32>
      %129 = vector.shape_cast %128 : vector<128xf32> to vector<128x1xf32>
      %130 = vector.broadcast %129 : vector<128x1xf32> to vector<128x128xf32>
      %131 = arith.subf %127, %130 : vector<128x128xf32>
      %132 = math.exp %131 : vector<128x128xf32>
      %cst_62 = arith.constant dense<0.000000e+00> : vector<128xf32>
      %133 = vector.multi_reduction <add>, %132, %cst_62 [1] : vector<128x128xf32> to vector<128xf32>
      %134 = vector.shape_cast %133 : vector<128xf32> to vector<128x1xf32>
      %135 = tpu.reciprocal %134 {approx = true} : vector<128x1xf32> -> vector<128x1xf32>
      %136 = vector.broadcast %135 : vector<128x1xf32> to vector<128x128xf32>
      %137 = arith.mulf %132, %136 : vector<128x128xf32>
      %138 = arith.truncf %137 : vector<128x128xf32> to vector<128x128xbf16>
      %cst_63 = arith.constant dense<0.000000e+00> : vector<128x16xf32>
      %139 = tpu.matmul %138, %124, %cst_63 {dimension_numbers = #tpu.dot_dimension_numbers<[1], [0], [0], [1], [0, 0, 1, 1], [], []>} : vector<128x128xbf16>, vector<128x16xbf16>, vector<128x16xf32> -> vector<128x16xf32>
      %c0_64 = arith.constant 0 : index
      %c64 = arith.constant 64 : index
      %140 = vector.load %arg20[%c0_64, %c64] : memref<128x128xf32, #tpu.memory_space<vmem>>, vector<128x16xf32>
      tpu.vector_store %arg20[%c0_64, %c64], %139 {strides = array<i32>} : memref<128x128xf32, #tpu.memory_space<vmem>>, vector<128x16xf32>,
      %141 = vector.extract_strided_slice %39 {offsets = [0, 80], sizes = [128, 16], strides = [1, 1]} : vector<128x128xbf16> to vector<128x16xbf16>
      %142 = vector.extract_strided_slice %38 {offsets = [0, 80], sizes = [128, 16], strides = [1, 1]} : vector<128x128xbf16> to vector<128x16xbf16>
      %143 = vector.extract_strided_slice %37 {offsets = [0, 80], sizes = [128, 16], strides = [1, 1]} : vector<128x128xbf16> to vector<128x16xbf16>
      %cst_65 = arith.constant dense<0.000000e+00> : vector<128x128xf32>
      %144 = tpu.matmul %141, %142, %cst_65 {dimension_numbers = #tpu.dot_dimension_numbers<[1], [1], [0], [0], [0, 0, 1, 0], [], []>} : vector<128x16xbf16>, vector<128x16xbf16>, vector<128x128xf32> -> vector<128x128xf32>
      %145 = vector.broadcast %45 : vector<1x128xf32> to vector<128x128xf32>
      %146 = arith.addf %144, %145 : vector<128x128xf32>
      %cst_66 = arith.constant dense<0xFF800000> : vector<128xf32>
      %147 = vector.multi_reduction <maximumf>, %146, %cst_66 [1] : vector<128x128xf32> to vector<128xf32>
      %148 = vector.shape_cast %147 : vector<128xf32> to vector<128x1xf32>
      %149 = vector.broadcast %148 : vector<128x1xf32> to vector<128x128xf32>
      %150 = arith.subf %146, %149 : vector<128x128xf32>
      %151 = math.exp %150 : vector<128x128xf32>
      %cst_67 = arith.constant dense<0.000000e+00> : vector<128xf32>
      %152 = vector.multi_reduction <add>, %151, %cst_67 [1] : vector<128x128xf32> to vector<128xf32>
      %153 = vector.shape_cast %152 : vector<128xf32> to vector<128x1xf32>
      %154 = tpu.reciprocal %153 {approx = true} : vector<128x1xf32> -> vector<128x1xf32>
      %155 = vector.broadcast %154 : vector<128x1xf32> to vector<128x128xf32>
      %156 = arith.mulf %151, %155 : vector<128x128xf32>
      %157 = arith.truncf %156 : vector<128x128xf32> to vector<128x128xbf16>
      %cst_68 = arith.constant dense<0.000000e+00> : vector<128x16xf32>
      %158 = tpu.matmul %157, %143, %cst_68 {dimension_numbers = #tpu.dot_dimension_numbers<[1], [0], [0], [1], [0, 0, 1, 1], [], []>} : vector<128x128xbf16>, vector<128x16xbf16>, vector<128x16xf32> -> vector<128x16xf32>
      %c0_69 = arith.constant 0 : index
      %c80 = arith.constant 80 : index
      %159 = vector.load %arg20[%c0_69, %c80] : memref<128x128xf32, #tpu.memory_space<vmem>>, vector<128x16xf32>
      tpu.vector_store %arg20[%c0_69, %c80], %158 {strides = array<i32>} : memref<128x128xf32, #tpu.memory_space<vmem>>, vector<128x16xf32>,
      %160 = vector.extract_strided_slice %39 {offsets = [0, 96], sizes = [128, 16], strides = [1, 1]} : vector<128x128xbf16> to vector<128x16xbf16>
      %161 = vector.extract_strided_slice %38 {offsets = [0, 96], sizes = [128, 16], strides = [1, 1]} : vector<128x128xbf16> to vector<128x16xbf16>
      %162 = vector.extract_strided_slice %37 {offsets = [0, 96], sizes = [128, 16], strides = [1, 1]} : vector<128x128xbf16> to vector<128x16xbf16>
      %cst_70 = arith.constant dense<0.000000e+00> : vector<128x128xf32>
      %163 = tpu.matmul %160, %161, %cst_70 {dimension_numbers = #tpu.dot_dimension_numbers<[1], [1], [0], [0], [0, 0, 1, 0], [], []>} : vector<128x16xbf16>, vector<128x16xbf16>, vector<128x128xf32> -> vector<128x128xf32>
      %164 = vector.broadcast %45 : vector<1x128xf32> to vector<128x128xf32>
      %165 = arith.addf %163, %164 : vector<128x128xf32>
      %cst_71 = arith.constant dense<0xFF800000> : vector<128xf32>
      %166 = vector.multi_reduction <maximumf>, %165, %cst_71 [1] : vector<128x128xf32> to vector<128xf32>
      %167 = vector.shape_cast %166 : vector<128xf32> to vector<128x1xf32>
      %168 = vector.broadcast %167 : vector<128x1xf32> to vector<128x128xf32>
      %169 = arith.subf %165, %168 : vector<128x128xf32>
      %170 = math.exp %169 : vector<128x128xf32>
      %cst_72 = arith.constant dense<0.000000e+00> : vector<128xf32>
      %171 = vector.multi_reduction <add>, %170, %cst_72 [1] : vector<128x128xf32> to vector<128xf32>
      %172 = vector.shape_cast %171 : vector<128xf32> to vector<128x1xf32>
      %173 = tpu.reciprocal %172 {approx = true} : vector<128x1xf32> -> vector<128x1xf32>
      %174 = vector.broadcast %173 : vector<128x1xf32> to vector<128x128xf32>
      %175 = arith.mulf %170, %174 : vector<128x128xf32>
      %176 = arith.truncf %175 : vector<128x128xf32> to vector<128x128xbf16>
      %cst_73 = arith.constant dense<0.000000e+00> : vector<128x16xf32>
      %177 = tpu.matmul %176, %162, %cst_73 {dimension_numbers = #tpu.dot_dimension_numbers<[1], [0], [0], [1], [0, 0, 1, 1], [], []>} : vector<128x128xbf16>, vector<128x16xbf16>, vector<128x16xf32> -> vector<128x16xf32>
      %c0_74 = arith.constant 0 : index
      %c96 = arith.constant 96 : index
      %178 = vector.load %arg20[%c0_74, %c96] : memref<128x128xf32, #tpu.memory_space<vmem>>, vector<128x16xf32>
      tpu.vector_store %arg20[%c0_74, %c96], %177 {strides = array<i32>} : memref<128x128xf32, #tpu.memory_space<vmem>>, vector<128x16xf32>,
      %179 = vector.extract_strided_slice %39 {offsets = [0, 112], sizes = [128, 16], strides = [1, 1]} : vector<128x128xbf16> to vector<128x16xbf16>
      %180 = vector.extract_strided_slice %38 {offsets = [0, 112], sizes = [128, 16], strides = [1, 1]} : vector<128x128xbf16> to vector<128x16xbf16>
      %181 = vector.extract_strided_slice %37 {offsets = [0, 112], sizes = [128, 16], strides = [1, 1]} : vector<128x128xbf16> to vector<128x16xbf16>
      %cst_75 = arith.constant dense<0.000000e+00> : vector<128x128xf32>
      %182 = tpu.matmul %179, %180, %cst_75 {dimension_numbers = #tpu.dot_dimension_numbers<[1], [1], [0], [0], [0, 0, 1, 0], [], []>} : vector<128x16xbf16>, vector<128x16xbf16>, vector<128x128xf32> -> vector<128x128xf32>
      %183 = vector.broadcast %45 : vector<1x128xf32> to vector<128x128xf32>
      %184 = arith.addf %182, %183 : vector<128x128xf32>
      %cst_76 = arith.constant dense<0xFF800000> : vector<128xf32>
      %185 = vector.multi_reduction <maximumf>, %184, %cst_76 [1] : vector<128x128xf32> to vector<128xf32>
      %186 = vector.shape_cast %185 : vector<128xf32> to vector<128x1xf32>
      %187 = vector.broadcast %186 : vector<128x1xf32> to vector<128x128xf32>
      %188 = arith.subf %184, %187 : vector<128x128xf32>
      %189 = math.exp %188 : vector<128x128xf32>
      %cst_77 = arith.constant dense<0.000000e+00> : vector<128xf32>
      %190 = vector.multi_reduction <add>, %189, %cst_77 [1] : vector<128x128xf32> to vector<128xf32>
      %191 = vector.shape_cast %190 : vector<128xf32> to vector<128x1xf32>
      %192 = tpu.reciprocal %191 {approx = true} : vector<128x1xf32> -> vector<128x1xf32>
      %193 = vector.broadcast %192 : vector<128x1xf32> to vector<128x128xf32>
      %194 = arith.mulf %189, %193 : vector<128x128xf32>
      %195 = arith.truncf %194 : vector<128x128xf32> to vector<128x128xbf16>
      %cst_78 = arith.constant dense<0.000000e+00> : vector<128x16xf32>
      %196 = tpu.matmul %195, %181, %cst_78 {dimension_numbers = #tpu.dot_dimension_numbers<[1], [0], [0], [1], [0, 0, 1, 1], [], []>} : vector<128x128xbf16>, vector<128x16xbf16>, vector<128x16xf32> -> vector<128x16xf32>
      %c0_79 = arith.constant 0 : index
      %c112 = arith.constant 112 : index
      %197 = vector.load %arg20[%c0_79, %c112] : memref<128x128xf32, #tpu.memory_space<vmem>>, vector<128x16xf32>
      tpu.vector_store %arg20[%c0_79, %c112], %196 {strides = array<i32>} : memref<128x128xf32, #tpu.memory_space<vmem>>, vector<128x16xf32>,
      %c0_80 = arith.constant 0 : index
      %c0_81 = arith.constant 0 : index
      %198 = vector.load %arg20[%c0_80, %c0_81] : memref<128x128xf32, #tpu.memory_space<vmem>>, vector<128x128xf32>
      %199 = arith.truncf %198 : vector<128x128xf32> to vector<128x128xbf16>
      %c0_82 = arith.constant 0 : index
      %c0_83 = arith.constant 0 : index
      %200 = vector.load %arg9[%c0_82, %c0_83] : memref<128x128xbf16, #tpu.memory_space<vmem>>, vector<128x128xbf16>
      %cst_84 = arith.constant dense<0.000000e+00> : vector<128x128xf32>
      %201 = tpu.matmul %199, %200, %cst_84 {dimension_numbers = #tpu.dot_dimension_numbers<[1], [0], [0], [1], [0, 0, 1, 1], [], []>} : vector<128x128xbf16>, vector<128x128xbf16>, vector<128x128xf32> -> vector<128x128xf32>
      %c0_85 = arith.constant 0 : index
      %c0_86 = arith.constant 0 : index
      %202 = vector.load %arg10[%c0_85, %c0_86] : memref<1x128xf32, #tpu.memory_space<vmem>>, vector<1x128xf32>
      %203 = vector.broadcast %202 : vector<1x128xf32> to vector<128x128xf32>
      %204 = arith.addf %201, %203 : vector<128x128xf32>
      %205 = arith.addf %204, %21 : vector<128x128xf32>
      %c0_87 = arith.constant 0 : index
      %c0_88 = arith.constant 0 : index
      %206 = vector.load %arg11[%c0_87, %c0_88] : memref<1x128xf32, #tpu.memory_space<vmem>>, vector<1x128xf32>
      %c0_89 = arith.constant 0 : index
      %c0_90 = arith.constant 0 : index
      %207 = vector.load %arg12[%c0_89, %c0_90] : memref<1x128xf32, #tpu.memory_space<vmem>>, vector<1x128xf32>
      %cst_91 = arith.constant dense<0.000000e+00> : vector<128xf32>
      %208 = vector.multi_reduction <add>, %205, %cst_91 [1] : vector<128x128xf32> to vector<128xf32>
      %209 = vector.shape_cast %208 : vector<128xf32> to vector<128x1xf32>
      %cst_92 = arith.constant 1.280000e+02 : f32
      %210 = vector.broadcast %cst_92 : f32 to vector<128x1xf32>
      %211 = arith.divf %209, %210 : vector<128x1xf32>
      %212 = vector.broadcast %211 : vector<128x1xf32> to vector<128x128xf32>
      %213 = arith.subf %205, %212 : vector<128x128xf32>
      %214 = arith.mulf %213, %213 : vector<128x128xf32>
      %cst_93 = arith.constant dense<0.000000e+00> : vector<128xf32>
      %215 = vector.multi_reduction <add>, %214, %cst_93 [1] : vector<128x128xf32> to vector<128xf32>
      %216 = vector.shape_cast %215 : vector<128xf32> to vector<128x1xf32>
      %cst_94 = arith.constant 1.280000e+02 : f32
      %217 = vector.broadcast %cst_94 : f32 to vector<128x1xf32>
      %218 = arith.divf %216, %217 : vector<128x1xf32>
      %219 = vector.broadcast %211 : vector<128x1xf32> to vector<128x128xf32>
      %220 = arith.subf %205, %219 : vector<128x128xf32>
      %cst_95 = arith.constant 9.99999974E-6 : f32
      %221 = vector.broadcast %cst_95 : f32 to vector<128x1xf32>
      %222 = arith.addf %218, %221 : vector<128x1xf32>
      %223 = math.rsqrt %222 : vector<128x1xf32>
      %224 = vector.broadcast %223 : vector<128x1xf32> to vector<128x128xf32>
      %225 = arith.mulf %220, %224 : vector<128x128xf32>
      %226 = vector.broadcast %206 : vector<1x128xf32> to vector<128x128xf32>
      %227 = arith.mulf %225, %226 : vector<128x128xf32>
      %228 = vector.broadcast %207 : vector<1x128xf32> to vector<128x128xf32>
      %229 = arith.addf %227, %228 : vector<128x128xf32>
      %c0_96 = arith.constant 0 : index
      %c0_97 = arith.constant 0 : index
      %230 = vector.load %arg21[%c0_96, %c0_97] : memref<128x128xf32, #tpu.memory_space<vmem>>, vector<128x128xf32>
      tpu.vector_store %arg21[%c0_96, %c0_97], %229 {strides = array<i32>} : memref<128x128xf32, #tpu.memory_space<vmem>>, vector<128x128xf32>,
      %231 = arith.truncf %229 : vector<128x128xf32> to vector<128x128xbf16>
      %c0_98 = arith.constant 0 : index
      %c0_99 = arith.constant 0 : index
      %232 = vector.load %arg22[%c0_98, %c0_99] : memref<128x128xbf16, #tpu.memory_space<vmem>>, vector<128x128xbf16>
      tpu.vector_store %arg22[%c0_98, %c0_99], %231 {strides = array<i32>} : memref<128x128xbf16, #tpu.memory_space<vmem>>, vector<128x128xbf16>,
      %cst_100 = arith.constant 0.000000e+00 : f32
      %233 = vector.broadcast %cst_100 : f32 to vector<128x128xf32>
      %c0_101 = arith.constant 0 : index
      %c0_102 = arith.constant 0 : index
      %234 = vector.load %arg23[%c0_101, %c0_102] : memref<128x128xf32, #tpu.memory_space<vmem>>, vector<128x128xf32>
      tpu.vector_store %arg23[%c0_101, %c0_102], %233 {strides = array<i32>} : memref<128x128xf32, #tpu.memory_space<vmem>>, vector<128x128xf32>,
    } else {
    }
    %c0 = arith.constant 0 : index
    %c0_1 = arith.constant 0 : index
    %3 = vector.load %arg22[%c0, %c0_1] : memref<128x128xbf16, #tpu.memory_space<vmem>>, vector<128x128xbf16>
    %c0_2 = arith.constant 0 : index
    %c0_3 = arith.constant 0 : index
    %4 = vector.load %arg13[%c0_2, %c0_3] : memref<128x256xbf16, #tpu.memory_space<vmem>>, vector<128x256xbf16>
    %cst = arith.constant dense<0.000000e+00> : vector<128x256xf32>
    %5 = tpu.matmul %3, %4, %cst {dimension_numbers = #tpu.dot_dimension_numbers<[1], [0], [0], [1], [0, 0, 1, 1], [], []>} : vector<128x128xbf16>, vector<128x256xbf16>, vector<128x256xf32> -> vector<128x256xf32>
    %c0_4 = arith.constant 0 : index
    %c0_5 = arith.constant 0 : index
    %6 = vector.load %arg14[%c0_4, %c0_5] : memref<1x256xf32, #tpu.memory_space<vmem>>, vector<1x256xf32>
    %7 = vector.broadcast %6 : vector<1x256xf32> to vector<128x256xf32>
    %8 = arith.addf %5, %7 : vector<128x256xf32>
    %cst_6 = arith.constant 0.000000e+00 : f32
    %9 = vector.broadcast %cst_6 : f32 to vector<128x256xf32>
    %10 = arith.maximumf %8, %9 : vector<128x256xf32>
    %c0_7 = arith.constant 0 : index
    %c0_8 = arith.constant 0 : index
    %11 = vector.load %arg23[%c0_7, %c0_8] : memref<128x128xf32, #tpu.memory_space<vmem>>, vector<128x128xf32>
    %12 = arith.truncf %10 : vector<128x256xf32> to vector<128x256xbf16>
    %c0_9 = arith.constant 0 : index
    %c0_10 = arith.constant 0 : index
    %13 = vector.load %arg15[%c0_9, %c0_10] : memref<256x128xbf16, #tpu.memory_space<vmem>>, vector<256x128xbf16>
    %cst_11 = arith.constant dense<0.000000e+00> : vector<128x128xf32>
    %14 = tpu.matmul %12, %13, %cst_11 {dimension_numbers = #tpu.dot_dimension_numbers<[1], [0], [0], [1], [0, 0, 1, 1], [], []>} : vector<128x256xbf16>, vector<256x128xbf16>, vector<128x128xf32> -> vector<128x128xf32>
    %15 = arith.addf %11, %14 : vector<128x128xf32>
    %c0_12 = arith.constant 0 : index
    %c0_13 = arith.constant 0 : index
    %16 = vector.load %arg23[%c0_12, %c0_13] : memref<128x128xf32, #tpu.memory_space<vmem>>, vector<128x128xf32>
    tpu.vector_store %arg23[%c0_12, %c0_13], %15 {strides = array<i32>} : memref<128x128xf32, #tpu.memory_space<vmem>>, vector<128x128xf32>,
    %c1_i32 = arith.constant 1 : i32
    %17 = arith.cmpi eq, %arg1, %c1_i32 : i32
    %18 = arith.extui %17 : i1 to i32
    %c0_i32_14 = arith.constant 0 : i32
    %19 = arith.cmpi ne, %18, %c0_i32_14 : i32
    scf.if %19 {
      %c0_15 = arith.constant 0 : index
      %c0_16 = arith.constant 0 : index
      %20 = vector.load %arg23[%c0_15, %c0_16] : memref<128x128xf32, #tpu.memory_space<vmem>>, vector<128x128xf32>
      %c0_17 = arith.constant 0 : index
      %c0_18 = arith.constant 0 : index
      %21 = vector.load %arg16[%c0_17, %c0_18] : memref<1x128xf32, #tpu.memory_space<vmem>>, vector<1x128xf32>
      %22 = vector.broadcast %21 : vector<1x128xf32> to vector<128x128xf32>
      %23 = arith.addf %20, %22 : vector<128x128xf32>
      %c0_19 = arith.constant 0 : index
      %c0_20 = arith.constant 0 : index
      %24 = vector.load %arg21[%c0_19, %c0_20] : memref<128x128xf32, #tpu.memory_space<vmem>>, vector<128x128xf32>
      %25 = arith.addf %23, %24 : vector<128x128xf32>
      %c0_21 = arith.constant 0 : index
      %c0_22 = arith.constant 0 : index
      %26 = vector.load %arg17[%c0_21, %c0_22] : memref<1x128xf32, #tpu.memory_space<vmem>>, vector<1x128xf32>
      %c0_23 = arith.constant 0 : index
      %c0_24 = arith.constant 0 : index
      %27 = vector.load %arg18[%c0_23, %c0_24] : memref<1x128xf32, #tpu.memory_space<vmem>>, vector<1x128xf32>
      %cst_25 = arith.constant dense<0.000000e+00> : vector<128xf32>
      %28 = vector.multi_reduction <add>, %25, %cst_25 [1] : vector<128x128xf32> to vector<128xf32>
      %29 = vector.shape_cast %28 : vector<128xf32> to vector<128x1xf32>
      %cst_26 = arith.constant 1.280000e+02 : f32
      %30 = vector.broadcast %cst_26 : f32 to vector<128x1xf32>
      %31 = arith.divf %29, %30 : vector<128x1xf32>
      %32 = vector.broadcast %31 : vector<128x1xf32> to vector<128x128xf32>
      %33 = arith.subf %25, %32 : vector<128x128xf32>
      %34 = arith.mulf %33, %33 : vector<128x128xf32>
      %cst_27 = arith.constant dense<0.000000e+00> : vector<128xf32>
      %35 = vector.multi_reduction <add>, %34, %cst_27 [1] : vector<128x128xf32> to vector<128xf32>
      %36 = vector.shape_cast %35 : vector<128xf32> to vector<128x1xf32>
      %cst_28 = arith.constant 1.280000e+02 : f32
      %37 = vector.broadcast %cst_28 : f32 to vector<128x1xf32>
      %38 = arith.divf %36, %37 : vector<128x1xf32>
      %39 = vector.broadcast %31 : vector<128x1xf32> to vector<128x128xf32>
      %40 = arith.subf %25, %39 : vector<128x128xf32>
      %cst_29 = arith.constant 9.99999974E-6 : f32
      %41 = vector.broadcast %cst_29 : f32 to vector<128x1xf32>
      %42 = arith.addf %38, %41 : vector<128x1xf32>
      %43 = math.rsqrt %42 : vector<128x1xf32>
      %44 = vector.broadcast %43 : vector<128x1xf32> to vector<128x128xf32>
      %45 = arith.mulf %40, %44 : vector<128x128xf32>
      %46 = vector.broadcast %26 : vector<1x128xf32> to vector<128x128xf32>
      %47 = arith.mulf %45, %46 : vector<128x128xf32>
      %48 = vector.broadcast %27 : vector<1x128xf32> to vector<128x128xf32>
      %49 = arith.addf %47, %48 : vector<128x128xf32>
      %c0_30 = arith.constant 0 : index
      %c0_31 = arith.constant 0 : index
      %c0_32 = arith.constant 0 : index
      %50 = vector.load %arg19[%c0_30, %c0_31, %c0_32] : memref<1x128x128xf32, #tpu.memory_space<vmem>>, vector<1x128x128xf32>
      %51 = vector.shape_cast %50 : vector<1x128x128xf32> to vector<128x128xf32>
      %52 = vector.shape_cast %49 : vector<128x128xf32> to vector<1x128x128xf32>
      tpu.vector_store %arg19[%c0_30, %c0_31, %c0_32], %52 {strides = array<i32>} : memref<1x128x128xf32, #tpu.memory_space<vmem>>, vector<1x128x128xf32>,
    } else {
    }
    return
  }
  func.func @transform_0(%arg0: i32, %arg1: i32) -> (i32, i32, i32) {
    %c0_i32 = arith.constant 0 : i32
    %c0_i32_0 = arith.constant 0 : i32
    %c0_i32_1 = arith.constant 0 : i32
    return %arg0, %c0_i32, %c0_i32_0 : i32, i32, i32
  }
  func.func @transform_1(%arg0: i32, %arg1: i32) -> (i32, i32, i32) {
    %c0_i32 = arith.constant 0 : i32
    %c0_i32_0 = arith.constant 0 : i32
    %c0_i32_1 = arith.constant 0 : i32
    return %arg0, %c0_i32, %c0_i32_0 : i32, i32, i32
  }
  func.func @transform_2(%arg0: i32, %arg1: i32) -> (i32, i32, i32) {
    %c0_i32 = arith.constant 0 : i32
    %c0_i32_0 = arith.constant 0 : i32
    %c0_i32_1 = arith.constant 0 : i32
    return %arg0, %c0_i32, %c0_i32_0 : i32, i32, i32
  }
  func.func @transform_3(%arg0: i32, %arg1: i32) -> (i32, i32) {
    %c0_i32 = arith.constant 0 : i32
    %c0_i32_0 = arith.constant 0 : i32
    %c0_i32_1 = arith.constant 0 : i32
    return %c0_i32, %c0_i32_0 : i32, i32
  }
  func.func @transform_4(%arg0: i32, %arg1: i32) -> (i32, i32) {
    %c0_i32 = arith.constant 0 : i32
    %c0_i32_0 = arith.constant 0 : i32
    %c0_i32_1 = arith.constant 0 : i32
    return %c0_i32, %c0_i32_0 : i32, i32
  }
  func.func @transform_5(%arg0: i32, %arg1: i32) -> (i32, i32) {
    %c0_i32 = arith.constant 0 : i32
    %c0_i32_0 = arith.constant 0 : i32
    %c0_i32_1 = arith.constant 0 : i32
    return %c0_i32, %c0_i32_0 : i32, i32
  }
  func.func @transform_6(%arg0: i32, %arg1: i32) -> (i32, i32) {
    %c0_i32 = arith.constant 0 : i32
    %c0_i32_0 = arith.constant 0 : i32
    %c0_i32_1 = arith.constant 0 : i32
    return %c0_i32, %c0_i32_0 : i32, i32
  }
  func.func @transform_7(%arg0: i32, %arg1: i32) -> (i32, i32) {
    %c0_i32 = arith.constant 0 : i32
    %c0_i32_0 = arith.constant 0 : i32
    %c0_i32_1 = arith.constant 0 : i32
    return %c0_i32, %c0_i32_0 : i32, i32
  }
  func.func @transform_8(%arg0: i32, %arg1: i32) -> (i32, i32) {
    %c0_i32 = arith.constant 0 : i32
    %c0_i32_0 = arith.constant 0 : i32
    %c0_i32_1 = arith.constant 0 : i32
    return %c0_i32, %c0_i32_0 : i32, i32
  }
  func.func @transform_9(%arg0: i32, %arg1: i32) -> (i32, i32) {
    %c0_i32 = arith.constant 0 : i32
    %c0_i32_0 = arith.constant 0 : i32
    %c0_i32_1 = arith.constant 0 : i32
    return %c0_i32, %c0_i32_0 : i32, i32
  }
  func.func @transform_10(%arg0: i32, %arg1: i32) -> (i32, i32) {
    %c0_i32 = arith.constant 0 : i32
    %c0_i32_0 = arith.constant 0 : i32
    %c0_i32_1 = arith.constant 0 : i32
    return %c0_i32, %c0_i32_0 : i32, i32
  }
  func.func @transform_11(%arg0: i32, %arg1: i32) -> (i32, i32) {
    %c0_i32 = arith.constant 0 : i32
    %c0_i32_0 = arith.constant 0 : i32
    return %c0_i32, %arg1 : i32, i32
  }
  func.func @transform_12(%arg0: i32, %arg1: i32) -> (i32, i32) {
    %c0_i32 = arith.constant 0 : i32
    %c0_i32_0 = arith.constant 0 : i32
    return %c0_i32, %arg1 : i32, i32
  }
  func.func @transform_13(%arg0: i32, %arg1: i32) -> (i32, i32) {
    %c0_i32 = arith.constant 0 : i32
    %c0_i32_0 = arith.constant 0 : i32
    return %arg1, %c0_i32 : i32, i32
  }
  func.func @transform_14(%arg0: i32, %arg1: i32) -> (i32, i32) {
    %c0_i32 = arith.constant 0 : i32
    %c0_i32_0 = arith.constant 0 : i32
    %c0_i32_1 = arith.constant 0 : i32
    return %c0_i32, %c0_i32_0 : i32, i32
  }
  func.func @transform_15(%arg0: i32, %arg1: i32) -> (i32, i32) {
    %c0_i32 = arith.constant 0 : i32
    %c0_i32_0 = arith.constant 0 : i32
    %c0_i32_1 = arith.constant 0 : i32
    return %c0_i32, %c0_i32_0 : i32, i32
  }
  func.func @transform_16(%arg0: i32, %arg1: i32) -> (i32, i32) {
    %c0_i32 = arith.constant 0 : i32
    %c0_i32_0 = arith.constant 0 : i32
    %c0_i32_1 = arith.constant 0 : i32
    return %c0_i32, %c0_i32_0 : i32, i32
  }
  func.func @transform_17(%arg0: i32, %arg1: i32) -> (i32, i32, i32) {
    %c0_i32 = arith.constant 0 : i32
    %c0_i32_0 = arith.constant 0 : i32
    %c0_i32_1 = arith.constant 0 : i32
    return %arg0, %c0_i32, %c0_i32_0 : i32, i32, i32
  }
}

</mosaic_0001>

<llo_original>
// kernel: tpu_custom_call.1
$region0: #{tpu_custom_call.1}
  #allocation0 [shape = 'u32[]', space=smem, size = 0x4, offset = 0x4, fixed_abs, tag = 'smem constant byte address 0x4 - core index']
  #allocation1 [shape = 'u32[144,128]{1,0:T(1,128)}', space=vmem, size = 0x12000, scoped, tag = 'internal scratch']
  #allocation2 [shape = 'f32[128,128]{1,0:T(8,128)}', space=vmem, size = 0x10000, scoped, tag = 'scratch operand']
  #allocation3 [shape = 'f32[128,128]{1,0:T(8,128)}', space=vmem, size = 0x10000, scoped, tag = 'scratch operand']
  #allocation4 [shape = 'bf16[128,128]{1,0:T(16,128)(2,1)}', space=vmem, size = 0x8000, scoped, tag = 'scratch operand']
  #allocation5 [shape = 'f32[128,128]{1,0:T(8,128)}', space=vmem, size = 0x10000, scoped, tag = 'scratch operand']
  %s0 = inlined_call_operand.hbm [shape: f32[2,128,128], index: 0, kind: input, shape index: {}]
  %s1 = inlined_call_operand.hbm [shape: f32[2,128,128], index: 1, kind: input, shape index: {}]
  %s2 = inlined_call_operand.hbm [shape: f32[2,128,128], index: 2, kind: input, shape index: {}]
  %s3 = inlined_call_operand.vmem [shape: f32[1,128], index: 3, kind: input, shape index: {}]
  %s4 = inlined_call_operand.hbm [shape: bf16[128,128], index: 4, kind: input, shape index: {}]
  %s5 = inlined_call_operand.hbm [shape: bf16[128,128], index: 5, kind: input, shape index: {}]
  %s6 = inlined_call_operand.hbm [shape: bf16[128,128], index: 6, kind: input, shape index: {}]
  %s7 = inlined_call_operand.hbm [shape: bf16[128,128], index: 7, kind: input, shape index: {}]
  %s8 = inlined_call_operand.vmem [shape: f32[1,128], index: 8, kind: input, shape index: {}]
  %s9 = inlined_call_operand.vmem [shape: f32[1,128], index: 9, kind: input, shape index: {}]
  %s10 = inlined_call_operand.vmem [shape: f32[1,128], index: 10, kind: input, shape index: {}]
  %s11 = inlined_call_operand.hbm [shape: bf16[128,512], index: 11, kind: input, shape index: {}]
  %s12 = inlined_call_operand.vmem [shape: f32[1,512], index: 12, kind: input, shape index: {}]
  %s13 = inlined_call_operand.hbm [shape: bf16[512,128], index: 13, kind: input, shape index: {}]
  %s14 = inlined_call_operand.vmem [shape: f32[1,128], index: 14, kind: input, shape index: {}]
  %s15 = inlined_call_operand.vmem [shape: f32[1,128], index: 15, kind: input, shape index: {}]
  %s16 = inlined_call_operand.vmem [shape: f32[1,128], index: 16, kind: input, shape index: {}]
  %s17 = inlined_call_operand.hbm [shape: f32[2,128,128], index: 17, kind: output, shape index: {}]
  %s18 = sld [smem:[#allocation0]]
  $region145: #{tpu_custom_call.1} parent=0
    _
  %s20 = ssub.s32 1, %s18
  %s21 = scalar_select 0, %s20, %s18
  $region1: #{tpu_custom_call.1} parent=0
    #allocation6 [shape = 'u8[131072]{0}', space=vmem, size = 0x20000, scoped, tag = 'input window, operand 0']
    #allocation7 [shape = 's32[2]{0}', space=sflag, size = 0x8, scoped, tag = 'scoped memory for tpu_custom_call.1']
    #allocation8 [shape = 's32[2]{0}', space=sflag, size = 0x8, scoped, tag = 'scoped memory for tpu_custom_call.1']
    #allocation9 [shape = 'u8[131072]{0}', space=vmem, size = 0x20000, scoped, tag = 'input window, operand 1']
    #allocation10 [shape = 's32[2]{0}', space=sflag, size = 0x8, scoped, tag = 'scoped memory for tpu_custom_call.1']
    #allocation11 [shape = 'u8[131072]{0}', space=vmem, size = 0x20000, scoped, tag = 'input window, operand 2']
    #allocation12 [shape = 'u8[32768]{0}', space=vmem, size = 0x8000, scoped, tag = 'input window, operand 4, single buffered']
    #allocation13 [shape = 's32[1]{0}', space=sflag, size = 0x4, scoped, tag = 'scoped memory for tpu_custom_call.1']
    #allocation14 [shape = 'u8[32768]{0}', space=vmem, size = 0x8000, scoped, tag = 'input window, operand 5, single buffered']
    #allocation15 [shape = 'u8[32768]{0}', space=vmem, size = 0x8000, scoped, tag = 'input window, operand 6, single buffered']
    #allocation16 [shape = 's32[1]{0}', space=sflag, size = 0x4, scoped, tag = 'scoped memory for tpu_custom_call.1']
    #allocation17 [shape = 'u8[32768]{0}', space=vmem, size = 0x8000, scoped, tag = 'input window, operand 7, single buffered']
    #allocation18 [shape = 'u8[131072]{0}', space=vmem, size = 0x20000, scoped, tag = 'input window, operand 11']
    #allocation19 [shape = 's32[2]{0}', space=sflag, size = 0x8, scoped, tag = 'scoped memory for tpu_custom_call.1']
    #allocation20 [shape = 'u8[131072]{0}', space=vmem, size = 0x20000, scoped, tag = 'input window, operand 13']
    #allocation21 [shape = 'u8[131072]{0}', space=vmem, size = 0x20000, scoped, tag = 'output window, operand 0']
    %22 = vsyncpa [#allocation7], 0
    %s23 = scalar_lea.sflag [#allocation7], 1
    %24 = vsyncpa %s23, 0
    %25 = vsyncpa [#allocation10], 0
    %s26 = scalar_lea.sflag [#allocation10], 1
    %27 = vsyncpa %s26, 0
    %28 = vsyncpa [#allocation13], 0
    %29 = vsyncpa [#allocation16], 0
    %30 = vsyncpa [#allocation19], 0
    %s31 = scalar_lea.sflag [#allocation19], 1
    %32 = vsyncpa %s31, 0
    %33 = vsyncpa [#allocation8], 0
    %s34 = scalar_lea.sflag [#allocation8], 1
    %35 = vsyncpa %s34, 0
    loop: start=0, step=1, limit=6
    $region2: #{tpu_custom_call.1} parent=1 // loop_pre_header
      _
    $region3: #{tpu_custom_call.1} parent=1 // loop_header
      %s37 = sphi 0, %s41
      %p38 = scmp.ge.s32.totalorder %s37, 6
      %s44 = sphi 0, %s56
      %s45 = sphi 0, %s52
      %s46 = sphi 0, %s44
      %s47 = sphi 0, %s45
      %s48 = sphi 0, %s46
      %s49 = sphi 0, %s47
      %s59 = sphi 0, %s61
      %s62 = sphi 0, %s59
      %s63 = sphi 0, %s62
      %s79 = sphi 0, %s63
      %s85 = sphi 0, %s87
      %s88 = sphi 0, %s85
      %s89 = sphi 0, %s88
      %s105 = sphi 0, %s89
      %s111 = sphi 0, %s113
      %s114 = sphi 0, %s111
      %s115 = sphi 0, %s114
      %s131 = sphi 0, %s115
      %s135 = sphi 0, %s135
      %s137 = sphi 0, %s135
      %s138 = sphi 0, %s137
      %s152 = sphi 0, %s138
      %s156 = sphi 0, %s156
      %s158 = sphi 0, %s156
      %s159 = sphi 0, %s158
      %s173 = sphi 0, %s159
      %s177 = sphi 0, %s177
      %s179 = sphi 0, %s177
      %s180 = sphi 0, %s179
      %s194 = sphi 0, %s180
      %s198 = sphi 0, %s198
      %s200 = sphi 0, %s198
      %s201 = sphi 0, %s200
      %s215 = sphi 0, %s201
      %s219 = sphi 0, %s219
      %s221 = sphi 0, %s219
      %s222 = sphi 0, %s221
      %s236 = sphi 0, %s222
      %s240 = sphi 0, %s240
      %s242 = sphi 0, %s240
      %s243 = sphi 0, %s242
      %s257 = sphi 0, %s243
      %s261 = sphi 0, %s261
      %s263 = sphi 0, %s261
      %s264 = sphi 0, %s263
      %s278 = sphi 0, %s264
      %s282 = sphi 0, %s282
      %s284 = sphi 0, %s282
      %s285 = sphi 0, %s284
      %s299 = sphi 0, %s285
      %s305 = sphi 0, %s307
      %s308 = sphi 0, %s305
      %s309 = sphi 0, %s308
      %s325 = sphi 0, %s309
      %s331 = sphi 0, %s333
      %s334 = sphi 0, %s331
      %s335 = sphi 0, %s334
      %s351 = sphi 0, %s335
      %s357 = sphi 0, %s359
      %s360 = sphi 0, %s357
      %s361 = sphi 0, %s360
      %s377 = sphi 0, %s361
      %s381 = sphi 0, %s381
      %s383 = sphi 0, %s381
      %s384 = sphi 0, %s383
      %s398 = sphi 0, %s384
      %s402 = sphi 0, %s402
      %s404 = sphi 0, %s402
      %s405 = sphi 0, %s404
      %s419 = sphi 0, %s405
      %s423 = sphi 0, %s423
      %s425 = sphi 0, %s423
      %s426 = sphi 0, %s425
      %s440 = sphi 0, %s426
      %s446 = sphi 0, %s448
      %s449 = sphi 0, %s446
      %s450 = sphi 0, %s449
      %s466 = sphi 0, %s450
    $region4: #{tpu_custom_call.1} parent=1 // loop_header_branch
      %40 = sbr.rel (%p38) target = $region8
    $region5: #{tpu_custom_call.1} parent=1 // loop_body
      %s42 = ssub.s32 %s37, 1
      %s43 = ssub.s32 %s37, 2
      %s50 = sadd.s32 1, %s45
      %p51 = scmp.ge.s32.totalorder %s50, 2
      %s52 = scalar_select %p51, 0, %s50
      %s53 = sadd.s32 1, %s44
      %s54 = scalar_select %p51, %s53, %s44
      %p55 = scmp.ge.s32.totalorder %s54, 2
      %s56 = scalar_select %p55, 0, %s54
      %s57 = ssub.s32 %s44, %s56
      %p58 = scmp.eq.s32.totalorder %s57, 0
      %s60 = sadd.s32 %s59, 1
      %s61 = scalar_select %p58, %s59, %s60
      %p64 = pneg %p58
      %p65 = scmp.eq.s32.totalorder %s37, 3
      %p66 = por %p64, %p65
      %p67 = scmp.ne.s32.totalorder %s59, %s62
      %p68 = scmp.eq.s32.totalorder %s37, 0
      %p69 = por %p67, %p68
      %p70 = scmp.ne.s32.totalorder %s59, %s62
      %p71 = scmp.eq.s32.totalorder %s42, 3
      %p72 = por %p70, %p71
      %p73 = scmp.ne.s32.totalorder %s62, %s63
      %p74 = scmp.eq.s32.totalorder %s42, 0
      %p75 = por %p73, %p74
      %p76 = scmp.ne.s32.totalorder %s62, %s63
      %p77 = scmp.eq.s32.totalorder %s43, 3
      %p78 = por %p76, %p77
      %p80 = scmp.ne.s32.totalorder %s63, %s79
      %p81 = scmp.eq.s32.totalorder %s43, 0
      %p82 = por %p80, %p81
      %s83 = ssub.s32 %s44, %s56
      %p84 = scmp.eq.s32.totalorder %s83, 0
      %s86 = sadd.s32 %s85, 1
      %s87 = scalar_select %p84, %s85, %s86
      %p90 = pneg %p84
      %p91 = scmp.eq.s32.totalorder %s37, 3
      %p92 = por %p90, %p91
      %p93 = scmp.ne.s32.totalorder %s85, %s88
      %p94 = scmp.eq.s32.totalorder %s37, 0
      %p95 = por %p93, %p94
      %p96 = scmp.ne.s32.totalorder %s85, %s88
      %p97 = scmp.eq.s32.totalorder %s42, 3
      %p98 = por %p96, %p97
      %p99 = scmp.ne.s32.totalorder %s88, %s89
      %p100 = scmp.eq.s32.totalorder %s42, 0
      %p101 = por %p99, %p100
      %p102 = scmp.ne.s32.totalorder %s88, %s89
      %p103 = scmp.eq.s32.totalorder %s43, 3
      %p104 = por %p102, %p103
      %p106 = scmp.ne.s32.totalorder %s89, %s105
      %p107 = scmp.eq.s32.totalorder %s43, 0
      %p108 = por %p106, %p107
      %s109 = ssub.s32 %s44, %s56
      %p110 = scmp.eq.s32.totalorder %s109, 0
      %s112 = sadd.s32 %s111, 1
      %s113 = scalar_select %p110, %s111, %s112
      %p116 = pneg %p110
      %p117 = scmp.eq.s32.totalorder %s37, 3
      %p118 = por %p116, %p117
      %p119 = scmp.ne.s32.totalorder %s111, %s114
      %p120 = scmp.eq.s32.totalorder %s37, 0
      %p121 = por %p119, %p120
      %p122 = scmp.ne.s32.totalorder %s111, %s114
      %p123 = scmp.eq.s32.totalorder %s42, 3
      %p124 = por %p122, %p123
      %p125 = scmp.ne.s32.totalorder %s114, %s115
      %p126 = scmp.eq.s32.totalorder %s42, 0
      %p127 = por %p125, %p126
      %p128 = scmp.ne.s32.totalorder %s114, %s115
      %p129 = scmp.eq.s32.totalorder %s43, 3
      %p130 = por %p128, %p129
      %p132 = scmp.ne.s32.totalorder %s115, %s131
      %p133 = scmp.eq.s32.totalorder %s43, 0
      %p134 = por %p132, %p133
      %s136 = sadd.s32 %s135, 1
      %p139 = scmp.eq.s32.totalorder %s37, 3
      %p140 = scmp.ne.s32.totalorder %s135, %s137
      %p141 = scmp.eq.s32.totalorder %s37, 0
      %p142 = por %p140, %p141
      %p143 = scmp.ne.s32.totalorder %s135, %s137
      %p144 = scmp.eq.s32.totalorder %s42, 3
      %p145 = por %p143, %p144
      %p146 = scmp.ne.s32.totalorder %s137, %s138
      %p147 = scmp.eq.s32.totalorder %s42, 0
      %p148 = por %p146, %p147
      %p149 = scmp.ne.s32.totalorder %s137, %s138
      %p150 = scmp.eq.s32.totalorder %s43, 3
      %p151 = por %p149, %p150
      %p153 = scmp.ne.s32.totalorder %s138, %s152
      %p154 = scmp.eq.s32.totalorder %s43, 0
      %p155 = por %p153, %p154
      %s157 = sadd.s32 %s156, 1
      %p160 = scmp.eq.s32.totalorder %s37, 3
      %p161 = scmp.ne.s32.totalorder %s156, %s158
      %p162 = scmp.eq.s32.totalorder %s37, 0
      %p163 = por %p161, %p162
      %p164 = scmp.ne.s32.totalorder %s156, %s158
      %p165 = scmp.eq.s32.totalorder %s42, 3
      %p166 = por %p164, %p165
      %p167 = scmp.ne.s32.totalorder %s158, %s159
      %p168 = scmp.eq.s32.totalorder %s42, 0
      %p169 = por %p167, %p168
      %p170 = scmp.ne.s32.totalorder %s158, %s159
      %p171 = scmp.eq.s32.totalorder %s43, 3
      %p172 = por %p170, %p171
      %p174 = scmp.ne.s32.totalorder %s159, %s173
      %p175 = scmp.eq.s32.totalorder %s43, 0
      %p176 = por %p174, %p175
      %s178 = sadd.s32 %s177, 1
      %p181 = scmp.eq.s32.totalorder %s37, 3
      %p182 = scmp.ne.s32.totalorder %s177, %s179
      %p183 = scmp.eq.s32.totalorder %s37, 0
      %p184 = por %p182, %p183
      %p185 = scmp.ne.s32.totalorder %s177, %s179
      %p186 = scmp.eq.s32.totalorder %s42, 3
      %p187 = por %p185, %p186
      %p188 = scmp.ne.s32.totalorder %s179, %s180
      %p189 = scmp.eq.s32.totalorder %s42, 0
      %p190 = por %p188, %p189
      %p191 = scmp.ne.s32.totalorder %s179, %s180
      %p192 = scmp.eq.s32.totalorder %s43, 3
      %p193 = por %p191, %p192
      %p195 = scmp.ne.s32.totalorder %s180, %s194
      %p196 = scmp.eq.s32.totalorder %s43, 0
      %p197 = por %p195, %p196
      %s199 = sadd.s32 %s198, 1
      %p202 = scmp.eq.s32.totalorder %s37, 3
      %p203 = scmp.ne.s32.totalorder %s198, %s200
      %p204 = scmp.eq.s32.totalorder %s37, 0
      %p205 = por %p203, %p204
      %p206 = scmp.ne.s32.totalorder %s198, %s200
      %p207 = scmp.eq.s32.totalorder %s42, 3
      %p208 = por %p206, %p207
      %p209 = scmp.ne.s32.totalorder %s200, %s201
      %p210 = scmp.eq.s32.totalorder %s42, 0
      %p211 = por %p209, %p210
      %p212 = scmp.ne.s32.totalorder %s200, %s201
      %p213 = scmp.eq.s32.totalorder %s43, 3
      %p214 = por %p212, %p213
      %p216 = scmp.ne.s32.totalorder %s201, %s215
      %p217 = scmp.eq.s32.totalorder %s43, 0
      %p218 = por %p216, %p217
      %s220 = sadd.s32 %s219, 1
      %p223 = scmp.eq.s32.totalorder %s37, 3
      %p224 = scmp.ne.s32.totalorder %s219, %s221
      %p225 = scmp.eq.s32.totalorder %s37, 0
      %p226 = por %p224, %p225
      %p227 = scmp.ne.s32.totalorder %s219, %s221
      %p228 = scmp.eq.s32.totalorder %s42, 3
      %p229 = por %p227, %p228
      %p230 = scmp.ne.s32.totalorder %s221, %s222
      %p231 = scmp.eq.s32.totalorder %s42, 0
      %p232 = por %p230, %p231
      %p233 = scmp.ne.s32.totalorder %s221, %s222
      %p234 = scmp.eq.s32.totalorder %s43, 3
      %p235 = por %p233, %p234
      %p237 = scmp.ne.s32.totalorder %s222, %s236
      %p238 = scmp.eq.s32.totalorder %s43, 0
      %p239 = por %p237, %p238
      %s241 = sadd.s32 %s240, 1
      %p244 = scmp.eq.s32.totalorder %s37, 3
      %p245 = scmp.ne.s32.totalorder %s240, %s242
      %p246 = scmp.eq.s32.totalorder %s37, 0
      %p247 = por %p245, %p246
      %p248 = scmp.ne.s32.totalorder %s240, %s242
      %p249 = scmp.eq.s32.totalorder %s42, 3
      %p250 = por %p248, %p249
      %p251 = scmp.ne.s32.totalorder %s242, %s243
      %p252 = scmp.eq.s32.totalorder %s42, 0
      %p253 = por %p251, %p252
      %p254 = scmp.ne.s32.totalorder %s242, %s243
      %p255 = scmp.eq.s32.totalorder %s43, 3
      %p256 = por %p254, %p255
      %p258 = scmp.ne.s32.totalorder %s243, %s257
      %p259 = scmp.eq.s32.totalorder %s43, 0
      %p260 = por %p258, %p259
      %s262 = sadd.s32 %s261, 1
      %p265 = scmp.eq.s32.totalorder %s37, 3
      %p266 = scmp.ne.s32.totalorder %s261, %s263
      %p267 = scmp.eq.s32.totalorder %s37, 0
      %p268 = por %p266, %p267
      %p269 = scmp.ne.s32.totalorder %s261, %s263
      %p270 = scmp.eq.s32.totalorder %s42, 3
      %p271 = por %p269, %p270
      %p272 = scmp.ne.s32.totalorder %s263, %s264
      %p273 = scmp.eq.s32.totalorder %s42, 0
      %p274 = por %p272, %p273
      %p275 = scmp.ne.s32.totalorder %s263, %s264
      %p276 = scmp.eq.s32.totalorder %s43, 3
      %p277 = por %p275, %p276
      %p279 = scmp.ne.s32.totalorder %s264, %s278
      %p280 = scmp.eq.s32.totalorder %s43, 0
      %p281 = por %p279, %p280
      %s283 = sadd.s32 %s282, 1
      %p286 = scmp.eq.s32.totalorder %s37, 3
      %p287 = scmp.ne.s32.totalorder %s282, %s284
      %p288 = scmp.eq.s32.totalorder %s37, 0
      %p289 = por %p287, %p288
      %p290 = scmp.ne.s32.totalorder %s282, %s284
      %p291 = scmp.eq.s32.totalorder %s42, 3
      %p292 = por %p290, %p291
      %p293 = scmp.ne.s32.totalorder %s284, %s285
      %p294 = scmp.eq.s32.totalorder %s42, 0
      %p295 = por %p293, %p294
      %p296 = scmp.ne.s32.totalorder %s284, %s285
      %p297 = scmp.eq.s32.totalorder %s43, 3
      %p298 = por %p296, %p297
      %p300 = scmp.ne.s32.totalorder %s285, %s299
      %p301 = scmp.eq.s32.totalorder %s43, 0
      %p302 = por %p300, %p301
      %s303 = ssub.s32 %s45, %s52
      %p304 = scmp.eq.s32.totalorder %s303, 0
      %s306 = sadd.s32 %s305, 1
      %s307 = scalar_select %p304, %s305, %s306
      %p310 = pneg %p304
      %p311 = scmp.eq.s32.totalorder %s37, 3
      %p312 = por %p310, %p311
      %p313 = scmp.ne.s32.totalorder %s305, %s308
      %p314 = scmp.eq.s32.totalorder %s37, 0
      %p315 = por %p313, %p314
      %p316 = scmp.ne.s32.totalorder %s305, %s308
      %p317 = scmp.eq.s32.totalorder %s42, 3
      %p318 = por %p316, %p317
      %p319 = scmp.ne.s32.totalorder %s308, %s309
      %p320 = scmp.eq.s32.totalorder %s42, 0
      %p321 = por %p319, %p320
      %p322 = scmp.ne.s32.totalorder %s308, %s309
      %p323 = scmp.eq.s32.totalorder %s43, 3
      %p324 = por %p322, %p323
      %p326 = scmp.ne.s32.totalorder %s309, %s325
      %p327 = scmp.eq.s32.totalorder %s43, 0
      %p328 = por %p326, %p327
      %s329 = ssub.s32 %s45, %s52
      %p330 = scmp.eq.s32.totalorder %s329, 0
      %s332 = sadd.s32 %s331, 1
      %s333 = scalar_select %p330, %s331, %s332
      %p336 = pneg %p330
      %p337 = scmp.eq.s32.totalorder %s37, 3
      %p338 = por %p336, %p337
      %p339 = scmp.ne.s32.totalorder %s331, %s334
      %p340 = scmp.eq.s32.totalorder %s37, 0
      %p341 = por %p339, %p340
      %p342 = scmp.ne.s32.totalorder %s331, %s334
      %p343 = scmp.eq.s32.totalorder %s42, 3
      %p344 = por %p342, %p343
      %p345 = scmp.ne.s32.totalorder %s334, %s335
      %p346 = scmp.eq.s32.totalorder %s42, 0
      %p347 = por %p345, %p346
      %p348 = scmp.ne.s32.totalorder %s334, %s335
      %p349 = scmp.eq.s32.totalorder %s43, 3
      %p350 = por %p348, %p349
      %p352 = scmp.ne.s32.totalorder %s335, %s351
      %p353 = scmp.eq.s32.totalorder %s43, 0
      %p354 = por %p352, %p353
      %s355 = ssub.s32 %s45, %s52
      %p356 = scmp.eq.s32.totalorder %s355, 0
      %s358 = sadd.s32 %s357, 1
      %s359 = scalar_select %p356, %s357, %s358
      %p362 = pneg %p356
      %p363 = scmp.eq.s32.totalorder %s37, 3
      %p364 = por %p362, %p363
      %p365 = scmp.ne.s32.totalorder %s357, %s360
      %p366 = scmp.eq.s32.totalorder %s37, 0
      %p367 = por %p365, %p366
      %p368 = scmp.ne.s32.totalorder %s357, %s360
      %p369 = scmp.eq.s32.totalorder %s42, 3
      %p370 = por %p368, %p369
      %p371 = scmp.ne.s32.totalorder %s360, %s361
      %p372 = scmp.eq.s32.totalorder %s42, 0
      %p373 = por %p371, %p372
      %p374 = scmp.ne.s32.totalorder %s360, %s361
      %p375 = scmp.eq.s32.totalorder %s43, 3
      %p376 = por %p374, %p375
      %p378 = scmp.ne.s32.totalorder %s361, %s377
      %p379 = scmp.eq.s32.totalorder %s43, 0
      %p380 = por %p378, %p379
      %s382 = sadd.s32 %s381, 1
      %p385 = scmp.eq.s32.totalorder %s37, 3
      %p386 = scmp.ne.s32.totalorder %s381, %s383
      %p387 = scmp.eq.s32.totalorder %s37, 0
      %p388 = por %p386, %p387
      %p389 = scmp.ne.s32.totalorder %s381, %s383
      %p390 = scmp.eq.s32.totalorder %s42, 3
      %p391 = por %p389, %p390
      %p392 = scmp.ne.s32.totalorder %s383, %s384
      %p393 = scmp.eq.s32.totalorder %s42, 0
      %p394 = por %p392, %p393
      %p395 = scmp.ne.s32.totalorder %s383, %s384
      %p396 = scmp.eq.s32.totalorder %s43, 3
      %p397 = por %p395, %p396
      %p399 = scmp.ne.s32.totalorder %s384, %s398
      %p400 = scmp.eq.s32.totalorder %s43, 0
      %p401 = por %p399, %p400
      %s403 = sadd.s32 %s402, 1
      %p406 = scmp.eq.s32.totalorder %s37, 3
      %p407 = scmp.ne.s32.totalorder %s402, %s404
      %p408 = scmp.eq.s32.totalorder %s37, 0
      %p409 = por %p407, %p408
      %p410 = scmp.ne.s32.totalorder %s402, %s404
      %p411 = scmp.eq.s32.totalorder %s42, 3
      %p412 = por %p410, %p411
      %p413 = scmp.ne.s32.totalorder %s404, %s405
      %p414 = scmp.eq.s32.totalorder %s42, 0
      %p415 = por %p413, %p414
      %p416 = scmp.ne.s32.totalorder %s404, %s405
      %p417 = scmp.eq.s32.totalorder %s43, 3
      %p418 = por %p416, %p417
      %p420 = scmp.ne.s32.totalorder %s405, %s419
      %p421 = scmp.eq.s32.totalorder %s43, 0
      %p422 = por %p420, %p421
      %s424 = sadd.s32 %s423, 1
      %p427 = scmp.eq.s32.totalorder %s37, 3
      %p428 = scmp.ne.s32.totalorder %s423, %s425
      %p429 = scmp.eq.s32.totalorder %s37, 0
      %p430 = por %p428, %p429
      %p431 = scmp.ne.s32.totalorder %s423, %s425
      %p432 = scmp.eq.s32.totalorder %s42, 3
      %p433 = por %p431, %p432
      %p434 = scmp.ne.s32.totalorder %s425, %s426
      %p435 = scmp.eq.s32.totalorder %s42, 0
      %p436 = por %p434, %p435
      %p437 = scmp.ne.s32.totalorder %s425, %s426
      %p438 = scmp.eq.s32.totalorder %s43, 3
      %p439 = por %p437, %p438
      %p441 = scmp.ne.s32.totalorder %s426, %s440
      %p442 = scmp.eq.s32.totalorder %s43, 0
      %p443 = por %p441, %p442
      %s444 = ssub.s32 %s44, %s56
      %p445 = scmp.eq.s32.totalorder %s444, 0
      %s447 = sadd.s32 %s446, 1
      %s448 = scalar_select %p445, %s446, %s447
      %p451 = pneg %p445
      %p452 = scmp.eq.s32.totalorder %s37, 3
      %p453 = por %p451, %p452
      %p454 = scmp.ne.s32.totalorder %s446, %s449
      %p455 = scmp.eq.s32.totalorder %s37, 0
      %p456 = por %p454, %p455
      %p457 = scmp.ne.s32.totalorder %s446, %s449
      %p458 = scmp.eq.s32.totalorder %s42, 3
      %p459 = por %p457, %p458
      %p460 = scmp.ne.s32.totalorder %s449, %s450
      %p461 = scmp.eq.s32.totalorder %s42, 0
      %p462 = por %p460, %p461
      %p463 = scmp.ne.s32.totalorder %s449, %s450
      %p464 = scmp.eq.s32.totalorder %s43, 3
      %p465 = por %p463, %p464
      %p467 = scmp.ne.s32.totalorder %s450, %s466
      %p468 = scmp.eq.s32.totalorder %s43, 0
      %p469 = por %p467, %p468
      %p470 = scmp.le.s32.totalorder 1, %s37
      %p471 = scmp.lt.s32.totalorder %s37, 5
      %p472 = pnand %p470, %p471
      %p473 = pneg %p472
      // Predicated region
      $region9: #{tpu_custom_call.1} parent=5 // pred_check
        _
      $region10: #{tpu_custom_call.1} parent=5 // pred_check_branch
        %475 = sbr.rel (%p472) target = $region12
      $region11: #{tpu_custom_call.1} parent=5 // pred_region
        %s476 = ssub.s32 %s37, 1
        // Predicated region
        $region13: #{tpu_custom_call.1} parent=11 // pred_check
          %p477 = pneg %p148
        $region14: #{tpu_custom_call.1} parent=11 // pred_check_branch
          %479 = sbr.rel (%p477) target = $region16
        $region15: #{tpu_custom_call.1} parent=11 // pred_region
          _
        $region16: #{tpu_custom_call.1} parent=11 // pred_fallthru
          _
        // Predicated region
        $region17: #{tpu_custom_call.1} parent=11 // pred_check
          %p480 = pneg %p169
        $region18: #{tpu_custom_call.1} parent=11 // pred_check_branch
          %482 = sbr.rel (%p480) target = $region20
        $region19: #{tpu_custom_call.1} parent=11 // pred_region
          %s484 = ssub.s32 1024, 1024
          %485 = vsyncadd [#allocation13], %s484
          %s486 = sshll.u32 [#allocation12], 4
          %s487 = int_to_ptr.vmem [resolvable:$true] %s486
          %492 = dma.hbm_to_vmem [thread:$0]  %s4, 1024, %s487, [#allocation13], 64, 64, 4
        $region20: #{tpu_custom_call.1} parent=11 // pred_fallthru
          _
        // Predicated region
        $region21: #{tpu_custom_call.1} parent=11 // pred_check
          %p493 = pneg %p190
        $region22: #{tpu_custom_call.1} parent=11 // pred_check_branch
          %495 = sbr.rel (%p493) target = $region24
        $region23: #{tpu_custom_call.1} parent=11 // pred_region
          %s497 = ssub.s32 1024, 1024
          %498 = vsyncadd [#allocation13], %s497
          %s499 = sshll.u32 [#allocation14], 4
          %s500 = int_to_ptr.vmem [resolvable:$true] %s499
          %505 = dma.hbm_to_vmem [thread:$0]  %s5, 1024, %s500, [#allocation13], 64, 64, 4
        $region24: #{tpu_custom_call.1} parent=11 // pred_fallthru
          _
        // Predicated region
        $region25: #{tpu_custom_call.1} parent=11 // pred_check
          %p506 = pneg %p211
        $region26: #{tpu_custom_call.1} parent=11 // pred_check_branch
          %508 = sbr.rel (%p506) target = $region28
        $region27: #{tpu_custom_call.1} parent=11 // pred_region
          %s510 = ssub.s32 1024, 1024
          %511 = vsyncadd [#allocation16], %s510
          %s512 = sshll.u32 [#allocation15], 4
          %s513 = int_to_ptr.vmem [resolvable:$true] %s512
          %518 = dma.hbm_to_vmem [thread:$0]  %s6, 1024, %s513, [#allocation16], 64, 64, 4
        $region28: #{tpu_custom_call.1} parent=11 // pred_fallthru
          _
        // Predicated region
        $region29: #{tpu_custom_call.1} parent=11 // pred_check
          %p519 = pneg %p232
        $region30: #{tpu_custom_call.1} parent=11 // pred_check_branch
          %521 = sbr.rel (%p519) target = $region32
        $region31: #{tpu_custom_call.1} parent=11 // pred_region
          %s523 = ssub.s32 1024, 1024
          %524 = vsyncadd [#allocation16], %s523
          %s525 = sshll.u32 [#allocation17], 4
          %s526 = int_to_ptr.vmem [resolvable:$true] %s525
          %531 = dma.hbm_to_vmem [thread:$0]  %s7, 1024, %s526, [#allocation16], 64, 64, 4
        $region32: #{tpu_custom_call.1} parent=11 // pred_fallthru
          _
        // Predicated region
        $region33: #{tpu_custom_call.1} parent=11 // pred_check
          %p532 = pneg %p253
        $region34: #{tpu_custom_call.1} parent=11 // pred_check_branch
          %534 = sbr.rel (%p532) target = $region36
        $region35: #{tpu_custom_call.1} parent=11 // pred_region
          _
        $region36: #{tpu_custom_call.1} parent=11 // pred_fallthru
          _
        // Predicated region
        $region37: #{tpu_custom_call.1} parent=11 // pred_check
          %p535 = pneg %p274
        $region38: #{tpu_custom_call.1} parent=11 // pred_check_branch
          %537 = sbr.rel (%p535) target = $region40
        $region39: #{tpu_custom_call.1} parent=11 // pred_region
          _
        $region40: #{tpu_custom_call.1} parent=11 // pred_fallthru
          _
        // Predicated region
        $region41: #{tpu_custom_call.1} parent=11 // pred_check
          %p538 = pneg %p295
        $region42: #{tpu_custom_call.1} parent=11 // pred_check_branch
          %540 = sbr.rel (%p538) target = $region44
        $region43: #{tpu_custom_call.1} parent=11 // pred_region
          _
        $region44: #{tpu_custom_call.1} parent=11 // pred_fallthru
          _
        // Predicated region
        $region45: #{tpu_custom_call.1} parent=11 // pred_check
          %p541 = pneg %p394
        $region46: #{tpu_custom_call.1} parent=11 // pred_check_branch
          %543 = sbr.rel (%p541) target = $region48
        $region47: #{tpu_custom_call.1} parent=11 // pred_region
          _
        $region48: #{tpu_custom_call.1} parent=11 // pred_fallthru
          _
        // Predicated region
        $region49: #{tpu_custom_call.1} parent=11 // pred_check
          %p544 = pneg %p415
        $region50: #{tpu_custom_call.1} parent=11 // pred_check_branch
          %546 = sbr.rel (%p544) target = $region52
        $region51: #{tpu_custom_call.1} parent=11 // pred_region
          _
        $region52: #{tpu_custom_call.1} parent=11 // pred_fallthru
          _
        // Predicated region
        $region53: #{tpu_custom_call.1} parent=11 // pred_check
          %p547 = pneg %p436
        $region54: #{tpu_custom_call.1} parent=11 // pred_check_branch
          %549 = sbr.rel (%p547) target = $region56
        $region55: #{tpu_custom_call.1} parent=11 // pred_region
          _
        $region56: #{tpu_custom_call.1} parent=11 // pred_fallthru
          _
      $region12: #{tpu_custom_call.1} parent=5 // pred_fallthru
        _
      %p550 = scmp.lt.s32.totalorder %s37, 4
      // Predicated region
      $region57: #{tpu_custom_call.1} parent=5 // pred_check
        %p551 = pneg %p550
      $region58: #{tpu_custom_call.1} parent=5 // pred_check_branch
        %553 = sbr.rel (%p551) target = $region60
      $region59: #{tpu_custom_call.1} parent=5 // pred_region
        // Predicated region
        $region61: #{tpu_custom_call.1} parent=59 // pred_check
          %p554 = pneg %p69
        $region62: #{tpu_custom_call.1} parent=59 // pred_check_branch
          %556 = sbr.rel (%p554) target = $region64
        $region63: #{tpu_custom_call.1} parent=59 // pred_region
          %s557 = sand.u32 %s59, 1
          %s558 = scalar_lea.sflag [#allocation7], %s557
          %s559 = sand.u32 %s59, 1
          %s560 = smul.addr %s559, 128
          %s561 = scalar_lea.vmem [#allocation6], %s560
          %s563 = ssub.s32 2048, 2048
          %564 = vsyncadd %s558, %s563
          %s565 = smul.addr %s44, 16
          %s566 = smul.addr %s565, 128
          %s567 = scalar_lea.hbm %s0, %s566
          %s568 = sshll.u32 %s561, 4
          %s569 = int_to_ptr.vmem [resolvable:$true] %s568
          %574 = dma.hbm_to_vmem [thread:$0]  %s567, 2048, %s569, %s558, 128, 128, 8
        $region64: #{tpu_custom_call.1} parent=59 // pred_fallthru
          _
        // Predicated region
        $region65: #{tpu_custom_call.1} parent=59 // pred_check
          %p575 = pneg %p95
        $region66: #{tpu_custom_call.1} parent=59 // pred_check_branch
          %577 = sbr.rel (%p575) target = $region68
        $region67: #{tpu_custom_call.1} parent=59 // pred_region
          %s578 = sand.u32 %s37, 1
          %s579 = scalar_lea.sflag [#allocation10], %s578
          %s580 = sand.u32 %s85, 1
          %s581 = smul.addr %s580, 128
          %s582 = scalar_lea.vmem [#allocation9], %s581
          %s584 = ssub.s32 2048, 2048
          %585 = vsyncadd %s579, %s584
          %s586 = smul.addr %s44, 16
          %s587 = smul.addr %s586, 128
          %s588 = scalar_lea.hbm %s1, %s587
          %s589 = sshll.u32 %s582, 4
          %s590 = int_to_ptr.vmem [resolvable:$true] %s589
          %595 = dma.hbm_to_vmem [thread:$0]  %s588, 2048, %s590, %s579, 128, 128, 8
        $region68: #{tpu_custom_call.1} parent=59 // pred_fallthru
          _
        // Predicated region
        $region69: #{tpu_custom_call.1} parent=59 // pred_check
          %p596 = pneg %p121
        $region70: #{tpu_custom_call.1} parent=59 // pred_check_branch
          %598 = sbr.rel (%p596) target = $region72
        $region71: #{tpu_custom_call.1} parent=59 // pred_region
          %s599 = sand.u32 %s37, 1
          %s600 = scalar_lea.sflag [#allocation10], %s599
          %s601 = sand.u32 %s111, 1
          %s602 = smul.addr %s601, 128
          %s603 = scalar_lea.vmem [#allocation11], %s602
          %s605 = ssub.s32 2048, 2048
          %606 = vsyncadd %s600, %s605
          %s607 = smul.addr %s44, 16
          %s608 = smul.addr %s607, 128
          %s609 = scalar_lea.hbm %s2, %s608
          %s610 = sshll.u32 %s603, 4
          %s611 = int_to_ptr.vmem [resolvable:$true] %s610
          %616 = dma.hbm_to_vmem [thread:$0]  %s609, 2048, %s611, %s600, 128, 128, 8
        $region72: #{tpu_custom_call.1} parent=59 // pred_fallthru
          _
        // Predicated region
        $region73: #{tpu_custom_call.1} parent=59 // pred_check
          %p617 = pneg %p315
        $region74: #{tpu_custom_call.1} parent=59 // pred_check_branch
          %619 = sbr.rel (%p617) target = $region76
        $region75: #{tpu_custom_call.1} parent=59 // pred_region
          %s620 = sand.u32 %s37, 1
          %s621 = scalar_lea.sflag [#allocation19], %s620
          %s622 = sand.u32 %s305, 1
          %s623 = smul.addr %s622, 128
          %s624 = scalar_lea.vmem [#allocation18], %s623
          %s625 = smul.u32 2, %s45
          %s627 = ssub.s32 2048, 2048
          %628 = vsyncadd %s621, %s627
          %s629 = smul.addr %s625, 64
          %s630 = scalar_lea.hbm %s11, %s629
          %s631 = sshll.u32 %s624, 4
          %s632 = int_to_ptr.vmem [resolvable:$true] %s631
          %637 = dma.hbm_to_vmem [thread:$0]  %s630, 2048, %s632, %s621, 256, 128, 8
        $region76: #{tpu_custom_call.1} parent=59 // pred_fallthru
          _
        // Predicated region
        $region77: #{tpu_custom_call.1} parent=59 // pred_check
          %p638 = pneg %p341
        $region78: #{tpu_custom_call.1} parent=59 // pred_check_branch
          %640 = sbr.rel (%p638) target = $region80
        $region79: #{tpu_custom_call.1} parent=59 // pred_region
          %s641 = smul.u32 2, %s45
          %p642 = scmp.lt.s32.totalorder %s641, 3
          %s643 = scalar_select %p642, %s641, 3
          %s644 = scalar_lea.vmem %s12, %s643
          %s645 = smul.u32 2, %s45
        $region80: #{tpu_custom_call.1} parent=59 // pred_fallthru
          _
        // Predicated region
        $region81: #{tpu_custom_call.1} parent=59 // pred_check
          %p646 = pneg %p367
        $region82: #{tpu_custom_call.1} parent=59 // pred_check_branch
          %648 = sbr.rel (%p646) target = $region84
        $region83: #{tpu_custom_call.1} parent=59 // pred_region
          %s649 = sand.u32 %s37, 1
          %s650 = scalar_lea.sflag [#allocation19], %s649
          %s651 = sand.u32 %s357, 1
          %s652 = smul.addr %s651, 128
          %s653 = scalar_lea.vmem [#allocation20], %s652
          %s654 = smul.u32 32, %s45
          %s656 = ssub.s32 2048, 2048
          %657 = vsyncadd %s650, %s656
          %s658 = smul.addr %s654, 64
          %s659 = scalar_lea.hbm %s13, %s658
          %s660 = sshll.u32 %s653, 4
          %s661 = int_to_ptr.vmem [resolvable:$true] %s660
          %666 = dma.hbm_to_vmem [thread:$0]  %s659, 2048, %s661, %s650, 64, 64, 4
        $region84: #{tpu_custom_call.1} parent=59 // pred_fallthru
          _
      $region60: #{tpu_custom_call.1} parent=5 // pred_fallthru
        _
      %p667 = scmp.le.s32.totalorder 1, %s37
      %p668 = scmp.lt.s32.totalorder %s37, 5
      %p669 = pnand %p667, %p668
      %p670 = pneg %p669
      // Predicated region
      $region85: #{tpu_custom_call.1} parent=5 // pred_check
        _
      $region86: #{tpu_custom_call.1} parent=5 // pred_check_branch
        %672 = sbr.rel (%p669) target = $region88
      $region87: #{tpu_custom_call.1} parent=5 // pred_region
        %s673 = ssub.s32 %s37, 1
        %s674 = sand.u32 %s62, 1
        %s675 = scalar_lea.sflag [#allocation7], %s674
        %s676 = sand.u32 %s62, 1
        %s677 = smul.addr %s676, 128
        %s678 = scalar_lea.vmem [#allocation6], %s677
        // Predicated region
        $region89: #{tpu_custom_call.1} parent=87 // pred_check
          %p679 = pneg %p75
        $region90: #{tpu_custom_call.1} parent=87 // pred_check_branch
          %681 = sbr.rel (%p679) target = $region92
        $region91: #{tpu_custom_call.1} parent=87 // pred_region
          %682 = dma.done %s675, 2048
        $region92: #{tpu_custom_call.1} parent=87 // pred_fallthru
          _
        %s683 = sand.u32 %s42, 1
        %s684 = scalar_lea.sflag [#allocation10], %s683
        %s685 = sand.u32 %s88, 1
        %s686 = smul.addr %s685, 128
        %s687 = scalar_lea.vmem [#allocation9], %s686
        // Predicated region
        $region93: #{tpu_custom_call.1} parent=87 // pred_check
          %p688 = pneg %p101
        $region94: #{tpu_custom_call.1} parent=87 // pred_check_branch
          %690 = sbr.rel (%p688) target = $region96
        $region95: #{tpu_custom_call.1} parent=87 // pred_region
          %691 = dma.done %s684, 2048
        $region96: #{tpu_custom_call.1} parent=87 // pred_fallthru
          _
        %s692 = sand.u32 %s42, 1
        %s693 = scalar_lea.sflag [#allocation10], %s692
        %s694 = sand.u32 %s114, 1
        %s695 = smul.addr %s694, 128
        %s696 = scalar_lea.vmem [#allocation11], %s695
        // Predicated region
        $region97: #{tpu_custom_call.1} parent=87 // pred_check
          %p697 = pneg %p127
        $region98: #{tpu_custom_call.1} parent=87 // pred_check_branch
          %699 = sbr.rel (%p697) target = $region100
        $region99: #{tpu_custom_call.1} parent=87 // pred_region
          %700 = dma.done %s693, 2048
        $region100: #{tpu_custom_call.1} parent=87 // pred_fallthru
          _
        // Predicated region
        $region101: #{tpu_custom_call.1} parent=87 // pred_check
          %p701 = pneg %p169
        $region102: #{tpu_custom_call.1} parent=87 // pred_check_branch
          %703 = sbr.rel (%p701) target = $region104
        $region103: #{tpu_custom_call.1} parent=87 // pred_region
          %704 = dma.done [#allocation13], 1024
        $region104: #{tpu_custom_call.1} parent=87 // pred_fallthru
          _
        // Predicated region
        $region105: #{tpu_custom_call.1} parent=87 // pred_check
          %p705 = pneg %p190
        $region106: #{tpu_custom_call.1} parent=87 // pred_check_branch
          %707 = sbr.rel (%p705) target = $region108
        $region107: #{tpu_custom_call.1} parent=87 // pred_region
          %708 = dma.done [#allocation13], 1024
        $region108: #{tpu_custom_call.1} parent=87 // pred_fallthru
          _
        // Predicated region
        $region109: #{tpu_custom_call.1} parent=87 // pred_check
          %p709 = pneg %p211
        $region110: #{tpu_custom_call.1} parent=87 // pred_check_branch
          %711 = sbr.rel (%p709) target = $region112
        $region111: #{tpu_custom_call.1} parent=87 // pred_region
          %712 = dma.done [#allocation16], 1024
        $region112: #{tpu_custom_call.1} parent=87 // pred_fallthru
          _
        // Predicated region
        $region113: #{tpu_custom_call.1} parent=87 // pred_check
          %p713 = pneg %p232
        $region114: #{tpu_custom_call.1} parent=87 // pred_check_branch
          %715 = sbr.rel (%p713) target = $region116
        $region115: #{tpu_custom_call.1} parent=87 // pred_region
          %716 = dma.done [#allocation16], 1024
        $region116: #{tpu_custom_call.1} parent=87 // pred_fallthru
          _
        %s717 = sand.u32 %s42, 1
        %s718 = scalar_lea.sflag [#allocation19], %s717
        %s719 = sand.u32 %s308, 1
        %s720 = smul.addr %s719, 128
        %s721 = scalar_lea.vmem [#allocation18], %s720
        // Predicated region
        $region117: #{tpu_custom_call.1} parent=87 // pred_check
          %p722 = pneg %p321
        $region118: #{tpu_custom_call.1} parent=87 // pred_check_branch
          %724 = sbr.rel (%p722) target = $region120
        $region119: #{tpu_custom_call.1} parent=87 // pred_region
          %725 = dma.done %s718, 2048
        $region120: #{tpu_custom_call.1} parent=87 // pred_fallthru
          _
        %s726 = sand.u32 %s42, 1
        %s727 = scalar_lea.sflag [#allocation19], %s726
        %s728 = sand.u32 %s360, 1
        %s729 = smul.addr %s728, 128
        %s730 = scalar_lea.vmem [#allocation20], %s729
        // Predicated region
        $region121: #{tpu_custom_call.1} parent=87 // pred_check
          %p731 = pneg %p373
        $region122: #{tpu_custom_call.1} parent=87 // pred_check_branch
          %733 = sbr.rel (%p731) target = $region124
        $region123: #{tpu_custom_call.1} parent=87 // pred_region
          %734 = dma.done %s727, 2048
        $region124: #{tpu_custom_call.1} parent=87 // pred_fallthru
          _
        %s735 = sand.u32 %s62, 1
        %s736 = scalar_lea.sflag [#allocation7], %s735
        %s737 = sand.u32 %s62, 1
        %s738 = smul.addr %s737, 128
        %s739 = scalar_lea.vmem [#allocation6], %s738
        %p740 = pneg %p75
        %p741 = pneg %p72
        %s742 = sand.u32 %s42, 1
        %s743 = scalar_lea.sflag [#allocation10], %s742
        %s744 = sand.u32 %s88, 1
        %s745 = smul.addr %s744, 128
        %s746 = scalar_lea.vmem [#allocation9], %s745
        %p747 = pneg %p101
        %p748 = pneg %p98
        %s749 = sand.u32 %s42, 1
        %s750 = scalar_lea.sflag [#allocation10], %s749
        %s751 = sand.u32 %s114, 1
        %s752 = smul.addr %s751, 128
        %s753 = scalar_lea.vmem [#allocation11], %s752
        %p754 = pneg %p127
        %p755 = pneg %p124
        %p756 = pneg %p148
        %p757 = pneg %p145
        %p758 = pneg %p169
        %p759 = pneg %p166
        %p760 = pneg %p190
        %p761 = pneg %p187
        %p762 = pneg %p211
        %p763 = pneg %p208
        %p764 = pneg %p232
        %p765 = pneg %p229
        %p766 = pneg %p253
        %p767 = pneg %p250
        %p768 = pneg %p274
        %p769 = pneg %p271
        %p770 = pneg %p295
        %p771 = pneg %p292
        %s772 = sand.u32 %s42, 1
        %s773 = scalar_lea.sflag [#allocation19], %s772
        %s774 = sand.u32 %s308, 1
        %s775 = smul.addr %s774, 128
        %s776 = scalar_lea.vmem [#allocation18], %s775
        %p777 = pneg %p321
        %p778 = pneg %p318
        %s779 = smul.u32 2, %s47
        %p780 = scmp.lt.s32.totalorder %s779, 3
        %s781 = scalar_select %p780, %s779, 3
        %s782 = scalar_lea.vmem %s12, %s781
        %p783 = pneg %p347
        %p784 = pneg %p344
        %s785 = sand.u32 %s42, 1
        %s786 = scalar_lea.sflag [#allocation19], %s785
        %s787 = sand.u32 %s360, 1
        %s788 = smul.addr %s787, 128
        %s789 = scalar_lea.vmem [#allocation20], %s788
        %p790 = pneg %p373
        %p791 = pneg %p370
        %p792 = pneg %p394
        %p793 = pneg %p391
        %p794 = pneg %p415
        %p795 = pneg %p412
        %p796 = pneg %p436
        %p797 = pneg %p433
        %p798 = pneg %p462
        %p799 = pneg %p459
        %s800 = sand.u32 %s449, 1
        %s801 = scalar_lea.sflag [#allocation8], %s800
        %s802 = sand.u32 %s449, 1
        %s803 = smul.addr %s802, 128
        %s804 = scalar_lea.vmem [#allocation21], %s803
        %s805 = smul.u32 2, %s47
        %s806 = smul.u32 2, %s47
        %p807 = scmp.lt.s32.totalorder %s806, 3
        %s808 = scalar_select %p807, %s806, 3
        %s809 = scalar_lea.vmem %s12, %s808
        %s810 = smul.u32 2, %s47
        %s811 = smul.u32 32, %s47
        %p813 = scmp.eq.s32.totalorder %s47, 0
        // Predicated region
        $region125: #{tpu_custom_call.1} parent=87 // pred_check
          %p814 = pneg %p813
        $region126: #{tpu_custom_call.1} parent=87 // pred_check_branch
          %816 = sbr.rel (%p814) target = $region128
        $region127: #{tpu_custom_call.1} parent=87 // pred_region
          %v817 = vld [vmem:[%s696] sm:$0xff]
          %v818 = vld [vmem:[%s696 + $0x8] sm:$0xff]
          %v819 = vld [vmem:[%s696 + $0x10] sm:$0xff]
          %v820 = vld [vmem:[%s696 + $0x18] sm:$0xff]
          %v821 = vld [vmem:[%s696 + $0x20] sm:$0xff]
          %v822 = vld [vmem:[%s696 + $0x28] sm:$0xff]
          %v823 = vld [vmem:[%s696 + $0x30] sm:$0xff]
          %v824 = vld [vmem:[%s696 + $0x38] sm:$0xff]
          %v825 = vld [vmem:[%s696 + $0x40] sm:$0xff]
          %v826 = vld [vmem:[%s696 + $0x48] sm:$0xff]
          %v827 = vld [vmem:[%s696 + $0x50] sm:$0xff]
          %v828 = vld [vmem:[%s696 + $0x58] sm:$0xff]
          %v829 = vld [vmem:[%s696 + $0x60] sm:$0xff]
          %v830 = vld [vmem:[%s696 + $0x68] sm:$0xff]
          %v831 = vld [vmem:[%s696 + $0x70] sm:$0xff]
          %v832 = vld [vmem:[%s696 + $0x78] sm:$0xff]
          %v833 = vld [vmem:[%s678] sm:$0xff]
          %v834 = vld [vmem:[%s678 + $0x8] sm:$0xff]
          %v835 = vld [vmem:[%s678 + $0x10] sm:$0xff]
          %v836 = vld [vmem:[%s678 + $0x18] sm:$0xff]
          %v837 = vld [vmem:[%s678 + $0x20] sm:$0xff]
          %v838 = vld [vmem:[%s678 + $0x28] sm:$0xff]
          %v839 = vld [vmem:[%s678 + $0x30] sm:$0xff]
          %v840 = vld [vmem:[%s678 + $0x38] sm:$0xff]
          %v841 = vld [vmem:[%s678 + $0x40] sm:$0xff]
          %v842 = vld [vmem:[%s678 + $0x48] sm:$0xff]
          %v843 = vld [vmem:[%s678 + $0x50] sm:$0xff]
          %v844 = vld [vmem:[%s678 + $0x58] sm:$0xff]
          %v845 = vld [vmem:[%s678 + $0x60] sm:$0xff]
          %v846 = vld [vmem:[%s678 + $0x68] sm:$0xff]
          %v847 = vld [vmem:[%s678 + $0x70] sm:$0xff]
          %v848 = vld [vmem:[%s678 + $0x78] sm:$0xff]
          %v849 = vpack.c.bf16 %v834, %v833
          %v850 = vpack.c.bf16 %v836, %v835
          %v851 = vpack.c.bf16 %v838, %v837
          %v852 = vpack.c.bf16 %v840, %v839
          %v853 = vpack.c.bf16 %v842, %v841
          %v854 = vpack.c.bf16 %v844, %v843
          %v855 = vpack.c.bf16 %v846, %v845
          %v856 = vpack.c.bf16 %v848, %v847
          %v857 = vld [vmem:[%s687] sm:$0xff]
          %v858 = vld [vmem:[%s687 + $0x8] sm:$0xff]
          %v859 = vld [vmem:[%s687 + $0x10] sm:$0xff]
          %v860 = vld [vmem:[%s687 + $0x18] sm:$0xff]
          %v861 = vld [vmem:[%s687 + $0x20] sm:$0xff]
          %v862 = vld [vmem:[%s687 + $0x28] sm:$0xff]
          %v863 = vld [vmem:[%s687 + $0x30] sm:$0xff]
          %v864 = vld [vmem:[%s687 + $0x38] sm:$0xff]
          %v865 = vld [vmem:[%s687 + $0x40] sm:$0xff]
          %v866 = vld [vmem:[%s687 + $0x48] sm:$0xff]
          %v867 = vld [vmem:[%s687 + $0x50] sm:$0xff]
          %v868 = vld [vmem:[%s687 + $0x58] sm:$0xff]
          %v869 = vld [vmem:[%s687 + $0x60] sm:$0xff]
          %v870 = vld [vmem:[%s687 + $0x68] sm:$0xff]
          %v871 = vld [vmem:[%s687 + $0x70] sm:$0xff]
          %v872 = vld [vmem:[%s687 + $0x78] sm:$0xff]
          %v873 = vpack.c.bf16 %v858, %v857
          %v874 = vpack.c.bf16 %v860, %v859
          %v875 = vpack.c.bf16 %v862, %v861
          %v876 = vpack.c.bf16 %v864, %v863
          %v877 = vpack.c.bf16 %v866, %v865
          %v878 = vpack.c.bf16 %v868, %v867
          %v879 = vpack.c.bf16 %v870, %v869
          %v880 = vpack.c.bf16 %v872, %v871
          %v881 = vmul.f32 %v817, 0.088388346
          %v882 = vmul.f32 %v818, 0.088388346
          %v883 = vmul.f32 %v819, 0.088388346
          %v884 = vmul.f32 %v820, 0.088388346
          %v885 = vmul.f32 %v821, 0.088388346
          %v886 = vmul.f32 %v822, 0.088388346
          %v887 = vmul.f32 %v823, 0.088388346
          %v888 = vmul.f32 %v824, 0.088388346
          %v889 = vmul.f32 %v825, 0.088388346
          %v890 = vmul.f32 %v826, 0.088388346
          %v891 = vmul.f32 %v827, 0.088388346
          %v892 = vmul.f32 %v828, 0.088388346
          %v893 = vmul.f32 %v829, 0.088388346
          %v894 = vmul.f32 %v830, 0.088388346
          %v895 = vmul.f32 %v831, 0.088388346
          %v896 = vmul.f32 %v832, 0.088388346
          %v897 = vpack.c.bf16 %v882, %v881
          %v898 = vpack.c.bf16 %v884, %v883
          %v899 = vpack.c.bf16 %v886, %v885
          %v900 = vpack.c.bf16 %v888, %v887
          %v901 = vpack.c.bf16 %v890, %v889
          %v902 = vpack.c.bf16 %v892, %v891
          %v903 = vpack.c.bf16 %v894, %v893
          %v904 = vpack.c.bf16 %v896, %v895
          %v905 = vld [vmem:[#allocation12] sm:$0xf]
          %v906 = vld [vmem:[#allocation12 + $0x4] sm:$0xf]
          %v907 = vld [vmem:[#allocation12 + $0x8] sm:$0xf]
          %v908 = vld [vmem:[#allocation12 + $0xc] sm:$0xf]
          %v909 = vld [vmem:[#allocation12 + $0x10] sm:$0xf]
          %v910 = vld [vmem:[#allocation12 + $0x14] sm:$0xf]
          %v911 = vld [vmem:[#allocation12 + $0x18] sm:$0xf]
          %v912 = vld [vmem:[#allocation12 + $0x1c] sm:$0xf]
          %v913 = vld [vmem:[#allocation12 + $0x20] sm:$0xf]
          %v914 = vld [vmem:[#allocation12 + $0x24] sm:$0xf]
          %v915 = vld [vmem:[#allocation12 + $0x28] sm:$0xf]
          %v916 = vld [vmem:[#allocation12 + $0x2c] sm:$0xf]
          %v917 = vld [vmem:[#allocation12 + $0x30] sm:$0xf]
          %v918 = vld [vmem:[#allocation12 + $0x34] sm:$0xf]
          %v919 = vld [vmem:[#allocation12 + $0x38] sm:$0xf]
          %v920 = vld [vmem:[#allocation12 + $0x3c] sm:$0xf]
          %v937 = vunpack.c.l.b16 %v905
          %v938 = vunpack.c.l.b16 %v906
          %v939 = vunpack.c.l.b16 %v907
          %v940 = vunpack.c.l.b16 %v908
          %v941 = vunpack.c.l.b16 %v909
          %v942 = vunpack.c.l.b16 %v910
          %v943 = vunpack.c.l.b16 %v911
          %v944 = vunpack.c.l.b16 %v912
          %v945 = vunpack.c.l.b16 %v913
          %v946 = vunpack.c.l.b16 %v914
          %v947 = vunpack.c.l.b16 %v915
          %v948 = vunpack.c.l.b16 %v916
          %v949 = vunpack.c.l.b16 %v917
          %v950 = vunpack.c.l.b16 %v918
          %v951 = vunpack.c.l.b16 %v919
          %v952 = vunpack.c.l.b16 %v920
          %v953 = vpack.c.b16 %v938, %v937
          %v954 = vpack.c.b16 %v940, %v939
          %v955 = vpack.c.b16 %v942, %v941
          %v956 = vpack.c.b16 %v944, %v943
          %v957 = vpack.c.b16 %v946, %v945
          %v958 = vpack.c.b16 %v948, %v947
          %v959 = vpack.c.b16 %v950, %v949
          %v960 = vpack.c.b16 %v952, %v951
          %969 = vmatprep.subr.bf16.mxu0 0
          %970 = vmatpush1.bf16.msra.mxu0 %v953
          %971 = vmatprep.subr.bf16.mxu0 0
          %972 = vmatpush1.bf16.msra.mxu0 %v954
          %973 = vmatprep.subr.bf16.mxu0 0
          %974 = vmatpush1.bf16.msra.mxu0 %v955
          %975 = vmatprep.subr.bf16.mxu0 0
          %976 = vmatpush1.bf16.msra.mxu0 %v956
          %977 = vmatprep.subr.bf16.mxu0 0
          %978 = vmatpush1.bf16.msra.mxu0 %v957
          %979 = vmatprep.subr.bf16.mxu0 0
          %980 = vmatpush1.bf16.msra.mxu0 %v958
          %981 = vmatprep.subr.bf16.mxu0 0
          %982 = vmatpush1.bf16.msra.mxu0 %v959
          %983 = vmatprep.subr.bf16.mxu0 0
          %984 = vmatpush1.bf16.msra.mxu0 %v960
          %985 = vmatprep.subr.bf16.mxu0 0
          %986 = vmatpush1.bf16.msra.mxu0 0
          %987 = vmatprep.subr.bf16.mxu0 0
          %988 = vmatpush1.bf16.msra.mxu0 0
          %989 = vmatprep.subr.bf16.mxu0 0
          %990 = vmatpush1.bf16.msra.mxu0 0
          %991 = vmatprep.subr.bf16.mxu0 0
          %992 = vmatpush1.bf16.msra.mxu0 0
          %993 = vmatprep.subr.bf16.mxu0 0
          %994 = vmatpush1.bf16.msra.mxu0 0
          %995 = vmatprep.subr.bf16.mxu0 0
          %996 = vmatpush1.bf16.msra.mxu0 0
          %997 = vmatprep.subr.bf16.mxu0 0
          %998 = vmatpush1.bf16.msra.mxu0 0
          %999 = vmatprep.subr.bf16.mxu0 0
          %1000 = vmatpush1.bf16.msra.mxu0 0
          %1001 = vmatprep.mubr.bf16.mxu0 0
          %1002 = vmatmul.mubr.bf16.gmra.mrb[0].mxu0 %v849
          %v1003 = vpop.f32.mrb[0].mxu0
          %v1004 = vadd.f32 0.0, %v1003
          %v1005 = vpop.f32.mrb[0].mxu0
          %v1006 = vpop.f32.mrb[0].mxu0
          %v1007 = vadd.f32 0.0, %v1006
          %v1008 = vpop.f32.mrb[0].mxu0
          %1009 = vmatprep.mubr.bf16.mxu0 0
          %1010 = vmatmul.mubr.bf16.gmra.mrb[0].mxu0 %v850
          %v1011 = vpop.f32.mrb[0].mxu0
          %v1012 = vadd.f32 0.0, %v1011
          %v1013 = vpop.f32.mrb[0].mxu0
          %v1014 = vpop.f32.mrb[0].mxu0
          %v1015 = vadd.f32 0.0, %v1014
          %v1016 = vpop.f32.mrb[0].mxu0
          %1017 = vmatprep.mubr.bf16.mxu0 0
          %1018 = vmatmul.mubr.bf16.gmra.mrb[0].mxu0 %v851
          %v1019 = vpop.f32.mrb[0].mxu0
          %v1020 = vadd.f32 0.0, %v1019
          %v1021 = vpop.f32.mrb[0].mxu0
          %v1022 = vpop.f32.mrb[0].mxu0
          %v1023 = vadd.f32 0.0, %v1022
          %v1024 = vpop.f32.mrb[0].mxu0
          %1025 = vmatprep.mubr.bf16.mxu0 0
          %1026 = vmatmul.mubr.bf16.gmra.mrb[0].mxu0 %v852
          %v1027 = vpop.f32.mrb[0].mxu0
          %v1028 = vadd.f32 0.0, %v1027
          %v1029 = vpop.f32.mrb[0].mxu0
          %v1030 = vpop.f32.mrb[0].mxu0
          %v1031 = vadd.f32 0.0, %v1030
          %v1032 = vpop.f32.mrb[0].mxu0
          %1033 = vmatprep.mubr.bf16.mxu0 0
          %1034 = vmatmul.mubr.bf16.gmra.mrb[0].mxu0 %v853
          %v1035 = vpop.f32.mrb[0].mxu0
          %v1036 = vadd.f32 0.0, %v1035
          %v1037 = vpop.f32.mrb[0].mxu0
          %v1038 = vpop.f32.mrb[0].mxu0
          %v1039 = vadd.f32 0.0, %v1038
          %v1040 = vpop.f32.mrb[0].mxu0
          %1041 = vmatprep.mubr.bf16.mxu0 0
          %1042 = vmatmul.mubr.bf16.gmra.mrb[0].mxu0 %v854
          %v1043 = vpop.f32.mrb[0].mxu0
          %v1044 = vadd.f32 0.0, %v1043
          %v1045 = vpop.f32.mrb[0].mxu0
          %v1046 = vpop.f32.mrb[0].mxu0
          %v1047 = vadd.f32 0.0, %v1046
          %v1048 = vpop.f32.mrb[0].mxu0
          %1049 = vmatprep.mubr.bf16.mxu0 0
          %1050 = vmatmul.mubr.bf16.gmra.mrb[0].mxu0 %v855
          %v1051 = vpop.f32.mrb[0].mxu0
          %v1052 = vadd.f32 0.0, %v1051
          %v1053 = vpop.f32.mrb[0].mxu0
          %v1054 = vpop.f32.mrb[0].mxu0
          %v1055 = vadd.f32 0.0, %v1054
          %v1056 = vpop.f32.mrb[0].mxu0
          %1057 = vmatprep.mubr.bf16.mxu0 0
          %1058 = vmatmul.mubr.bf16.gmra.mrb[0].mxu0 %v856
          %v1059 = vpop.f32.mrb[0].mxu0
          %v1060 = vadd.f32 0.0, %v1059
          %v1061 = vpop.f32.mrb[0].mxu0
          %v1062 = vpop.f32.mrb[0].mxu0
          %v1063 = vadd.f32 0.0, %v1062
          %v1064 = vpop.f32.mrb[0].mxu0
          %1065 = vdwg.mxu0
          %v1066 = vld [vmem:[#allocation14] sm:$0xf]
          %v1067 = vld [vmem:[#allocation14 + $0x4] sm:$0xf]
          %v1068 = vld [vmem:[#allocation14 + $0x8] sm:$0xf]
          %v1069 = vld [vmem:[#allocation14 + $0xc] sm:$0xf]
          %v1070 = vld [vmem:[#allocation14 + $0x10] sm:$0xf]
          %v1071 = vld [vmem:[#allocation14 + $0x14] sm:$0xf]
          %v1072 = vld [vmem:[#allocation14 + $0x18] sm:$0xf]
          %v1073 = vld [vmem:[#allocation14 + $0x1c] sm:$0xf]
          %v1074 = vld [vmem:[#allocation14 + $0x20] sm:$0xf]
          %v1075 = vld [vmem:[#allocation14 + $0x24] sm:$0xf]
          %v1076 = vld [vmem:[#allocation14 + $0x28] sm:$0xf]
          %v1077 = vld [vmem:[#allocation14 + $0x2c] sm:$0xf]
          %v1078 = vld [vmem:[#allocation14 + $0x30] sm:$0xf]
          %v1079 = vld [vmem:[#allocation14 + $0x34] sm:$0xf]
          %v1080 = vld [vmem:[#allocation14 + $0x38] sm:$0xf]
          %v1081 = vld [vmem:[#allocation14 + $0x3c] sm:$0xf]
          %v1098 = vunpack.c.l.b16 %v1066
          %v1099 = vunpack.c.l.b16 %v1067
          %v1100 = vunpack.c.l.b16 %v1068
          %v1101 = vunpack.c.l.b16 %v1069
          %v1102 = vunpack.c.l.b16 %v1070
          %v1103 = vunpack.c.l.b16 %v1071
          %v1104 = vunpack.c.l.b16 %v1072
          %v1105 = vunpack.c.l.b16 %v1073
          %v1106 = vunpack.c.l.b16 %v1074
          %v1107 = vunpack.c.l.b16 %v1075
          %v1108 = vunpack.c.l.b16 %v1076
          %v1109 = vunpack.c.l.b16 %v1077
          %v1110 = vunpack.c.l.b16 %v1078
          %v1111 = vunpack.c.l.b16 %v1079
          %v1112 = vunpack.c.l.b16 %v1080
          %v1113 = vunpack.c.l.b16 %v1081
          %v1114 = vpack.c.b16 %v1099, %v1098
          %v1115 = vpack.c.b16 %v1101, %v1100
          %v1116 = vpack.c.b16 %v1103, %v1102
          %v1117 = vpack.c.b16 %v1105, %v1104
          %v1118 = vpack.c.b16 %v1107, %v1106
          %v1119 = vpack.c.b16 %v1109, %v1108
          %v1120 = vpack.c.b16 %v1111, %v1110
          %v1121 = vpack.c.b16 %v1113, %v1112
          %1130 = vmatprep.subr.bf16.mxu0 0
          %1131 = vmatpush1.bf16.msra.mxu0 %v1114
          %1132 = vmatprep.subr.bf16.mxu0 0
          %1133 = vmatpush1.bf16.msra.mxu0 %v1115
          %1134 = vmatprep.subr.bf16.mxu0 0
          %1135 = vmatpush1.bf16.msra.mxu0 %v1116
          %1136 = vmatprep.subr.bf16.mxu0 0
          %1137 = vmatpush1.bf16.msra.mxu0 %v1117
          %1138 = vmatprep.subr.bf16.mxu0 0
          %1139 = vmatpush1.bf16.msra.mxu0 %v1118
          %1140 = vmatprep.subr.bf16.mxu0 0
          %1141 = vmatpush1.bf16.msra.mxu0 %v1119
          %1142 = vmatprep.subr.bf16.mxu0 0
          %1143 = vmatpush1.bf16.msra.mxu0 %v1120
          %1144 = vmatprep.subr.bf16.mxu0 0
          %1145 = vmatpush1.bf16.msra.mxu0 %v1121
          %1146 = vmatprep.subr.bf16.mxu0 0
          %1147 = vmatpush1.bf16.msra.mxu0 0
          %1148 = vmatprep.subr.bf16.mxu0 0
          %1149 = vmatpush1.bf16.msra.mxu0 0
          %1150 = vmatprep.subr.bf16.mxu0 0
          %1151 = vmatpush1.bf16.msra.mxu0 0
          %1152 = vmatprep.subr.bf16.mxu0 0
          %1153 = vmatpush1.bf16.msra.mxu0 0
          %1154 = vmatprep.subr.bf16.mxu0 0
          %1155 = vmatpush1.bf16.msra.mxu0 0
          %1156 = vmatprep.subr.bf16.mxu0 0
          %1157 = vmatpush1.bf16.msra.mxu0 0
          %1158 = vmatprep.subr.bf16.mxu0 0
          %1159 = vmatpush1.bf16.msra.mxu0 0
          %1160 = vmatprep.subr.bf16.mxu0 0
          %1161 = vmatpush1.bf16.msra.mxu0 0
          %1162 = vmatprep.mubr.bf16.mxu0 0
          %1163 = vmatmul.mubr.bf16.gmra.mrb[0].mxu0 %v873
          %v1164 = vpop.f32.mrb[0].mxu0
          %v1165 = vadd.f32 0.0, %v1164
          %v1166 = vpop.f32.mrb[0].mxu0
          %v1167 = vpop.f32.mrb[0].mxu0
          %v1168 = vadd.f32 0.0, %v1167
          %v1169 = vpop.f32.mrb[0].mxu0
          %1170 = vmatprep.mubr.bf16.mxu0 0
          %1171 = vmatmul.mubr.bf16.gmra.mrb[0].mxu0 %v874
          %v1172 = vpop.f32.mrb[0].mxu0
          %v1173 = vadd.f32 0.0, %v1172
          %v1174 = vpop.f32.mrb[0].mxu0
          %v1175 = vpop.f32.mrb[0].mxu0
          %v1176 = vadd.f32 0.0, %v1175
          %v1177 = vpop.f32.mrb[0].mxu0
          %1178 = vmatprep.mubr.bf16.mxu0 0
          %1179 = vmatmul.mubr.bf16.gmra.mrb[0].mxu0 %v875
          %v1180 = vpop.f32.mrb[0].mxu0
          %v1181 = vadd.f32 0.0, %v1180
          %v1182 = vpop.f32.mrb[0].mxu0
          %v1183 = vpop.f32.mrb[0].mxu0
          %v1184 = vadd.f32 0.0, %v1183
          %v1185 = vpop.f32.mrb[0].mxu0
          %1186 = vmatprep.mubr.bf16.mxu0 0
          %1187 = vmatmul.mubr.bf16.gmra.mrb[0].mxu0 %v876
          %v1188 = vpop.f32.mrb[0].mxu0
          %v1189 = vadd.f32 0.0, %v1188
          %v1190 = vpop.f32.mrb[0].mxu0
          %v1191 = vpop.f32.mrb[0].mxu0
          %v1192 = vadd.f32 0.0, %v1191
          %v1193 = vpop.f32.mrb[0].mxu0
          %1194 = vmatprep.mubr.bf16.mxu0 0
          %1195 = vmatmul.mubr.bf16.gmra.mrb[0].mxu0 %v877
          %v1196 = vpop.f32.mrb[0].mxu0
          %v1197 = vadd.f32 0.0, %v1196
          %v1198 = vpop.f32.mrb[0].mxu0
          %v1199 = vpop.f32.mrb[0].mxu0
          %v1200 = vadd.f32 0.0, %v1199
          %v1201 = vpop.f32.mrb[0].mxu0
          %1202 = vmatprep.mubr.bf16.mxu0 0
          %1203 = vmatmul.mubr.bf16.gmra.mrb[0].mxu0 %v878
          %v1204 = vpop.f32.mrb[0].mxu0
          %v1205 = vadd.f32 0.0, %v1204
          %v1206 = vpop.f32.mrb[0].mxu0
          %v1207 = vpop.f32.mrb[0].mxu0
          %v1208 = vadd.f32 0.0, %v1207
          %v1209 = vpop.f32.mrb[0].mxu0
          %1210 = vmatprep.mubr.bf16.mxu0 0
          %1211 = vmatmul.mubr.bf16.gmra.mrb[0].mxu0 %v879
          %v1212 = vpop.f32.mrb[0].mxu0
          %v1213 = vadd.f32 0.0, %v1212
          %v1214 = vpop.f32.mrb[0].mxu0
          %v1215 = vpop.f32.mrb[0].mxu0
          %v1216 = vadd.f32 0.0, %v1215
          %v1217 = vpop.f32.mrb[0].mxu0
          %1218 = vmatprep.mubr.bf16.mxu0 0
          %1219 = vmatmul.mubr.bf16.gmra.mrb[0].mxu0 %v880
          %v1220 = vpop.f32.mrb[0].mxu0
          %v1221 = vadd.f32 0.0, %v1220
          %v1222 = vpop.f32.mrb[0].mxu0
          %v1223 = vpop.f32.mrb[0].mxu0
          %v1224 = vadd.f32 0.0, %v1223
          %v1225 = vpop.f32.mrb[0].mxu0
          %1226 = vdwg.mxu0
          %v1227 = vld [vmem:[#allocation15] sm:$0xf]
          %v1228 = vld [vmem:[#allocation15 + $0x4] sm:$0xf]
          %v1229 = vld [vmem:[#allocation15 + $0x8] sm:$0xf]
          %v1230 = vld [vmem:[#allocation15 + $0xc] sm:$0xf]
          %v1231 = vld [vmem:[#allocation15 + $0x10] sm:$0xf]
          %v1232 = vld [vmem:[#allocation15 + $0x14] sm:$0xf]
          %v1233 = vld [vmem:[#allocation15 + $0x18] sm:$0xf]
          %v1234 = vld [vmem:[#allocation15 + $0x1c] sm:$0xf]
          %v1235 = vld [vmem:[#allocation15 + $0x20] sm:$0xf]
          %v1236 = vld [vmem:[#allocation15 + $0x24] sm:$0xf]
          %v1237 = vld [vmem:[#allocation15 + $0x28] sm:$0xf]
          %v1238 = vld [vmem:[#allocation15 + $0x2c] sm:$0xf]
          %v1239 = vld [vmem:[#allocation15 + $0x30] sm:$0xf]
          %v1240 = vld [vmem:[#allocation15 + $0x34] sm:$0xf]
          %v1241 = vld [vmem:[#allocation15 + $0x38] sm:$0xf]
          %v1242 = vld [vmem:[#allocation15 + $0x3c] sm:$0xf]
          %v1259 = vunpack.c.l.b16 %v1227
          %v1260 = vunpack.c.l.b16 %v1228
          %v1261 = vunpack.c.l.b16 %v1229
          %v1262 = vunpack.c.l.b16 %v1230
          %v1263 = vunpack.c.l.b16 %v1231
          %v1264 = vunpack.c.l.b16 %v1232
          %v1265 = vunpack.c.l.b16 %v1233
          %v1266 = vunpack.c.l.b16 %v1234
          %v1267 = vunpack.c.l.b16 %v1235
          %v1268 = vunpack.c.l.b16 %v1236
          %v1269 = vunpack.c.l.b16 %v1237
          %v1270 = vunpack.c.l.b16 %v1238
          %v1271 = vunpack.c.l.b16 %v1239
          %v1272 = vunpack.c.l.b16 %v1240
          %v1273 = vunpack.c.l.b16 %v1241
          %v1274 = vunpack.c.l.b16 %v1242
          %v1275 = vpack.c.b16 %v1260, %v1259
          %v1276 = vpack.c.b16 %v1262, %v1261
          %v1277 = vpack.c.b16 %v1264, %v1263
          %v1278 = vpack.c.b16 %v1266, %v1265
          %v1279 = vpack.c.b16 %v1268, %v1267
          %v1280 = vpack.c.b16 %v1270, %v1269
          %v1281 = vpack.c.b16 %v1272, %v1271
          %v1282 = vpack.c.b16 %v1274, %v1273
          %1291 = vmatprep.subr.bf16.mxu0 0
          %1292 = vmatpush1.bf16.msra.mxu0 %v1275
          %1293 = vmatprep.subr.bf16.mxu0 0
          %1294 = vmatpush1.bf16.msra.mxu0 %v1276
          %1295 = vmatprep.subr.bf16.mxu0 0
          %1296 = vmatpush1.bf16.msra.mxu0 %v1277
          %1297 = vmatprep.subr.bf16.mxu0 0
          %1298 = vmatpush1.bf16.msra.mxu0 %v1278
          %1299 = vmatprep.subr.bf16.mxu0 0
          %1300 = vmatpush1.bf16.msra.mxu0 %v1279
          %1301 = vmatprep.subr.bf16.mxu0 0
          %1302 = vmatpush1.bf16.msra.mxu0 %v1280
          %1303 = vmatprep.subr.bf16.mxu0 0
          %1304 = vmatpush1.bf16.msra.mxu0 %v1281
          %1305 = vmatprep.subr.bf16.mxu0 0
          %1306 = vmatpush1.bf16.msra.mxu0 %v1282
          %1307 = vmatprep.subr.bf16.mxu0 0
          %1308 = vmatpush1.bf16.msra.mxu0 0
          %1309 = vmatprep.subr.bf16.mxu0 0
          %1310 = vmatpush1.bf16.msra.mxu0 0
          %1311 = vmatprep.subr.bf16.mxu0 0
          %1312 = vmatpush1.bf16.msra.mxu0 0
          %1313 = vmatprep.subr.bf16.mxu0 0
          %1314 = vmatpush1.bf16.msra.mxu0 0
          %1315 = vmatprep.subr.bf16.mxu0 0
          %1316 = vmatpush1.bf16.msra.mxu0 0
          %1317 = vmatprep.subr.bf16.mxu0 0
          %1318 = vmatpush1.bf16.msra.mxu0 0
          %1319 = vmatprep.subr.bf16.mxu0 0
          %1320 = vmatpush1.bf16.msra.mxu0 0
          %1321 = vmatprep.subr.bf16.mxu0 0
          %1322 = vmatpush1.bf16.msra.mxu0 0
          %1323 = vmatprep.mubr.bf16.mxu0 0
          %1324 = vmatmul.mubr.bf16.gmra.mrb[0].mxu0 %v897
          %v1325 = vpop.f32.mrb[0].mxu0
          %v1326 = vadd.f32 0.0, %v1325
          %v1327 = vpop.f32.mrb[0].mxu0
          %v1328 = vpop.f32.mrb[0].mxu0
          %v1329 = vadd.f32 0.0, %v1328
          %v1330 = vpop.f32.mrb[0].mxu0
          %1331 = vmatprep.mubr.bf16.mxu0 0
          %1332 = vmatmul.mubr.bf16.gmra.mrb[0].mxu0 %v898
          %v1333 = vpop.f32.mrb[0].mxu0
          %v1334 = vadd.f32 0.0, %v1333
          %v1335 = vpop.f32.mrb[0].mxu0
          %v1336 = vpop.f32.mrb[0].mxu0
          %v1337 = vadd.f32 0.0, %v1336
          %v1338 = vpop.f32.mrb[0].mxu0
          %1339 = vmatprep.mubr.bf16.mxu0 0
          %1340 = vmatmul.mubr.bf16.gmra.mrb[0].mxu0 %v899
          %v1341 = vpop.f32.mrb[0].mxu0
          %v1342 = vadd.f32 0.0, %v1341
          %v1343 = vpop.f32.mrb[0].mxu0
          %v1344 = vpop.f32.mrb[0].mxu0
          %v1345 = vadd.f32 0.0, %v1344
          %v1346 = vpop.f32.mrb[0].mxu0
          %1347 = vmatprep.mubr.bf16.mxu0 0
          %1348 = vmatmul.mubr.bf16.gmra.mrb[0].mxu0 %v900
          %v1349 = vpop.f32.mrb[0].mxu0
          %v1350 = vadd.f32 0.0, %v1349
          %v1351 = vpop.f32.mrb[0].mxu0
          %v1352 = vpop.f32.mrb[0].mxu0
          %v1353 = vadd.f32 0.0, %v1352
          %v1354 = vpop.f32.mrb[0].mxu0
          %1355 = vmatprep.mubr.bf16.mxu0 0
          %1356 = vmatmul.mubr.bf16.gmra.mrb[0].mxu0 %v901
          %v1357 = vpop.f32.mrb[0].mxu0
          %v1358 = vadd.f32 0.0, %v1357
          %v1359 = vpop.f32.mrb[0].mxu0
          %v1360 = vpop.f32.mrb[0].mxu0
          %v1361 = vadd.f32 0.0, %v1360
          %v1362 = vpop.f32.mrb[0].mxu0
          %1363 = vmatprep.mubr.bf16.mxu0 0
          %1364 = vmatmul.mubr.bf16.gmra.mrb[0].mxu0 %v902
          %v1365 = vpop.f32.mrb[0].mxu0
          %v1366 = vadd.f32 0.0, %v1365
          %v1367 = vpop.f32.mrb[0].mxu0
          %v1368 = vpop.f32.mrb[0].mxu0
          %v1369 = vadd.f32 0.0, %v1368
          %v1370 = vpop.f32.mrb[0].mxu0
          %1371 = vmatprep.mubr.bf16.mxu0 0
          %1372 = vmatmul.mubr.bf16.gmra.mrb[0].mxu0 %v903
          %v1373 = vpop.f32.mrb[0].mxu0
          %v1374 = vadd.f32 0.0, %v1373
          %v1375 = vpop.f32.mrb[0].mxu0
          %v1376 = vpop.f32.mrb[0].mxu0
          %v1377 = vadd.f32 0.0, %v1376
          %v1378 = vpop.f32.mrb[0].mxu0
          %1379 = vmatprep.mubr.bf16.mxu0 0
          %1380 = vmatmul.mubr.bf16.gmra.mrb[0].mxu0 %v904
          %v1381 = vpop.f32.mrb[0].mxu0
          %v1382 = vadd.f32 0.0, %v1381
          %v1383 = vpop.f32.mrb[0].mxu0
          %v1384 = vpop.f32.mrb[0].mxu0
          %v1385 = vadd.f32 0.0, %v1384
          %v1386 = vpop.f32.mrb[0].mxu0
          %1387 = vdwg.mxu0
          %v1388 = vpack.c.bf16 %v1007, %v1004
          %v1389 = vpack.c.bf16 %v1015, %v1012
          %v1390 = vpack.c.bf16 %v1023, %v1020
          %v1391 = vpack.c.bf16 %v1031, %v1028
          %v1392 = vpack.c.bf16 %v1039, %v1036
          %v1393 = vpack.c.bf16 %v1047, %v1044
          %v1394 = vpack.c.bf16 %v1055, %v1052
          %v1395 = vpack.c.bf16 %v1063, %v1060
          %v1396 = vpack.c.bf16 %v1168, %v1165
          %v1397 = vpack.c.bf16 %v1176, %v1173
          %v1398 = vpack.c.bf16 %v1184, %v1181
          %v1399 = vpack.c.bf16 %v1192, %v1189
          %v1400 = vpack.c.bf16 %v1200, %v1197
          %v1401 = vpack.c.bf16 %v1208, %v1205
          %v1402 = vpack.c.bf16 %v1216, %v1213
          %v1403 = vpack.c.bf16 %v1224, %v1221
          %v1404 = vpack.c.bf16 %v1329, %v1326
          %v1405 = vpack.c.bf16 %v1337, %v1334
          %v1406 = vpack.c.bf16 %v1345, %v1342
          %v1407 = vpack.c.bf16 %v1353, %v1350
          %v1408 = vpack.c.bf16 %v1361, %v1358
          %v1409 = vpack.c.bf16 %v1369, %v1366
          %v1410 = vpack.c.bf16 %v1377, %v1374
          %v1411 = vpack.c.bf16 %v1385, %v1382
          %v1412 = vld [vmem:[%s3] sm:$0x1]
          %vm1413 = vcmp.eq.f32.partialorder %v1412, 0.0
          %v1414 = vsel %vm1413, -8.838835e+18, 0.0
          %v1416 = vlaneseq
          %v1417 = vshrl.u32 %v1416, 7
          %v1418 = vsub.s32 0, %v1417
          %v1419 = vrot.slane %v1414, %v1418
          %vm1421 = vcmask 130048
          %v1423 = vsel %vm1421, %v1404, 0
          %v1426 = vsel %vm1421, %v1405, 0
          %v1429 = vsel %vm1421, %v1406, 0
          %v1432 = vsel %vm1421, %v1407, 0
          %v1435 = vsel %vm1421, %v1408, 0
          %v1438 = vsel %vm1421, %v1409, 0
          %v1441 = vsel %vm1421, %v1410, 0
          %v1444 = vsel %vm1421, %v1411, 0
          %v1447 = vsel %vm1421, %v1396, 0
          %v1450 = vsel %vm1421, %v1397, 0
          %v1453 = vsel %vm1421, %v1398, 0
          %v1456 = vsel %vm1421, %v1399, 0
          %v1459 = vsel %vm1421, %v1400, 0
          %v1462 = vsel %vm1421, %v1401, 0
          %v1465 = vsel %vm1421, %v1402, 0
          %v1468 = vsel %vm1421, %v1403, 0
          %1470 = vmatprep.subr.bf16.mxu0 0
          %1471 = vmatpush1.bf16.xpose.msra.mxu0 %v1447
          %1472 = vmatprep.subr.bf16.mxu0 0
          %1473 = vmatpush1.bf16.xpose.msra.mxu0 %v1450
          %1474 = vmatprep.subr.bf16.mxu0 0
          %1475 = vmatpush1.bf16.xpose.msra.mxu0 %v1453
          %1476 = vmatprep.subr.bf16.mxu0 0
          %1477 = vmatpush1.bf16.xpose.msra.mxu0 %v1456
          %1478 = vmatprep.subr.bf16.mxu0 0
          %1479 = vmatpush1.bf16.xpose.msra.mxu0 %v1459
          %1480 = vmatprep.subr.bf16.mxu0 0
          %1481 = vmatpush1.bf16.xpose.msra.mxu0 %v1462
          %1482 = vmatprep.subr.bf16.mxu0 0
          %1483 = vmatpush1.bf16.xpose.msra.mxu0 %v1465
          %1484 = vmatprep.subr.bf16.mxu0 0
          %1485 = vmatpush1.bf16.xpose.msra.mxu0 %v1468
          %1486 = vmatprep.subr.bf16.mxu0 0
          %1487 = vmatpush1.bf16.xpose.msra.mxu0 0
          %1488 = vmatprep.subr.bf16.mxu0 0
          %1489 = vmatpush1.bf16.xpose.msra.mxu0 0
          %1490 = vmatprep.subr.bf16.mxu0 0
          %1491 = vmatpush1.bf16.xpose.msra.mxu0 0
          %1492 = vmatprep.subr.bf16.mxu0 0
          %1493 = vmatpush1.bf16.xpose.msra.mxu0 0
          %1494 = vmatprep.subr.bf16.mxu0 0
          %1495 = vmatpush1.bf16.xpose.msra.mxu0 0
          %1496 = vmatprep.subr.bf16.mxu0 0
          %1497 = vmatpush1.bf16.xpose.msra.mxu0 0
          %1498 = vmatprep.subr.bf16.mxu0 0
          %1499 = vmatpush1.bf16.xpose.msra.mxu0 0
          %1500 = vmatprep.subr.bf16.mxu0 0
          %1501 = vmatpush1.bf16.xpose.msra.mxu0 0
          %1502 = vmatprep.mubr.bf16.mxu0 0
          %1503 = vmatmul.mubr.bf16.gmra.mrb[0].mxu0 %v1423
          %v1504 = vpop.f32.mrb[0].mxu0
          %v1505 = vadd.f32 %v1419, %v1504
          %v1506 = vpop.f32.mrb[0].mxu0
          %v1507 = vpop.f32.mrb[0].mxu0
          %v1508 = vadd.f32 %v1419, %v1507
          %v1509 = vpop.f32.mrb[0].mxu0
          %1510 = vmatprep.mubr.bf16.mxu0 0
          %1511 = vmatmul.mubr.bf16.gmra.mrb[0].mxu0 %v1426
          %v1512 = vpop.f32.mrb[0].mxu0
          %v1513 = vadd.f32 %v1419, %v1512
          %v1514 = vpop.f32.mrb[0].mxu0
          %v1515 = vpop.f32.mrb[0].mxu0
          %v1516 = vadd.f32 %v1419, %v1515
          %v1517 = vpop.f32.mrb[0].mxu0
          %1518 = vmatprep.mubr.bf16.mxu0 0
          %1519 = vmatmul.mubr.bf16.gmra.mrb[0].mxu0 %v1429
          %v1520 = vpop.f32.mrb[0].mxu0
          %v1521 = vadd.f32 %v1419, %v1520
          %v1522 = vpop.f32.mrb[0].mxu0
          %v1523 = vpop.f32.mrb[0].mxu0
          %v1524 = vadd.f32 %v1419, %v1523
          %v1525 = vpop.f32.mrb[0].mxu0
          %1526 = vmatprep.mubr.bf16.mxu0 0
          %1527 = vmatmul.mubr.bf16.gmra.mrb[0].mxu0 %v1432
          %v1528 = vpop.f32.mrb[0].mxu0
          %v1529 = vadd.f32 %v1419, %v1528
          %v1530 = vpop.f32.mrb[0].mxu0
          %v1531 = vpop.f32.mrb[0].mxu0
          %v1532 = vadd.f32 %v1419, %v1531
          %v1533 = vpop.f32.mrb[0].mxu0
          %1534 = vmatprep.mubr.bf16.mxu0 0
          %1535 = vmatmul.mubr.bf16.gmra.mrb[0].mxu0 %v1435
          %v1536 = vpop.f32.mrb[0].mxu0
          %v1537 = vadd.f32 %v1419, %v1536
          %v1538 = vpop.f32.mrb[0].mxu0
          %v1539 = vpop.f32.mrb[0].mxu0
          %v1540 = vadd.f32 %v1419, %v1539
          %v1541 = vpop.f32.mrb[0].mxu0
          %1542 = vmatprep.mubr.bf16.mxu0 0
          %1543 = vmatmul.mubr.bf16.gmra.mrb[0].mxu0 %v1438
          %v1544 = vpop.f32.mrb[0].mxu0
          %v1545 = vadd.f32 %v1419, %v1544
          %v1546 = vpop.f32.mrb[0].mxu0
          %v1547 = vpop.f32.mrb[0].mxu0
          %v1548 = vadd.f32 %v1419, %v1547
          %v1549 = vpop.f32.mrb[0].mxu0
          %1550 = vmatprep.mubr.bf16.mxu0 0
          %1551 = vmatmul.mubr.bf16.gmra.mrb[0].mxu0 %v1441
          %v1552 = vpop.f32.mrb[0].mxu0
          %v1553 = vadd.f32 %v1419, %v1552
          %v1554 = vpop.f32.mrb[0].mxu0
          %v1555 = vpop.f32.mrb[0].mxu0
          %v1556 = vadd.f32 %v1419, %v1555
          %v1557 = vpop.f32.mrb[0].mxu0
          %1558 = vmatprep.mubr.bf16.mxu0 0
          %1559 = vmatmul.mubr.bf16.gmra.mrb[0].mxu0 %v1444
          %v1560 = vpop.f32.mrb[0].mxu0
          %v1561 = vadd.f32 %v1419, %v1560
          %v1562 = vpop.f32.mrb[0].mxu0
          %v1563 = vpop.f32.mrb[0].mxu0
          %v1564 = vadd.f32 %v1419, %v1563
          %v1565 = vpop.f32.mrb[0].mxu0
          %1566 = vdwg.mxu0
          %1567 = vmax.xlane.f32.xlu0 %v1505
          %v1568 = vpop.xlane.xlu0 %1567
          %1569 = vmax.xlane.f32.xlu0 %v1508
          %v1570 = vpop.xlane.xlu0 %1569
          %1571 = vmax.xlane.f32.xlu0 %v1513
          %v1572 = vpop.xlane.xlu0 %1571
          %1573 = vmax.xlane.f32.xlu0 %v1516
          %v1574 = vpop.xlane.xlu0 %1573
          %1575 = vmax.xlane.f32.xlu0 %v1521
          %v1576 = vpop.xlane.xlu0 %1575
          %1577 = vmax.xlane.f32.xlu0 %v1524
          %v1578 = vpop.xlane.xlu0 %1577
          %1579 = vmax.xlane.f32.xlu0 %v1529
          %v1580 = vpop.xlane.xlu0 %1579
          %1581 = vmax.xlane.f32.xlu0 %v1532
          %v1582 = vpop.xlane.xlu0 %1581
          %1583 = vmax.xlane.f32.xlu0 %v1537
          %v1584 = vpop.xlane.xlu0 %1583
          %1585 = vmax.xlane.f32.xlu0 %v1540
          %v1586 = vpop.xlane.xlu0 %1585
          %1587 = vmax.xlane.f32.xlu0 %v1545
          %v1588 = vpop.xlane.xlu0 %1587
          %1589 = vmax.xlane.f32.xlu0 %v1548
          %v1590 = vpop.xlane.xlu0 %1589
          %1591 = vmax.xlane.f32.xlu0 %v1553
          %v1592 = vpop.xlane.xlu0 %1591
          %1593 = vmax.xlane.f32.xlu0 %v1556
          %v1594 = vpop.xlane.xlu0 %1593
          %1595 = vmax.xlane.f32.xlu0 %v1561
          %v1596 = vpop.xlane.xlu0 %1595
          %1597 = vmax.xlane.f32.xlu0 %v1564
          %v1598 = vpop.xlane.xlu0 %1597
          %v1599 = vsub.f32 %v1505, %v1568
          %v1600 = vsub.f32 %v1508, %v1570
          %v1601 = vsub.f32 %v1513, %v1572
          %v1602 = vsub.f32 %v1516, %v1574
          %v1603 = vsub.f32 %v1521, %v1576
          %v1604 = vsub.f32 %v1524, %v1578
          %v1605 = vsub.f32 %v1529, %v1580
          %v1606 = vsub.f32 %v1532, %v1582
          %v1607 = vsub.f32 %v1537, %v1584
          %v1608 = vsub.f32 %v1540, %v1586
          %v1609 = vsub.f32 %v1545, %v1588
          %v1610 = vsub.f32 %v1548, %v1590
          %v1611 = vsub.f32 %v1553, %v1592
          %v1612 = vsub.f32 %v1556, %v1594
          %v1613 = vsub.f32 %v1561, %v1596
          %v1614 = vsub.f32 %v1564, %v1598
          %v1615 = vmul.f32 %v1599, 1.442695
          %v1616 = vpow.pop %v1615
          %v1617 = vmul.f32 %v1600, 1.442695
          %v1618 = vpow.pop %v1617
          %v1619 = vmul.f32 %v1601, 1.442695
          %v1620 = vpow.pop %v1619
          %v1621 = vmul.f32 %v1602, 1.442695
          %v1622 = vpow.pop %v1621
          %v1623 = vmul.f32 %v1603, 1.442695
          %v1624 = vpow.pop %v1623
          %v1625 = vmul.f32 %v1604, 1.442695
          %v1626 = vpow.pop %v1625
          %v1627 = vmul.f32 %v1605, 1.442695
          %v1628 = vpow.pop %v1627
          %v1629 = vmul.f32 %v1606, 1.442695
          %v1630 = vpow.pop %v1629
          %v1631 = vmul.f32 %v1607, 1.442695
          %v1632 = vpow.pop %v1631
          %v1633 = vmul.f32 %v1608, 1.442695
          %v1634 = vpow.pop %v1633
          %v1635 = vmul.f32 %v1609, 1.442695
          %v1636 = vpow.pop %v1635
          %v1637 = vmul.f32 %v1610, 1.442695
          %v1638 = vpow.pop %v1637
          %v1639 = vmul.f32 %v1611, 1.442695
          %v1640 = vpow.pop %v1639
          %v1641 = vmul.f32 %v1612, 1.442695
          %v1642 = vpow.pop %v1641
          %v1643 = vmul.f32 %v1613, 1.442695
          %v1644 = vpow.pop %v1643
          %v1645 = vmul.f32 %v1614, 1.442695
          %v1646 = vpow.pop %v1645
          %1647 = vadd.xlane.f32.xlu0 %v1616
          %v1648 = vpop.xlane.xlu0 %1647
          %1649 = vadd.xlane.f32.xlu0 %v1618
          %v1650 = vpop.xlane.xlu0 %1649
          %1651 = vadd.xlane.f32.xlu0 %v1620
          %v1652 = vpop.xlane.xlu0 %1651
          %1653 = vadd.xlane.f32.xlu0 %v1622
          %v1654 = vpop.xlane.xlu0 %1653
          %1655 = vadd.xlane.f32.xlu0 %v1624
          %v1656 = vpop.xlane.xlu0 %1655
          %1657 = vadd.xlane.f32.xlu0 %v1626
          %v1658 = vpop.xlane.xlu0 %1657
          %1659 = vadd.xlane.f32.xlu0 %v1628
          %v1660 = vpop.xlane.xlu0 %1659
          %1661 = vadd.xlane.f32.xlu0 %v1630
          %v1662 = vpop.xlane.xlu0 %1661
          %1663 = vadd.xlane.f32.xlu0 %v1632
          %v1664 = vpop.xlane.xlu0 %1663
          %1665 = vadd.xlane.f32.xlu0 %v1634
          %v1666 = vpop.xlane.xlu0 %1665
          %1667 = vadd.xlane.f32.xlu0 %v1636
          %v1668 = vpop.xlane.xlu0 %1667
          %1669 = vadd.xlane.f32.xlu0 %v1638
          %v1670 = vpop.xlane.xlu0 %1669
          %1671 = vadd.xlane.f32.xlu0 %v1640
          %v1672 = vpop.xlane.xlu0 %1671
          %1673 = vadd.xlane.f32.xlu0 %v1642
          %v1674 = vpop.xlane.xlu0 %1673
          %1675 = vadd.xlane.f32.xlu0 %v1644
          %v1676 = vpop.xlane.xlu0 %1675
          %1677 = vadd.xlane.f32.xlu0 %v1646
          %v1678 = vpop.xlane.xlu0 %1677
          %v1679 = vrcp.pop %v1648
          %v1680 = vrcp.pop %v1650
          %v1681 = vrcp.pop %v1652
          %v1682 = vrcp.pop %v1654
          %v1683 = vrcp.pop %v1656
          %v1684 = vrcp.pop %v1658
          %v1685 = vrcp.pop %v1660
          %v1686 = vrcp.pop %v1662
          %v1687 = vrcp.pop %v1664
          %v1688 = vrcp.pop %v1666
          %v1689 = vrcp.pop %v1668
          %v1690 = vrcp.pop %v1670
          %v1691 = vrcp.pop %v1672
          %v1692 = vrcp.pop %v1674
          %v1693 = vrcp.pop %v1676
          %v1694 = vrcp.pop %v1678
          %v1695 = vmul.f32 %v1616, %v1679
          %v1696 = vmul.f32 %v1618, %v1680
          %v1697 = vmul.f32 %v1620, %v1681
          %v1698 = vmul.f32 %v1622, %v1682
          %v1699 = vmul.f32 %v1624, %v1683
          %v1700 = vmul.f32 %v1626, %v1684
          %v1701 = vmul.f32 %v1628, %v1685
          %v1702 = vmul.f32 %v1630, %v1686
          %v1703 = vmul.f32 %v1632, %v1687
          %v1704 = vmul.f32 %v1634, %v1688
          %v1705 = vmul.f32 %v1636, %v1689
          %v1706 = vmul.f32 %v1638, %v1690
          %v1707 = vmul.f32 %v1640, %v1691
          %v1708 = vmul.f32 %v1642, %v1692
          %v1709 = vmul.f32 %v1644, %v1693
          %v1710 = vmul.f32 %v1646, %v1694
          %v1711 = vpack.c.bf16 %v1696, %v1695
          %v1712 = vpack.c.bf16 %v1698, %v1697
          %v1713 = vpack.c.bf16 %v1700, %v1699
          %v1714 = vpack.c.bf16 %v1702, %v1701
          %v1715 = vpack.c.bf16 %v1704, %v1703
          %v1716 = vpack.c.bf16 %v1706, %v1705
          %v1717 = vpack.c.bf16 %v1708, %v1707
          %v1718 = vpack.c.bf16 %v1710, %v1709
          %1719 = vmatprep.subr.bf16.mxu0 0
          %1720 = vmatpush1.bf16.msra.mxu0 %v1388
          %1721 = vmatprep.subr.bf16.mxu0 0
          %1722 = vmatpush1.bf16.msra.mxu0 %v1389
          %1723 = vmatprep.subr.bf16.mxu0 0
          %1724 = vmatpush1.bf16.msra.mxu0 %v1390
          %1725 = vmatprep.subr.bf16.mxu0 0
          %1726 = vmatpush1.bf16.msra.mxu0 %v1391
          %1727 = vmatprep.subr.bf16.mxu0 0
          %1728 = vmatpush1.bf16.msra.mxu0 %v1392
          %1729 = vmatprep.subr.bf16.mxu0 0
          %1730 = vmatpush1.bf16.msra.mxu0 %v1393
          %1731 = vmatprep.subr.bf16.mxu0 0
          %1732 = vmatpush1.bf16.msra.mxu0 %v1394
          %1733 = vmatprep.subr.bf16.mxu0 0
          %1734 = vmatpush1.bf16.msra.mxu0 %v1395
          %1735 = vmatprep.subr.bf16.mxu0 0
          %1736 = vmatpush1.bf16.msra.mxu0 0
          %1737 = vmatprep.subr.bf16.mxu0 0
          %1738 = vmatpush1.bf16.msra.mxu0 0
          %1739 = vmatprep.subr.bf16.mxu0 0
          %1740 = vmatpush1.bf16.msra.mxu0 0
          %1741 = vmatprep.subr.bf16.mxu0 0
          %1742 = vmatpush1.bf16.msra.mxu0 0
          %1743 = vmatprep.subr.bf16.mxu0 0
          %1744 = vmatpush1.bf16.msra.mxu0 0
          %1745 = vmatprep.subr.bf16.mxu0 0
          %1746 = vmatpush1.bf16.msra.mxu0 0
          %1747 = vmatprep.subr.bf16.mxu0 0
          %1748 = vmatpush1.bf16.msra.mxu0 0
          %1749 = vmatprep.subr.bf16.mxu0 0
          %1750 = vmatpush1.bf16.msra.mxu0 0
          %1751 = vmatprep.mubr.bf16.mxu0 0
          %1752 = vmatmul.mubr.bf16.gmra.mrb[0].mxu0 %v1711
          %v1753 = vpop.f32.mrb[0].mxu0
          %v1754 = vadd.f32 0.0, %v1753
          %v1755 = vpop.f32.mrb[0].mxu0
          %v1756 = vpop.f32.mrb[0].mxu0
          %v1757 = vadd.f32 0.0, %v1756
          %v1758 = vpop.f32.mrb[0].mxu0
          %1759 = vmatprep.mubr.bf16.mxu0 0
          %1760 = vmatmul.mubr.bf16.gmra.mrb[0].mxu0 %v1712
          %v1761 = vpop.f32.mrb[0].mxu0
          %v1762 = vadd.f32 0.0, %v1761
          %v1763 = vpop.f32.mrb[0].mxu0
          %v1764 = vpop.f32.mrb[0].mxu0
          %v1765 = vadd.f32 0.0, %v1764
          %v1766 = vpop.f32.mrb[0].mxu0
          %1767 = vmatprep.mubr.bf16.mxu0 0
          %1768 = vmatmul.mubr.bf16.gmra.mrb[0].mxu0 %v1713
          %v1769 = vpop.f32.mrb[0].mxu0
          %v1770 = vadd.f32 0.0, %v1769
          %v1771 = vpop.f32.mrb[0].mxu0
          %v1772 = vpop.f32.mrb[0].mxu0
          %v1773 = vadd.f32 0.0, %v1772
          %v1774 = vpop.f32.mrb[0].mxu0
          %1775 = vmatprep.mubr.bf16.mxu0 0
          %1776 = vmatmul.mubr.bf16.gmra.mrb[0].mxu0 %v1714
          %v1777 = vpop.f32.mrb[0].mxu0
          %v1778 = vadd.f32 0.0, %v1777
          %v1779 = vpop.f32.mrb[0].mxu0
          %v1780 = vpop.f32.mrb[0].mxu0
          %v1781 = vadd.f32 0.0, %v1780
          %v1782 = vpop.f32.mrb[0].mxu0
          %1783 = vmatprep.mubr.bf16.mxu0 0
          %1784 = vmatmul.mubr.bf16.gmra.mrb[0].mxu0 %v1715
          %v1785 = vpop.f32.mrb[0].mxu0
          %v1786 = vadd.f32 0.0, %v1785
          %v1787 = vpop.f32.mrb[0].mxu0
          %v1788 = vpop.f32.mrb[0].mxu0
          %v1789 = vadd.f32 0.0, %v1788
          %v1790 = vpop.f32.mrb[0].mxu0
          %1791 = vmatprep.mubr.bf16.mxu0 0
          %1792 = vmatmul.mubr.bf16.gmra.mrb[0].mxu0 %v1716
          %v1793 = vpop.f32.mrb[0].mxu0
          %v1794 = vadd.f32 0.0, %v1793
          %v1795 = vpop.f32.mrb[0].mxu0
          %v1796 = vpop.f32.mrb[0].mxu0
          %v1797 = vadd.f32 0.0, %v1796
          %v1798 = vpop.f32.mrb[0].mxu0
          %1799 = vmatprep.mubr.bf16.mxu0 0
          %1800 = vmatmul.mubr.bf16.gmra.mrb[0].mxu0 %v1717
          %v1801 = vpop.f32.mrb[0].mxu0
          %v1802 = vadd.f32 0.0, %v1801
          %v1803 = vpop.f32.mrb[0].mxu0
          %v1804 = vpop.f32.mrb[0].mxu0
          %v1805 = vadd.f32 0.0, %v1804
          %v1806 = vpop.f32.mrb[0].mxu0
          %1807 = vmatprep.mubr.bf16.mxu0 0
          %1808 = vmatmul.mubr.bf16.gmra.mrb[0].mxu0 %v1718
          %v1809 = vpop.f32.mrb[0].mxu0
          %v1810 = vadd.f32 0.0, %v1809
          %v1811 = vpop.f32.mrb[0].mxu0
          %v1812 = vpop.f32.mrb[0].mxu0
          %v1813 = vadd.f32 0.0, %v1812
          %v1814 = vpop.f32.mrb[0].mxu0
          %1815 = vdwg.mxu0
          %1816 = vst.msk [vmem:[#allocation2] sm:$0xff] %vm1421, %v1754
          %1817 = vst.msk [vmem:[#allocation2 + $0x8] sm:$0xff] %vm1421, %v1757
          %1818 = vst.msk [vmem:[#allocation2 + $0x10] sm:$0xff] %vm1421, %v1762
          %1819 = vst.msk [vmem:[#allocation2 + $0x18] sm:$0xff] %vm1421, %v1765
          %1820 = vst.msk [vmem:[#allocation2 + $0x20] sm:$0xff] %vm1421, %v1770
          %1821 = vst.msk [vmem:[#allocation2 + $0x28] sm:$0xff] %vm1421, %v1773
          %1822 = vst.msk [vmem:[#allocation2 + $0x30] sm:$0xff] %vm1421, %v1778
          %1823 = vst.msk [vmem:[#allocation2 + $0x38] sm:$0xff] %vm1421, %v1781
          %1824 = vst.msk [vmem:[#allocation2 + $0x40] sm:$0xff] %vm1421, %v1786
          %1825 = vst.msk [vmem:[#allocation2 + $0x48] sm:$0xff] %vm1421, %v1789
          %1826 = vst.msk [vmem:[#allocation2 + $0x50] sm:$0xff] %vm1421, %v1794
          %1827 = vst.msk [vmem:[#allocation2 + $0x58] sm:$0xff] %vm1421, %v1797
          %1828 = vst.msk [vmem:[#allocation2 + $0x60] sm:$0xff] %vm1421, %v1802
          %1829 = vst.msk [vmem:[#allocation2 + $0x68] sm:$0xff] %vm1421, %v1805
          %1830 = vst.msk [vmem:[#allocation2 + $0x70] sm:$0xff] %vm1421, %v1810
          %1831 = vst.msk [vmem:[#allocation2 + $0x78] sm:$0xff] %vm1421, %v1813
          %1840 = vrot.lane.b32.xlu0 %v1404, 112
          %v1841 = vpop.permute.xlu0 %1840
          %1842 = vrot.lane.b32.xlu0 %v1405, 112
          %v1843 = vpop.permute.xlu0 %1842
          %1844 = vrot.lane.b32.xlu0 %v1406, 112
          %v1845 = vpop.permute.xlu0 %1844
          %1846 = vrot.lane.b32.xlu0 %v1407, 112
          %v1847 = vpop.permute.xlu0 %1846
          %1848 = vrot.lane.b32.xlu0 %v1408, 112
          %v1849 = vpop.permute.xlu0 %1848
          %1850 = vrot.lane.b32.xlu0 %v1409, 112
          %v1851 = vpop.permute.xlu0 %1850
          %1852 = vrot.lane.b32.xlu0 %v1410, 112
          %v1853 = vpop.permute.xlu0 %1852
          %1854 = vrot.lane.b32.xlu0 %v1411, 112
          %v1855 = vpop.permute.xlu0 %1854
          %1864 = vrot.lane.b32.xlu0 %v1396, 112
          %v1865 = vpop.permute.xlu0 %1864
          %1866 = vrot.lane.b32.xlu0 %v1397, 112
          %v1867 = vpop.permute.xlu0 %1866
          %1868 = vrot.lane.b32.xlu0 %v1398, 112
          %v1869 = vpop.permute.xlu0 %1868
          %1870 = vrot.lane.b32.xlu0 %v1399, 112
          %v1871 = vpop.permute.xlu0 %1870
          %1872 = vrot.lane.b32.xlu0 %v1400, 112
          %v1873 = vpop.permute.xlu0 %1872
          %1874 = vrot.lane.b32.xlu0 %v1401, 112
          %v1875 = vpop.permute.xlu0 %1874
          %1876 = vrot.lane.b32.xlu0 %v1402, 112
          %v1877 = vpop.permute.xlu0 %1876
          %1878 = vrot.lane.b32.xlu0 %v1403, 112
          %v1879 = vpop.permute.xlu0 %1878
          %v1881 = vsel %vm1421, %v1841, 0
          %v1884 = vsel %vm1421, %v1843, 0
          %v1887 = vsel %vm1421, %v1845, 0
          %v1890 = vsel %vm1421, %v1847, 0
          %v1893 = vsel %vm1421, %v1849, 0
          %v1896 = vsel %vm1421, %v1851, 0
          %v1899 = vsel %vm1421, %v1853, 0
          %v1902 = vsel %vm1421, %v1855, 0
          %v1905 = vsel %vm1421, %v1865, 0
          %v1908 = vsel %vm1421, %v1867, 0
          %v1911 = vsel %vm1421, %v1869, 0
          %v1914 = vsel %vm1421, %v1871, 0
          %v1917 = vsel %vm1421, %v1873, 0
          %v1920 = vsel %vm1421, %v1875, 0
          %v1923 = vsel %vm1421, %v1877, 0
          %v1926 = vsel %vm1421, %v1879, 0
          %1928 = vmatprep.subr.bf16.mxu0 0
          %1929 = vmatpush1.bf16.xpose.msra.mxu0 %v1905
          %1930 = vmatprep.subr.bf16.mxu0 0
          %1931 = vmatpush1.bf16.xpose.msra.mxu0 %v1908
          %1932 = vmatprep.subr.bf16.mxu0 0
          %1933 = vmatpush1.bf16.xpose.msra.mxu0 %v1911
          %1934 = vmatprep.subr.bf16.mxu0 0
          %1935 = vmatpush1.bf16.xpose.msra.mxu0 %v1914
          %1936 = vmatprep.subr.bf16.mxu0 0
          %1937 = vmatpush1.bf16.xpose.msra.mxu0 %v1917
          %1938 = vmatprep.subr.bf16.mxu0 0
          %1939 = vmatpush1.bf16.xpose.msra.mxu0 %v1920
          %1940 = vmatprep.subr.bf16.mxu0 0
          %1941 = vmatpush1.bf16.xpose.msra.mxu0 %v1923
          %1942 = vmatprep.subr.bf16.mxu0 0
          %1943 = vmatpush1.bf16.xpose.msra.mxu0 %v1926
          %1944 = vmatprep.subr.bf16.mxu0 0
          %1945 = vmatpush1.bf16.xpose.msra.mxu0 0
          %1946 = vmatprep.subr.bf16.mxu0 0
          %1947 = vmatpush1.bf16.xpose.msra.mxu0 0
          %1948 = vmatprep.subr.bf16.mxu0 0
          %1949 = vmatpush1.bf16.xpose.msra.mxu0 0
          %1950 = vmatprep.subr.bf16.mxu0 0
          %1951 = vmatpush1.bf16.xpose.msra.mxu0 0
          %1952 = vmatprep.subr.bf16.mxu0 0
          %1953 = vmatpush1.bf16.xpose.msra.mxu0 0
          %1954 = vmatprep.subr.bf16.mxu0 0
          %1955 = vmatpush1.bf16.xpose.msra.mxu0 0
          %1956 = vmatprep.subr.bf16.mxu0 0
          %1957 = vmatpush1.bf16.xpose.msra.mxu0 0
          %1958 = vmatprep.subr.bf16.mxu0 0
          %1959 = vmatpush1.bf16.xpose.msra.mxu0 0
          %1960 = vmatprep.mubr.bf16.mxu0 0
          %1961 = vmatmul.mubr.bf16.gmra.mrb[0].mxu0 %v1881
          %v1962 = vpop.f32.mrb[0].mxu0
          %v1963 = vadd.f32 %v1419, %v1962
          %v1964 = vpop.f32.mrb[0].mxu0
          %v1965 = vpop.f32.mrb[0].mxu0
          %v1966 = vadd.f32 %v1419, %v1965
          %v1967 = vpop.f32.mrb[0].mxu0
          %1968 = vmatprep.mubr.bf16.mxu0 0
          %1969 = vmatmul.mubr.bf16.gmra.mrb[0].mxu0 %v1884
          %v1970 = vpop.f32.mrb[0].mxu0
          %v1971 = vadd.f32 %v1419, %v1970
          %v1972 = vpop.f32.mrb[0].mxu0
          %v1973 = vpop.f32.mrb[0].mxu0
          %v1974 = vadd.f32 %v1419, %v1973
          %v1975 = vpop.f32.mrb[0].mxu0
          %1976 = vmatprep.mubr.bf16.mxu0 0
          %1977 = vmatmul.mubr.bf16.gmra.mrb[0].mxu0 %v1887
          %v1978 = vpop.f32.mrb[0].mxu0
          %v1979 = vadd.f32 %v1419, %v1978
          %v1980 = vpop.f32.mrb[0].mxu0
          %v1981 = vpop.f32.mrb[0].mxu0
          %v1982 = vadd.f32 %v1419, %v1981
          %v1983 = vpop.f32.mrb[0].mxu0
          %1984 = vmatprep.mubr.bf16.mxu0 0
          %1985 = vmatmul.mubr.bf16.gmra.mrb[0].mxu0 %v1890
          %v1986 = vpop.f32.mrb[0].mxu0
          %v1987 = vadd.f32 %v1419, %v1986
          %v1988 = vpop.f32.mrb[0].mxu0
          %v1989 = vpop.f32.mrb[0].mxu0
          %v1990 = vadd.f32 %v1419, %v1989
          %v1991 = vpop.f32.mrb[0].mxu0
          %1992 = vmatprep.mubr.bf16.mxu0 0
          %1993 = vmatmul.mubr.bf16.gmra.mrb[0].mxu0 %v1893
          %v1994 = vpop.f32.mrb[0].mxu0
          %v1995 = vadd.f32 %v1419, %v1994
          %v1996 = vpop.f32.mrb[0].mxu0
          %v1997 = vpop.f32.mrb[0].mxu0
          %v1998 = vadd.f32 %v1419, %v1997
          %v1999 = vpop.f32.mrb[0].mxu0
          %2000 = vmatprep.mubr.bf16.mxu0 0
          %2001 = vmatmul.mubr.bf16.gmra.mrb[0].mxu0 %v1896
          %v2002 = vpop.f32.mrb[0].mxu0
          %v2003 = vadd.f32 %v1419, %v2002
          %v2004 = vpop.f32.mrb[0].mxu0
          %v2005 = vpop.f32.mrb[0].mxu0
          %v2006 = vadd.f32 %v1419, %v2005
          %v2007 = vpop.f32.mrb[0].mxu0
          %2008 = vmatprep.mubr.bf16.mxu0 0
          %2009 = vmatmul.mubr.bf16.gmra.mrb[0].mxu0 %v1899
          %v2010 = vpop.f32.mrb[0].mxu0
          %v2011 = vadd.f32 %v1419, %v2010
          %v2012 = vpop.f32.mrb[0].mxu0
          %v2013 = vpop.f32.mrb[0].mxu0
          %v2014 = vadd.f32 %v1419, %v2013
          %v2015 = vpop.f32.mrb[0].mxu0
          %2016 = vmatprep.mubr.bf16.mxu0 0
          %2017 = vmatmul.mubr.bf16.gmra.mrb[0].mxu0 %v1902
          %v2018 = vpop.f32.mrb[0].mxu0
          %v2019 = vadd.f32 %v1419, %v2018
          %v2020 = vpop.f32.mrb[0].mxu0
          %v2021 = vpop.f32.mrb[0].mxu0
          %v2022 = vadd.f32 %v1419, %v2021
          %v2023 = vpop.f32.mrb[0].mxu0
          %2024 = vdwg.mxu0
          %2025 = vmax.xlane.f32.xlu0 %v1963
          %v2026 = vpop.xlane.xlu0 %2025
          %2027 = vmax.xlane.f32.xlu0 %v1966
          %v2028 = vpop.xlane.xlu0 %2027
          %2029 = vmax.xlane.f32.xlu0 %v1971
          %v2030 = vpop.xlane.xlu0 %2029
          %2031 = vmax.xlane.f32.xlu0 %v1974
          %v2032 = vpop.xlane.xlu0 %2031
          %2033 = vmax.xlane.f32.xlu0 %v1979
          %v2034 = vpop.xlane.xlu0 %2033
          %2035 = vmax.xlane.f32.xlu0 %v1982
          %v2036 = vpop.xlane.xlu0 %2035
          %2037 = vmax.xlane.f32.xlu0 %v1987
          %v2038 = vpop.xlane.xlu0 %2037
          %2039 = vmax.xlane.f32.xlu0 %v1990
          %v2040 = vpop.xlane.xlu0 %2039
          %2041 = vmax.xlane.f32.xlu0 %v1995
          %v2042 = vpop.xlane.xlu0 %2041
          %2043 = vmax.xlane.f32.xlu0 %v1998
          %v2044 = vpop.xlane.xlu0 %2043
          %2045 = vmax.xlane.f32.xlu0 %v2003
          %v2046 = vpop.xlane.xlu0 %2045
          %2047 = vmax.xlane.f32.xlu0 %v2006
          %v2048 = vpop.xlane.xlu0 %2047
          %2049 = vmax.xlane.f32.xlu0 %v2011
          %v2050 = vpop.xlane.xlu0 %2049
          %2051 = vmax.xlane.f32.xlu0 %v2014
          %v2052 = vpop.xlane.xlu0 %2051
          %2053 = vmax.xlane.f32.xlu0 %v2019
          %v2054 = vpop.xlane.xlu0 %2053
          %2055 = vmax.xlane.f32.xlu0 %v2022
          %v2056 = vpop.xlane.xlu0 %2055
          %v2057 = vsub.f32 %v1963, %v2026
          %v2058 = vsub.f32 %v1966, %v2028
          %v2059 = vsub.f32 %v1971, %v2030
          %v2060 = vsub.f32 %v1974, %v2032
          %v2061 = vsub.f32 %v1979, %v2034
          %v2062 = vsub.f32 %v1982, %v2036
          %v2063 = vsub.f32 %v1987, %v2038
          %v2064 = vsub.f32 %v1990, %v2040
          %v2065 = vsub.f32 %v1995, %v2042
          %v2066 = vsub.f32 %v1998, %v2044
          %v2067 = vsub.f32 %v2003, %v2046
          %v2068 = vsub.f32 %v2006, %v2048
          %v2069 = vsub.f32 %v2011, %v2050
          %v2070 = vsub.f32 %v2014, %v2052
          %v2071 = vsub.f32 %v2019, %v2054
          %v2072 = vsub.f32 %v2022, %v2056
          %v2073 = vmul.f32 %v2057, 1.442695
          %v2074 = vpow.pop %v2073
          %v2075 = vmul.f32 %v2058, 1.442695
          %v2076 = vpow.pop %v2075
          %v2077 = vmul.f32 %v2059, 1.442695
          %v2078 = vpow.pop %v2077
          %v2079 = vmul.f32 %v2060, 1.442695
          %v2080 = vpow.pop %v2079
          %v2081 = vmul.f32 %v2061, 1.442695
          %v2082 = vpow.pop %v2081
          %v2083 = vmul.f32 %v2062, 1.442695
          %v2084 = vpow.pop %v2083
          %v2085 = vmul.f32 %v2063, 1.442695
          %v2086 = vpow.pop %v2085
          %v2087 = vmul.f32 %v2064, 1.442695
          %v2088 = vpow.pop %v2087
          %v2089 = vmul.f32 %v2065, 1.442695
          %v2090 = vpow.pop %v2089
          %v2091 = vmul.f32 %v2066, 1.442695
          %v2092 = vpow.pop %v2091
          %v2093 = vmul.f32 %v2067, 1.442695
          %v2094 = vpow.pop %v2093
          %v2095 = vmul.f32 %v2068, 1.442695
          %v2096 = vpow.pop %v2095
          %v2097 = vmul.f32 %v2069, 1.442695
          %v2098 = vpow.pop %v2097
          %v2099 = vmul.f32 %v2070, 1.442695
          %v2100 = vpow.pop %v2099
          %v2101 = vmul.f32 %v2071, 1.442695
          %v2102 = vpow.pop %v2101
          %v2103 = vmul.f32 %v2072, 1.442695
          %v2104 = vpow.pop %v2103
          %2105 = vadd.xlane.f32.xlu0 %v2074
          %v2106 = vpop.xlane.xlu0 %2105
          %2107 = vadd.xlane.f32.xlu0 %v2076
          %v2108 = vpop.xlane.xlu0 %2107
          %2109 = vadd.xlane.f32.xlu0 %v2078
          %v2110 = vpop.xlane.xlu0 %2109
          %2111 = vadd.xlane.f32.xlu0 %v2080
          %v2112 = vpop.xlane.xlu0 %2111
          %2113 = vadd.xlane.f32.xlu0 %v2082
          %v2114 = vpop.xlane.xlu0 %2113
          %2115 = vadd.xlane.f32.xlu0 %v2084
          %v2116 = vpop.xlane.xlu0 %2115
          %2117 = vadd.xlane.f32.xlu0 %v2086
          %v2118 = vpop.xlane.xlu0 %2117
          %2119 = vadd.xlane.f32.xlu0 %v2088
          %v2120 = vpop.xlane.xlu0 %2119
          %2121 = vadd.xlane.f32.xlu0 %v2090
          %v2122 = vpop.xlane.xlu0 %2121
          %2123 = vadd.xlane.f32.xlu0 %v2092
          %v2124 = vpop.xlane.xlu0 %2123
          %2125 = vadd.xlane.f32.xlu0 %v2094
          %v2126 = vpop.xlane.xlu0 %2125
          %2127 = vadd.xlane.f32.xlu0 %v2096
          %v2128 = vpop.xlane.xlu0 %2127
          %2129 = vadd.xlane.f32.xlu0 %v2098
          %v2130 = vpop.xlane.xlu0 %2129
          %2131 = vadd.xlane.f32.xlu0 %v2100
          %v2132 = vpop.xlane.xlu0 %2131
          %2133 = vadd.xlane.f32.xlu0 %v2102
          %v2134 = vpop.xlane.xlu0 %2133
          %2135 = vadd.xlane.f32.xlu0 %v2104
          %v2136 = vpop.xlane.xlu0 %2135
          %v2137 = vrcp.pop %v2106
          %v2138 = vrcp.pop %v2108
          %v2139 = vrcp.pop %v2110
          %v2140 = vrcp.pop %v2112
          %v2141 = vrcp.pop %v2114
          %v2142 = vrcp.pop %v2116
          %v2143 = vrcp.pop %v2118
          %v2144 = vrcp.pop %v2120
          %v2145 = vrcp.pop %v2122
          %v2146 = vrcp.pop %v2124
          %v2147 = vrcp.pop %v2126
          %v2148 = vrcp.pop %v2128
          %v2149 = vrcp.pop %v2130
          %v2150 = vrcp.pop %v2132
          %v2151 = vrcp.pop %v2134
          %v2152 = vrcp.pop %v2136
          %v2153 = vmul.f32 %v2074, %v2137
          %v2154 = vmul.f32 %v2076, %v2138
          %v2155 = vmul.f32 %v2078, %v2139
          %v2156 = vmul.f32 %v2080, %v2140
          %v2157 = vmul.f32 %v2082, %v2141
          %v2158 = vmul.f32 %v2084, %v2142
          %v2159 = vmul.f32 %v2086, %v2143
          %v2160 = vmul.f32 %v2088, %v2144
          %v2161 = vmul.f32 %v2090, %v2145
          %v2162 = vmul.f32 %v2092, %v2146
          %v2163 = vmul.f32 %v2094, %v2147
          %v2164 = vmul.f32 %v2096, %v2148
          %v2165 = vmul.f32 %v2098, %v2149
          %v2166 = vmul.f32 %v2100, %v2150
          %v2167 = vmul.f32 %v2102, %v2151
          %v2168 = vmul.f32 %v2104, %v2152
          %v2169 = vpack.c.bf16 %v2154, %v2153
          %v2170 = vpack.c.bf16 %v2156, %v2155
          %v2171 = vpack.c.bf16 %v2158, %v2157
          %v2172 = vpack.c.bf16 %v2160, %v2159
          %v2173 = vpack.c.bf16 %v2162, %v2161
          %v2174 = vpack.c.bf16 %v2164, %v2163
          %v2175 = vpack.c.bf16 %v2166, %v2165
          %v2176 = vpack.c.bf16 %v2168, %v2167
          %2185 = vrot.lane.b32.xlu0 %v1388, 112
          %v2186 = vpop.permute.xlu0 %2185
          %2187 = vrot.lane.b32.xlu0 %v1389, 112
          %v2188 = vpop.permute.xlu0 %2187
          %2189 = vrot.lane.b32.xlu0 %v1390, 112
          %v2190 = vpop.permute.xlu0 %2189
          %2191 = vrot.lane.b32.xlu0 %v1391, 112
          %v2192 = vpop.permute.xlu0 %2191
          %2193 = vrot.lane.b32.xlu0 %v1392, 112
          %v2194 = vpop.permute.xlu0 %2193
          %2195 = vrot.lane.b32.xlu0 %v1393, 112
          %v2196 = vpop.permute.xlu0 %2195
          %2197 = vrot.lane.b32.xlu0 %v1394, 112
          %v2198 = vpop.permute.xlu0 %2197
          %2199 = vrot.lane.b32.xlu0 %v1395, 112
          %v2200 = vpop.permute.xlu0 %2199
          %2209 = vmatprep.subr.bf16.mxu0 0
          %2210 = vmatpush1.bf16.msra.mxu0 %v2186
          %2211 = vmatprep.subr.bf16.mxu0 0
          %2212 = vmatpush1.bf16.msra.mxu0 %v2188
          %2213 = vmatprep.subr.bf16.mxu0 0
          %2214 = vmatpush1.bf16.msra.mxu0 %v2190
          %2215 = vmatprep.subr.bf16.mxu0 0
          %2216 = vmatpush1.bf16.msra.mxu0 %v2192
          %2217 = vmatprep.subr.bf16.mxu0 0
          %2218 = vmatpush1.bf16.msra.mxu0 %v2194
          %2219 = vmatprep.subr.bf16.mxu0 0
          %2220 = vmatpush1.bf16.msra.mxu0 %v2196
          %2221 = vmatprep.subr.bf16.mxu0 0
          %2222 = vmatpush1.bf16.msra.mxu0 %v2198
          %2223 = vmatprep.subr.bf16.mxu0 0
          %2224 = vmatpush1.bf16.msra.mxu0 %v2200
          %2225 = vmatprep.subr.bf16.mxu0 0
          %2226 = vmatpush1.bf16.msra.mxu0 0
          %2227 = vmatprep.subr.bf16.mxu0 0
          %2228 = vmatpush1.bf16.msra.mxu0 0
          %2229 = vmatprep.subr.bf16.mxu0 0
          %2230 = vmatpush1.bf16.msra.mxu0 0
          %2231 = vmatprep.subr.bf16.mxu0 0
          %2232 = vmatpush1.bf16.msra.mxu0 0
          %2233 = vmatprep.subr.bf16.mxu0 0
          %2234 = vmatpush1.bf16.msra.mxu0 0
          %2235 = vmatprep.subr.bf16.mxu0 0
          %2236 = vmatpush1.bf16.msra.mxu0 0
          %2237 = vmatprep.subr.bf16.mxu0 0
          %2238 = vmatpush1.bf16.msra.mxu0 0
          %2239 = vmatprep.subr.bf16.mxu0 0
          %2240 = vmatpush1.bf16.msra.mxu0 0
          %2241 = vmatprep.mubr.bf16.mxu0 0
          %2242 = vmatmul.mubr.bf16.gmra.mrb[0].mxu0 %v2169
          %v2243 = vpop.f32.mrb[0].mxu0
          %v2244 = vadd.f32 0.0, %v2243
          %v2245 = vpop.f32.mrb[0].mxu0
          %v2246 = vpop.f32.mrb[0].mxu0
          %v2247 = vadd.f32 0.0, %v2246
          %v2248 = vpop.f32.mrb[0].mxu0
          %2249 = vmatprep.mubr.bf16.mxu0 0
          %2250 = vmatmul.mubr.bf16.gmra.mrb[0].mxu0 %v2170
          %v2251 = vpop.f32.mrb[0].mxu0
          %v2252 = vadd.f32 0.0, %v2251
          %v2253 = vpop.f32.mrb[0].mxu0
          %v2254 = vpop.f32.mrb[0].mxu0
          %v2255 = vadd.f32 0.0, %v2254
          %v2256 = vpop.f32.mrb[0].mxu0
          %2257 = vmatprep.mubr.bf16.mxu0 0
          %2258 = vmatmul.mubr.bf16.gmra.mrb[0].mxu0 %v2171
          %v2259 = vpop.f32.mrb[0].mxu0
          %v2260 = vadd.f32 0.0, %v2259
          %v2261 = vpop.f32.mrb[0].mxu0
          %v2262 = vpop.f32.mrb[0].mxu0
          %v2263 = vadd.f32 0.0, %v2262
          %v2264 = vpop.f32.mrb[0].mxu0
          %2265 = vmatprep.mubr.bf16.mxu0 0
          %2266 = vmatmul.mubr.bf16.gmra.mrb[0].mxu0 %v2172
          %v2267 = vpop.f32.mrb[0].mxu0
          %v2268 = vadd.f32 0.0, %v2267
          %v2269 = vpop.f32.mrb[0].mxu0
          %v2270 = vpop.f32.mrb[0].mxu0
          %v2271 = vadd.f32 0.0, %v2270
          %v2272 = vpop.f32.mrb[0].mxu0
          %2273 = vmatprep.mubr.bf16.mxu0 0
          %2274 = vmatmul.mubr.bf16.gmra.mrb[0].mxu0 %v2173
          %v2275 = vpop.f32.mrb[0].mxu0
          %v2276 = vadd.f32 0.0, %v2275
          %v2277 = vpop.f32.mrb[0].mxu0
          %v2278 = vpop.f32.mrb[0].mxu0
          %v2279 = vadd.f32 0.0, %v2278
          %v2280 = vpop.f32.mrb[0].mxu0
          %2281 = vmatprep.mubr.bf16.mxu0 0
          %2282 = vmatmul.mubr.bf16.gmra.mrb[0].mxu0 %v2174
          %v2283 = vpop.f32.mrb[0].mxu0
          %v2284 = vadd.f32 0.0, %v2283
          %v2285 = vpop.f32.mrb[0].mxu0
          %v2286 = vpop.f32.mrb[0].mxu0
          %v2287 = vadd.f32 0.0, %v2286
          %v2288 = vpop.f32.mrb[0].mxu0
          %2289 = vmatprep.mubr.bf16.mxu0 0
          %2290 = vmatmul.mubr.bf16.gmra.mrb[0].mxu0 %v2175
          %v2291 = vpop.f32.mrb[0].mxu0
          %v2292 = vadd.f32 0.0, %v2291
          %v2293 = vpop.f32.mrb[0].mxu0
          %v2294 = vpop.f32.mrb[0].mxu0
          %v2295 = vadd.f32 0.0, %v2294
          %v2296 = vpop.f32.mrb[0].mxu0
          %2297 = vmatprep.mubr.bf16.mxu0 0
          %2298 = vmatmul.mubr.bf16.gmra.mrb[0].mxu0 %v2176
          %v2299 = vpop.f32.mrb[0].mxu0
          %v2300 = vadd.f32 0.0, %v2299
          %v2301 = vpop.f32.mrb[0].mxu0
          %v2302 = vpop.f32.mrb[0].mxu0
          %v2303 = vadd.f32 0.0, %v2302
          %v2304 = vpop.f32.mrb[0].mxu0
          %2305 = vdwg.mxu0
          %2322 = vrot.lane.b32.xlu0 %v2244, 16
          %v2323 = vpop.permute.xlu0 %2322
          %2324 = vrot.lane.b32.xlu0 %v2247, 16
          %v2325 = vpop.permute.xlu0 %2324
          %2326 = vrot.lane.b32.xlu0 %v2252, 16
          %v2327 = vpop.permute.xlu0 %2326
          %2328 = vrot.lane.b32.xlu0 %v2255, 16
          %v2329 = vpop.permute.xlu0 %2328
          %2330 = vrot.lane.b32.xlu0 %v2260, 16
          %v2331 = vpop.permute.xlu0 %2330
          %2332 = vrot.lane.b32.xlu0 %v2263, 16
          %v2333 = vpop.permute.xlu0 %2332
          %2334 = vrot.lane.b32.xlu0 %v2268, 16
          %v2335 = vpop.permute.xlu0 %2334
          %2336 = vrot.lane.b32.xlu0 %v2271, 16
          %v2337 = vpop.permute.xlu0 %2336
          %2338 = vrot.lane.b32.xlu0 %v2276, 16
          %v2339 = vpop.permute.xlu0 %2338
          %2340 = vrot.lane.b32.xlu0 %v2279, 16
          %v2341 = vpop.permute.xlu0 %2340
          %2342 = vrot.lane.b32.xlu0 %v2284, 16
          %v2343 = vpop.permute.xlu0 %2342
          %2344 = vrot.lane.b32.xlu0 %v2287, 16
          %v2345 = vpop.permute.xlu0 %2344
          %2346 = vrot.lane.b32.xlu0 %v2292, 16
          %v2347 = vpop.permute.xlu0 %2346
          %2348 = vrot.lane.b32.xlu0 %v2295, 16
          %v2349 = vpop.permute.xlu0 %2348
          %2350 = vrot.lane.b32.xlu0 %v2300, 16
          %v2351 = vpop.permute.xlu0 %2350
          %2352 = vrot.lane.b32.xlu0 %v2303, 16
          %v2353 = vpop.permute.xlu0 %2352
          %vm2370 = vcmask 261248
          %2371 = vst.msk [vmem:[#allocation2] sm:$0xff] %vm2370, %v2323
          %2372 = vst.msk [vmem:[#allocation2 + $0x8] sm:$0xff] %vm2370, %v2325
          %2373 = vst.msk [vmem:[#allocation2 + $0x10] sm:$0xff] %vm2370, %v2327
          %2374 = vst.msk [vmem:[#allocation2 + $0x18] sm:$0xff] %vm2370, %v2329
          %2375 = vst.msk [vmem:[#allocation2 + $0x20] sm:$0xff] %vm2370, %v2331
          %2376 = vst.msk [vmem:[#allocation2 + $0x28] sm:$0xff] %vm2370, %v2333
          %2377 = vst.msk [vmem:[#allocation2 + $0x30] sm:$0xff] %vm2370, %v2335
          %2378 = vst.msk [vmem:[#allocation2 + $0x38] sm:$0xff] %vm2370, %v2337
          %2379 = vst.msk [vmem:[#allocation2 + $0x40] sm:$0xff] %vm2370, %v2339
          %2380 = vst.msk [vmem:[#allocation2 + $0x48] sm:$0xff] %vm2370, %v2341
          %2381 = vst.msk [vmem:[#allocation2 + $0x50] sm:$0xff] %vm2370, %v2343
          %2382 = vst.msk [vmem:[#allocation2 + $0x58] sm:$0xff] %vm2370, %v2345
          %2383 = vst.msk [vmem:[#allocation2 + $0x60] sm:$0xff] %vm2370, %v2347
          %2384 = vst.msk [vmem:[#allocation2 + $0x68] sm:$0xff] %vm2370, %v2349
          %2385 = vst.msk [vmem:[#allocation2 + $0x70] sm:$0xff] %vm2370, %v2351
          %2386 = vst.msk [vmem:[#allocation2 + $0x78] sm:$0xff] %vm2370, %v2353
          %2387 = vrot.lane.b32.xlu0 %v1404, 96
          %v2388 = vpop.permute.xlu0 %2387
          %2389 = vrot.lane.b32.xlu0 %v1405, 96
          %v2390 = vpop.permute.xlu0 %2389
          %2391 = vrot.lane.b32.xlu0 %v1406, 96
          %v2392 = vpop.permute.xlu0 %2391
          %2393 = vrot.lane.b32.xlu0 %v1407, 96
          %v2394 = vpop.permute.xlu0 %2393
          %2395 = vrot.lane.b32.xlu0 %v1408, 96
          %v2396 = vpop.permute.xlu0 %2395
          %2397 = vrot.lane.b32.xlu0 %v1409, 96
          %v2398 = vpop.permute.xlu0 %2397
          %2399 = vrot.lane.b32.xlu0 %v1410, 96
          %v2400 = vpop.permute.xlu0 %2399
          %2401 = vrot.lane.b32.xlu0 %v1411, 96
          %v2402 = vpop.permute.xlu0 %2401
          %2403 = vrot.lane.b32.xlu0 %v1396, 96
          %v2404 = vpop.permute.xlu0 %2403
          %2405 = vrot.lane.b32.xlu0 %v1397, 96
          %v2406 = vpop.permute.xlu0 %2405
          %2407 = vrot.lane.b32.xlu0 %v1398, 96
          %v2408 = vpop.permute.xlu0 %2407
          %2409 = vrot.lane.b32.xlu0 %v1399, 96
          %v2410 = vpop.permute.xlu0 %2409
          %2411 = vrot.lane.b32.xlu0 %v1400, 96
          %v2412 = vpop.permute.xlu0 %2411
          %2413 = vrot.lane.b32.xlu0 %v1401, 96
          %v2414 = vpop.permute.xlu0 %2413
          %2415 = vrot.lane.b32.xlu0 %v1402, 96
          %v2416 = vpop.permute.xlu0 %2415
          %2417 = vrot.lane.b32.xlu0 %v1403, 96
          %v2418 = vpop.permute.xlu0 %2417
          %v2420 = vsel %vm1421, %v2388, 0
          %v2423 = vsel %vm1421, %v2390, 0
          %v2426 = vsel %vm1421, %v2392, 0
          %v2429 = vsel %vm1421, %v2394, 0
          %v2432 = vsel %vm1421, %v2396, 0
          %v2435 = vsel %vm1421, %v2398, 0
          %v2438 = vsel %vm1421, %v2400, 0
          %v2441 = vsel %vm1421, %v2402, 0
          %v2444 = vsel %vm1421, %v2404, 0
          %v2447 = vsel %vm1421, %v2406, 0
          %v2450 = vsel %vm1421, %v2408, 0
          %v2453 = vsel %vm1421, %v2410, 0
          %v2456 = vsel %vm1421, %v2412, 0
          %v2459 = vsel %vm1421, %v2414, 0
          %v2462 = vsel %vm1421, %v2416, 0
          %v2465 = vsel %vm1421, %v2418, 0
          %2467 = vmatprep.subr.bf16.mxu0 0
          %2468 = vmatpush1.bf16.xpose.msra.mxu0 %v2444
          %2469 = vmatprep.subr.bf16.mxu0 0
          %2470 = vmatpush1.bf16.xpose.msra.mxu0 %v2447
          %2471 = vmatprep.subr.bf16.mxu0 0
          %2472 = vmatpush1.bf16.xpose.msra.mxu0 %v2450
          %2473 = vmatprep.subr.bf16.mxu0 0
          %2474 = vmatpush1.bf16.xpose.msra.mxu0 %v2453
          %2475 = vmatprep.subr.bf16.mxu0 0
          %2476 = vmatpush1.bf16.xpose.msra.mxu0 %v2456
          %2477 = vmatprep.subr.bf16.mxu0 0
          %2478 = vmatpush1.bf16.xpose.msra.mxu0 %v2459
          %2479 = vmatprep.subr.bf16.mxu0 0
          %2480 = vmatpush1.bf16.xpose.msra.mxu0 %v2462
          %2481 = vmatprep.subr.bf16.mxu0 0
          %2482 = vmatpush1.bf16.xpose.msra.mxu0 %v2465
          %2483 = vmatprep.subr.bf16.mxu0 0
          %2484 = vmatpush1.bf16.xpose.msra.mxu0 0
          %2485 = vmatprep.subr.bf16.mxu0 0
          %2486 = vmatpush1.bf16.xpose.msra.mxu0 0
          %2487 = vmatprep.subr.bf16.mxu0 0
          %2488 = vmatpush1.bf16.xpose.msra.mxu0 0
          %2489 = vmatprep.subr.bf16.mxu0 0
          %2490 = vmatpush1.bf16.xpose.msra.mxu0 0
          %2491 = vmatprep.subr.bf16.mxu0 0
          %2492 = vmatpush1.bf16.xpose.msra.mxu0 0
          %2493 = vmatprep.subr.bf16.mxu0 0
          %2494 = vmatpush1.bf16.xpose.msra.mxu0 0
          %2495 = vmatprep.subr.bf16.mxu0 0
          %2496 = vmatpush1.bf16.xpose.msra.mxu0 0
          %2497 = vmatprep.subr.bf16.mxu0 0
          %2498 = vmatpush1.bf16.xpose.msra.mxu0 0
          %2499 = vmatprep.mubr.bf16.mxu0 0
          %2500 = vmatmul.mubr.bf16.gmra.mrb[0].mxu0 %v2420
          %v2501 = vpop.f32.mrb[0].mxu0
          %v2502 = vadd.f32 %v1419, %v2501
          %v2503 = vpop.f32.mrb[0].mxu0
          %v2504 = vpop.f32.mrb[0].mxu0
          %v2505 = vadd.f32 %v1419, %v2504
          %v2506 = vpop.f32.mrb[0].mxu0
          %2507 = vmatprep.mubr.bf16.mxu0 0
          %2508 = vmatmul.mubr.bf16.gmra.mrb[0].mxu0 %v2423
          %v2509 = vpop.f32.mrb[0].mxu0
          %v2510 = vadd.f32 %v1419, %v2509
          %v2511 = vpop.f32.mrb[0].mxu0
          %v2512 = vpop.f32.mrb[0].mxu0
          %v2513 = vadd.f32 %v1419, %v2512
          %v2514 = vpop.f32.mrb[0].mxu0
          %2515 = vmatprep.mubr.bf16.mxu0 0
          %2516 = vmatmul.mubr.bf16.gmra.mrb[0].mxu0 %v2426
          %v2517 = vpop.f32.mrb[0].mxu0
          %v2518 = vadd.f32 %v1419, %v2517
          %v2519 = vpop.f32.mrb[0].mxu0
          %v2520 = vpop.f32.mrb[0].mxu0
          %v2521 = vadd.f32 %v1419, %v2520
          %v2522 = vpop.f32.mrb[0].mxu0
          %2523 = vmatprep.mubr.bf16.mxu0 0
          %2524 = vmatmul.mubr.bf16.gmra.mrb[0].mxu0 %v2429
          %v2525 = vpop.f32.mrb[0].mxu0
          %v2526 = vadd.f32 %v1419, %v2525
          %v2527 = vpop.f32.mrb[0].mxu0
          %v2528 = vpop.f32.mrb[0].mxu0
          %v2529 = vadd.f32 %v1419, %v2528
          %v2530 = vpop.f32.mrb[0].mxu0
          %2531 = vmatprep.mubr.bf16.mxu0 0
          %2532 = vmatmul.mubr.bf16.gmra.mrb[0].mxu0 %v2432
          %v2533 = vpop.f32.mrb[0].mxu0
          %v2534 = vadd.f32 %v1419, %v2533
          %v2535 = vpop.f32.mrb[0].mxu0
          %v2536 = vpop.f32.mrb[0].mxu0
          %v2537 = vadd.f32 %v1419, %v2536
          %v2538 = vpop.f32.mrb[0].mxu0
          %2539 = vmatprep.mubr.bf16.mxu0 0
          %2540 = vmatmul.mubr.bf16.gmra.mrb[0].mxu0 %v2435
          %v2541 = vpop.f32.mrb[0].mxu0
          %v2542 = vadd.f32 %v1419, %v2541
          %v2543 = vpop.f32.mrb[0].mxu0
          %v2544 = vpop.f32.mrb[0].mxu0
          %v2545 = vadd.f32 %v1419, %v2544
          %v2546 = vpop.f32.mrb[0].mxu0
          %2547 = vmatprep.mubr.bf16.mxu0 0
          %2548 = vmatmul.mubr.bf16.gmra.mrb[0].mxu0 %v2438
          %v2549 = vpop.f32.mrb[0].mxu0
          %v2550 = vadd.f32 %v1419, %v2549
          %v2551 = vpop.f32.mrb[0].mxu0
          %v2552 = vpop.f32.mrb[0].mxu0
          %v2553 = vadd.f32 %v1419, %v2552
          %v2554 = vpop.f32.mrb[0].mxu0
          %2555 = vmatprep.mubr.bf16.mxu0 0
          %2556 = vmatmul.mubr.bf16.gmra.mrb[0].mxu0 %v2441
          %v2557 = vpop.f32.mrb[0].mxu0
          %v2558 = vadd.f32 %v1419, %v2557
          %v2559 = vpop.f32.mrb[0].mxu0
          %v2560 = vpop.f32.mrb[0].mxu0
          %v2561 = vadd.f32 %v1419, %v2560
          %v2562 = vpop.f32.mrb[0].mxu0
          %2563 = vdwg.mxu0
          %2564 = vmax.xlane.f32.xlu0 %v2502
          %v2565 = vpop.xlane.xlu0 %2564
          %2566 = vmax.xlane.f32.xlu0 %v2505
          %v2567 = vpop.xlane.xlu0 %2566
          %2568 = vmax.xlane.f32.xlu0 %v2510
          %v2569 = vpop.xlane.xlu0 %2568
          %2570 = vmax.xlane.f32.xlu0 %v2513
          %v2571 = vpop.xlane.xlu0 %2570
          %2572 = vmax.xlane.f32.xlu0 %v2518
          %v2573 = vpop.xlane.xlu0 %2572
          %2574 = vmax.xlane.f32.xlu0 %v2521
          %v2575 = vpop.xlane.xlu0 %2574
          %2576 = vmax.xlane.f32.xlu0 %v2526
          %v2577 = vpop.xlane.xlu0 %2576
          %2578 = vmax.xlane.f32.xlu0 %v2529
          %v2579 = vpop.xlane.xlu0 %2578
          %2580 = vmax.xlane.f32.xlu0 %v2534
          %v2581 = vpop.xlane.xlu0 %2580
          %2582 = vmax.xlane.f32.xlu0 %v2537
          %v2583 = vpop.xlane.xlu0 %2582
          %2584 = vmax.xlane.f32.xlu0 %v2542
          %v2585 = vpop.xlane.xlu0 %2584
          %2586 = vmax.xlane.f32.xlu0 %v2545
          %v2587 = vpop.xlane.xlu0 %2586
          %2588 = vmax.xlane.f32.xlu0 %v2550
          %v2589 = vpop.xlane.xlu0 %2588
          %2590 = vmax.xlane.f32.xlu0 %v2553
          %v2591 = vpop.xlane.xlu0 %2590
          %2592 = vmax.xlane.f32.xlu0 %v2558
          %v2593 = vpop.xlane.xlu0 %2592
          %2594 = vmax.xlane.f32.xlu0 %v2561
          %v2595 = vpop.xlane.xlu0 %2594
          %v2596 = vsub.f32 %v2502, %v2565
          %v2597 = vsub.f32 %v2505, %v2567
          %v2598 = vsub.f32 %v2510, %v2569
          %v2599 = vsub.f32 %v2513, %v2571
          %v2600 = vsub.f32 %v2518, %v2573
          %v2601 = vsub.f32 %v2521, %v2575
          %v2602 = vsub.f32 %v2526, %v2577
          %v2603 = vsub.f32 %v2529, %v2579
          %v2604 = vsub.f32 %v2534, %v2581
          %v2605 = vsub.f32 %v2537, %v2583
          %v2606 = vsub.f32 %v2542, %v2585
          %v2607 = vsub.f32 %v2545, %v2587
          %v2608 = vsub.f32 %v2550, %v2589
          %v2609 = vsub.f32 %v2553, %v2591
          %v2610 = vsub.f32 %v2558, %v2593
          %v2611 = vsub.f32 %v2561, %v2595
          %v2612 = vmul.f32 %v2596, 1.442695
          %v2613 = vpow.pop %v2612
          %v2614 = vmul.f32 %v2597, 1.442695
          %v2615 = vpow.pop %v2614
          %v2616 = vmul.f32 %v2598, 1.442695
          %v2617 = vpow.pop %v2616
          %v2618 = vmul.f32 %v2599, 1.442695
          %v2619 = vpow.pop %v2618
          %v2620 = vmul.f32 %v2600, 1.442695
          %v2621 = vpow.pop %v2620
          %v2622 = vmul.f32 %v2601, 1.442695
          %v2623 = vpow.pop %v2622
          %v2624 = vmul.f32 %v2602, 1.442695
          %v2625 = vpow.pop %v2624
          %v2626 = vmul.f32 %v2603, 1.442695
          %v2627 = vpow.pop %v2626
          %v2628 = vmul.f32 %v2604, 1.442695
          %v2629 = vpow.pop %v2628
          %v2630 = vmul.f32 %v2605, 1.442695
          %v2631 = vpow.pop %v2630
          %v2632 = vmul.f32 %v2606, 1.442695
          %v2633 = vpow.pop %v2632
          %v2634 = vmul.f32 %v2607, 1.442695
          %v2635 = vpow.pop %v2634
          %v2636 = vmul.f32 %v2608, 1.442695
          %v2637 = vpow.pop %v2636
          %v2638 = vmul.f32 %v2609, 1.442695
          %v2639 = vpow.pop %v2638
          %v2640 = vmul.f32 %v2610, 1.442695
          %v2641 = vpow.pop %v2640
          %v2642 = vmul.f32 %v2611, 1.442695
          %v2643 = vpow.pop %v2642
          %2644 = vadd.xlane.f32.xlu0 %v2613
          %v2645 = vpop.xlane.xlu0 %2644
          %2646 = vadd.xlane.f32.xlu0 %v2615
          %v2647 = vpop.xlane.xlu0 %2646
          %2648 = vadd.xlane.f32.xlu0 %v2617
          %v2649 = vpop.xlane.xlu0 %2648
          %2650 = vadd.xlane.f32.xlu0 %v2619
          %v2651 = vpop.xlane.xlu0 %2650
          %2652 = vadd.xlane.f32.xlu0 %v2621
          %v2653 = vpop.xlane.xlu0 %2652
          %2654 = vadd.xlane.f32.xlu0 %v2623
          %v2655 = vpop.xlane.xlu0 %2654
          %2656 = vadd.xlane.f32.xlu0 %v2625
          %v2657 = vpop.xlane.xlu0 %2656
          %2658 = vadd.xlane.f32.xlu0 %v2627
          %v2659 = vpop.xlane.xlu0 %2658
          %2660 = vadd.xlane.f32.xlu0 %v2629
          %v2661 = vpop.xlane.xlu0 %2660
          %2662 = vadd.xlane.f32.xlu0 %v2631
          %v2663 = vpop.xlane.xlu0 %2662
          %2664 = vadd.xlane.f32.xlu0 %v2633
          %v2665 = vpop.xlane.xlu0 %2664
          %2666 = vadd.xlane.f32.xlu0 %v2635
          %v2667 = vpop.xlane.xlu0 %2666
          %2668 = vadd.xlane.f32.xlu0 %v2637
          %v2669 = vpop.xlane.xlu0 %2668
          %2670 = vadd.xlane.f32.xlu0 %v2639
          %v2671 = vpop.xlane.xlu0 %2670
          %2672 = vadd.xlane.f32.xlu0 %v2641
          %v2673 = vpop.xlane.xlu0 %2672
          %2674 = vadd.xlane.f32.xlu0 %v2643
          %v2675 = vpop.xlane.xlu0 %2674
          %v2676 = vrcp.pop %v2645
          %v2677 = vrcp.pop %v2647
          %v2678 = vrcp.pop %v2649
          %v2679 = vrcp.pop %v2651
          %v2680 = vrcp.pop %v2653
          %v2681 = vrcp.pop %v2655
          %v2682 = vrcp.pop %v2657
          %v2683 = vrcp.pop %v2659
          %v2684 = vrcp.pop %v2661
          %v2685 = vrcp.pop %v2663
          %v2686 = vrcp.pop %v2665
          %v2687 = vrcp.pop %v2667
          %v2688 = vrcp.pop %v2669
          %v2689 = vrcp.pop %v2671
          %v2690 = vrcp.pop %v2673
          %v2691 = vrcp.pop %v2675
          %v2692 = vmul.f32 %v2613, %v2676
          %v2693 = vmul.f32 %v2615, %v2677
          %v2694 = vmul.f32 %v2617, %v2678
          %v2695 = vmul.f32 %v2619, %v2679
          %v2696 = vmul.f32 %v2621, %v2680
          %v2697 = vmul.f32 %v2623, %v2681
          %v2698 = vmul.f32 %v2625, %v2682
          %v2699 = vmul.f32 %v2627, %v2683
          %v2700 = vmul.f32 %v2629, %v2684
          %v2701 = vmul.f32 %v2631, %v2685
          %v2702 = vmul.f32 %v2633, %v2686
          %v2703 = vmul.f32 %v2635, %v2687
          %v2704 = vmul.f32 %v2637, %v2688
          %v2705 = vmul.f32 %v2639, %v2689
          %v2706 = vmul.f32 %v2641, %v2690
          %v2707 = vmul.f32 %v2643, %v2691
          %v2708 = vpack.c.bf16 %v2693, %v2692
          %v2709 = vpack.c.bf16 %v2695, %v2694
          %v2710 = vpack.c.bf16 %v2697, %v2696
          %v2711 = vpack.c.bf16 %v2699, %v2698
          %v2712 = vpack.c.bf16 %v2701, %v2700
          %v2713 = vpack.c.bf16 %v2703, %v2702
          %v2714 = vpack.c.bf16 %v2705, %v2704
          %v2715 = vpack.c.bf16 %v2707, %v2706
          %2716 = vrot.lane.b32.xlu0 %v1388, 96
          %v2717 = vpop.permute.xlu0 %2716
          %2718 = vrot.lane.b32.xlu0 %v1389, 96
          %v2719 = vpop.permute.xlu0 %2718
          %2720 = vrot.lane.b32.xlu0 %v1390, 96
          %v2721 = vpop.permute.xlu0 %2720
          %2722 = vrot.lane.b32.xlu0 %v1391, 96
          %v2723 = vpop.permute.xlu0 %2722
          %2724 = vrot.lane.b32.xlu0 %v1392, 96
          %v2725 = vpop.permute.xlu0 %2724
          %2726 = vrot.lane.b32.xlu0 %v1393, 96
          %v2727 = vpop.permute.xlu0 %2726
          %2728 = vrot.lane.b32.xlu0 %v1394, 96
          %v2729 = vpop.permute.xlu0 %2728
          %2730 = vrot.lane.b32.xlu0 %v1395, 96
          %v2731 = vpop.permute.xlu0 %2730
          %2740 = vmatprep.subr.bf16.mxu0 0
          %2741 = vmatpush1.bf16.msra.mxu0 %v2717
          %2742 = vmatprep.subr.bf16.mxu0 0
          %2743 = vmatpush1.bf16.msra.mxu0 %v2719
          %2744 = vmatprep.subr.bf16.mxu0 0
          %2745 = vmatpush1.bf16.msra.mxu0 %v2721
          %2746 = vmatprep.subr.bf16.mxu0 0
          %2747 = vmatpush1.bf16.msra.mxu0 %v2723
          %2748 = vmatprep.subr.bf16.mxu0 0
          %2749 = vmatpush1.bf16.msra.mxu0 %v2725
          %2750 = vmatprep.subr.bf16.mxu0 0
          %2751 = vmatpush1.bf16.msra.mxu0 %v2727
          %2752 = vmatprep.subr.bf16.mxu0 0
          %2753 = vmatpush1.bf16.msra.mxu0 %v2729
          %2754 = vmatprep.subr.bf16.mxu0 0
          %2755 = vmatpush1.bf16.msra.mxu0 %v2731
          %2756 = vmatprep.subr.bf16.mxu0 0
          %2757 = vmatpush1.bf16.msra.mxu0 0
          %2758 = vmatprep.subr.bf16.mxu0 0
          %2759 = vmatpush1.bf16.msra.mxu0 0
          %2760 = vmatprep.subr.bf16.mxu0 0
          %2761 = vmatpush1.bf16.msra.mxu0 0
          %2762 = vmatprep.subr.bf16.mxu0 0
          %2763 = vmatpush1.bf16.msra.mxu0 0
          %2764 = vmatprep.subr.bf16.mxu0 0
          %2765 = vmatpush1.bf16.msra.mxu0 0
          %2766 = vmatprep.subr.bf16.mxu0 0
          %2767 = vmatpush1.bf16.msra.mxu0 0
          %2768 = vmatprep.subr.bf16.mxu0 0
          %2769 = vmatpush1.bf16.msra.mxu0 0
          %2770 = vmatprep.subr.bf16.mxu0 0
          %2771 = vmatpush1.bf16.msra.mxu0 0
          %2772 = vmatprep.mubr.bf16.mxu0 0
          %2773 = vmatmul.mubr.bf16.gmra.mrb[0].mxu0 %v2708
          %v2774 = vpop.f32.mrb[0].mxu0
          %v2775 = vadd.f32 0.0, %v2774
          %v2776 = vpop.f32.mrb[0].mxu0
          %v2777 = vpop.f32.mrb[0].mxu0
          %v2778 = vadd.f32 0.0, %v2777
          %v2779 = vpop.f32.mrb[0].mxu0
          %2780 = vmatprep.mubr.bf16.mxu0 0
          %2781 = vmatmul.mubr.bf16.gmra.mrb[0].mxu0 %v2709
          %v2782 = vpop.f32.mrb[0].mxu0
          %v2783 = vadd.f32 0.0, %v2782
          %v2784 = vpop.f32.mrb[0].mxu0
          %v2785 = vpop.f32.mrb[0].mxu0
          %v2786 = vadd.f32 0.0, %v2785
          %v2787 = vpop.f32.mrb[0].mxu0
          %2788 = vmatprep.mubr.bf16.mxu0 0
          %2789 = vmatmul.mubr.bf16.gmra.mrb[0].mxu0 %v2710
          %v2790 = vpop.f32.mrb[0].mxu0
          %v2791 = vadd.f32 0.0, %v2790
          %v2792 = vpop.f32.mrb[0].mxu0
          %v2793 = vpop.f32.mrb[0].mxu0
          %v2794 = vadd.f32 0.0, %v2793
          %v2795 = vpop.f32.mrb[0].mxu0
          %2796 = vmatprep.mubr.bf16.mxu0 0
          %2797 = vmatmul.mubr.bf16.gmra.mrb[0].mxu0 %v2711
          %v2798 = vpop.f32.mrb[0].mxu0
          %v2799 = vadd.f32 0.0, %v2798
          %v2800 = vpop.f32.mrb[0].mxu0
          %v2801 = vpop.f32.mrb[0].mxu0
          %v2802 = vadd.f32 0.0, %v2801
          %v2803 = vpop.f32.mrb[0].mxu0
          %2804 = vmatprep.mubr.bf16.mxu0 0
          %2805 = vmatmul.mubr.bf16.gmra.mrb[0].mxu0 %v2712
          %v2806 = vpop.f32.mrb[0].mxu0
          %v2807 = vadd.f32 0.0, %v2806
          %v2808 = vpop.f32.mrb[0].mxu0
          %v2809 = vpop.f32.mrb[0].mxu0
          %v2810 = vadd.f32 0.0, %v2809
          %v2811 = vpop.f32.mrb[0].mxu0
          %2812 = vmatprep.mubr.bf16.mxu0 0
          %2813 = vmatmul.mubr.bf16.gmra.mrb[0].mxu0 %v2713
          %v2814 = vpop.f32.mrb[0].mxu0
          %v2815 = vadd.f32 0.0, %v2814
          %v2816 = vpop.f32.mrb[0].mxu0
          %v2817 = vpop.f32.mrb[0].mxu0
          %v2818 = vadd.f32 0.0, %v2817
          %v2819 = vpop.f32.mrb[0].mxu0
          %2820 = vmatprep.mubr.bf16.mxu0 0
          %2821 = vmatmul.mubr.bf16.gmra.mrb[0].mxu0 %v2714
          %v2822 = vpop.f32.mrb[0].mxu0
          %v2823 = vadd.f32 0.0, %v2822
          %v2824 = vpop.f32.mrb[0].mxu0
          %v2825 = vpop.f32.mrb[0].mxu0
          %v2826 = vadd.f32 0.0, %v2825
          %v2827 = vpop.f32.mrb[0].mxu0
          %2828 = vmatprep.mubr.bf16.mxu0 0
          %2829 = vmatmul.mubr.bf16.gmra.mrb[0].mxu0 %v2715
          %v2830 = vpop.f32.mrb[0].mxu0
          %v2831 = vadd.f32 0.0, %v2830
          %v2832 = vpop.f32.mrb[0].mxu0
          %v2833 = vpop.f32.mrb[0].mxu0
          %v2834 = vadd.f32 0.0, %v2833
          %v2835 = vpop.f32.mrb[0].mxu0
          %2836 = vdwg.mxu0
          %2853 = vrot.lane.b32.xlu0 %v2775, 32
          %v2854 = vpop.permute.xlu0 %2853
          %2855 = vrot.lane.b32.xlu0 %v2778, 32
          %v2856 = vpop.permute.xlu0 %2855
          %2857 = vrot.lane.b32.xlu0 %v2783, 32
          %v2858 = vpop.permute.xlu0 %2857
          %2859 = vrot.lane.b32.xlu0 %v2786, 32
          %v2860 = vpop.permute.xlu0 %2859
          %2861 = vrot.lane.b32.xlu0 %v2791, 32
          %v2862 = vpop.permute.xlu0 %2861
          %2863 = vrot.lane.b32.xlu0 %v2794, 32
          %v2864 = vpop.permute.xlu0 %2863
          %2865 = vrot.lane.b32.xlu0 %v2799, 32
          %v2866 = vpop.permute.xlu0 %2865
          %2867 = vrot.lane.b32.xlu0 %v2802, 32
          %v2868 = vpop.permute.xlu0 %2867
          %2869 = vrot.lane.b32.xlu0 %v2807, 32
          %v2870 = vpop.permute.xlu0 %2869
          %2871 = vrot.lane.b32.xlu0 %v2810, 32
          %v2872 = vpop.permute.xlu0 %2871
          %2873 = vrot.lane.b32.xlu0 %v2815, 32
          %v2874 = vpop.permute.xlu0 %2873
          %2875 = vrot.lane.b32.xlu0 %v2818, 32
          %v2876 = vpop.permute.xlu0 %2875
          %2877 = vrot.lane.b32.xlu0 %v2823, 32
          %v2878 = vpop.permute.xlu0 %2877
          %2879 = vrot.lane.b32.xlu0 %v2826, 32
          %v2880 = vpop.permute.xlu0 %2879
          %2881 = vrot.lane.b32.xlu0 %v2831, 32
          %v2882 = vpop.permute.xlu0 %2881
          %2883 = vrot.lane.b32.xlu0 %v2834, 32
          %v2884 = vpop.permute.xlu0 %2883
          %vm2901 = vcmask 392448
          %2902 = vst.msk [vmem:[#allocation2] sm:$0xff] %vm2901, %v2854
          %2903 = vst.msk [vmem:[#allocation2 + $0x8] sm:$0xff] %vm2901, %v2856
          %2904 = vst.msk [vmem:[#allocation2 + $0x10] sm:$0xff] %vm2901, %v2858
          %2905 = vst.msk [vmem:[#allocation2 + $0x18] sm:$0xff] %vm2901, %v2860
          %2906 = vst.msk [vmem:[#allocation2 + $0x20] sm:$0xff] %vm2901, %v2862
          %2907 = vst.msk [vmem:[#allocation2 + $0x28] sm:$0xff] %vm2901, %v2864
          %2908 = vst.msk [vmem:[#allocation2 + $0x30] sm:$0xff] %vm2901, %v2866
          %2909 = vst.msk [vmem:[#allocation2 + $0x38] sm:$0xff] %vm2901, %v2868
          %2910 = vst.msk [vmem:[#allocation2 + $0x40] sm:$0xff] %vm2901, %v2870
          %2911 = vst.msk [vmem:[#allocation2 + $0x48] sm:$0xff] %vm2901, %v2872
          %2912 = vst.msk [vmem:[#allocation2 + $0x50] sm:$0xff] %vm2901, %v2874
          %2913 = vst.msk [vmem:[#allocation2 + $0x58] sm:$0xff] %vm2901, %v2876
          %2914 = vst.msk [vmem:[#allocation2 + $0x60] sm:$0xff] %vm2901, %v2878
          %2915 = vst.msk [vmem:[#allocation2 + $0x68] sm:$0xff] %vm2901, %v2880
          %2916 = vst.msk [vmem:[#allocation2 + $0x70] sm:$0xff] %vm2901, %v2882
          %2917 = vst.msk [vmem:[#allocation2 + $0x78] sm:$0xff] %vm2901, %v2884
          %2918 = vrot.lane.b32.xlu0 %v1404, 80
          %v2919 = vpop.permute.xlu0 %2918
          %2920 = vrot.lane.b32.xlu0 %v1405, 80
          %v2921 = vpop.permute.xlu0 %2920
          %2922 = vrot.lane.b32.xlu0 %v1406, 80
          %v2923 = vpop.permute.xlu0 %2922
          %2924 = vrot.lane.b32.xlu0 %v1407, 80
          %v2925 = vpop.permute.xlu0 %2924
          %2926 = vrot.lane.b32.xlu0 %v1408, 80
          %v2927 = vpop.permute.xlu0 %2926
          %2928 = vrot.lane.b32.xlu0 %v1409, 80
          %v2929 = vpop.permute.xlu0 %2928
          %2930 = vrot.lane.b32.xlu0 %v1410, 80
          %v2931 = vpop.permute.xlu0 %2930
          %2932 = vrot.lane.b32.xlu0 %v1411, 80
          %v2933 = vpop.permute.xlu0 %2932
          %2934 = vrot.lane.b32.xlu0 %v1396, 80
          %v2935 = vpop.permute.xlu0 %2934
          %2936 = vrot.lane.b32.xlu0 %v1397, 80
          %v2937 = vpop.permute.xlu0 %2936
          %2938 = vrot.lane.b32.xlu0 %v1398, 80
          %v2939 = vpop.permute.xlu0 %2938
          %2940 = vrot.lane.b32.xlu0 %v1399, 80
          %v2941 = vpop.permute.xlu0 %2940
          %2942 = vrot.lane.b32.xlu0 %v1400, 80
          %v2943 = vpop.permute.xlu0 %2942
          %2944 = vrot.lane.b32.xlu0 %v1401, 80
          %v2945 = vpop.permute.xlu0 %2944
          %2946 = vrot.lane.b32.xlu0 %v1402, 80
          %v2947 = vpop.permute.xlu0 %2946
          %2948 = vrot.lane.b32.xlu0 %v1403, 80
          %v2949 = vpop.permute.xlu0 %2948
          %v2951 = vsel %vm1421, %v2919, 0
          %v2954 = vsel %vm1421, %v2921, 0
          %v2957 = vsel %vm1421, %v2923, 0
          %v2960 = vsel %vm1421, %v2925, 0
          %v2963 = vsel %vm1421, %v2927, 0
          %v2966 = vsel %vm1421, %v2929, 0
          %v2969 = vsel %vm1421, %v2931, 0
          %v2972 = vsel %vm1421, %v2933, 0
          %v2975 = vsel %vm1421, %v2935, 0
          %v2978 = vsel %vm1421, %v2937, 0
          %v2981 = vsel %vm1421, %v2939, 0
          %v2984 = vsel %vm1421, %v2941, 0
          %v2987 = vsel %vm1421, %v2943, 0
          %v2990 = vsel %vm1421, %v2945, 0
          %v2993 = vsel %vm1421, %v2947, 0
          %v2996 = vsel %vm1421, %v2949, 0
          %2998 = vmatprep.subr.bf16.mxu0 0
          %2999 = vmatpush1.bf16.xpose.msra.mxu0 %v2975
          %3000 = vmatprep.subr.bf16.mxu0 0
          %3001 = vmatpush1.bf16.xpose.msra.mxu0 %v2978
          %3002 = vmatprep.subr.bf16.mxu0 0
          %3003 = vmatpush1.bf16.xpose.msra.mxu0 %v2981
          %3004 = vmatprep.subr.bf16.mxu0 0
          %3005 = vmatpush1.bf16.xpose.msra.mxu0 %v2984
          %3006 = vmatprep.subr.bf16.mxu0 0
          %3007 = vmatpush1.bf16.xpose.msra.mxu0 %v2987
          %3008 = vmatprep.subr.bf16.mxu0 0
          %3009 = vmatpush1.bf16.xpose.msra.mxu0 %v2990
          %3010 = vmatprep.subr.bf16.mxu0 0
          %3011 = vmatpush1.bf16.xpose.msra.mxu0 %v2993
          %3012 = vmatprep.subr.bf16.mxu0 0
          %3013 = vmatpush1.bf16.xpose.msra.mxu0 %v2996
          %3014 = vmatprep.subr.bf16.mxu0 0
          %3015 = vmatpush1.bf16.xpose.msra.mxu0 0
          %3016 = vmatprep.subr.bf16.mxu0 0
          %3017 = vmatpush1.bf16.xpose.msra.mxu0 0
          %3018 = vmatprep.subr.bf16.mxu0 0
          %3019 = vmatpush1.bf16.xpose.msra.mxu0 0
          %3020 = vmatprep.subr.bf16.mxu0 0
          %3021 = vmatpush1.bf16.xpose.msra.mxu0 0
          %3022 = vmatprep.subr.bf16.mxu0 0
          %3023 = vmatpush1.bf16.xpose.msra.mxu0 0
          %3024 = vmatprep.subr.bf16.mxu0 0
          %3025 = vmatpush1.bf16.xpose.msra.mxu0 0
          %3026 = vmatprep.subr.bf16.mxu0 0
          %3027 = vmatpush1.bf16.xpose.msra.mxu0 0
          %3028 = vmatprep.subr.bf16.mxu0 0
          %3029 = vmatpush1.bf16.xpose.msra.mxu0 0
          %3030 = vmatprep.mubr.bf16.mxu0 0
          %3031 = vmatmul.mubr.bf16.gmra.mrb[0].mxu0 %v2951
          %v3032 = vpop.f32.mrb[0].mxu0
          %v3033 = vadd.f32 %v1419, %v3032
          %v3034 = vpop.f32.mrb[0].mxu0
          %v3035 = vpop.f32.mrb[0].mxu0
          %v3036 = vadd.f32 %v1419, %v3035
          %v3037 = vpop.f32.mrb[0].mxu0
          %3038 = vmatprep.mubr.bf16.mxu0 0
          %3039 = vmatmul.mubr.bf16.gmra.mrb[0].mxu0 %v2954
          %v3040 = vpop.f32.mrb[0].mxu0
          %v3041 = vadd.f32 %v1419, %v3040
          %v3042 = vpop.f32.mrb[0].mxu0
          %v3043 = vpop.f32.mrb[0].mxu0
          %v3044 = vadd.f32 %v1419, %v3043
          %v3045 = vpop.f32.mrb[0].mxu0
          %3046 = vmatprep.mubr.bf16.mxu0 0
          %3047 = vmatmul.mubr.bf16.gmra.mrb[0].mxu0 %v2957
          %v3048 = vpop.f32.mrb[0].mxu0
          %v3049 = vadd.f32 %v1419, %v3048
          %v3050 = vpop.f32.mrb[0].mxu0
          %v3051 = vpop.f32.mrb[0].mxu0
          %v3052 = vadd.f32 %v1419, %v3051
          %v3053 = vpop.f32.mrb[0].mxu0
          %3054 = vmatprep.mubr.bf16.mxu0 0
          %3055 = vmatmul.mubr.bf16.gmra.mrb[0].mxu0 %v2960
          %v3056 = vpop.f32.mrb[0].mxu0
          %v3057 = vadd.f32 %v1419, %v3056
          %v3058 = vpop.f32.mrb[0].mxu0
          %v3059 = vpop.f32.mrb[0].mxu0
          %v3060 = vadd.f32 %v1419, %v3059
          %v3061 = vpop.f32.mrb[0].mxu0
          %3062 = vmatprep.mubr.bf16.mxu0 0
          %3063 = vmatmul.mubr.bf16.gmra.mrb[0].mxu0 %v2963
          %v3064 = vpop.f32.mrb[0].mxu0
          %v3065 = vadd.f32 %v1419, %v3064
          %v3066 = vpop.f32.mrb[0].mxu0
          %v3067 = vpop.f32.mrb[0].mxu0
          %v3068 = vadd.f32 %v1419, %v3067
          %v3069 = vpop.f32.mrb[0].mxu0
          %3070 = vmatprep.mubr.bf16.mxu0 0
          %3071 = vmatmul.mubr.bf16.gmra.mrb[0].mxu0 %v2966
          %v3072 = vpop.f32.mrb[0].mxu0
          %v3073 = vadd.f32 %v1419, %v3072
          %v3074 = vpop.f32.mrb[0].mxu0
          %v3075 = vpop.f32.mrb[0].mxu0
          %v3076 = vadd.f32 %v1419, %v3075
          %v3077 = vpop.f32.mrb[0].mxu0
          %3078 = vmatprep.mubr.bf16.mxu0 0
          %3079 = vmatmul.mubr.bf16.gmra.mrb[0].mxu0 %v2969
          %v3080 = vpop.f32.mrb[0].mxu0
          %v3081 = vadd.f32 %v1419, %v3080
          %v3082 = vpop.f32.mrb[0].mxu0
          %v3083 = vpop.f32.mrb[0].mxu0
          %v3084 = vadd.f32 %v1419, %v3083
          %v3085 = vpop.f32.mrb[0].mxu0
          %3086 = vmatprep.mubr.bf16.mxu0 0
          %3087 = vmatmul.mubr.bf16.gmra.mrb[0].mxu0 %v2972
          %v3088 = vpop.f32.mrb[0].mxu0
          %v3089 = vadd.f32 %v1419, %v3088
          %v3090 = vpop.f32.mrb[0].mxu0
          %v3091 = vpop.f32.mrb[0].mxu0
          %v3092 = vadd.f32 %v1419, %v3091
          %v3093 = vpop.f32.mrb[0].mxu0
          %3094 = vdwg.mxu0
          %3095 = vmax.xlane.f32.xlu0 %v3033
          %v3096 = vpop.xlane.xlu0 %3095
          %3097 = vmax.xlane.f32.xlu0 %v3036
          %v3098 = vpop.xlane.xlu0 %3097
          %3099 = vmax.xlane.f32.xlu0 %v3041
          %v3100 = vpop.xlane.xlu0 %3099
          %3101 = vmax.xlane.f32.xlu0 %v3044
          %v3102 = vpop.xlane.xlu0 %3101
          %3103 = vmax.xlane.f32.xlu0 %v3049
          %v3104 = vpop.xlane.xlu0 %3103
          %3105 = vmax.xlane.f32.xlu0 %v3052
          %v3106 = vpop.xlane.xlu0 %3105
          %3107 = vmax.xlane.f32.xlu0 %v3057
          %v3108 = vpop.xlane.xlu0 %3107
          %3109 = vmax.xlane.f32.xlu0 %v3060
          %v3110 = vpop.xlane.xlu0 %3109
          %3111 = vmax.xlane.f32.xlu0 %v3065
          %v3112 = vpop.xlane.xlu0 %3111
          %3113 = vmax.xlane.f32.xlu0 %v3068
          %v3114 = vpop.xlane.xlu0 %3113
          %3115 = vmax.xlane.f32.xlu0 %v3073
          %v3116 = vpop.xlane.xlu0 %3115
          %3117 = vmax.xlane.f32.xlu0 %v3076
          %v3118 = vpop.xlane.xlu0 %3117
          %3119 = vmax.xlane.f32.xlu0 %v3081
          %v3120 = vpop.xlane.xlu0 %3119
          %3121 = vmax.xlane.f32.xlu0 %v3084
          %v3122 = vpop.xlane.xlu0 %3121
          %3123 = vmax.xlane.f32.xlu0 %v3089
          %v3124 = vpop.xlane.xlu0 %3123
          %3125 = vmax.xlane.f32.xlu0 %v3092
          %v3126 = vpop.xlane.xlu0 %3125
          %v3127 = vsub.f32 %v3033, %v3096
          %v3128 = vsub.f32 %v3036, %v3098
          %v3129 = vsub.f32 %v3041, %v3100
          %v3130 = vsub.f32 %v3044, %v3102
          %v3131 = vsub.f32 %v3049, %v3104
          %v3132 = vsub.f32 %v3052, %v3106
          %v3133 = vsub.f32 %v3057, %v3108
          %v3134 = vsub.f32 %v3060, %v3110
          %v3135 = vsub.f32 %v3065, %v3112
          %v3136 = vsub.f32 %v3068, %v3114
          %v3137 = vsub.f32 %v3073, %v3116
          %v3138 = vsub.f32 %v3076, %v3118
          %v3139 = vsub.f32 %v3081, %v3120
          %v3140 = vsub.f32 %v3084, %v3122
          %v3141 = vsub.f32 %v3089, %v3124
          %v3142 = vsub.f32 %v3092, %v3126
          %v3143 = vmul.f32 %v3127, 1.442695
          %v3144 = vpow.pop %v3143
          %v3145 = vmul.f32 %v3128, 1.442695
          %v3146 = vpow.pop %v3145
          %v3147 = vmul.f32 %v3129, 1.442695
          %v3148 = vpow.pop %v3147
          %v3149 = vmul.f32 %v3130, 1.442695
          %v3150 = vpow.pop %v3149
          %v3151 = vmul.f32 %v3131, 1.442695
          %v3152 = vpow.pop %v3151
          %v3153 = vmul.f32 %v3132, 1.442695
          %v3154 = vpow.pop %v3153
          %v3155 = vmul.f32 %v3133, 1.442695
          %v3156 = vpow.pop %v3155
          %v3157 = vmul.f32 %v3134, 1.442695
          %v3158 = vpow.pop %v3157
          %v3159 = vmul.f32 %v3135, 1.442695
          %v3160 = vpow.pop %v3159
          %v3161 = vmul.f32 %v3136, 1.442695
          %v3162 = vpow.pop %v3161
          %v3163 = vmul.f32 %v3137, 1.442695
          %v3164 = vpow.pop %v3163
          %v3165 = vmul.f32 %v3138, 1.442695
          %v3166 = vpow.pop %v3165
          %v3167 = vmul.f32 %v3139, 1.442695
          %v3168 = vpow.pop %v3167
          %v3169 = vmul.f32 %v3140, 1.442695
          %v3170 = vpow.pop %v3169
          %v3171 = vmul.f32 %v3141, 1.442695
          %v3172 = vpow.pop %v3171
          %v3173 = vmul.f32 %v3142, 1.442695
          %v3174 = vpow.pop %v3173
          %3175 = vadd.xlane.f32.xlu0 %v3144
          %v3176 = vpop.xlane.xlu0 %3175
          %3177 = vadd.xlane.f32.xlu0 %v3146
          %v3178 = vpop.xlane.xlu0 %3177
          %3179 = vadd.xlane.f32.xlu0 %v3148
          %v3180 = vpop.xlane.xlu0 %3179
          %3181 = vadd.xlane.f32.xlu0 %v3150
          %v3182 = vpop.xlane.xlu0 %3181
          %3183 = vadd.xlane.f32.xlu0 %v3152
          %v3184 = vpop.xlane.xlu0 %3183
          %3185 = vadd.xlane.f32.xlu0 %v3154
          %v3186 = vpop.xlane.xlu0 %3185
          %3187 = vadd.xlane.f32.xlu0 %v3156
          %v3188 = vpop.xlane.xlu0 %3187
          %3189 = vadd.xlane.f32.xlu0 %v3158
          %v3190 = vpop.xlane.xlu0 %3189
          %3191 = vadd.xlane.f32.xlu0 %v3160
          %v3192 = vpop.xlane.xlu0 %3191
          %3193 = vadd.xlane.f32.xlu0 %v3162
          %v3194 = vpop.xlane.xlu0 %3193
          %3195 = vadd.xlane.f32.xlu0 %v3164
          %v3196 = vpop.xlane.xlu0 %3195
          %3197 = vadd.xlane.f32.xlu0 %v3166
          %v3198 = vpop.xlane.xlu0 %3197
          %3199 = vadd.xlane.f32.xlu0 %v3168
          %v3200 = vpop.xlane.xlu0 %3199
          %3201 = vadd.xlane.f32.xlu0 %v3170
          %v3202 = vpop.xlane.xlu0 %3201
          %3203 = vadd.xlane.f32.xlu0 %v3172
          %v3204 = vpop.xlane.xlu0 %3203
          %3205 = vadd.xlane.f32.xlu0 %v3174
          %v3206 = vpop.xlane.xlu0 %3205
          %v3207 = vrcp.pop %v3176
          %v3208 = vrcp.pop %v3178
          %v3209 = vrcp.pop %v3180
          %v3210 = vrcp.pop %v3182
          %v3211 = vrcp.pop %v3184
          %v3212 = vrcp.pop %v3186
          %v3213 = vrcp.pop %v3188
          %v3214 = vrcp.pop %v3190
          %v3215 = vrcp.pop %v3192
          %v3216 = vrcp.pop %v3194
          %v3217 = vrcp.pop %v3196
          %v3218 = vrcp.pop %v3198
          %v3219 = vrcp.pop %v3200
          %v3220 = vrcp.pop %v3202
          %v3221 = vrcp.pop %v3204
          %v3222 = vrcp.pop %v3206
          %v3223 = vmul.f32 %v3144, %v3207
          %v3224 = vmul.f32 %v3146, %v3208
          %v3225 = vmul.f32 %v3148, %v3209
          %v3226 = vmul.f32 %v3150, %v3210
          %v3227 = vmul.f32 %v3152, %v3211
          %v3228 = vmul.f32 %v3154, %v3212
          %v3229 = vmul.f32 %v3156, %v3213
          %v3230 = vmul.f32 %v3158, %v3214
          %v3231 = vmul.f32 %v3160, %v3215
          %v3232 = vmul.f32 %v3162, %v3216
          %v3233 = vmul.f32 %v3164, %v3217
          %v3234 = vmul.f32 %v3166, %v3218
          %v3235 = vmul.f32 %v3168, %v3219
          %v3236 = vmul.f32 %v3170, %v3220
          %v3237 = vmul.f32 %v3172, %v3221
          %v3238 = vmul.f32 %v3174, %v3222
          %v3239 = vpack.c.bf16 %v3224, %v3223
          %v3240 = vpack.c.bf16 %v3226, %v3225
          %v3241 = vpack.c.bf16 %v3228, %v3227
          %v3242 = vpack.c.bf16 %v3230, %v3229
          %v3243 = vpack.c.bf16 %v3232, %v3231
          %v3244 = vpack.c.bf16 %v3234, %v3233
          %v3245 = vpack.c.bf16 %v3236, %v3235
          %v3246 = vpack.c.bf16 %v3238, %v3237
          %3247 = vrot.lane.b32.xlu0 %v1388, 80
          %v3248 = vpop.permute.xlu0 %3247
          %3249 = vrot.lane.b32.xlu0 %v1389, 80
          %v3250 = vpop.permute.xlu0 %3249
          %3251 = vrot.lane.b32.xlu0 %v1390, 80
          %v3252 = vpop.permute.xlu0 %3251
          %3253 = vrot.lane.b32.xlu0 %v1391, 80
          %v3254 = vpop.permute.xlu0 %3253
          %3255 = vrot.lane.b32.xlu0 %v1392, 80
          %v3256 = vpop.permute.xlu0 %3255
          %3257 = vrot.lane.b32.xlu0 %v1393, 80
          %v3258 = vpop.permute.xlu0 %3257
          %3259 = vrot.lane.b32.xlu0 %v1394, 80
          %v3260 = vpop.permute.xlu0 %3259
          %3261 = vrot.lane.b32.xlu0 %v1395, 80
          %v3262 = vpop.permute.xlu0 %3261
          %3271 = vmatprep.subr.bf16.mxu0 0
          %3272 = vmatpush1.bf16.msra.mxu0 %v3248
          %3273 = vmatprep.subr.bf16.mxu0 0
          %3274 = vmatpush1.bf16.msra.mxu0 %v3250
          %3275 = vmatprep.subr.bf16.mxu0 0
          %3276 = vmatpush1.bf16.msra.mxu0 %v3252
          %3277 = vmatprep.subr.bf16.mxu0 0
          %3278 = vmatpush1.bf16.msra.mxu0 %v3254
          %3279 = vmatprep.subr.bf16.mxu0 0
          %3280 = vmatpush1.bf16.msra.mxu0 %v3256
          %3281 = vmatprep.subr.bf16.mxu0 0
          %3282 = vmatpush1.bf16.msra.mxu0 %v3258
          %3283 = vmatprep.subr.bf16.mxu0 0
          %3284 = vmatpush1.bf16.msra.mxu0 %v3260
          %3285 = vmatprep.subr.bf16.mxu0 0
          %3286 = vmatpush1.bf16.msra.mxu0 %v3262
          %3287 = vmatprep.subr.bf16.mxu0 0
          %3288 = vmatpush1.bf16.msra.mxu0 0
          %3289 = vmatprep.subr.bf16.mxu0 0
          %3290 = vmatpush1.bf16.msra.mxu0 0
          %3291 = vmatprep.subr.bf16.mxu0 0
          %3292 = vmatpush1.bf16.msra.mxu0 0
          %3293 = vmatprep.subr.bf16.mxu0 0
          %3294 = vmatpush1.bf16.msra.mxu0 0
          %3295 = vmatprep.subr.bf16.mxu0 0
          %3296 = vmatpush1.bf16.msra.mxu0 0
          %3297 = vmatprep.subr.bf16.mxu0 0
          %3298 = vmatpush1.bf16.msra.mxu0 0
          %3299 = vmatprep.subr.bf16.mxu0 0
          %3300 = vmatpush1.bf16.msra.mxu0 0
          %3301 = vmatprep.subr.bf16.mxu0 0
          %3302 = vmatpush1.bf16.msra.mxu0 0
          %3303 = vmatprep.mubr.bf16.mxu0 0
          %3304 = vmatmul.mubr.bf16.gmra.mrb[0].mxu0 %v3239
          %v3305 = vpop.f32.mrb[0].mxu0
          %v3306 = vadd.f32 0.0, %v3305
          %v3307 = vpop.f32.mrb[0].mxu0
          %v3308 = vpop.f32.mrb[0].mxu0
          %v3309 = vadd.f32 0.0, %v3308
          %v3310 = vpop.f32.mrb[0].mxu0
          %3311 = vmatprep.mubr.bf16.mxu0 0
          %3312 = vmatmul.mubr.bf16.gmra.mrb[0].mxu0 %v3240
          %v3313 = vpop.f32.mrb[0].mxu0
          %v3314 = vadd.f32 0.0, %v3313
          %v3315 = vpop.f32.mrb[0].mxu0
          %v3316 = vpop.f32.mrb[0].mxu0
          %v3317 = vadd.f32 0.0, %v3316
          %v3318 = vpop.f32.mrb[0].mxu0
          %3319 = vmatprep.mubr.bf16.mxu0 0
          %3320 = vmatmul.mubr.bf16.gmra.mrb[0].mxu0 %v3241
          %v3321 = vpop.f32.mrb[0].mxu0
          %v3322 = vadd.f32 0.0, %v3321
          %v3323 = vpop.f32.mrb[0].mxu0
          %v3324 = vpop.f32.mrb[0].mxu0
          %v3325 = vadd.f32 0.0, %v3324
          %v3326 = vpop.f32.mrb[0].mxu0
          %3327 = vmatprep.mubr.bf16.mxu0 0
          %3328 = vmatmul.mubr.bf16.gmra.mrb[0].mxu0 %v3242
          %v3329 = vpop.f32.mrb[0].mxu0
          %v3330 = vadd.f32 0.0, %v3329
          %v3331 = vpop.f32.mrb[0].mxu0
          %v3332 = vpop.f32.mrb[0].mxu0
          %v3333 = vadd.f32 0.0, %v3332
          %v3334 = vpop.f32.mrb[0].mxu0
          %3335 = vmatprep.mubr.bf16.mxu0 0
          %3336 = vmatmul.mubr.bf16.gmra.mrb[0].mxu0 %v3243
          %v3337 = vpop.f32.mrb[0].mxu0
          %v3338 = vadd.f32 0.0, %v3337
          %v3339 = vpop.f32.mrb[0].mxu0
          %v3340 = vpop.f32.mrb[0].mxu0
          %v3341 = vadd.f32 0.0, %v3340
          %v3342 = vpop.f32.mrb[0].mxu0
          %3343 = vmatprep.mubr.bf16.mxu0 0
          %3344 = vmatmul.mubr.bf16.gmra.mrb[0].mxu0 %v3244
          %v3345 = vpop.f32.mrb[0].mxu0
          %v3346 = vadd.f32 0.0, %v3345
          %v3347 = vpop.f32.mrb[0].mxu0
          %v3348 = vpop.f32.mrb[0].mxu0
          %v3349 = vadd.f32 0.0, %v3348
          %v3350 = vpop.f32.mrb[0].mxu0
          %3351 = vmatprep.mubr.bf16.mxu0 0
          %3352 = vmatmul.mubr.bf16.gmra.mrb[0].mxu0 %v3245
          %v3353 = vpop.f32.mrb[0].mxu0
          %v3354 = vadd.f32 0.0, %v3353
          %v3355 = vpop.f32.mrb[0].mxu0
          %v3356 = vpop.f32.mrb[0].mxu0
          %v3357 = vadd.f32 0.0, %v3356
          %v3358 = vpop.f32.mrb[0].mxu0
          %3359 = vmatprep.mubr.bf16.mxu0 0
          %3360 = vmatmul.mubr.bf16.gmra.mrb[0].mxu0 %v3246
          %v3361 = vpop.f32.mrb[0].mxu0
          %v3362 = vadd.f32 0.0, %v3361
          %v3363 = vpop.f32.mrb[0].mxu0
          %v3364 = vpop.f32.mrb[0].mxu0
          %v3365 = vadd.f32 0.0, %v3364
          %v3366 = vpop.f32.mrb[0].mxu0
          %3367 = vdwg.mxu0
          %3384 = vrot.lane.b32.xlu0 %v3306, 48
          %v3385 = vpop.permute.xlu0 %3384
          %3386 = vrot.lane.b32.xlu0 %v3309, 48
          %v3387 = vpop.permute.xlu0 %3386
          %3388 = vrot.lane.b32.xlu0 %v3314, 48
          %v3389 = vpop.permute.xlu0 %3388
          %3390 = vrot.lane.b32.xlu0 %v3317, 48
          %v3391 = vpop.permute.xlu0 %3390
          %3392 = vrot.lane.b32.xlu0 %v3322, 48
          %v3393 = vpop.permute.xlu0 %3392
          %3394 = vrot.lane.b32.xlu0 %v3325, 48
          %v3395 = vpop.permute.xlu0 %3394
          %3396 = vrot.lane.b32.xlu0 %v3330, 48
          %v3397 = vpop.permute.xlu0 %3396
          %3398 = vrot.lane.b32.xlu0 %v3333, 48
          %v3399 = vpop.permute.xlu0 %3398
          %3400 = vrot.lane.b32.xlu0 %v3338, 48
          %v3401 = vpop.permute.xlu0 %3400
          %3402 = vrot.lane.b32.xlu0 %v3341, 48
          %v3403 = vpop.permute.xlu0 %3402
          %3404 = vrot.lane.b32.xlu0 %v3346, 48
          %v3405 = vpop.permute.xlu0 %3404
          %3406 = vrot.lane.b32.xlu0 %v3349, 48
          %v3407 = vpop.permute.xlu0 %3406
          %3408 = vrot.lane.b32.xlu0 %v3354, 48
          %v3409 = vpop.permute.xlu0 %3408
          %3410 = vrot.lane.b32.xlu0 %v3357, 48
          %v3411 = vpop.permute.xlu0 %3410
          %3412 = vrot.lane.b32.xlu0 %v3362, 48
          %v3413 = vpop.permute.xlu0 %3412
          %3414 = vrot.lane.b32.xlu0 %v3365, 48
          %v3415 = vpop.permute.xlu0 %3414
          %vm3432 = vcmask 523648
          %3433 = vst.msk [vmem:[#allocation2] sm:$0xff] %vm3432, %v3385
          %3434 = vst.msk [vmem:[#allocation2 + $0x8] sm:$0xff] %vm3432, %v3387
          %3435 = vst.msk [vmem:[#allocation2 + $0x10] sm:$0xff] %vm3432, %v3389
          %3436 = vst.msk [vmem:[#allocation2 + $0x18] sm:$0xff] %vm3432, %v3391
          %3437 = vst.msk [vmem:[#allocation2 + $0x20] sm:$0xff] %vm3432, %v3393
          %3438 = vst.msk [vmem:[#allocation2 + $0x28] sm:$0xff] %vm3432, %v3395
          %3439 = vst.msk [vmem:[#allocation2 + $0x30] sm:$0xff] %vm3432, %v3397
          %3440 = vst.msk [vmem:[#allocation2 + $0x38] sm:$0xff] %vm3432, %v3399
          %3441 = vst.msk [vmem:[#allocation2 + $0x40] sm:$0xff] %vm3432, %v3401
          %3442 = vst.msk [vmem:[#allocation2 + $0x48] sm:$0xff] %vm3432, %v3403
          %3443 = vst.msk [vmem:[#allocation2 + $0x50] sm:$0xff] %vm3432, %v3405
          %3444 = vst.msk [vmem:[#allocation2 + $0x58] sm:$0xff] %vm3432, %v3407
          %3445 = vst.msk [vmem:[#allocation2 + $0x60] sm:$0xff] %vm3432, %v3409
          %3446 = vst.msk [vmem:[#allocation2 + $0x68] sm:$0xff] %vm3432, %v3411
          %3447 = vst.msk [vmem:[#allocation2 + $0x70] sm:$0xff] %vm3432, %v3413
          %3448 = vst.msk [vmem:[#allocation2 + $0x78] sm:$0xff] %vm3432, %v3415
          %3449 = vrot.lane.b32.xlu0 %v1404, 64
          %v3450 = vpop.permute.xlu0 %3449
          %3451 = vrot.lane.b32.xlu0 %v1405, 64
          %v3452 = vpop.permute.xlu0 %3451
          %3453 = vrot.lane.b32.xlu0 %v1406, 64
          %v3454 = vpop.permute.xlu0 %3453
          %3455 = vrot.lane.b32.xlu0 %v1407, 64
          %v3456 = vpop.permute.xlu0 %3455
          %3457 = vrot.lane.b32.xlu0 %v1408, 64
          %v3458 = vpop.permute.xlu0 %3457
          %3459 = vrot.lane.b32.xlu0 %v1409, 64
          %v3460 = vpop.permute.xlu0 %3459
          %3461 = vrot.lane.b32.xlu0 %v1410, 64
          %v3462 = vpop.permute.xlu0 %3461
          %3463 = vrot.lane.b32.xlu0 %v1411, 64
          %v3464 = vpop.permute.xlu0 %3463
          %3465 = vrot.lane.b32.xlu0 %v1396, 64
          %v3466 = vpop.permute.xlu0 %3465
          %3467 = vrot.lane.b32.xlu0 %v1397, 64
          %v3468 = vpop.permute.xlu0 %3467
          %3469 = vrot.lane.b32.xlu0 %v1398, 64
          %v3470 = vpop.permute.xlu0 %3469
          %3471 = vrot.lane.b32.xlu0 %v1399, 64
          %v3472 = vpop.permute.xlu0 %3471
          %3473 = vrot.lane.b32.xlu0 %v1400, 64
          %v3474 = vpop.permute.xlu0 %3473
          %3475 = vrot.lane.b32.xlu0 %v1401, 64
          %v3476 = vpop.permute.xlu0 %3475
          %3477 = vrot.lane.b32.xlu0 %v1402, 64
          %v3478 = vpop.permute.xlu0 %3477
          %3479 = vrot.lane.b32.xlu0 %v1403, 64
          %v3480 = vpop.permute.xlu0 %3479
          %v3482 = vsel %vm1421, %v3450, 0
          %v3485 = vsel %vm1421, %v3452, 0
          %v3488 = vsel %vm1421, %v3454, 0
          %v3491 = vsel %vm1421, %v3456, 0
          %v3494 = vsel %vm1421, %v3458, 0
          %v3497 = vsel %vm1421, %v3460, 0
          %v3500 = vsel %vm1421, %v3462, 0
          %v3503 = vsel %vm1421, %v3464, 0
          %v3506 = vsel %vm1421, %v3466, 0
          %v3509 = vsel %vm1421, %v3468, 0
          %v3512 = vsel %vm1421, %v3470, 0
          %v3515 = vsel %vm1421, %v3472, 0
          %v3518 = vsel %vm1421, %v3474, 0
          %v3521 = vsel %vm1421, %v3476, 0
          %v3524 = vsel %vm1421, %v3478, 0
          %v3527 = vsel %vm1421, %v3480, 0
          %3529 = vmatprep.subr.bf16.mxu0 0
          %3530 = vmatpush1.bf16.xpose.msra.mxu0 %v3506
          %3531 = vmatprep.subr.bf16.mxu0 0
          %3532 = vmatpush1.bf16.xpose.msra.mxu0 %v3509
          %3533 = vmatprep.subr.bf16.mxu0 0
          %3534 = vmatpush1.bf16.xpose.msra.mxu0 %v3512
          %3535 = vmatprep.subr.bf16.mxu0 0
          %3536 = vmatpush1.bf16.xpose.msra.mxu0 %v3515
          %3537 = vmatprep.subr.bf16.mxu0 0
          %3538 = vmatpush1.bf16.xpose.msra.mxu0 %v3518
          %3539 = vmatprep.subr.bf16.mxu0 0
          %3540 = vmatpush1.bf16.xpose.msra.mxu0 %v3521
          %3541 = vmatprep.subr.bf16.mxu0 0
          %3542 = vmatpush1.bf16.xpose.msra.mxu0 %v3524
          %3543 = vmatprep.subr.bf16.mxu0 0
          %3544 = vmatpush1.bf16.xpose.msra.mxu0 %v3527
          %3545 = vmatprep.subr.bf16.mxu0 0
          %3546 = vmatpush1.bf16.xpose.msra.mxu0 0
          %3547 = vmatprep.subr.bf16.mxu0 0
          %3548 = vmatpush1.bf16.xpose.msra.mxu0 0
          %3549 = vmatprep.subr.bf16.mxu0 0
          %3550 = vmatpush1.bf16.xpose.msra.mxu0 0
          %3551 = vmatprep.subr.bf16.mxu0 0
          %3552 = vmatpush1.bf16.xpose.msra.mxu0 0
          %3553 = vmatprep.subr.bf16.mxu0 0
          %3554 = vmatpush1.bf16.xpose.msra.mxu0 0
          %3555 = vmatprep.subr.bf16.mxu0 0
          %3556 = vmatpush1.bf16.xpose.msra.mxu0 0
          %3557 = vmatprep.subr.bf16.mxu0 0
          %3558 = vmatpush1.bf16.xpose.msra.mxu0 0
          %3559 = vmatprep.subr.bf16.mxu0 0
          %3560 = vmatpush1.bf16.xpose.msra.mxu0 0
          %3561 = vmatprep.mubr.bf16.mxu0 0
          %3562 = vmatmul.mubr.bf16.gmra.mrb[0].mxu0 %v3482
          %v3563 = vpop.f32.mrb[0].mxu0
          %v3564 = vadd.f32 %v1419, %v3563
          %v3565 = vpop.f32.mrb[0].mxu0
          %v3566 = vpop.f32.mrb[0].mxu0
          %v3567 = vadd.f32 %v1419, %v3566
          %v3568 = vpop.f32.mrb[0].mxu0
          %3569 = vmatprep.mubr.bf16.mxu0 0
          %3570 = vmatmul.mubr.bf16.gmra.mrb[0].mxu0 %v3485
          %v3571 = vpop.f32.mrb[0].mxu0
          %v3572 = vadd.f32 %v1419, %v3571
          %v3573 = vpop.f32.mrb[0].mxu0
          %v3574 = vpop.f32.mrb[0].mxu0
          %v3575 = vadd.f32 %v1419, %v3574
          %v3576 = vpop.f32.mrb[0].mxu0
          %3577 = vmatprep.mubr.bf16.mxu0 0
          %3578 = vmatmul.mubr.bf16.gmra.mrb[0].mxu0 %v3488
          %v3579 = vpop.f32.mrb[0].mxu0
          %v3580 = vadd.f32 %v1419, %v3579
          %v3581 = vpop.f32.mrb[0].mxu0
          %v3582 = vpop.f32.mrb[0].mxu0
          %v3583 = vadd.f32 %v1419, %v3582
          %v3584 = vpop.f32.mrb[0].mxu0
          %3585 = vmatprep.mubr.bf16.mxu0 0
          %3586 = vmatmul.mubr.bf16.gmra.mrb[0].mxu0 %v3491
          %v3587 = vpop.f32.mrb[0].mxu0
          %v3588 = vadd.f32 %v1419, %v3587
          %v3589 = vpop.f32.mrb[0].mxu0
          %v3590 = vpop.f32.mrb[0].mxu0
          %v3591 = vadd.f32 %v1419, %v3590
          %v3592 = vpop.f32.mrb[0].mxu0
          %3593 = vmatprep.mubr.bf16.mxu0 0
          %3594 = vmatmul.mubr.bf16.gmra.mrb[0].mxu0 %v3494
          %v3595 = vpop.f32.mrb[0].mxu0
          %v3596 = vadd.f32 %v1419, %v3595
          %v3597 = vpop.f32.mrb[0].mxu0
          %v3598 = vpop.f32.mrb[0].mxu0
          %v3599 = vadd.f32 %v1419, %v3598
          %v3600 = vpop.f32.mrb[0].mxu0
          %3601 = vmatprep.mubr.bf16.mxu0 0
          %3602 = vmatmul.mubr.bf16.gmra.mrb[0].mxu0 %v3497
          %v3603 = vpop.f32.mrb[0].mxu0
          %v3604 = vadd.f32 %v1419, %v3603
          %v3605 = vpop.f32.mrb[0].mxu0
          %v3606 = vpop.f32.mrb[0].mxu0
          %v3607 = vadd.f32 %v1419, %v3606
          %v3608 = vpop.f32.mrb[0].mxu0
          %3609 = vmatprep.mubr.bf16.mxu0 0
          %3610 = vmatmul.mubr.bf16.gmra.mrb[0].mxu0 %v3500
          %v3611 = vpop.f32.mrb[0].mxu0
          %v3612 = vadd.f32 %v1419, %v3611
          %v3613 = vpop.f32.mrb[0].mxu0
          %v3614 = vpop.f32.mrb[0].mxu0
          %v3615 = vadd.f32 %v1419, %v3614
          %v3616 = vpop.f32.mrb[0].mxu0
          %3617 = vmatprep.mubr.bf16.mxu0 0
          %3618 = vmatmul.mubr.bf16.gmra.mrb[0].mxu0 %v3503
          %v3619 = vpop.f32.mrb[0].mxu0
          %v3620 = vadd.f32 %v1419, %v3619
          %v3621 = vpop.f32.mrb[0].mxu0
          %v3622 = vpop.f32.mrb[0].mxu0
          %v3623 = vadd.f32 %v1419, %v3622
          %v3624 = vpop.f32.mrb[0].mxu0
          %3625 = vdwg.mxu0
          %3626 = vmax.xlane.f32.xlu0 %v3564
          %v3627 = vpop.xlane.xlu0 %3626
          %3628 = vmax.xlane.f32.xlu0 %v3567
          %v3629 = vpop.xlane.xlu0 %3628
          %3630 = vmax.xlane.f32.xlu0 %v3572
          %v3631 = vpop.xlane.xlu0 %3630
          %3632 = vmax.xlane.f32.xlu0 %v3575
          %v3633 = vpop.xlane.xlu0 %3632
          %3634 = vmax.xlane.f32.xlu0 %v3580
          %v3635 = vpop.xlane.xlu0 %3634
          %3636 = vmax.xlane.f32.xlu0 %v3583
          %v3637 = vpop.xlane.xlu0 %3636
          %3638 = vmax.xlane.f32.xlu0 %v3588
          %v3639 = vpop.xlane.xlu0 %3638
          %3640 = vmax.xlane.f32.xlu0 %v3591
          %v3641 = vpop.xlane.xlu0 %3640
          %3642 = vmax.xlane.f32.xlu0 %v3596
          %v3643 = vpop.xlane.xlu0 %3642
          %3644 = vmax.xlane.f32.xlu0 %v3599
          %v3645 = vpop.xlane.xlu0 %3644
          %3646 = vmax.xlane.f32.xlu0 %v3604
          %v3647 = vpop.xlane.xlu0 %3646
          %3648 = vmax.xlane.f32.xlu0 %v3607
          %v3649 = vpop.xlane.xlu0 %3648
          %3650 = vmax.xlane.f32.xlu0 %v3612
          %v3651 = vpop.xlane.xlu0 %3650
          %3652 = vmax.xlane.f32.xlu0 %v3615
          %v3653 = vpop.xlane.xlu0 %3652
          %3654 = vmax.xlane.f32.xlu0 %v3620
          %v3655 = vpop.xlane.xlu0 %3654
          %3656 = vmax.xlane.f32.xlu0 %v3623
          %v3657 = vpop.xlane.xlu0 %3656
          %v3658 = vsub.f32 %v3564, %v3627
          %v3659 = vsub.f32 %v3567, %v3629
          %v3660 = vsub.f32 %v3572, %v3631
          %v3661 = vsub.f32 %v3575, %v3633
          %v3662 = vsub.f32 %v3580, %v3635
          %v3663 = vsub.f32 %v3583, %v3637
          %v3664 = vsub.f32 %v3588, %v3639
          %v3665 = vsub.f32 %v3591, %v3641
          %v3666 = vsub.f32 %v3596, %v3643
          %v3667 = vsub.f32 %v3599, %v3645
          %v3668 = vsub.f32 %v3604, %v3647
          %v3669 = vsub.f32 %v3607, %v3649
          %v3670 = vsub.f32 %v3612, %v3651
          %v3671 = vsub.f32 %v3615, %v3653
          %v3672 = vsub.f32 %v3620, %v3655
          %v3673 = vsub.f32 %v3623, %v3657
          %v3674 = vmul.f32 %v3658, 1.442695
          %v3675 = vpow.pop %v3674
          %v3676 = vmul.f32 %v3659, 1.442695
          %v3677 = vpow.pop %v3676
          %v3678 = vmul.f32 %v3660, 1.442695
          %v3679 = vpow.pop %v3678
          %v3680 = vmul.f32 %v3661, 1.442695
          %v3681 = vpow.pop %v3680
          %v3682 = vmul.f32 %v3662, 1.442695
          %v3683 = vpow.pop %v3682
          %v3684 = vmul.f32 %v3663, 1.442695
          %v3685 = vpow.pop %v3684
          %v3686 = vmul.f32 %v3664, 1.442695
          %v3687 = vpow.pop %v3686
          %v3688 = vmul.f32 %v3665, 1.442695
          %v3689 = vpow.pop %v3688
          %v3690 = vmul.f32 %v3666, 1.442695
          %v3691 = vpow.pop %v3690
          %v3692 = vmul.f32 %v3667, 1.442695
          %v3693 = vpow.pop %v3692
          %v3694 = vmul.f32 %v3668, 1.442695
          %v3695 = vpow.pop %v3694
          %v3696 = vmul.f32 %v3669, 1.442695
          %v3697 = vpow.pop %v3696
          %v3698 = vmul.f32 %v3670, 1.442695
          %v3699 = vpow.pop %v3698
          %v3700 = vmul.f32 %v3671, 1.442695
          %v3701 = vpow.pop %v3700
          %v3702 = vmul.f32 %v3672, 1.442695
          %v3703 = vpow.pop %v3702
          %v3704 = vmul.f32 %v3673, 1.442695
          %v3705 = vpow.pop %v3704
          %3706 = vadd.xlane.f32.xlu0 %v3675
          %v3707 = vpop.xlane.xlu0 %3706
          %3708 = vadd.xlane.f32.xlu0 %v3677
          %v3709 = vpop.xlane.xlu0 %3708
          %3710 = vadd.xlane.f32.xlu0 %v3679
          %v3711 = vpop.xlane.xlu0 %3710
          %3712 = vadd.xlane.f32.xlu0 %v3681
          %v3713 = vpop.xlane.xlu0 %3712
          %3714 = vadd.xlane.f32.xlu0 %v3683
          %v3715 = vpop.xlane.xlu0 %3714
          %3716 = vadd.xlane.f32.xlu0 %v3685
          %v3717 = vpop.xlane.xlu0 %3716
          %3718 = vadd.xlane.f32.xlu0 %v3687
          %v3719 = vpop.xlane.xlu0 %3718
          %3720 = vadd.xlane.f32.xlu0 %v3689
          %v3721 = vpop.xlane.xlu0 %3720
          %3722 = vadd.xlane.f32.xlu0 %v3691
          %v3723 = vpop.xlane.xlu0 %3722
          %3724 = vadd.xlane.f32.xlu0 %v3693
          %v3725 = vpop.xlane.xlu0 %3724
          %3726 = vadd.xlane.f32.xlu0 %v3695
          %v3727 = vpop.xlane.xlu0 %3726
          %3728 = vadd.xlane.f32.xlu0 %v3697
          %v3729 = vpop.xlane.xlu0 %3728
          %3730 = vadd.xlane.f32.xlu0 %v3699
          %v3731 = vpop.xlane.xlu0 %3730
          %3732 = vadd.xlane.f32.xlu0 %v3701
          %v3733 = vpop.xlane.xlu0 %3732
          %3734 = vadd.xlane.f32.xlu0 %v3703
          %v3735 = vpop.xlane.xlu0 %3734
          %3736 = vadd.xlane.f32.xlu0 %v3705
          %v3737 = vpop.xlane.xlu0 %3736
          %v3738 = vrcp.pop %v3707
          %v3739 = vrcp.pop %v3709
          %v3740 = vrcp.pop %v3711
          %v3741 = vrcp.pop %v3713
          %v3742 = vrcp.pop %v3715
          %v3743 = vrcp.pop %v3717
          %v3744 = vrcp.pop %v3719
          %v3745 = vrcp.pop %v3721
          %v3746 = vrcp.pop %v3723
          %v3747 = vrcp.pop %v3725
          %v3748 = vrcp.pop %v3727
          %v3749 = vrcp.pop %v3729
          %v3750 = vrcp.pop %v3731
          %v3751 = vrcp.pop %v3733
          %v3752 = vrcp.pop %v3735
          %v3753 = vrcp.pop %v3737
          %v3754 = vmul.f32 %v3675, %v3738
          %v3755 = vmul.f32 %v3677, %v3739
          %v3756 = vmul.f32 %v3679, %v3740
          %v3757 = vmul.f32 %v3681, %v3741
          %v3758 = vmul.f32 %v3683, %v3742
          %v3759 = vmul.f32 %v3685, %v3743
          %v3760 = vmul.f32 %v3687, %v3744
          %v3761 = vmul.f32 %v3689, %v3745
          %v3762 = vmul.f32 %v3691, %v3746
          %v3763 = vmul.f32 %v3693, %v3747
          %v3764 = vmul.f32 %v3695, %v3748
          %v3765 = vmul.f32 %v3697, %v3749
          %v3766 = vmul.f32 %v3699, %v3750
          %v3767 = vmul.f32 %v3701, %v3751
          %v3768 = vmul.f32 %v3703, %v3752
          %v3769 = vmul.f32 %v3705, %v3753
          %v3770 = vpack.c.bf16 %v3755, %v3754
          %v3771 = vpack.c.bf16 %v3757, %v3756
          %v3772 = vpack.c.bf16 %v3759, %v3758
          %v3773 = vpack.c.bf16 %v3761, %v3760
          %v3774 = vpack.c.bf16 %v3763, %v3762
          %v3775 = vpack.c.bf16 %v3765, %v3764
          %v3776 = vpack.c.bf16 %v3767, %v3766
          %v3777 = vpack.c.bf16 %v3769, %v3768
          %3778 = vrot.lane.b32.xlu0 %v1388, 64
          %v3779 = vpop.permute.xlu0 %3778
          %3780 = vrot.lane.b32.xlu0 %v1389, 64
          %v3781 = vpop.permute.xlu0 %3780
          %3782 = vrot.lane.b32.xlu0 %v1390, 64
          %v3783 = vpop.permute.xlu0 %3782
          %3784 = vrot.lane.b32.xlu0 %v1391, 64
          %v3785 = vpop.permute.xlu0 %3784
          %3786 = vrot.lane.b32.xlu0 %v1392, 64
          %v3787 = vpop.permute.xlu0 %3786
          %3788 = vrot.lane.b32.xlu0 %v1393, 64
          %v3789 = vpop.permute.xlu0 %3788
          %3790 = vrot.lane.b32.xlu0 %v1394, 64
          %v3791 = vpop.permute.xlu0 %3790
          %3792 = vrot.lane.b32.xlu0 %v1395, 64
          %v3793 = vpop.permute.xlu0 %3792
          %3802 = vmatprep.subr.bf16.mxu0 0
          %3803 = vmatpush1.bf16.msra.mxu0 %v3779
          %3804 = vmatprep.subr.bf16.mxu0 0
          %3805 = vmatpush1.bf16.msra.mxu0 %v3781
          %3806 = vmatprep.subr.bf16.mxu0 0
          %3807 = vmatpush1.bf16.msra.mxu0 %v3783
          %3808 = vmatprep.subr.bf16.mxu0 0
          %3809 = vmatpush1.bf16.msra.mxu0 %v3785
          %3810 = vmatprep.subr.bf16.mxu0 0
          %3811 = vmatpush1.bf16.msra.mxu0 %v3787
          %3812 = vmatprep.subr.bf16.mxu0 0
          %3813 = vmatpush1.bf16.msra.mxu0 %v3789
          %3814 = vmatprep.subr.bf16.mxu0 0
          %3815 = vmatpush1.bf16.msra.mxu0 %v3791
          %3816 = vmatprep.subr.bf16.mxu0 0
          %3817 = vmatpush1.bf16.msra.mxu0 %v3793
          %3818 = vmatprep.subr.bf16.mxu0 0
          %3819 = vmatpush1.bf16.msra.mxu0 0
          %3820 = vmatprep.subr.bf16.mxu0 0
          %3821 = vmatpush1.bf16.msra.mxu0 0
          %3822 = vmatprep.subr.bf16.mxu0 0
          %3823 = vmatpush1.bf16.msra.mxu0 0
          %3824 = vmatprep.subr.bf16.mxu0 0
          %3825 = vmatpush1.bf16.msra.mxu0 0
          %3826 = vmatprep.subr.bf16.mxu0 0
          %3827 = vmatpush1.bf16.msra.mxu0 0
          %3828 = vmatprep.subr.bf16.mxu0 0
          %3829 = vmatpush1.bf16.msra.mxu0 0
          %3830 = vmatprep.subr.bf16.mxu0 0
          %3831 = vmatpush1.bf16.msra.mxu0 0
          %3832 = vmatprep.subr.bf16.mxu0 0
          %3833 = vmatpush1.bf16.msra.mxu0 0
          %3834 = vmatprep.mubr.bf16.mxu0 0
          %3835 = vmatmul.mubr.bf16.gmra.mrb[0].mxu0 %v3770
          %v3836 = vpop.f32.mrb[0].mxu0
          %v3837 = vadd.f32 0.0, %v3836
          %v3838 = vpop.f32.mrb[0].mxu0
          %v3839 = vpop.f32.mrb[0].mxu0
          %v3840 = vadd.f32 0.0, %v3839
          %v3841 = vpop.f32.mrb[0].mxu0
          %3842 = vmatprep.mubr.bf16.mxu0 0
          %3843 = vmatmul.mubr.bf16.gmra.mrb[0].mxu0 %v3771
          %v3844 = vpop.f32.mrb[0].mxu0
          %v3845 = vadd.f32 0.0, %v3844
          %v3846 = vpop.f32.mrb[0].mxu0
          %v3847 = vpop.f32.mrb[0].mxu0
          %v3848 = vadd.f32 0.0, %v3847
          %v3849 = vpop.f32.mrb[0].mxu0
          %3850 = vmatprep.mubr.bf16.mxu0 0
          %3851 = vmatmul.mubr.bf16.gmra.mrb[0].mxu0 %v3772
          %v3852 = vpop.f32.mrb[0].mxu0
          %v3853 = vadd.f32 0.0, %v3852
          %v3854 = vpop.f32.mrb[0].mxu0
          %v3855 = vpop.f32.mrb[0].mxu0
          %v3856 = vadd.f32 0.0, %v3855
          %v3857 = vpop.f32.mrb[0].mxu0
          %3858 = vmatprep.mubr.bf16.mxu0 0
          %3859 = vmatmul.mubr.bf16.gmra.mrb[0].mxu0 %v3773
          %v3860 = vpop.f32.mrb[0].mxu0
          %v3861 = vadd.f32 0.0, %v3860
          %v3862 = vpop.f32.mrb[0].mxu0
          %v3863 = vpop.f32.mrb[0].mxu0
          %v3864 = vadd.f32 0.0, %v3863
          %v3865 = vpop.f32.mrb[0].mxu0
          %3866 = vmatprep.mubr.bf16.mxu0 0
          %3867 = vmatmul.mubr.bf16.gmra.mrb[0].mxu0 %v3774
          %v3868 = vpop.f32.mrb[0].mxu0
          %v3869 = vadd.f32 0.0, %v3868
          %v3870 = vpop.f32.mrb[0].mxu0
          %v3871 = vpop.f32.mrb[0].mxu0
          %v3872 = vadd.f32 0.0, %v3871
          %v3873 = vpop.f32.mrb[0].mxu0
          %3874 = vmatprep.mubr.bf16.mxu0 0
          %3875 = vmatmul.mubr.bf16.gmra.mrb[0].mxu0 %v3775
          %v3876 = vpop.f32.mrb[0].mxu0
          %v3877 = vadd.f32 0.0, %v3876
          %v3878 = vpop.f32.mrb[0].mxu0
          %v3879 = vpop.f32.mrb[0].mxu0
          %v3880 = vadd.f32 0.0, %v3879
          %v3881 = vpop.f32.mrb[0].mxu0
          %3882 = vmatprep.mubr.bf16.mxu0 0
          %3883 = vmatmul.mubr.bf16.gmra.mrb[0].mxu0 %v3776
          %v3884 = vpop.f32.mrb[0].mxu0
          %v3885 = vadd.f32 0.0, %v3884
          %v3886 = vpop.f32.mrb[0].mxu0
          %v3887 = vpop.f32.mrb[0].mxu0
          %v3888 = vadd.f32 0.0, %v3887
          %v3889 = vpop.f32.mrb[0].mxu0
          %3890 = vmatprep.mubr.bf16.mxu0 0
          %3891 = vmatmul.mubr.bf16.gmra.mrb[0].mxu0 %v3777
          %v3892 = vpop.f32.mrb[0].mxu0
          %v3893 = vadd.f32 0.0, %v3892
          %v3894 = vpop.f32.mrb[0].mxu0
          %v3895 = vpop.f32.mrb[0].mxu0
          %v3896 = vadd.f32 0.0, %v3895
          %v3897 = vpop.f32.mrb[0].mxu0
          %3898 = vdwg.mxu0
          %3915 = vrot.lane.b32.xlu0 %v3837, 64
          %v3916 = vpop.permute.xlu0 %3915
          %3917 = vrot.lane.b32.xlu0 %v3840, 64
          %v3918 = vpop.permute.xlu0 %3917
          %3919 = vrot.lane.b32.xlu0 %v3845, 64
          %v3920 = vpop.permute.xlu0 %3919
          %3921 = vrot.lane.b32.xlu0 %v3848, 64
          %v3922 = vpop.permute.xlu0 %3921
          %3923 = vrot.lane.b32.xlu0 %v3853, 64
          %v3924 = vpop.permute.xlu0 %3923
          %3925 = vrot.lane.b32.xlu0 %v3856, 64
          %v3926 = vpop.permute.xlu0 %3925
          %3927 = vrot.lane.b32.xlu0 %v3861, 64
          %v3928 = vpop.permute.xlu0 %3927
          %3929 = vrot.lane.b32.xlu0 %v3864, 64
          %v3930 = vpop.permute.xlu0 %3929
          %3931 = vrot.lane.b32.xlu0 %v3869, 64
          %v3932 = vpop.permute.xlu0 %3931
          %3933 = vrot.lane.b32.xlu0 %v3872, 64
          %v3934 = vpop.permute.xlu0 %3933
          %3935 = vrot.lane.b32.xlu0 %v3877, 64
          %v3936 = vpop.permute.xlu0 %3935
          %3937 = vrot.lane.b32.xlu0 %v3880, 64
          %v3938 = vpop.permute.xlu0 %3937
          %3939 = vrot.lane.b32.xlu0 %v3885, 64
          %v3940 = vpop.permute.xlu0 %3939
          %3941 = vrot.lane.b32.xlu0 %v3888, 64
          %v3942 = vpop.permute.xlu0 %3941
          %3943 = vrot.lane.b32.xlu0 %v3893, 64
          %v3944 = vpop.permute.xlu0 %3943
          %3945 = vrot.lane.b32.xlu0 %v3896, 64
          %v3946 = vpop.permute.xlu0 %3945
          %vm3963 = vcmask 654848
          %3964 = vst.msk [vmem:[#allocation2] sm:$0xff] %vm3963, %v3916
          %3965 = vst.msk [vmem:[#allocation2 + $0x8] sm:$0xff] %vm3963, %v3918
          %3966 = vst.msk [vmem:[#allocation2 + $0x10] sm:$0xff] %vm3963, %v3920
          %3967 = vst.msk [vmem:[#allocation2 + $0x18] sm:$0xff] %vm3963, %v3922
          %3968 = vst.msk [vmem:[#allocation2 + $0x20] sm:$0xff] %vm3963, %v3924
          %3969 = vst.msk [vmem:[#allocation2 + $0x28] sm:$0xff] %vm3963, %v3926
          %3970 = vst.msk [vmem:[#allocation2 + $0x30] sm:$0xff] %vm3963, %v3928
          %3971 = vst.msk [vmem:[#allocation2 + $0x38] sm:$0xff] %vm3963, %v3930
          %3972 = vst.msk [vmem:[#allocation2 + $0x40] sm:$0xff] %vm3963, %v3932
          %3973 = vst.msk [vmem:[#allocation2 + $0x48] sm:$0xff] %vm3963, %v3934
          %3974 = vst.msk [vmem:[#allocation2 + $0x50] sm:$0xff] %vm3963, %v3936
          %3975 = vst.msk [vmem:[#allocation2 + $0x58] sm:$0xff] %vm3963, %v3938
          %3976 = vst.msk [vmem:[#allocation2 + $0x60] sm:$0xff] %vm3963, %v3940
          %3977 = vst.msk [vmem:[#allocation2 + $0x68] sm:$0xff] %vm3963, %v3942
          %3978 = vst.msk [vmem:[#allocation2 + $0x70] sm:$0xff] %vm3963, %v3944
          %3979 = vst.msk [vmem:[#allocation2 + $0x78] sm:$0xff] %vm3963, %v3946
          %3980 = vrot.lane.b32.xlu0 %v1404, 48
          %v3981 = vpop.permute.xlu0 %3980
          %3982 = vrot.lane.b32.xlu0 %v1405, 48
          %v3983 = vpop.permute.xlu0 %3982
          %3984 = vrot.lane.b32.xlu0 %v1406, 48
          %v3985 = vpop.permute.xlu0 %3984
          %3986 = vrot.lane.b32.xlu0 %v1407, 48
          %v3987 = vpop.permute.xlu0 %3986
          %3988 = vrot.lane.b32.xlu0 %v1408, 48
          %v3989 = vpop.permute.xlu0 %3988
          %3990 = vrot.lane.b32.xlu0 %v1409, 48
          %v3991 = vpop.permute.xlu0 %3990
          %3992 = vrot.lane.b32.xlu0 %v1410, 48
          %v3993 = vpop.permute.xlu0 %3992
          %3994 = vrot.lane.b32.xlu0 %v1411, 48
          %v3995 = vpop.permute.xlu0 %3994
          %3996 = vrot.lane.b32.xlu0 %v1396, 48
          %v3997 = vpop.permute.xlu0 %3996
          %3998 = vrot.lane.b32.xlu0 %v1397, 48
          %v3999 = vpop.permute.xlu0 %3998
          %4000 = vrot.lane.b32.xlu0 %v1398, 48
          %v4001 = vpop.permute.xlu0 %4000
          %4002 = vrot.lane.b32.xlu0 %v1399, 48
          %v4003 = vpop.permute.xlu0 %4002
          %4004 = vrot.lane.b32.xlu0 %v1400, 48
          %v4005 = vpop.permute.xlu0 %4004
          %4006 = vrot.lane.b32.xlu0 %v1401, 48
          %v4007 = vpop.permute.xlu0 %4006
          %4008 = vrot.lane.b32.xlu0 %v1402, 48
          %v4009 = vpop.permute.xlu0 %4008
          %4010 = vrot.lane.b32.xlu0 %v1403, 48
          %v4011 = vpop.permute.xlu0 %4010
          %v4013 = vsel %vm1421, %v3981, 0
          %v4016 = vsel %vm1421, %v3983, 0
          %v4019 = vsel %vm1421, %v3985, 0
          %v4022 = vsel %vm1421, %v3987, 0
          %v4025 = vsel %vm1421, %v3989, 0
          %v4028 = vsel %vm1421, %v3991, 0
          %v4031 = vsel %vm1421, %v3993, 0
          %v4034 = vsel %vm1421, %v3995, 0
          %v4037 = vsel %vm1421, %v3997, 0
          %v4040 = vsel %vm1421, %v3999, 0
          %v4043 = vsel %vm1421, %v4001, 0
          %v4046 = vsel %vm1421, %v4003, 0
          %v4049 = vsel %vm1421, %v4005, 0
          %v4052 = vsel %vm1421, %v4007, 0
          %v4055 = vsel %vm1421, %v4009, 0
          %v4058 = vsel %vm1421, %v4011, 0
          %4060 = vmatprep.subr.bf16.mxu0 0
          %4061 = vmatpush1.bf16.xpose.msra.mxu0 %v4037
          %4062 = vmatprep.subr.bf16.mxu0 0
          %4063 = vmatpush1.bf16.xpose.msra.mxu0 %v4040
          %4064 = vmatprep.subr.bf16.mxu0 0
          %4065 = vmatpush1.bf16.xpose.msra.mxu0 %v4043
          %4066 = vmatprep.subr.bf16.mxu0 0
          %4067 = vmatpush1.bf16.xpose.msra.mxu0 %v4046
          %4068 = vmatprep.subr.bf16.mxu0 0
          %4069 = vmatpush1.bf16.xpose.msra.mxu0 %v4049
          %4070 = vmatprep.subr.bf16.mxu0 0
          %4071 = vmatpush1.bf16.xpose.msra.mxu0 %v4052
          %4072 = vmatprep.subr.bf16.mxu0 0
          %4073 = vmatpush1.bf16.xpose.msra.mxu0 %v4055
          %4074 = vmatprep.subr.bf16.mxu0 0
          %4075 = vmatpush1.bf16.xpose.msra.mxu0 %v4058
          %4076 = vmatprep.subr.bf16.mxu0 0
          %4077 = vmatpush1.bf16.xpose.msra.mxu0 0
          %4078 = vmatprep.subr.bf16.mxu0 0
          %4079 = vmatpush1.bf16.xpose.msra.mxu0 0
          %4080 = vmatprep.subr.bf16.mxu0 0
          %4081 = vmatpush1.bf16.xpose.msra.mxu0 0
          %4082 = vmatprep.subr.bf16.mxu0 0
          %4083 = vmatpush1.bf16.xpose.msra.mxu0 0
          %4084 = vmatprep.subr.bf16.mxu0 0
          %4085 = vmatpush1.bf16.xpose.msra.mxu0 0
          %4086 = vmatprep.subr.bf16.mxu0 0
          %4087 = vmatpush1.bf16.xpose.msra.mxu0 0
          %4088 = vmatprep.subr.bf16.mxu0 0
          %4089 = vmatpush1.bf16.xpose.msra.mxu0 0
          %4090 = vmatprep.subr.bf16.mxu0 0
          %4091 = vmatpush1.bf16.xpose.msra.mxu0 0
          %4092 = vmatprep.mubr.bf16.mxu0 0
          %4093 = vmatmul.mubr.bf16.gmra.mrb[0].mxu0 %v4013
          %v4094 = vpop.f32.mrb[0].mxu0
          %v4095 = vadd.f32 %v1419, %v4094
          %v4096 = vpop.f32.mrb[0].mxu0
          %v4097 = vpop.f32.mrb[0].mxu0
          %v4098 = vadd.f32 %v1419, %v4097
          %v4099 = vpop.f32.mrb[0].mxu0
          %4100 = vmatprep.mubr.bf16.mxu0 0
          %4101 = vmatmul.mubr.bf16.gmra.mrb[0].mxu0 %v4016
          %v4102 = vpop.f32.mrb[0].mxu0
          %v4103 = vadd.f32 %v1419, %v4102
          %v4104 = vpop.f32.mrb[0].mxu0
          %v4105 = vpop.f32.mrb[0].mxu0
          %v4106 = vadd.f32 %v1419, %v4105
          %v4107 = vpop.f32.mrb[0].mxu0
          %4108 = vmatprep.mubr.bf16.mxu0 0
          %4109 = vmatmul.mubr.bf16.gmra.mrb[0].mxu0 %v4019
          %v4110 = vpop.f32.mrb[0].mxu0
          %v4111 = vadd.f32 %v1419, %v4110
          %v4112 = vpop.f32.mrb[0].mxu0
          %v4113 = vpop.f32.mrb[0].mxu0
          %v4114 = vadd.f32 %v1419, %v4113
          %v4115 = vpop.f32.mrb[0].mxu0
          %4116 = vmatprep.mubr.bf16.mxu0 0
          %4117 = vmatmul.mubr.bf16.gmra.mrb[0].mxu0 %v4022
          %v4118 = vpop.f32.mrb[0].mxu0
          %v4119 = vadd.f32 %v1419, %v4118
          %v4120 = vpop.f32.mrb[0].mxu0
          %v4121 = vpop.f32.mrb[0].mxu0
          %v4122 = vadd.f32 %v1419, %v4121
          %v4123 = vpop.f32.mrb[0].mxu0
          %4124 = vmatprep.mubr.bf16.mxu0 0
          %4125 = vmatmul.mubr.bf16.gmra.mrb[0].mxu0 %v4025
          %v4126 = vpop.f32.mrb[0].mxu0
          %v4127 = vadd.f32 %v1419, %v4126
          %v4128 = vpop.f32.mrb[0].mxu0
          %v4129 = vpop.f32.mrb[0].mxu0
          %v4130 = vadd.f32 %v1419, %v4129
          %v4131 = vpop.f32.mrb[0].mxu0
          %4132 = vmatprep.mubr.bf16.mxu0 0
          %4133 = vmatmul.mubr.bf16.gmra.mrb[0].mxu0 %v4028
          %v4134 = vpop.f32.mrb[0].mxu0
          %v4135 = vadd.f32 %v1419, %v4134
          %v4136 = vpop.f32.mrb[0].mxu0
          %v4137 = vpop.f32.mrb[0].mxu0
          %v4138 = vadd.f32 %v1419, %v4137
          %v4139 = vpop.f32.mrb[0].mxu0
          %4140 = vmatprep.mubr.bf16.mxu0 0
          %4141 = vmatmul.mubr.bf16.gmra.mrb[0].mxu0 %v4031
          %v4142 = vpop.f32.mrb[0].mxu0
          %v4143 = vadd.f32 %v1419, %v4142
          %v4144 = vpop.f32.mrb[0].mxu0
          %v4145 = vpop.f32.mrb[0].mxu0
          %v4146 = vadd.f32 %v1419, %v4145
          %v4147 = vpop.f32.mrb[0].mxu0
          %4148 = vmatprep.mubr.bf16.mxu0 0
          %4149 = vmatmul.mubr.bf16.gmra.mrb[0].mxu0 %v4034
          %v4150 = vpop.f32.mrb[0].mxu0
          %v4151 = vadd.f32 %v1419, %v4150
          %v4152 = vpop.f32.mrb[0].mxu0
          %v4153 = vpop.f32.mrb[0].mxu0
          %v4154 = vadd.f32 %v1419, %v4153
          %v4155 = vpop.f32.mrb[0].mxu0
          %4156 = vdwg.mxu0
          %4157 = vmax.xlane.f32.xlu0 %v4095
          %v4158 = vpop.xlane.xlu0 %4157
          %4159 = vmax.xlane.f32.xlu0 %v4098
          %v4160 = vpop.xlane.xlu0 %4159
          %4161 = vmax.xlane.f32.xlu0 %v4103
          %v4162 = vpop.xlane.xlu0 %4161
          %4163 = vmax.xlane.f32.xlu0 %v4106
          %v4164 = vpop.xlane.xlu0 %4163
          %4165 = vmax.xlane.f32.xlu0 %v4111
          %v4166 = vpop.xlane.xlu0 %4165
          %4167 = vmax.xlane.f32.xlu0 %v4114
          %v4168 = vpop.xlane.xlu0 %4167
          %4169 = vmax.xlane.f32.xlu0 %v4119
          %v4170 = vpop.xlane.xlu0 %4169
          %4171 = vmax.xlane.f32.xlu0 %v4122
          %v4172 = vpop.xlane.xlu0 %4171
          %4173 = vmax.xlane.f32.xlu0 %v4127
          %v4174 = vpop.xlane.xlu0 %4173
          %4175 = vmax.xlane.f32.xlu0 %v4130
          %v4176 = vpop.xlane.xlu0 %4175
          %4177 = vmax.xlane.f32.xlu0 %v4135
          %v4178 = vpop.xlane.xlu0 %4177
          %4179 = vmax.xlane.f32.xlu0 %v4138
          %v4180 = vpop.xlane.xlu0 %4179
          %4181 = vmax.xlane.f32.xlu0 %v4143
          %v4182 = vpop.xlane.xlu0 %4181
          %4183 = vmax.xlane.f32.xlu0 %v4146
          %v4184 = vpop.xlane.xlu0 %4183
          %4185 = vmax.xlane.f32.xlu0 %v4151
          %v4186 = vpop.xlane.xlu0 %4185
          %4187 = vmax.xlane.f32.xlu0 %v4154
          %v4188 = vpop.xlane.xlu0 %4187
          %v4189 = vsub.f32 %v4095, %v4158
          %v4190 = vsub.f32 %v4098, %v4160
          %v4191 = vsub.f32 %v4103, %v4162
          %v4192 = vsub.f32 %v4106, %v4164
          %v4193 = vsub.f32 %v4111, %v4166
          %v4194 = vsub.f32 %v4114, %v4168
          %v4195 = vsub.f32 %v4119, %v4170
          %v4196 = vsub.f32 %v4122, %v4172
          %v4197 = vsub.f32 %v4127, %v4174
          %v4198 = vsub.f32 %v4130, %v4176
          %v4199 = vsub.f32 %v4135, %v4178
          %v4200 = vsub.f32 %v4138, %v4180
          %v4201 = vsub.f32 %v4143, %v4182
          %v4202 = vsub.f32 %v4146, %v4184
          %v4203 = vsub.f32 %v4151, %v4186
          %v4204 = vsub.f32 %v4154, %v4188
          %v4205 = vmul.f32 %v4189, 1.442695
          %v4206 = vpow.pop %v4205
          %v4207 = vmul.f32 %v4190, 1.442695
          %v4208 = vpow.pop %v4207
          %v4209 = vmul.f32 %v4191, 1.442695
          %v4210 = vpow.pop %v4209
          %v4211 = vmul.f32 %v4192, 1.442695
          %v4212 = vpow.pop %v4211
          %v4213 = vmul.f32 %v4193, 1.442695
          %v4214 = vpow.pop %v4213
          %v4215 = vmul.f32 %v4194, 1.442695
          %v4216 = vpow.pop %v4215
          %v4217 = vmul.f32 %v4195, 1.442695
          %v4218 = vpow.pop %v4217
          %v4219 = vmul.f32 %v4196, 1.442695
          %v4220 = vpow.pop %v4219
          %v4221 = vmul.f32 %v4197, 1.442695
          %v4222 = vpow.pop %v4221
          %v4223 = vmul.f32 %v4198, 1.442695
          %v4224 = vpow.pop %v4223
          %v4225 = vmul.f32 %v4199, 1.442695
          %v4226 = vpow.pop %v4225
          %v4227 = vmul.f32 %v4200, 1.442695
          %v4228 = vpow.pop %v4227
          %v4229 = vmul.f32 %v4201, 1.442695
          %v4230 = vpow.pop %v4229
          %v4231 = vmul.f32 %v4202, 1.442695
          %v4232 = vpow.pop %v4231
          %v4233 = vmul.f32 %v4203, 1.442695
          %v4234 = vpow.pop %v4233
          %v4235 = vmul.f32 %v4204, 1.442695
          %v4236 = vpow.pop %v4235
          %4237 = vadd.xlane.f32.xlu0 %v4206
          %v4238 = vpop.xlane.xlu0 %4237
          %4239 = vadd.xlane.f32.xlu0 %v4208
          %v4240 = vpop.xlane.xlu0 %4239
          %4241 = vadd.xlane.f32.xlu0 %v4210
          %v4242 = vpop.xlane.xlu0 %4241
          %4243 = vadd.xlane.f32.xlu0 %v4212
          %v4244 = vpop.xlane.xlu0 %4243
          %4245 = vadd.xlane.f32.xlu0 %v4214
          %v4246 = vpop.xlane.xlu0 %4245
          %4247 = vadd.xlane.f32.xlu0 %v4216
          %v4248 = vpop.xlane.xlu0 %4247
          %4249 = vadd.xlane.f32.xlu0 %v4218
          %v4250 = vpop.xlane.xlu0 %4249
          %4251 = vadd.xlane.f32.xlu0 %v4220
          %v4252 = vpop.xlane.xlu0 %4251
          %4253 = vadd.xlane.f32.xlu0 %v4222
          %v4254 = vpop.xlane.xlu0 %4253
          %4255 = vadd.xlane.f32.xlu0 %v4224
          %v4256 = vpop.xlane.xlu0 %4255
          %4257 = vadd.xlane.f32.xlu0 %v4226
          %v4258 = vpop.xlane.xlu0 %4257
          %4259 = vadd.xlane.f32.xlu0 %v4228
          %v4260 = vpop.xlane.xlu0 %4259
          %4261 = vadd.xlane.f32.xlu0 %v4230
          %v4262 = vpop.xlane.xlu0 %4261
          %4263 = vadd.xlane.f32.xlu0 %v4232
          %v4264 = vpop.xlane.xlu0 %4263
          %4265 = vadd.xlane.f32.xlu0 %v4234
          %v4266 = vpop.xlane.xlu0 %4265
          %4267 = vadd.xlane.f32.xlu0 %v4236
          %v4268 = vpop.xlane.xlu0 %4267
          %v4269 = vrcp.pop %v4238
          %v4270 = vrcp.pop %v4240
          %v4271 = vrcp.pop %v4242
          %v4272 = vrcp.pop %v4244
          %v4273 = vrcp.pop %v4246
          %v4274 = vrcp.pop %v4248
          %v4275 = vrcp.pop %v4250
          %v4276 = vrcp.pop %v4252
          %v4277 = vrcp.pop %v4254
          %v4278 = vrcp.pop %v4256
          %v4279 = vrcp.pop %v4258
          %v4280 = vrcp.pop %v4260
          %v4281 = vrcp.pop %v4262
          %v4282 = vrcp.pop %v4264
          %v4283 = vrcp.pop %v4266
          %v4284 = vrcp.pop %v4268
          %v4285 = vmul.f32 %v4206, %v4269
          %v4286 = vmul.f32 %v4208, %v4270
          %v4287 = vmul.f32 %v4210, %v4271
          %v4288 = vmul.f32 %v4212, %v4272
          %v4289 = vmul.f32 %v4214, %v4273
          %v4290 = vmul.f32 %v4216, %v4274
          %v4291 = vmul.f32 %v4218, %v4275
          %v4292 = vmul.f32 %v4220, %v4276
          %v4293 = vmul.f32 %v4222, %v4277
          %v4294 = vmul.f32 %v4224, %v4278
          %v4295 = vmul.f32 %v4226, %v4279
          %v4296 = vmul.f32 %v4228, %v4280
          %v4297 = vmul.f32 %v4230, %v4281
          %v4298 = vmul.f32 %v4232, %v4282
          %v4299 = vmul.f32 %v4234, %v4283
          %v4300 = vmul.f32 %v4236, %v4284
          %v4301 = vpack.c.bf16 %v4286, %v4285
          %v4302 = vpack.c.bf16 %v4288, %v4287
          %v4303 = vpack.c.bf16 %v4290, %v4289
          %v4304 = vpack.c.bf16 %v4292, %v4291
          %v4305 = vpack.c.bf16 %v4294, %v4293
          %v4306 = vpack.c.bf16 %v4296, %v4295
          %v4307 = vpack.c.bf16 %v4298, %v4297
          %v4308 = vpack.c.bf16 %v4300, %v4299
          %4309 = vrot.lane.b32.xlu0 %v1388, 48
          %v4310 = vpop.permute.xlu0 %4309
          %4311 = vrot.lane.b32.xlu0 %v1389, 48
          %v4312 = vpop.permute.xlu0 %4311
          %4313 = vrot.lane.b32.xlu0 %v1390, 48
          %v4314 = vpop.permute.xlu0 %4313
          %4315 = vrot.lane.b32.xlu0 %v1391, 48
          %v4316 = vpop.permute.xlu0 %4315
          %4317 = vrot.lane.b32.xlu0 %v1392, 48
          %v4318 = vpop.permute.xlu0 %4317
          %4319 = vrot.lane.b32.xlu0 %v1393, 48
          %v4320 = vpop.permute.xlu0 %4319
          %4321 = vrot.lane.b32.xlu0 %v1394, 48
          %v4322 = vpop.permute.xlu0 %4321
          %4323 = vrot.lane.b32.xlu0 %v1395, 48
          %v4324 = vpop.permute.xlu0 %4323
          %4333 = vmatprep.subr.bf16.mxu0 0
          %4334 = vmatpush1.bf16.msra.mxu0 %v4310
          %4335 = vmatprep.subr.bf16.mxu0 0
          %4336 = vmatpush1.bf16.msra.mxu0 %v4312
          %4337 = vmatprep.subr.bf16.mxu0 0
          %4338 = vmatpush1.bf16.msra.mxu0 %v4314
          %4339 = vmatprep.subr.bf16.mxu0 0
          %4340 = vmatpush1.bf16.msra.mxu0 %v4316
          %4341 = vmatprep.subr.bf16.mxu0 0
          %4342 = vmatpush1.bf16.msra.mxu0 %v4318
          %4343 = vmatprep.subr.bf16.mxu0 0
          %4344 = vmatpush1.bf16.msra.mxu0 %v4320
          %4345 = vmatprep.subr.bf16.mxu0 0
          %4346 = vmatpush1.bf16.msra.mxu0 %v4322
          %4347 = vmatprep.subr.bf16.mxu0 0
          %4348 = vmatpush1.bf16.msra.mxu0 %v4324
          %4349 = vmatprep.subr.bf16.mxu0 0
          %4350 = vmatpush1.bf16.msra.mxu0 0
          %4351 = vmatprep.subr.bf16.mxu0 0
          %4352 = vmatpush1.bf16.msra.mxu0 0
          %4353 = vmatprep.subr.bf16.mxu0 0
          %4354 = vmatpush1.bf16.msra.mxu0 0
          %4355 = vmatprep.subr.bf16.mxu0 0
          %4356 = vmatpush1.bf16.msra.mxu0 0
          %4357 = vmatprep.subr.bf16.mxu0 0
          %4358 = vmatpush1.bf16.msra.mxu0 0
          %4359 = vmatprep.subr.bf16.mxu0 0
          %4360 = vmatpush1.bf16.msra.mxu0 0
          %4361 = vmatprep.subr.bf16.mxu0 0
          %4362 = vmatpush1.bf16.msra.mxu0 0
          %4363 = vmatprep.subr.bf16.mxu0 0
          %4364 = vmatpush1.bf16.msra.mxu0 0
          %4365 = vmatprep.mubr.bf16.mxu0 0
          %4366 = vmatmul.mubr.bf16.gmra.mrb[0].mxu0 %v4301
          %v4367 = vpop.f32.mrb[0].mxu0
          %v4368 = vadd.f32 0.0, %v4367
          %v4369 = vpop.f32.mrb[0].mxu0
          %v4370 = vpop.f32.mrb[0].mxu0
          %v4371 = vadd.f32 0.0, %v4370
          %v4372 = vpop.f32.mrb[0].mxu0
          %4373 = vmatprep.mubr.bf16.mxu0 0
          %4374 = vmatmul.mubr.bf16.gmra.mrb[0].mxu0 %v4302
          %v4375 = vpop.f32.mrb[0].mxu0
          %v4376 = vadd.f32 0.0, %v4375
          %v4377 = vpop.f32.mrb[0].mxu0
          %v4378 = vpop.f32.mrb[0].mxu0
          %v4379 = vadd.f32 0.0, %v4378
          %v4380 = vpop.f32.mrb[0].mxu0
          %4381 = vmatprep.mubr.bf16.mxu0 0
          %4382 = vmatmul.mubr.bf16.gmra.mrb[0].mxu0 %v4303
          %v4383 = vpop.f32.mrb[0].mxu0
          %v4384 = vadd.f32 0.0, %v4383
          %v4385 = vpop.f32.mrb[0].mxu0
          %v4386 = vpop.f32.mrb[0].mxu0
          %v4387 = vadd.f32 0.0, %v4386
          %v4388 = vpop.f32.mrb[0].mxu0
          %4389 = vmatprep.mubr.bf16.mxu0 0
          %4390 = vmatmul.mubr.bf16.gmra.mrb[0].mxu0 %v4304
          %v4391 = vpop.f32.mrb[0].mxu0
          %v4392 = vadd.f32 0.0, %v4391
          %v4393 = vpop.f32.mrb[0].mxu0
          %v4394 = vpop.f32.mrb[0].mxu0
          %v4395 = vadd.f32 0.0, %v4394
          %v4396 = vpop.f32.mrb[0].mxu0
          %4397 = vmatprep.mubr.bf16.mxu0 0
          %4398 = vmatmul.mubr.bf16.gmra.mrb[0].mxu0 %v4305
          %v4399 = vpop.f32.mrb[0].mxu0
          %v4400 = vadd.f32 0.0, %v4399
          %v4401 = vpop.f32.mrb[0].mxu0
          %v4402 = vpop.f32.mrb[0].mxu0
          %v4403 = vadd.f32 0.0, %v4402
          %v4404 = vpop.f32.mrb[0].mxu0
          %4405 = vmatprep.mubr.bf16.mxu0 0
          %4406 = vmatmul.mubr.bf16.gmra.mrb[0].mxu0 %v4306
          %v4407 = vpop.f32.mrb[0].mxu0
          %v4408 = vadd.f32 0.0, %v4407
          %v4409 = vpop.f32.mrb[0].mxu0
          %v4410 = vpop.f32.mrb[0].mxu0
          %v4411 = vadd.f32 0.0, %v4410
          %v4412 = vpop.f32.mrb[0].mxu0
          %4413 = vmatprep.mubr.bf16.mxu0 0
          %4414 = vmatmul.mubr.bf16.gmra.mrb[0].mxu0 %v4307
          %v4415 = vpop.f32.mrb[0].mxu0
          %v4416 = vadd.f32 0.0, %v4415
          %v4417 = vpop.f32.mrb[0].mxu0
          %v4418 = vpop.f32.mrb[0].mxu0
          %v4419 = vadd.f32 0.0, %v4418
          %v4420 = vpop.f32.mrb[0].mxu0
          %4421 = vmatprep.mubr.bf16.mxu0 0
          %4422 = vmatmul.mubr.bf16.gmra.mrb[0].mxu0 %v4308
          %v4423 = vpop.f32.mrb[0].mxu0
          %v4424 = vadd.f32 0.0, %v4423
          %v4425 = vpop.f32.mrb[0].mxu0
          %v4426 = vpop.f32.mrb[0].mxu0
          %v4427 = vadd.f32 0.0, %v4426
          %v4428 = vpop.f32.mrb[0].mxu0
          %4429 = vdwg.mxu0
          %4446 = vrot.lane.b32.xlu0 %v4368, 80
          %v4447 = vpop.permute.xlu0 %4446
          %4448 = vrot.lane.b32.xlu0 %v4371, 80
          %v4449 = vpop.permute.xlu0 %4448
          %4450 = vrot.lane.b32.xlu0 %v4376, 80
          %v4451 = vpop.permute.xlu0 %4450
          %4452 = vrot.lane.b32.xlu0 %v4379, 80
          %v4453 = vpop.permute.xlu0 %4452
          %4454 = vrot.lane.b32.xlu0 %v4384, 80
          %v4455 = vpop.permute.xlu0 %4454
          %4456 = vrot.lane.b32.xlu0 %v4387, 80
          %v4457 = vpop.permute.xlu0 %4456
          %4458 = vrot.lane.b32.xlu0 %v4392, 80
          %v4459 = vpop.permute.xlu0 %4458
          %4460 = vrot.lane.b32.xlu0 %v4395, 80
          %v4461 = vpop.permute.xlu0 %4460
          %4462 = vrot.lane.b32.xlu0 %v4400, 80
          %v4463 = vpop.permute.xlu0 %4462
          %4464 = vrot.lane.b32.xlu0 %v4403, 80
          %v4465 = vpop.permute.xlu0 %4464
          %4466 = vrot.lane.b32.xlu0 %v4408, 80
          %v4467 = vpop.permute.xlu0 %4466
          %4468 = vrot.lane.b32.xlu0 %v4411, 80
          %v4469 = vpop.permute.xlu0 %4468
          %4470 = vrot.lane.b32.xlu0 %v4416, 80
          %v4471 = vpop.permute.xlu0 %4470
          %4472 = vrot.lane.b32.xlu0 %v4419, 80
          %v4473 = vpop.permute.xlu0 %4472
          %4474 = vrot.lane.b32.xlu0 %v4424, 80
          %v4475 = vpop.permute.xlu0 %4474
          %4476 = vrot.lane.b32.xlu0 %v4427, 80
          %v4477 = vpop.permute.xlu0 %4476
          %vm4494 = vcmask 786048
          %4495 = vst.msk [vmem:[#allocation2] sm:$0xff] %vm4494, %v4447
          %4496 = vst.msk [vmem:[#allocation2 + $0x8] sm:$0xff] %vm4494, %v4449
          %4497 = vst.msk [vmem:[#allocation2 + $0x10] sm:$0xff] %vm4494, %v4451
          %4498 = vst.msk [vmem:[#allocation2 + $0x18] sm:$0xff] %vm4494, %v4453
          %4499 = vst.msk [vmem:[#allocation2 + $0x20] sm:$0xff] %vm4494, %v4455
          %4500 = vst.msk [vmem:[#allocation2 + $0x28] sm:$0xff] %vm4494, %v4457
          %4501 = vst.msk [vmem:[#allocation2 + $0x30] sm:$0xff] %vm4494, %v4459
          %4502 = vst.msk [vmem:[#allocation2 + $0x38] sm:$0xff] %vm4494, %v4461
          %4503 = vst.msk [vmem:[#allocation2 + $0x40] sm:$0xff] %vm4494, %v4463
          %4504 = vst.msk [vmem:[#allocation2 + $0x48] sm:$0xff] %vm4494, %v4465
          %4505 = vst.msk [vmem:[#allocation2 + $0x50] sm:$0xff] %vm4494, %v4467
          %4506 = vst.msk [vmem:[#allocation2 + $0x58] sm:$0xff] %vm4494, %v4469
          %4507 = vst.msk [vmem:[#allocation2 + $0x60] sm:$0xff] %vm4494, %v4471
          %4508 = vst.msk [vmem:[#allocation2 + $0x68] sm:$0xff] %vm4494, %v4473
          %4509 = vst.msk [vmem:[#allocation2 + $0x70] sm:$0xff] %vm4494, %v4475
          %4510 = vst.msk [vmem:[#allocation2 + $0x78] sm:$0xff] %vm4494, %v4477
          %4511 = vrot.lane.b32.xlu0 %v1404, 32
          %v4512 = vpop.permute.xlu0 %4511
          %4513 = vrot.lane.b32.xlu0 %v1405, 32
          %v4514 = vpop.permute.xlu0 %4513
          %4515 = vrot.lane.b32.xlu0 %v1406, 32
          %v4516 = vpop.permute.xlu0 %4515
          %4517 = vrot.lane.b32.xlu0 %v1407, 32
          %v4518 = vpop.permute.xlu0 %4517
          %4519 = vrot.lane.b32.xlu0 %v1408, 32
          %v4520 = vpop.permute.xlu0 %4519
          %4521 = vrot.lane.b32.xlu0 %v1409, 32
          %v4522 = vpop.permute.xlu0 %4521
          %4523 = vrot.lane.b32.xlu0 %v1410, 32
          %v4524 = vpop.permute.xlu0 %4523
          %4525 = vrot.lane.b32.xlu0 %v1411, 32
          %v4526 = vpop.permute.xlu0 %4525
          %4527 = vrot.lane.b32.xlu0 %v1396, 32
          %v4528 = vpop.permute.xlu0 %4527
          %4529 = vrot.lane.b32.xlu0 %v1397, 32
          %v4530 = vpop.permute.xlu0 %4529
          %4531 = vrot.lane.b32.xlu0 %v1398, 32
          %v4532 = vpop.permute.xlu0 %4531
          %4533 = vrot.lane.b32.xlu0 %v1399, 32
          %v4534 = vpop.permute.xlu0 %4533
          %4535 = vrot.lane.b32.xlu0 %v1400, 32
          %v4536 = vpop.permute.xlu0 %4535
          %4537 = vrot.lane.b32.xlu0 %v1401, 32
          %v4538 = vpop.permute.xlu0 %4537
          %4539 = vrot.lane.b32.xlu0 %v1402, 32
          %v4540 = vpop.permute.xlu0 %4539
          %4541 = vrot.lane.b32.xlu0 %v1403, 32
          %v4542 = vpop.permute.xlu0 %4541
          %v4544 = vsel %vm1421, %v4512, 0
          %v4547 = vsel %vm1421, %v4514, 0
          %v4550 = vsel %vm1421, %v4516, 0
          %v4553 = vsel %vm1421, %v4518, 0
          %v4556 = vsel %vm1421, %v4520, 0
          %v4559 = vsel %vm1421, %v4522, 0
          %v4562 = vsel %vm1421, %v4524, 0
          %v4565 = vsel %vm1421, %v4526, 0
          %v4568 = vsel %vm1421, %v4528, 0
          %v4571 = vsel %vm1421, %v4530, 0
          %v4574 = vsel %vm1421, %v4532, 0
          %v4577 = vsel %vm1421, %v4534, 0
          %v4580 = vsel %vm1421, %v4536, 0
          %v4583 = vsel %vm1421, %v4538, 0
          %v4586 = vsel %vm1421, %v4540, 0
          %v4589 = vsel %vm1421, %v4542, 0
          %4591 = vmatprep.subr.bf16.mxu0 0
          %4592 = vmatpush1.bf16.xpose.msra.mxu0 %v4568
          %4593 = vmatprep.subr.bf16.mxu0 0
          %4594 = vmatpush1.bf16.xpose.msra.mxu0 %v4571
          %4595 = vmatprep.subr.bf16.mxu0 0
          %4596 = vmatpush1.bf16.xpose.msra.mxu0 %v4574
          %4597 = vmatprep.subr.bf16.mxu0 0
          %4598 = vmatpush1.bf16.xpose.msra.mxu0 %v4577
          %4599 = vmatprep.subr.bf16.mxu0 0
          %4600 = vmatpush1.bf16.xpose.msra.mxu0 %v4580
          %4601 = vmatprep.subr.bf16.mxu0 0
          %4602 = vmatpush1.bf16.xpose.msra.mxu0 %v4583
          %4603 = vmatprep.subr.bf16.mxu0 0
          %4604 = vmatpush1.bf16.xpose.msra.mxu0 %v4586
          %4605 = vmatprep.subr.bf16.mxu0 0
          %4606 = vmatpush1.bf16.xpose.msra.mxu0 %v4589
          %4607 = vmatprep.subr.bf16.mxu0 0
          %4608 = vmatpush1.bf16.xpose.msra.mxu0 0
          %4609 = vmatprep.subr.bf16.mxu0 0
          %4610 = vmatpush1.bf16.xpose.msra.mxu0 0
          %4611 = vmatprep.subr.bf16.mxu0 0
          %4612 = vmatpush1.bf16.xpose.msra.mxu0 0
          %4613 = vmatprep.subr.bf16.mxu0 0
          %4614 = vmatpush1.bf16.xpose.msra.mxu0 0
          %4615 = vmatprep.subr.bf16.mxu0 0
          %4616 = vmatpush1.bf16.xpose.msra.mxu0 0
          %4617 = vmatprep.subr.bf16.mxu0 0
          %4618 = vmatpush1.bf16.xpose.msra.mxu0 0
          %4619 = vmatprep.subr.bf16.mxu0 0
          %4620 = vmatpush1.bf16.xpose.msra.mxu0 0
          %4621 = vmatprep.subr.bf16.mxu0 0
          %4622 = vmatpush1.bf16.xpose.msra.mxu0 0
          %4623 = vmatprep.mubr.bf16.mxu0 0
          %4624 = vmatmul.mubr.bf16.gmra.mrb[0].mxu0 %v4544
          %v4625 = vpop.f32.mrb[0].mxu0
          %v4626 = vadd.f32 %v1419, %v4625
          %v4627 = vpop.f32.mrb[0].mxu0
          %v4628 = vpop.f32.mrb[0].mxu0
          %v4629 = vadd.f32 %v1419, %v4628
          %v4630 = vpop.f32.mrb[0].mxu0
          %4631 = vmatprep.mubr.bf16.mxu0 0
          %4632 = vmatmul.mubr.bf16.gmra.mrb[0].mxu0 %v4547
          %v4633 = vpop.f32.mrb[0].mxu0
          %v4634 = vadd.f32 %v1419, %v4633
          %v4635 = vpop.f32.mrb[0].mxu0
          %v4636 = vpop.f32.mrb[0].mxu0
          %v4637 = vadd.f32 %v1419, %v4636
          %v4638 = vpop.f32.mrb[0].mxu0
          %4639 = vmatprep.mubr.bf16.mxu0 0
          %4640 = vmatmul.mubr.bf16.gmra.mrb[0].mxu0 %v4550
          %v4641 = vpop.f32.mrb[0].mxu0
          %v4642 = vadd.f32 %v1419, %v4641
          %v4643 = vpop.f32.mrb[0].mxu0
          %v4644 = vpop.f32.mrb[0].mxu0
          %v4645 = vadd.f32 %v1419, %v4644
          %v4646 = vpop.f32.mrb[0].mxu0
          %4647 = vmatprep.mubr.bf16.mxu0 0
          %4648 = vmatmul.mubr.bf16.gmra.mrb[0].mxu0 %v4553
          %v4649 = vpop.f32.mrb[0].mxu0
          %v4650 = vadd.f32 %v1419, %v4649
          %v4651 = vpop.f32.mrb[0].mxu0
          %v4652 = vpop.f32.mrb[0].mxu0
          %v4653 = vadd.f32 %v1419, %v4652
          %v4654 = vpop.f32.mrb[0].mxu0
          %4655 = vmatprep.mubr.bf16.mxu0 0
          %4656 = vmatmul.mubr.bf16.gmra.mrb[0].mxu0 %v4556
          %v4657 = vpop.f32.mrb[0].mxu0
          %v4658 = vadd.f32 %v1419, %v4657
          %v4659 = vpop.f32.mrb[0].mxu0
          %v4660 = vpop.f32.mrb[0].mxu0
          %v4661 = vadd.f32 %v1419, %v4660
          %v4662 = vpop.f32.mrb[0].mxu0
          %4663 = vmatprep.mubr.bf16.mxu0 0
          %4664 = vmatmul.mubr.bf16.gmra.mrb[0].mxu0 %v4559
          %v4665 = vpop.f32.mrb[0].mxu0
          %v4666 = vadd.f32 %v1419, %v4665
          %v4667 = vpop.f32.mrb[0].mxu0
          %v4668 = vpop.f32.mrb[0].mxu0
          %v4669 = vadd.f32 %v1419, %v4668
          %v4670 = vpop.f32.mrb[0].mxu0
          %4671 = vmatprep.mubr.bf16.mxu0 0
          %4672 = vmatmul.mubr.bf16.gmra.mrb[0].mxu0 %v4562
          %v4673 = vpop.f32.mrb[0].mxu0
          %v4674 = vadd.f32 %v1419, %v4673
          %v4675 = vpop.f32.mrb[0].mxu0
          %v4676 = vpop.f32.mrb[0].mxu0
          %v4677 = vadd.f32 %v1419, %v4676
          %v4678 = vpop.f32.mrb[0].mxu0
          %4679 = vmatprep.mubr.bf16.mxu0 0
          %4680 = vmatmul.mubr.bf16.gmra.mrb[0].mxu0 %v4565
          %v4681 = vpop.f32.mrb[0].mxu0
          %v4682 = vadd.f32 %v1419, %v4681
          %v4683 = vpop.f32.mrb[0].mxu0
          %v4684 = vpop.f32.mrb[0].mxu0
          %v4685 = vadd.f32 %v1419, %v4684
          %v4686 = vpop.f32.mrb[0].mxu0
          %4687 = vdwg.mxu0
          %4688 = vmax.xlane.f32.xlu0 %v4626
          %v4689 = vpop.xlane.xlu0 %4688
          %4690 = vmax.xlane.f32.xlu0 %v4629
          %v4691 = vpop.xlane.xlu0 %4690
          %4692 = vmax.xlane.f32.xlu0 %v4634
          %v4693 = vpop.xlane.xlu0 %4692
          %4694 = vmax.xlane.f32.xlu0 %v4637
          %v4695 = vpop.xlane.xlu0 %4694
          %4696 = vmax.xlane.f32.xlu0 %v4642
          %v4697 = vpop.xlane.xlu0 %4696
          %4698 = vmax.xlane.f32.xlu0 %v4645
          %v4699 = vpop.xlane.xlu0 %4698
          %4700 = vmax.xlane.f32.xlu0 %v4650
          %v4701 = vpop.xlane.xlu0 %4700
          %4702 = vmax.xlane.f32.xlu0 %v4653
          %v4703 = vpop.xlane.xlu0 %4702
          %4704 = vmax.xlane.f32.xlu0 %v4658
          %v4705 = vpop.xlane.xlu0 %4704
          %4706 = vmax.xlane.f32.xlu0 %v4661
          %v4707 = vpop.xlane.xlu0 %4706
          %4708 = vmax.xlane.f32.xlu0 %v4666
          %v4709 = vpop.xlane.xlu0 %4708
          %4710 = vmax.xlane.f32.xlu0 %v4669
          %v4711 = vpop.xlane.xlu0 %4710
          %4712 = vmax.xlane.f32.xlu0 %v4674
          %v4713 = vpop.xlane.xlu0 %4712
          %4714 = vmax.xlane.f32.xlu0 %v4677
          %v4715 = vpop.xlane.xlu0 %4714
          %4716 = vmax.xlane.f32.xlu0 %v4682
          %v4717 = vpop.xlane.xlu0 %4716
          %4718 = vmax.xlane.f32.xlu0 %v4685
          %v4719 = vpop.xlane.xlu0 %4718
          %v4720 = vsub.f32 %v4626, %v4689
          %v4721 = vsub.f32 %v4629, %v4691
          %v4722 = vsub.f32 %v4634, %v4693
          %v4723 = vsub.f32 %v4637, %v4695
          %v4724 = vsub.f32 %v4642, %v4697
          %v4725 = vsub.f32 %v4645, %v4699
          %v4726 = vsub.f32 %v4650, %v4701
          %v4727 = vsub.f32 %v4653, %v4703
          %v4728 = vsub.f32 %v4658, %v4705
          %v4729 = vsub.f32 %v4661, %v4707
          %v4730 = vsub.f32 %v4666, %v4709
          %v4731 = vsub.f32 %v4669, %v4711
          %v4732 = vsub.f32 %v4674, %v4713
          %v4733 = vsub.f32 %v4677, %v4715
          %v4734 = vsub.f32 %v4682, %v4717
          %v4735 = vsub.f32 %v4685, %v4719
          %v4736 = vmul.f32 %v4720, 1.442695
          %v4737 = vpow.pop %v4736
          %v4738 = vmul.f32 %v4721, 1.442695
          %v4739 = vpow.pop %v4738
          %v4740 = vmul.f32 %v4722, 1.442695
          %v4741 = vpow.pop %v4740
          %v4742 = vmul.f32 %v4723, 1.442695
          %v4743 = vpow.pop %v4742
          %v4744 = vmul.f32 %v4724, 1.442695
          %v4745 = vpow.pop %v4744
          %v4746 = vmul.f32 %v4725, 1.442695
          %v4747 = vpow.pop %v4746
          %v4748 = vmul.f32 %v4726, 1.442695
          %v4749 = vpow.pop %v4748
          %v4750 = vmul.f32 %v4727, 1.442695
          %v4751 = vpow.pop %v4750
          %v4752 = vmul.f32 %v4728, 1.442695
          %v4753 = vpow.pop %v4752
          %v4754 = vmul.f32 %v4729, 1.442695
          %v4755 = vpow.pop %v4754
          %v4756 = vmul.f32 %v4730, 1.442695
          %v4757 = vpow.pop %v4756
          %v4758 = vmul.f32 %v4731, 1.442695
          %v4759 = vpow.pop %v4758
          %v4760 = vmul.f32 %v4732, 1.442695
          %v4761 = vpow.pop %v4760
          %v4762 = vmul.f32 %v4733, 1.442695
          %v4763 = vpow.pop %v4762
          %v4764 = vmul.f32 %v4734, 1.442695
          %v4765 = vpow.pop %v4764
          %v4766 = vmul.f32 %v4735, 1.442695
          %v4767 = vpow.pop %v4766
          %4768 = vadd.xlane.f32.xlu0 %v4737
          %v4769 = vpop.xlane.xlu0 %4768
          %4770 = vadd.xlane.f32.xlu0 %v4739
          %v4771 = vpop.xlane.xlu0 %4770
          %4772 = vadd.xlane.f32.xlu0 %v4741
          %v4773 = vpop.xlane.xlu0 %4772
          %4774 = vadd.xlane.f32.xlu0 %v4743
          %v4775 = vpop.xlane.xlu0 %4774
          %4776 = vadd.xlane.f32.xlu0 %v4745
          %v4777 = vpop.xlane.xlu0 %4776
          %4778 = vadd.xlane.f32.xlu0 %v4747
          %v4779 = vpop.xlane.xlu0 %4778
          %4780 = vadd.xlane.f32.xlu0 %v4749
          %v4781 = vpop.xlane.xlu0 %4780
          %4782 = vadd.xlane.f32.xlu0 %v4751
          %v4783 = vpop.xlane.xlu0 %4782
          %4784 = vadd.xlane.f32.xlu0 %v4753
          %v4785 = vpop.xlane.xlu0 %4784
          %4786 = vadd.xlane.f32.xlu0 %v4755
          %v4787 = vpop.xlane.xlu0 %4786
          %4788 = vadd.xlane.f32.xlu0 %v4757
          %v4789 = vpop.xlane.xlu0 %4788
          %4790 = vadd.xlane.f32.xlu0 %v4759
          %v4791 = vpop.xlane.xlu0 %4790
          %4792 = vadd.xlane.f32.xlu0 %v4761
          %v4793 = vpop.xlane.xlu0 %4792
          %4794 = vadd.xlane.f32.xlu0 %v4763
          %v4795 = vpop.xlane.xlu0 %4794
          %4796 = vadd.xlane.f32.xlu0 %v4765
          %v4797 = vpop.xlane.xlu0 %4796
          %4798 = vadd.xlane.f32.xlu0 %v4767
          %v4799 = vpop.xlane.xlu0 %4798
          %v4800 = vrcp.pop %v4769
          %v4801 = vrcp.pop %v4771
          %v4802 = vrcp.pop %v4773
          %v4803 = vrcp.pop %v4775
          %v4804 = vrcp.pop %v4777
          %v4805 = vrcp.pop %v4779
          %v4806 = vrcp.pop %v4781
          %v4807 = vrcp.pop %v4783
          %v4808 = vrcp.pop %v4785
          %v4809 = vrcp.pop %v4787
          %v4810 = vrcp.pop %v4789
          %v4811 = vrcp.pop %v4791
          %v4812 = vrcp.pop %v4793
          %v4813 = vrcp.pop %v4795
          %v4814 = vrcp.pop %v4797
          %v4815 = vrcp.pop %v4799
          %v4816 = vmul.f32 %v4737, %v4800
          %v4817 = vmul.f32 %v4739, %v4801
          %v4818 = vmul.f32 %v4741, %v4802
          %v4819 = vmul.f32 %v4743, %v4803
          %v4820 = vmul.f32 %v4745, %v4804
          %v4821 = vmul.f32 %v4747, %v4805
          %v4822 = vmul.f32 %v4749, %v4806
          %v4823 = vmul.f32 %v4751, %v4807
          %v4824 = vmul.f32 %v4753, %v4808
          %v4825 = vmul.f32 %v4755, %v4809
          %v4826 = vmul.f32 %v4757, %v4810
          %v4827 = vmul.f32 %v4759, %v4811
          %v4828 = vmul.f32 %v4761, %v4812
          %v4829 = vmul.f32 %v4763, %v4813
          %v4830 = vmul.f32 %v4765, %v4814
          %v4831 = vmul.f32 %v4767, %v4815
          %v4832 = vpack.c.bf16 %v4817, %v4816
          %v4833 = vpack.c.bf16 %v4819, %v4818
          %v4834 = vpack.c.bf16 %v4821, %v4820
          %v4835 = vpack.c.bf16 %v4823, %v4822
          %v4836 = vpack.c.bf16 %v4825, %v4824
          %v4837 = vpack.c.bf16 %v4827, %v4826
          %v4838 = vpack.c.bf16 %v4829, %v4828
          %v4839 = vpack.c.bf16 %v4831, %v4830
          %4840 = vrot.lane.b32.xlu0 %v1388, 32
          %v4841 = vpop.permute.xlu0 %4840
          %4842 = vrot.lane.b32.xlu0 %v1389, 32
          %v4843 = vpop.permute.xlu0 %4842
          %4844 = vrot.lane.b32.xlu0 %v1390, 32
          %v4845 = vpop.permute.xlu0 %4844
          %4846 = vrot.lane.b32.xlu0 %v1391, 32
          %v4847 = vpop.permute.xlu0 %4846
          %4848 = vrot.lane.b32.xlu0 %v1392, 32
          %v4849 = vpop.permute.xlu0 %4848
          %4850 = vrot.lane.b32.xlu0 %v1393, 32
          %v4851 = vpop.permute.xlu0 %4850
          %4852 = vrot.lane.b32.xlu0 %v1394, 32
          %v4853 = vpop.permute.xlu0 %4852
          %4854 = vrot.lane.b32.xlu0 %v1395, 32
          %v4855 = vpop.permute.xlu0 %4854
          %4864 = vmatprep.subr.bf16.mxu0 0
          %4865 = vmatpush1.bf16.msra.mxu0 %v4841
          %4866 = vmatprep.subr.bf16.mxu0 0
          %4867 = vmatpush1.bf16.msra.mxu0 %v4843
          %4868 = vmatprep.subr.bf16.mxu0 0
          %4869 = vmatpush1.bf16.msra.mxu0 %v4845
          %4870 = vmatprep.subr.bf16.mxu0 0
          %4871 = vmatpush1.bf16.msra.mxu0 %v4847
          %4872 = vmatprep.subr.bf16.mxu0 0
          %4873 = vmatpush1.bf16.msra.mxu0 %v4849
          %4874 = vmatprep.subr.bf16.mxu0 0
          %4875 = vmatpush1.bf16.msra.mxu0 %v4851
          %4876 = vmatprep.subr.bf16.mxu0 0
          %4877 = vmatpush1.bf16.msra.mxu0 %v4853
          %4878 = vmatprep.subr.bf16.mxu0 0
          %4879 = vmatpush1.bf16.msra.mxu0 %v4855
          %4880 = vmatprep.subr.bf16.mxu0 0
          %4881 = vmatpush1.bf16.msra.mxu0 0
          %4882 = vmatprep.subr.bf16.mxu0 0
          %4883 = vmatpush1.bf16.msra.mxu0 0
          %4884 = vmatprep.subr.bf16.mxu0 0
          %4885 = vmatpush1.bf16.msra.mxu0 0
          %4886 = vmatprep.subr.bf16.mxu0 0
          %4887 = vmatpush1.bf16.msra.mxu0 0
          %4888 = vmatprep.subr.bf16.mxu0 0
          %4889 = vmatpush1.bf16.msra.mxu0 0
          %4890 = vmatprep.subr.bf16.mxu0 0
          %4891 = vmatpush1.bf16.msra.mxu0 0
          %4892 = vmatprep.subr.bf16.mxu0 0
          %4893 = vmatpush1.bf16.msra.mxu0 0
          %4894 = vmatprep.subr.bf16.mxu0 0
          %4895 = vmatpush1.bf16.msra.mxu0 0
          %4896 = vmatprep.mubr.bf16.mxu0 0
          %4897 = vmatmul.mubr.bf16.gmra.mrb[0].mxu0 %v4832
          %v4898 = vpop.f32.mrb[0].mxu0
          %v4899 = vadd.f32 0.0, %v4898
          %v4900 = vpop.f32.mrb[0].mxu0
          %v4901 = vpop.f32.mrb[0].mxu0
          %v4902 = vadd.f32 0.0, %v4901
          %v4903 = vpop.f32.mrb[0].mxu0
          %4904 = vmatprep.mubr.bf16.mxu0 0
          %4905 = vmatmul.mubr.bf16.gmra.mrb[0].mxu0 %v4833
          %v4906 = vpop.f32.mrb[0].mxu0
          %v4907 = vadd.f32 0.0, %v4906
          %v4908 = vpop.f32.mrb[0].mxu0
          %v4909 = vpop.f32.mrb[0].mxu0
          %v4910 = vadd.f32 0.0, %v4909
          %v4911 = vpop.f32.mrb[0].mxu0
          %4912 = vmatprep.mubr.bf16.mxu0 0
          %4913 = vmatmul.mubr.bf16.gmra.mrb[0].mxu0 %v4834
          %v4914 = vpop.f32.mrb[0].mxu0
          %v4915 = vadd.f32 0.0, %v4914
          %v4916 = vpop.f32.mrb[0].mxu0
          %v4917 = vpop.f32.mrb[0].mxu0
          %v4918 = vadd.f32 0.0, %v4917
          %v4919 = vpop.f32.mrb[0].mxu0
          %4920 = vmatprep.mubr.bf16.mxu0 0
          %4921 = vmatmul.mubr.bf16.gmra.mrb[0].mxu0 %v4835
          %v4922 = vpop.f32.mrb[0].mxu0
          %v4923 = vadd.f32 0.0, %v4922
          %v4924 = vpop.f32.mrb[0].mxu0
          %v4925 = vpop.f32.mrb[0].mxu0
          %v4926 = vadd.f32 0.0, %v4925
          %v4927 = vpop.f32.mrb[0].mxu0
          %4928 = vmatprep.mubr.bf16.mxu0 0
          %4929 = vmatmul.mubr.bf16.gmra.mrb[0].mxu0 %v4836
          %v4930 = vpop.f32.mrb[0].mxu0
          %v4931 = vadd.f32 0.0, %v4930
          %v4932 = vpop.f32.mrb[0].mxu0
          %v4933 = vpop.f32.mrb[0].mxu0
          %v4934 = vadd.f32 0.0, %v4933
          %v4935 = vpop.f32.mrb[0].mxu0
          %4936 = vmatprep.mubr.bf16.mxu0 0
          %4937 = vmatmul.mubr.bf16.gmra.mrb[0].mxu0 %v4837
          %v4938 = vpop.f32.mrb[0].mxu0
          %v4939 = vadd.f32 0.0, %v4938
          %v4940 = vpop.f32.mrb[0].mxu0
          %v4941 = vpop.f32.mrb[0].mxu0
          %v4942 = vadd.f32 0.0, %v4941
          %v4943 = vpop.f32.mrb[0].mxu0
          %4944 = vmatprep.mubr.bf16.mxu0 0
          %4945 = vmatmul.mubr.bf16.gmra.mrb[0].mxu0 %v4838
          %v4946 = vpop.f32.mrb[0].mxu0
          %v4947 = vadd.f32 0.0, %v4946
          %v4948 = vpop.f32.mrb[0].mxu0
          %v4949 = vpop.f32.mrb[0].mxu0
          %v4950 = vadd.f32 0.0, %v4949
          %v4951 = vpop.f32.mrb[0].mxu0
          %4952 = vmatprep.mubr.bf16.mxu0 0
          %4953 = vmatmul.mubr.bf16.gmra.mrb[0].mxu0 %v4839
          %v4954 = vpop.f32.mrb[0].mxu0
          %v4955 = vadd.f32 0.0, %v4954
          %v4956 = vpop.f32.mrb[0].mxu0
          %v4957 = vpop.f32.mrb[0].mxu0
          %v4958 = vadd.f32 0.0, %v4957
          %v4959 = vpop.f32.mrb[0].mxu0
          %4960 = vdwg.mxu0
          %4977 = vrot.lane.b32.xlu0 %v4899, 96
          %v4978 = vpop.permute.xlu0 %4977
          %4979 = vrot.lane.b32.xlu0 %v4902, 96
          %v4980 = vpop.permute.xlu0 %4979
          %4981 = vrot.lane.b32.xlu0 %v4907, 96
          %v4982 = vpop.permute.xlu0 %4981
          %4983 = vrot.lane.b32.xlu0 %v4910, 96
          %v4984 = vpop.permute.xlu0 %4983
          %4985 = vrot.lane.b32.xlu0 %v4915, 96
          %v4986 = vpop.permute.xlu0 %4985
          %4987 = vrot.lane.b32.xlu0 %v4918, 96
          %v4988 = vpop.permute.xlu0 %4987
          %4989 = vrot.lane.b32.xlu0 %v4923, 96
          %v4990 = vpop.permute.xlu0 %4989
          %4991 = vrot.lane.b32.xlu0 %v4926, 96
          %v4992 = vpop.permute.xlu0 %4991
          %4993 = vrot.lane.b32.xlu0 %v4931, 96
          %v4994 = vpop.permute.xlu0 %4993
          %4995 = vrot.lane.b32.xlu0 %v4934, 96
          %v4996 = vpop.permute.xlu0 %4995
          %4997 = vrot.lane.b32.xlu0 %v4939, 96
          %v4998 = vpop.permute.xlu0 %4997
          %4999 = vrot.lane.b32.xlu0 %v4942, 96
          %v5000 = vpop.permute.xlu0 %4999
          %5001 = vrot.lane.b32.xlu0 %v4947, 96
          %v5002 = vpop.permute.xlu0 %5001
          %5003 = vrot.lane.b32.xlu0 %v4950, 96
          %v5004 = vpop.permute.xlu0 %5003
          %5005 = vrot.lane.b32.xlu0 %v4955, 96
          %v5006 = vpop.permute.xlu0 %5005
          %5007 = vrot.lane.b32.xlu0 %v4958, 96
          %v5008 = vpop.permute.xlu0 %5007
          %vm5025 = vcmask 917248
          %5026 = vst.msk [vmem:[#allocation2] sm:$0xff] %vm5025, %v4978
          %5027 = vst.msk [vmem:[#allocation2 + $0x8] sm:$0xff] %vm5025, %v4980
          %5028 = vst.msk [vmem:[#allocation2 + $0x10] sm:$0xff] %vm5025, %v4982
          %5029 = vst.msk [vmem:[#allocation2 + $0x18] sm:$0xff] %vm5025, %v4984
          %5030 = vst.msk [vmem:[#allocation2 + $0x20] sm:$0xff] %vm5025, %v4986
          %5031 = vst.msk [vmem:[#allocation2 + $0x28] sm:$0xff] %vm5025, %v4988
          %5032 = vst.msk [vmem:[#allocation2 + $0x30] sm:$0xff] %vm5025, %v4990
          %5033 = vst.msk [vmem:[#allocation2 + $0x38] sm:$0xff] %vm5025, %v4992
          %5034 = vst.msk [vmem:[#allocation2 + $0x40] sm:$0xff] %vm5025, %v4994
          %5035 = vst.msk [vmem:[#allocation2 + $0x48] sm:$0xff] %vm5025, %v4996
          %5036 = vst.msk [vmem:[#allocation2 + $0x50] sm:$0xff] %vm5025, %v4998
          %5037 = vst.msk [vmem:[#allocation2 + $0x58] sm:$0xff] %vm5025, %v5000
          %5038 = vst.msk [vmem:[#allocation2 + $0x60] sm:$0xff] %vm5025, %v5002
          %5039 = vst.msk [vmem:[#allocation2 + $0x68] sm:$0xff] %vm5025, %v5004
          %5040 = vst.msk [vmem:[#allocation2 + $0x70] sm:$0xff] %vm5025, %v5006
          %5041 = vst.msk [vmem:[#allocation2 + $0x78] sm:$0xff] %vm5025, %v5008
          %5042 = vrot.lane.b32.xlu0 %v1404, 16
          %v5043 = vpop.permute.xlu0 %5042
          %5044 = vrot.lane.b32.xlu0 %v1405, 16
          %v5045 = vpop.permute.xlu0 %5044
          %5046 = vrot.lane.b32.xlu0 %v1406, 16
          %v5047 = vpop.permute.xlu0 %5046
          %5048 = vrot.lane.b32.xlu0 %v1407, 16
          %v5049 = vpop.permute.xlu0 %5048
          %5050 = vrot.lane.b32.xlu0 %v1408, 16
          %v5051 = vpop.permute.xlu0 %5050
          %5052 = vrot.lane.b32.xlu0 %v1409, 16
          %v5053 = vpop.permute.xlu0 %5052
          %5054 = vrot.lane.b32.xlu0 %v1410, 16
          %v5055 = vpop.permute.xlu0 %5054
          %5056 = vrot.lane.b32.xlu0 %v1411, 16
          %v5057 = vpop.permute.xlu0 %5056
          %5058 = vrot.lane.b32.xlu0 %v1396, 16
          %v5059 = vpop.permute.xlu0 %5058
          %5060 = vrot.lane.b32.xlu0 %v1397, 16
          %v5061 = vpop.permute.xlu0 %5060
          %5062 = vrot.lane.b32.xlu0 %v1398, 16
          %v5063 = vpop.permute.xlu0 %5062
          %5064 = vrot.lane.b32.xlu0 %v1399, 16
          %v5065 = vpop.permute.xlu0 %5064
          %5066 = vrot.lane.b32.xlu0 %v1400, 16
          %v5067 = vpop.permute.xlu0 %5066
          %5068 = vrot.lane.b32.xlu0 %v1401, 16
          %v5069 = vpop.permute.xlu0 %5068
          %5070 = vrot.lane.b32.xlu0 %v1402, 16
          %v5071 = vpop.permute.xlu0 %5070
          %5072 = vrot.lane.b32.xlu0 %v1403, 16
          %v5073 = vpop.permute.xlu0 %5072
          %v5075 = vsel %vm1421, %v5043, 0
          %v5078 = vsel %vm1421, %v5045, 0
          %v5081 = vsel %vm1421, %v5047, 0
          %v5084 = vsel %vm1421, %v5049, 0
          %v5087 = vsel %vm1421, %v5051, 0
          %v5090 = vsel %vm1421, %v5053, 0
          %v5093 = vsel %vm1421, %v5055, 0
          %v5096 = vsel %vm1421, %v5057, 0
          %v5099 = vsel %vm1421, %v5059, 0
          %v5102 = vsel %vm1421, %v5061, 0
          %v5105 = vsel %vm1421, %v5063, 0
          %v5108 = vsel %vm1421, %v5065, 0
          %v5111 = vsel %vm1421, %v5067, 0
          %v5114 = vsel %vm1421, %v5069, 0
          %v5117 = vsel %vm1421, %v5071, 0
          %v5120 = vsel %vm1421, %v5073, 0
          %5122 = vmatprep.subr.bf16.mxu0 0
          %5123 = vmatpush1.bf16.xpose.msra.mxu0 %v5099
          %5124 = vmatprep.subr.bf16.mxu0 0
          %5125 = vmatpush1.bf16.xpose.msra.mxu0 %v5102
          %5126 = vmatprep.subr.bf16.mxu0 0
          %5127 = vmatpush1.bf16.xpose.msra.mxu0 %v5105
          %5128 = vmatprep.subr.bf16.mxu0 0
          %5129 = vmatpush1.bf16.xpose.msra.mxu0 %v5108
          %5130 = vmatprep.subr.bf16.mxu0 0
          %5131 = vmatpush1.bf16.xpose.msra.mxu0 %v5111
          %5132 = vmatprep.subr.bf16.mxu0 0
          %5133 = vmatpush1.bf16.xpose.msra.mxu0 %v5114
          %5134 = vmatprep.subr.bf16.mxu0 0
          %5135 = vmatpush1.bf16.xpose.msra.mxu0 %v5117
          %5136 = vmatprep.subr.bf16.mxu0 0
          %5137 = vmatpush1.bf16.xpose.msra.mxu0 %v5120
          %5138 = vmatprep.subr.bf16.mxu0 0
          %5139 = vmatpush1.bf16.xpose.msra.mxu0 0
          %5140 = vmatprep.subr.bf16.mxu0 0
          %5141 = vmatpush1.bf16.xpose.msra.mxu0 0
          %5142 = vmatprep.subr.bf16.mxu0 0
          %5143 = vmatpush1.bf16.xpose.msra.mxu0 0
          %5144 = vmatprep.subr.bf16.mxu0 0
          %5145 = vmatpush1.bf16.xpose.msra.mxu0 0
          %5146 = vmatprep.subr.bf16.mxu0 0
          %5147 = vmatpush1.bf16.xpose.msra.mxu0 0
          %5148 = vmatprep.subr.bf16.mxu0 0
          %5149 = vmatpush1.bf16.xpose.msra.mxu0 0
          %5150 = vmatprep.subr.bf16.mxu0 0
          %5151 = vmatpush1.bf16.xpose.msra.mxu0 0
          %5152 = vmatprep.subr.bf16.mxu0 0
          %5153 = vmatpush1.bf16.xpose.msra.mxu0 0
          %5154 = vmatprep.mubr.bf16.mxu0 0
          %5155 = vmatmul.mubr.bf16.gmra.mrb[0].mxu0 %v5075
          %v5156 = vpop.f32.mrb[0].mxu0
          %v5157 = vadd.f32 %v1419, %v5156
          %v5158 = vpop.f32.mrb[0].mxu0
          %v5159 = vpop.f32.mrb[0].mxu0
          %v5160 = vadd.f32 %v1419, %v5159
          %v5161 = vpop.f32.mrb[0].mxu0
          %5162 = vmatprep.mubr.bf16.mxu0 0
          %5163 = vmatmul.mubr.bf16.gmra.mrb[0].mxu0 %v5078
          %v5164 = vpop.f32.mrb[0].mxu0
          %v5165 = vadd.f32 %v1419, %v5164
          %v5166 = vpop.f32.mrb[0].mxu0
          %v5167 = vpop.f32.mrb[0].mxu0
          %v5168 = vadd.f32 %v1419, %v5167
          %v5169 = vpop.f32.mrb[0].mxu0
          %5170 = vmatprep.mubr.bf16.mxu0 0
          %5171 = vmatmul.mubr.bf16.gmra.mrb[0].mxu0 %v5081
          %v5172 = vpop.f32.mrb[0].mxu0
          %v5173 = vadd.f32 %v1419, %v5172
          %v5174 = vpop.f32.mrb[0].mxu0
          %v5175 = vpop.f32.mrb[0].mxu0
          %v5176 = vadd.f32 %v1419, %v5175
          %v5177 = vpop.f32.mrb[0].mxu0
          %5178 = vmatprep.mubr.bf16.mxu0 0
          %5179 = vmatmul.mubr.bf16.gmra.mrb[0].mxu0 %v5084
          %v5180 = vpop.f32.mrb[0].mxu0
          %v5181 = vadd.f32 %v1419, %v5180
          %v5182 = vpop.f32.mrb[0].mxu0
          %v5183 = vpop.f32.mrb[0].mxu0
          %v5184 = vadd.f32 %v1419, %v5183
          %v5185 = vpop.f32.mrb[0].mxu0
          %5186 = vmatprep.mubr.bf16.mxu0 0
          %5187 = vmatmul.mubr.bf16.gmra.mrb[0].mxu0 %v5087
          %v5188 = vpop.f32.mrb[0].mxu0
          %v5189 = vadd.f32 %v1419, %v5188
          %v5190 = vpop.f32.mrb[0].mxu0
          %v5191 = vpop.f32.mrb[0].mxu0
          %v5192 = vadd.f32 %v1419, %v5191
          %v5193 = vpop.f32.mrb[0].mxu0
          %5194 = vmatprep.mubr.bf16.mxu0 0
          %5195 = vmatmul.mubr.bf16.gmra.mrb[0].mxu0 %v5090
          %v5196 = vpop.f32.mrb[0].mxu0
          %v5197 = vadd.f32 %v1419, %v5196
          %v5198 = vpop.f32.mrb[0].mxu0
          %v5199 = vpop.f32.mrb[0].mxu0
          %v5200 = vadd.f32 %v1419, %v5199
          %v5201 = vpop.f32.mrb[0].mxu0
          %5202 = vmatprep.mubr.bf16.mxu0 0
          %5203 = vmatmul.mubr.bf16.gmra.mrb[0].mxu0 %v5093
          %v5204 = vpop.f32.mrb[0].mxu0
          %v5205 = vadd.f32 %v1419, %v5204
          %v5206 = vpop.f32.mrb[0].mxu0
          %v5207 = vpop.f32.mrb[0].mxu0
          %v5208 = vadd.f32 %v1419, %v5207
          %v5209 = vpop.f32.mrb[0].mxu0
          %5210 = vmatprep.mubr.bf16.mxu0 0
          %5211 = vmatmul.mubr.bf16.gmra.mrb[0].mxu0 %v5096
          %v5212 = vpop.f32.mrb[0].mxu0
          %v5213 = vadd.f32 %v1419, %v5212
          %v5214 = vpop.f32.mrb[0].mxu0
          %v5215 = vpop.f32.mrb[0].mxu0
          %v5216 = vadd.f32 %v1419, %v5215
          %v5217 = vpop.f32.mrb[0].mxu0
          %5218 = vdwg.mxu0
          %5219 = vmax.xlane.f32.xlu0 %v5157
          %v5220 = vpop.xlane.xlu0 %5219
          %5221 = vmax.xlane.f32.xlu0 %v5160
          %v5222 = vpop.xlane.xlu0 %5221
          %5223 = vmax.xlane.f32.xlu0 %v5165
          %v5224 = vpop.xlane.xlu0 %5223
          %5225 = vmax.xlane.f32.xlu0 %v5168
          %v5226 = vpop.xlane.xlu0 %5225
          %5227 = vmax.xlane.f32.xlu0 %v5173
          %v5228 = vpop.xlane.xlu0 %5227
          %5229 = vmax.xlane.f32.xlu0 %v5176
          %v5230 = vpop.xlane.xlu0 %5229
          %5231 = vmax.xlane.f32.xlu0 %v5181
          %v5232 = vpop.xlane.xlu0 %5231
          %5233 = vmax.xlane.f32.xlu0 %v5184
          %v5234 = vpop.xlane.xlu0 %5233
          %5235 = vmax.xlane.f32.xlu0 %v5189
          %v5236 = vpop.xlane.xlu0 %5235
          %5237 = vmax.xlane.f32.xlu0 %v5192
          %v5238 = vpop.xlane.xlu0 %5237
          %5239 = vmax.xlane.f32.xlu0 %v5197
          %v5240 = vpop.xlane.xlu0 %5239
          %5241 = vmax.xlane.f32.xlu0 %v5200
          %v5242 = vpop.xlane.xlu0 %5241
          %5243 = vmax.xlane.f32.xlu0 %v5205
          %v5244 = vpop.xlane.xlu0 %5243
          %5245 = vmax.xlane.f32.xlu0 %v5208
          %v5246 = vpop.xlane.xlu0 %5245
          %5247 = vmax.xlane.f32.xlu0 %v5213
          %v5248 = vpop.xlane.xlu0 %5247
          %5249 = vmax.xlane.f32.xlu0 %v5216
          %v5250 = vpop.xlane.xlu0 %5249
          %v5251 = vsub.f32 %v5157, %v5220
          %v5252 = vsub.f32 %v5160, %v5222
          %v5253 = vsub.f32 %v5165, %v5224
          %v5254 = vsub.f32 %v5168, %v5226
          %v5255 = vsub.f32 %v5173, %v5228
          %v5256 = vsub.f32 %v5176, %v5230
          %v5257 = vsub.f32 %v5181, %v5232
          %v5258 = vsub.f32 %v5184, %v5234
          %v5259 = vsub.f32 %v5189, %v5236
          %v5260 = vsub.f32 %v5192, %v5238
          %v5261 = vsub.f32 %v5197, %v5240
          %v5262 = vsub.f32 %v5200, %v5242
          %v5263 = vsub.f32 %v5205, %v5244
          %v5264 = vsub.f32 %v5208, %v5246
          %v5265 = vsub.f32 %v5213, %v5248
          %v5266 = vsub.f32 %v5216, %v5250
          %v5267 = vmul.f32 %v5251, 1.442695
          %v5268 = vpow.pop %v5267
          %v5269 = vmul.f32 %v5252, 1.442695
          %v5270 = vpow.pop %v5269
          %v5271 = vmul.f32 %v5253, 1.442695
          %v5272 = vpow.pop %v5271
          %v5273 = vmul.f32 %v5254, 1.442695
          %v5274 = vpow.pop %v5273
          %v5275 = vmul.f32 %v5255, 1.442695
          %v5276 = vpow.pop %v5275
          %v5277 = vmul.f32 %v5256, 1.442695
          %v5278 = vpow.pop %v5277
          %v5279 = vmul.f32 %v5257, 1.442695
          %v5280 = vpow.pop %v5279
          %v5281 = vmul.f32 %v5258, 1.442695
          %v5282 = vpow.pop %v5281
          %v5283 = vmul.f32 %v5259, 1.442695
          %v5284 = vpow.pop %v5283
          %v5285 = vmul.f32 %v5260, 1.442695
          %v5286 = vpow.pop %v5285
          %v5287 = vmul.f32 %v5261, 1.442695
          %v5288 = vpow.pop %v5287
          %v5289 = vmul.f32 %v5262, 1.442695
          %v5290 = vpow.pop %v5289
          %v5291 = vmul.f32 %v5263, 1.442695
          %v5292 = vpow.pop %v5291
          %v5293 = vmul.f32 %v5264, 1.442695
          %v5294 = vpow.pop %v5293
          %v5295 = vmul.f32 %v5265, 1.442695
          %v5296 = vpow.pop %v5295
          %v5297 = vmul.f32 %v5266, 1.442695
          %v5298 = vpow.pop %v5297
          %5299 = vadd.xlane.f32.xlu0 %v5268
          %v5300 = vpop.xlane.xlu0 %5299
          %5301 = vadd.xlane.f32.xlu0 %v5270
          %v5302 = vpop.xlane.xlu0 %5301
          %5303 = vadd.xlane.f32.xlu0 %v5272
          %v5304 = vpop.xlane.xlu0 %5303
          %5305 = vadd.xlane.f32.xlu0 %v5274
          %v5306 = vpop.xlane.xlu0 %5305
          %5307 = vadd.xlane.f32.xlu0 %v5276
          %v5308 = vpop.xlane.xlu0 %5307
          %5309 = vadd.xlane.f32.xlu0 %v5278
          %v5310 = vpop.xlane.xlu0 %5309
          %5311 = vadd.xlane.f32.xlu0 %v5280
          %v5312 = vpop.xlane.xlu0 %5311
          %5313 = vadd.xlane.f32.xlu0 %v5282
          %v5314 = vpop.xlane.xlu0 %5313
          %5315 = vadd.xlane.f32.xlu0 %v5284
          %v5316 = vpop.xlane.xlu0 %5315
          %5317 = vadd.xlane.f32.xlu0 %v5286
          %v5318 = vpop.xlane.xlu0 %5317
          %5319 = vadd.xlane.f32.xlu0 %v5288
          %v5320 = vpop.xlane.xlu0 %5319
          %5321 = vadd.xlane.f32.xlu0 %v5290
          %v5322 = vpop.xlane.xlu0 %5321
          %5323 = vadd.xlane.f32.xlu0 %v5292
          %v5324 = vpop.xlane.xlu0 %5323
          %5325 = vadd.xlane.f32.xlu0 %v5294
          %v5326 = vpop.xlane.xlu0 %5325
          %5327 = vadd.xlane.f32.xlu0 %v5296
          %v5328 = vpop.xlane.xlu0 %5327
          %5329 = vadd.xlane.f32.xlu0 %v5298
          %v5330 = vpop.xlane.xlu0 %5329
          %v5331 = vrcp.pop %v5300
          %v5332 = vrcp.pop %v5302
          %v5333 = vrcp.pop %v5304
          %v5334 = vrcp.pop %v5306
          %v5335 = vrcp.pop %v5308
          %v5336 = vrcp.pop %v5310
          %v5337 = vrcp.pop %v5312
          %v5338 = vrcp.pop %v5314
          %v5339 = vrcp.pop %v5316
          %v5340 = vrcp.pop %v5318
          %v5341 = vrcp.pop %v5320
          %v5342 = vrcp.pop %v5322
          %v5343 = vrcp.pop %v5324
          %v5344 = vrcp.pop %v5326
          %v5345 = vrcp.pop %v5328
          %v5346 = vrcp.pop %v5330
          %v5347 = vmul.f32 %v5268, %v5331
          %v5348 = vmul.f32 %v5270, %v5332
          %v5349 = vmul.f32 %v5272, %v5333
          %v5350 = vmul.f32 %v5274, %v5334
          %v5351 = vmul.f32 %v5276, %v5335
          %v5352 = vmul.f32 %v5278, %v5336
          %v5353 = vmul.f32 %v5280, %v5337
          %v5354 = vmul.f32 %v5282, %v5338
          %v5355 = vmul.f32 %v5284, %v5339
          %v5356 = vmul.f32 %v5286, %v5340
          %v5357 = vmul.f32 %v5288, %v5341
          %v5358 = vmul.f32 %v5290, %v5342
          %v5359 = vmul.f32 %v5292, %v5343
          %v5360 = vmul.f32 %v5294, %v5344
          %v5361 = vmul.f32 %v5296, %v5345
          %v5362 = vmul.f32 %v5298, %v5346
          %v5363 = vpack.c.bf16 %v5348, %v5347
          %v5364 = vpack.c.bf16 %v5350, %v5349
          %v5365 = vpack.c.bf16 %v5352, %v5351
          %v5366 = vpack.c.bf16 %v5354, %v5353
          %v5367 = vpack.c.bf16 %v5356, %v5355
          %v5368 = vpack.c.bf16 %v5358, %v5357
          %v5369 = vpack.c.bf16 %v5360, %v5359
          %v5370 = vpack.c.bf16 %v5362, %v5361
          %5371 = vrot.lane.b32.xlu0 %v1388, 16
          %v5372 = vpop.permute.xlu0 %5371
          %5373 = vrot.lane.b32.xlu0 %v1389, 16
          %v5374 = vpop.permute.xlu0 %5373
          %5375 = vrot.lane.b32.xlu0 %v1390, 16
          %v5376 = vpop.permute.xlu0 %5375
          %5377 = vrot.lane.b32.xlu0 %v1391, 16
          %v5378 = vpop.permute.xlu0 %5377
          %5379 = vrot.lane.b32.xlu0 %v1392, 16
          %v5380 = vpop.permute.xlu0 %5379
          %5381 = vrot.lane.b32.xlu0 %v1393, 16
          %v5382 = vpop.permute.xlu0 %5381
          %5383 = vrot.lane.b32.xlu0 %v1394, 16
          %v5384 = vpop.permute.xlu0 %5383
          %5385 = vrot.lane.b32.xlu0 %v1395, 16
          %v5386 = vpop.permute.xlu0 %5385
          %5395 = vmatprep.subr.bf16.mxu0 0
          %5396 = vmatpush1.bf16.msra.mxu0 %v5372
          %5397 = vmatprep.subr.bf16.mxu0 0
          %5398 = vmatpush1.bf16.msra.mxu0 %v5374
          %5399 = vmatprep.subr.bf16.mxu0 0
          %5400 = vmatpush1.bf16.msra.mxu0 %v5376
          %5401 = vmatprep.subr.bf16.mxu0 0
          %5402 = vmatpush1.bf16.msra.mxu0 %v5378
          %5403 = vmatprep.subr.bf16.mxu0 0
          %5404 = vmatpush1.bf16.msra.mxu0 %v5380
          %5405 = vmatprep.subr.bf16.mxu0 0
          %5406 = vmatpush1.bf16.msra.mxu0 %v5382
          %5407 = vmatprep.subr.bf16.mxu0 0
          %5408 = vmatpush1.bf16.msra.mxu0 %v5384
          %5409 = vmatprep.subr.bf16.mxu0 0
          %5410 = vmatpush1.bf16.msra.mxu0 %v5386
          %5411 = vmatprep.subr.bf16.mxu0 0
          %5412 = vmatpush1.bf16.msra.mxu0 0
          %5413 = vmatprep.subr.bf16.mxu0 0
          %5414 = vmatpush1.bf16.msra.mxu0 0
          %5415 = vmatprep.subr.bf16.mxu0 0
          %5416 = vmatpush1.bf16.msra.mxu0 0
          %5417 = vmatprep.subr.bf16.mxu0 0
          %5418 = vmatpush1.bf16.msra.mxu0 0
          %5419 = vmatprep.subr.bf16.mxu0 0
          %5420 = vmatpush1.bf16.msra.mxu0 0
          %5421 = vmatprep.subr.bf16.mxu0 0
          %5422 = vmatpush1.bf16.msra.mxu0 0
          %5423 = vmatprep.subr.bf16.mxu0 0
          %5424 = vmatpush1.bf16.msra.mxu0 0
          %5425 = vmatprep.subr.bf16.mxu0 0
          %5426 = vmatpush1.bf16.msra.mxu0 0
          %5427 = vmatprep.mubr.bf16.mxu0 0
          %5428 = vmatmul.mubr.bf16.gmra.mrb[0].mxu0 %v5363
          %v5429 = vpop.f32.mrb[0].mxu0
          %v5430 = vadd.f32 0.0, %v5429
          %v5431 = vpop.f32.mrb[0].mxu0
          %v5432 = vpop.f32.mrb[0].mxu0
          %v5433 = vadd.f32 0.0, %v5432
          %v5434 = vpop.f32.mrb[0].mxu0
          %5435 = vmatprep.mubr.bf16.mxu0 0
          %5436 = vmatmul.mubr.bf16.gmra.mrb[0].mxu0 %v5364
          %v5437 = vpop.f32.mrb[0].mxu0
          %v5438 = vadd.f32 0.0, %v5437
          %v5439 = vpop.f32.mrb[0].mxu0
          %v5440 = vpop.f32.mrb[0].mxu0
          %v5441 = vadd.f32 0.0, %v5440
          %v5442 = vpop.f32.mrb[0].mxu0
          %5443 = vmatprep.mubr.bf16.mxu0 0
          %5444 = vmatmul.mubr.bf16.gmra.mrb[0].mxu0 %v5365
          %v5445 = vpop.f32.mrb[0].mxu0
          %v5446 = vadd.f32 0.0, %v5445
          %v5447 = vpop.f32.mrb[0].mxu0
          %v5448 = vpop.f32.mrb[0].mxu0
          %v5449 = vadd.f32 0.0, %v5448
          %v5450 = vpop.f32.mrb[0].mxu0
          %5451 = vmatprep.mubr.bf16.mxu0 0
          %5452 = vmatmul.mubr.bf16.gmra.mrb[0].mxu0 %v5366
          %v5453 = vpop.f32.mrb[0].mxu0
          %v5454 = vadd.f32 0.0, %v5453
          %v5455 = vpop.f32.mrb[0].mxu0
          %v5456 = vpop.f32.mrb[0].mxu0
          %v5457 = vadd.f32 0.0, %v5456
          %v5458 = vpop.f32.mrb[0].mxu0
          %5459 = vmatprep.mubr.bf16.mxu0 0
          %5460 = vmatmul.mubr.bf16.gmra.mrb[0].mxu0 %v5367
          %v5461 = vpop.f32.mrb[0].mxu0
          %v5462 = vadd.f32 0.0, %v5461
          %v5463 = vpop.f32.mrb[0].mxu0
          %v5464 = vpop.f32.mrb[0].mxu0
          %v5465 = vadd.f32 0.0, %v5464
          %v5466 = vpop.f32.mrb[0].mxu0
          %5467 = vmatprep.mubr.bf16.mxu0 0
          %5468 = vmatmul.mubr.bf16.gmra.mrb[0].mxu0 %v5368
          %v5469 = vpop.f32.mrb[0].mxu0
          %v5470 = vadd.f32 0.0, %v5469
          %v5471 = vpop.f32.mrb[0].mxu0
          %v5472 = vpop.f32.mrb[0].mxu0
          %v5473 = vadd.f32 0.0, %v5472
          %v5474 = vpop.f32.mrb[0].mxu0
          %5475 = vmatprep.mubr.bf16.mxu0 0
          %5476 = vmatmul.mubr.bf16.gmra.mrb[0].mxu0 %v5369
          %v5477 = vpop.f32.mrb[0].mxu0
          %v5478 = vadd.f32 0.0, %v5477
          %v5479 = vpop.f32.mrb[0].mxu0
          %v5480 = vpop.f32.mrb[0].mxu0
          %v5481 = vadd.f32 0.0, %v5480
          %v5482 = vpop.f32.mrb[0].mxu0
          %5483 = vmatprep.mubr.bf16.mxu0 0
          %5484 = vmatmul.mubr.bf16.gmra.mrb[0].mxu0 %v5370
          %v5485 = vpop.f32.mrb[0].mxu0
          %v5486 = vadd.f32 0.0, %v5485
          %v5487 = vpop.f32.mrb[0].mxu0
          %v5488 = vpop.f32.mrb[0].mxu0
          %v5489 = vadd.f32 0.0, %v5488
          %v5490 = vpop.f32.mrb[0].mxu0
          %5491 = vdwg.mxu0
          %5508 = vrot.lane.b32.xlu0 %v5430, 112
          %v5509 = vpop.permute.xlu0 %5508
          %5510 = vrot.lane.b32.xlu0 %v5433, 112
          %v5511 = vpop.permute.xlu0 %5510
          %5512 = vrot.lane.b32.xlu0 %v5438, 112
          %v5513 = vpop.permute.xlu0 %5512
          %5514 = vrot.lane.b32.xlu0 %v5441, 112
          %v5515 = vpop.permute.xlu0 %5514
          %5516 = vrot.lane.b32.xlu0 %v5446, 112
          %v5517 = vpop.permute.xlu0 %5516
          %5518 = vrot.lane.b32.xlu0 %v5449, 112
          %v5519 = vpop.permute.xlu0 %5518
          %5520 = vrot.lane.b32.xlu0 %v5454, 112
          %v5521 = vpop.permute.xlu0 %5520
          %5522 = vrot.lane.b32.xlu0 %v5457, 112
          %v5523 = vpop.permute.xlu0 %5522
          %5524 = vrot.lane.b32.xlu0 %v5462, 112
          %v5525 = vpop.permute.xlu0 %5524
          %5526 = vrot.lane.b32.xlu0 %v5465, 112
          %v5527 = vpop.permute.xlu0 %5526
          %5528 = vrot.lane.b32.xlu0 %v5470, 112
          %v5529 = vpop.permute.xlu0 %5528
          %5530 = vrot.lane.b32.xlu0 %v5473, 112
          %v5531 = vpop.permute.xlu0 %5530
          %5532 = vrot.lane.b32.xlu0 %v5478, 112
          %v5533 = vpop.permute.xlu0 %5532
          %5534 = vrot.lane.b32.xlu0 %v5481, 112
          %v5535 = vpop.permute.xlu0 %5534
          %5536 = vrot.lane.b32.xlu0 %v5486, 112
          %v5537 = vpop.permute.xlu0 %5536
          %5538 = vrot.lane.b32.xlu0 %v5489, 112
          %v5539 = vpop.permute.xlu0 %5538
          %vm5556 = vcmask 1048448
          %5557 = vst.msk [vmem:[#allocation2] sm:$0xff] %vm5556, %v5509
          %5558 = vst.msk [vmem:[#allocation2 + $0x8] sm:$0xff] %vm5556, %v5511
          %5559 = vst.msk [vmem:[#allocation2 + $0x10] sm:$0xff] %vm5556, %v5513
          %5560 = vst.msk [vmem:[#allocation2 + $0x18] sm:$0xff] %vm5556, %v5515
          %5561 = vst.msk [vmem:[#allocation2 + $0x20] sm:$0xff] %vm5556, %v5517
          %5562 = vst.msk [vmem:[#allocation2 + $0x28] sm:$0xff] %vm5556, %v5519
          %5563 = vst.msk [vmem:[#allocation2 + $0x30] sm:$0xff] %vm5556, %v5521
          %5564 = vst.msk [vmem:[#allocation2 + $0x38] sm:$0xff] %vm5556, %v5523
          %5565 = vst.msk [vmem:[#allocation2 + $0x40] sm:$0xff] %vm5556, %v5525
          %5566 = vst.msk [vmem:[#allocation2 + $0x48] sm:$0xff] %vm5556, %v5527
          %5567 = vst.msk [vmem:[#allocation2 + $0x50] sm:$0xff] %vm5556, %v5529
          %5568 = vst.msk [vmem:[#allocation2 + $0x58] sm:$0xff] %vm5556, %v5531
          %5569 = vst.msk [vmem:[#allocation2 + $0x60] sm:$0xff] %vm5556, %v5533
          %5570 = vst.msk [vmem:[#allocation2 + $0x68] sm:$0xff] %vm5556, %v5535
          %5571 = vst.msk [vmem:[#allocation2 + $0x70] sm:$0xff] %vm5556, %v5537
          %5572 = vst.msk [vmem:[#allocation2 + $0x78] sm:$0xff] %vm5556, %v5539
          %v5573 = vld [vmem:[#allocation2] sm:$0xff]
          %v5574 = vld [vmem:[#allocation2 + $0x8] sm:$0xff]
          %v5575 = vld [vmem:[#allocation2 + $0x10] sm:$0xff]
          %v5576 = vld [vmem:[#allocation2 + $0x18] sm:$0xff]
          %v5577 = vld [vmem:[#allocation2 + $0x20] sm:$0xff]
          %v5578 = vld [vmem:[#allocation2 + $0x28] sm:$0xff]
          %v5579 = vld [vmem:[#allocation2 + $0x30] sm:$0xff]
          %v5580 = vld [vmem:[#allocation2 + $0x38] sm:$0xff]
          %v5581 = vld [vmem:[#allocation2 + $0x40] sm:$0xff]
          %v5582 = vld [vmem:[#allocation2 + $0x48] sm:$0xff]
          %v5583 = vld [vmem:[#allocation2 + $0x50] sm:$0xff]
          %v5584 = vld [vmem:[#allocation2 + $0x58] sm:$0xff]
          %v5585 = vld [vmem:[#allocation2 + $0x60] sm:$0xff]
          %v5586 = vld [vmem:[#allocation2 + $0x68] sm:$0xff]
          %v5587 = vld [vmem:[#allocation2 + $0x70] sm:$0xff]
          %v5588 = vld [vmem:[#allocation2 + $0x78] sm:$0xff]
          %v5589 = vpack.c.bf16 %v5574, %v5573
          %v5590 = vpack.c.bf16 %v5576, %v5575
          %v5591 = vpack.c.bf16 %v5578, %v5577
          %v5592 = vpack.c.bf16 %v5580, %v5579
          %v5593 = vpack.c.bf16 %v5582, %v5581
          %v5594 = vpack.c.bf16 %v5584, %v5583
          %v5595 = vpack.c.bf16 %v5586, %v5585
          %v5596 = vpack.c.bf16 %v5588, %v5587
          %v5597 = vld [vmem:[#allocation17] sm:$0xf]
          %v5598 = vld [vmem:[#allocation17 + $0x4] sm:$0xf]
          %v5599 = vld [vmem:[#allocation17 + $0x8] sm:$0xf]
          %v5600 = vld [vmem:[#allocation17 + $0xc] sm:$0xf]
          %v5601 = vld [vmem:[#allocation17 + $0x10] sm:$0xf]
          %v5602 = vld [vmem:[#allocation17 + $0x14] sm:$0xf]
          %v5603 = vld [vmem:[#allocation17 + $0x18] sm:$0xf]
          %v5604 = vld [vmem:[#allocation17 + $0x1c] sm:$0xf]
          %v5605 = vld [vmem:[#allocation17 + $0x20] sm:$0xf]
          %v5606 = vld [vmem:[#allocation17 + $0x24] sm:$0xf]
          %v5607 = vld [vmem:[#allocation17 + $0x28] sm:$0xf]
          %v5608 = vld [vmem:[#allocation17 + $0x2c] sm:$0xf]
          %v5609 = vld [vmem:[#allocation17 + $0x30] sm:$0xf]
          %v5610 = vld [vmem:[#allocation17 + $0x34] sm:$0xf]
          %v5611 = vld [vmem:[#allocation17 + $0x38] sm:$0xf]
          %v5612 = vld [vmem:[#allocation17 + $0x3c] sm:$0xf]
          %v5613 = vld [vmem:[%s8] sm:$0x1]
          %v5615 = vlaneseq
          %v5616 = vshrl.u32 %v5615, 7
          %v5617 = vsub.s32 0, %v5616
          %v5618 = vrot.slane %v5613, %v5617
          %v5636 = vunpack.c.l.b16 %v5597
          %v5637 = vunpack.c.l.b16 %v5598
          %v5638 = vunpack.c.l.b16 %v5599
          %v5639 = vunpack.c.l.b16 %v5600
          %v5640 = vunpack.c.l.b16 %v5601
          %v5641 = vunpack.c.l.b16 %v5602
          %v5642 = vunpack.c.l.b16 %v5603
          %v5643 = vunpack.c.l.b16 %v5604
          %v5644 = vunpack.c.l.b16 %v5605
          %v5645 = vunpack.c.l.b16 %v5606
          %v5646 = vunpack.c.l.b16 %v5607
          %v5647 = vunpack.c.l.b16 %v5608
          %v5648 = vunpack.c.l.b16 %v5609
          %v5649 = vunpack.c.l.b16 %v5610
          %v5650 = vunpack.c.l.b16 %v5611
          %v5651 = vunpack.c.l.b16 %v5612
          %v5652 = vpack.c.b16 %v5637, %v5636
          %v5653 = vpack.c.b16 %v5639, %v5638
          %v5654 = vpack.c.b16 %v5641, %v5640
          %v5655 = vpack.c.b16 %v5643, %v5642
          %v5656 = vpack.c.b16 %v5645, %v5644
          %v5657 = vpack.c.b16 %v5647, %v5646
          %v5658 = vpack.c.b16 %v5649, %v5648
          %v5659 = vpack.c.b16 %v5651, %v5650
          %5668 = vmatprep.subr.bf16.mxu0 0
          %5669 = vmatpush1.bf16.msra.mxu0 %v5652
          %5670 = vmatprep.subr.bf16.mxu0 0
          %5671 = vmatpush1.bf16.msra.mxu0 %v5653
          %5672 = vmatprep.subr.bf16.mxu0 0
          %5673 = vmatpush1.bf16.msra.mxu0 %v5654
          %5674 = vmatprep.subr.bf16.mxu0 0
          %5675 = vmatpush1.bf16.msra.mxu0 %v5655
          %5676 = vmatprep.subr.bf16.mxu0 0
          %5677 = vmatpush1.bf16.msra.mxu0 %v5656
          %5678 = vmatprep.subr.bf16.mxu0 0
          %5679 = vmatpush1.bf16.msra.mxu0 %v5657
          %5680 = vmatprep.subr.bf16.mxu0 0
          %5681 = vmatpush1.bf16.msra.mxu0 %v5658
          %5682 = vmatprep.subr.bf16.mxu0 0
          %5683 = vmatpush1.bf16.msra.mxu0 %v5659
          %5684 = vmatprep.subr.bf16.mxu0 0
          %5685 = vmatpush1.bf16.msra.mxu0 0
          %5686 = vmatprep.subr.bf16.mxu0 0
          %5687 = vmatpush1.bf16.msra.mxu0 0
          %5688 = vmatprep.subr.bf16.mxu0 0
          %5689 = vmatpush1.bf16.msra.mxu0 0
          %5690 = vmatprep.subr.bf16.mxu0 0
          %5691 = vmatpush1.bf16.msra.mxu0 0
          %5692 = vmatprep.subr.bf16.mxu0 0
          %5693 = vmatpush1.bf16.msra.mxu0 0
          %5694 = vmatprep.subr.bf16.mxu0 0
          %5695 = vmatpush1.bf16.msra.mxu0 0
          %5696 = vmatprep.subr.bf16.mxu0 0
          %5697 = vmatpush1.bf16.msra.mxu0 0
          %5698 = vmatprep.subr.bf16.mxu0 0
          %5699 = vmatpush1.bf16.msra.mxu0 0
          %5700 = vmatprep.mubr.bf16.mxu0 0
          %5701 = vmatmul.mubr.bf16.gmra.mrb[0].mxu0 %v5589
          %v5702 = vpop.f32.mrb[0].mxu0
          %v5703 = vadd.f32 %v5618, %v5702
          %v5704 = vpop.f32.mrb[0].mxu0
          %v5705 = vpop.f32.mrb[0].mxu0
          %v5706 = vadd.f32 %v5618, %v5705
          %v5707 = vpop.f32.mrb[0].mxu0
          %5708 = vmatprep.mubr.bf16.mxu0 0
          %5709 = vmatmul.mubr.bf16.gmra.mrb[0].mxu0 %v5590
          %v5710 = vpop.f32.mrb[0].mxu0
          %v5711 = vadd.f32 %v5618, %v5710
          %v5712 = vpop.f32.mrb[0].mxu0
          %v5713 = vpop.f32.mrb[0].mxu0
          %v5714 = vadd.f32 %v5618, %v5713
          %v5715 = vpop.f32.mrb[0].mxu0
          %5716 = vmatprep.mubr.bf16.mxu0 0
          %5717 = vmatmul.mubr.bf16.gmra.mrb[0].mxu0 %v5591
          %v5718 = vpop.f32.mrb[0].mxu0
          %v5719 = vadd.f32 %v5618, %v5718
          %v5720 = vpop.f32.mrb[0].mxu0
          %v5721 = vpop.f32.mrb[0].mxu0
          %v5722 = vadd.f32 %v5618, %v5721
          %v5723 = vpop.f32.mrb[0].mxu0
          %5724 = vmatprep.mubr.bf16.mxu0 0
          %5725 = vmatmul.mubr.bf16.gmra.mrb[0].mxu0 %v5592
          %v5726 = vpop.f32.mrb[0].mxu0
          %v5727 = vadd.f32 %v5618, %v5726
          %v5728 = vpop.f32.mrb[0].mxu0
          %v5729 = vpop.f32.mrb[0].mxu0
          %v5730 = vadd.f32 %v5618, %v5729
          %v5731 = vpop.f32.mrb[0].mxu0
          %5732 = vmatprep.mubr.bf16.mxu0 0
          %5733 = vmatmul.mubr.bf16.gmra.mrb[0].mxu0 %v5593
          %v5734 = vpop.f32.mrb[0].mxu0
          %v5735 = vadd.f32 %v5618, %v5734
          %v5736 = vpop.f32.mrb[0].mxu0
          %v5737 = vpop.f32.mrb[0].mxu0
          %v5738 = vadd.f32 %v5618, %v5737
          %v5739 = vpop.f32.mrb[0].mxu0
          %5740 = vmatprep.mubr.bf16.mxu0 0
          %5741 = vmatmul.mubr.bf16.gmra.mrb[0].mxu0 %v5594
          %v5742 = vpop.f32.mrb[0].mxu0
          %v5743 = vadd.f32 %v5618, %v5742
          %v5744 = vpop.f32.mrb[0].mxu0
          %v5745 = vpop.f32.mrb[0].mxu0
          %v5746 = vadd.f32 %v5618, %v5745
          %v5747 = vpop.f32.mrb[0].mxu0
          %5748 = vmatprep.mubr.bf16.mxu0 0
          %5749 = vmatmul.mubr.bf16.gmra.mrb[0].mxu0 %v5595
          %v5750 = vpop.f32.mrb[0].mxu0
          %v5751 = vadd.f32 %v5618, %v5750
          %v5752 = vpop.f32.mrb[0].mxu0
          %v5753 = vpop.f32.mrb[0].mxu0
          %v5754 = vadd.f32 %v5618, %v5753
          %v5755 = vpop.f32.mrb[0].mxu0
          %5756 = vmatprep.mubr.bf16.mxu0 0
          %5757 = vmatmul.mubr.bf16.gmra.mrb[0].mxu0 %v5596
          %v5758 = vpop.f32.mrb[0].mxu0
          %v5759 = vadd.f32 %v5618, %v5758
          %v5760 = vpop.f32.mrb[0].mxu0
          %v5761 = vpop.f32.mrb[0].mxu0
          %v5762 = vadd.f32 %v5618, %v5761
          %v5763 = vpop.f32.mrb[0].mxu0
          %5764 = vdwg.mxu0
          %v5765 = vadd.f32 %v5703, %v817
          %v5766 = vadd.f32 %v5706, %v818
          %v5767 = vadd.f32 %v5711, %v819
          %v5768 = vadd.f32 %v5714, %v820
          %v5769 = vadd.f32 %v5719, %v821
          %v5770 = vadd.f32 %v5722, %v822
          %v5771 = vadd.f32 %v5727, %v823
          %v5772 = vadd.f32 %v5730, %v824
          %v5773 = vadd.f32 %v5735, %v825
          %v5774 = vadd.f32 %v5738, %v826
          %v5775 = vadd.f32 %v5743, %v827
          %v5776 = vadd.f32 %v5746, %v828
          %v5777 = vadd.f32 %v5751, %v829
          %v5778 = vadd.f32 %v5754, %v830
          %v5779 = vadd.f32 %v5759, %v831
          %v5780 = vadd.f32 %v5762, %v832
          %v5781 = vld [vmem:[%s9] sm:$0x1]
          %v5782 = vld [vmem:[%s10] sm:$0x1]
          %5783 = vadd.xlane.f32.xlu0 %v5765
          %v5784 = vpop.xlane.xlu0 %5783
          %5785 = vadd.xlane.f32.xlu0 %v5766
          %v5786 = vpop.xlane.xlu0 %5785
          %5787 = vadd.xlane.f32.xlu0 %v5767
          %v5788 = vpop.xlane.xlu0 %5787
          %5789 = vadd.xlane.f32.xlu0 %v5768
          %v5790 = vpop.xlane.xlu0 %5789
          %5791 = vadd.xlane.f32.xlu0 %v5769
          %v5792 = vpop.xlane.xlu0 %5791
          %5793 = vadd.xlane.f32.xlu0 %v5770
          %v5794 = vpop.xlane.xlu0 %5793
          %5795 = vadd.xlane.f32.xlu0 %v5771
          %v5796 = vpop.xlane.xlu0 %5795
          %5797 = vadd.xlane.f32.xlu0 %v5772
          %v5798 = vpop.xlane.xlu0 %5797
          %5799 = vadd.xlane.f32.xlu0 %v5773
          %v5800 = vpop.xlane.xlu0 %5799
          %5801 = vadd.xlane.f32.xlu0 %v5774
          %v5802 = vpop.xlane.xlu0 %5801
          %5803 = vadd.xlane.f32.xlu0 %v5775
          %v5804 = vpop.xlane.xlu0 %5803
          %5805 = vadd.xlane.f32.xlu0 %v5776
          %v5806 = vpop.xlane.xlu0 %5805
          %5807 = vadd.xlane.f32.xlu0 %v5777
          %v5808 = vpop.xlane.xlu0 %5807
          %5809 = vadd.xlane.f32.xlu0 %v5778
          %v5810 = vpop.xlane.xlu0 %5809
          %5811 = vadd.xlane.f32.xlu0 %v5779
          %v5812 = vpop.xlane.xlu0 %5811
          %5813 = vadd.xlane.f32.xlu0 %v5780
          %v5814 = vpop.xlane.xlu0 %5813
          %v5815 = vrcp.pop 128.0
          %v5816 = vmul.f32 %v5784, %v5815
          %v5817 = vmul.f32 %v5786, %v5815
          %v5818 = vmul.f32 %v5788, %v5815
          %v5819 = vmul.f32 %v5790, %v5815
          %v5820 = vmul.f32 %v5792, %v5815
          %v5821 = vmul.f32 %v5794, %v5815
          %v5822 = vmul.f32 %v5796, %v5815
          %v5823 = vmul.f32 %v5798, %v5815
          %v5824 = vmul.f32 %v5800, %v5815
          %v5825 = vmul.f32 %v5802, %v5815
          %v5826 = vmul.f32 %v5804, %v5815
          %v5827 = vmul.f32 %v5806, %v5815
          %v5828 = vmul.f32 %v5808, %v5815
          %v5829 = vmul.f32 %v5810, %v5815
          %v5830 = vmul.f32 %v5812, %v5815
          %v5831 = vmul.f32 %v5814, %v5815
          %v5832 = vsub.f32 %v5765, %v5816
          %v5833 = vsub.f32 %v5766, %v5817
          %v5834 = vsub.f32 %v5767, %v5818
          %v5835 = vsub.f32 %v5768, %v5819
          %v5836 = vsub.f32 %v5769, %v5820
          %v5837 = vsub.f32 %v5770, %v5821
          %v5838 = vsub.f32 %v5771, %v5822
          %v5839 = vsub.f32 %v5772, %v5823
          %v5840 = vsub.f32 %v5773, %v5824
          %v5841 = vsub.f32 %v5774, %v5825
          %v5842 = vsub.f32 %v5775, %v5826
          %v5843 = vsub.f32 %v5776, %v5827
          %v5844 = vsub.f32 %v5777, %v5828
          %v5845 = vsub.f32 %v5778, %v5829
          %v5846 = vsub.f32 %v5779, %v5830
          %v5847 = vsub.f32 %v5780, %v5831
          %v5848 = vmul.f32 %v5832, %v5832
          %v5849 = vmul.f32 %v5833, %v5833
          %v5850 = vmul.f32 %v5834, %v5834
          %v5851 = vmul.f32 %v5835, %v5835
          %v5852 = vmul.f32 %v5836, %v5836
          %v5853 = vmul.f32 %v5837, %v5837
          %v5854 = vmul.f32 %v5838, %v5838
          %v5855 = vmul.f32 %v5839, %v5839
          %v5856 = vmul.f32 %v5840, %v5840
          %v5857 = vmul.f32 %v5841, %v5841
          %v5858 = vmul.f32 %v5842, %v5842
          %v5859 = vmul.f32 %v5843, %v5843
          %v5860 = vmul.f32 %v5844, %v5844
          %v5861 = vmul.f32 %v5845, %v5845
          %v5862 = vmul.f32 %v5846, %v5846
          %v5863 = vmul.f32 %v5847, %v5847
          %5864 = vadd.xlane.f32.xlu0 %v5848
          %v5865 = vpop.xlane.xlu0 %5864
          %5866 = vadd.xlane.f32.xlu0 %v5849
          %v5867 = vpop.xlane.xlu0 %5866
          %5868 = vadd.xlane.f32.xlu0 %v5850
          %v5869 = vpop.xlane.xlu0 %5868
          %5870 = vadd.xlane.f32.xlu0 %v5851
          %v5871 = vpop.xlane.xlu0 %5870
          %5872 = vadd.xlane.f32.xlu0 %v5852
          %v5873 = vpop.xlane.xlu0 %5872
          %5874 = vadd.xlane.f32.xlu0 %v5853
          %v5875 = vpop.xlane.xlu0 %5874
          %5876 = vadd.xlane.f32.xlu0 %v5854
          %v5877 = vpop.xlane.xlu0 %5876
          %5878 = vadd.xlane.f32.xlu0 %v5855
          %v5879 = vpop.xlane.xlu0 %5878
          %5880 = vadd.xlane.f32.xlu0 %v5856
          %v5881 = vpop.xlane.xlu0 %5880
          %5882 = vadd.xlane.f32.xlu0 %v5857
          %v5883 = vpop.xlane.xlu0 %5882
          %5884 = vadd.xlane.f32.xlu0 %v5858
          %v5885 = vpop.xlane.xlu0 %5884
          %5886 = vadd.xlane.f32.xlu0 %v5859
          %v5887 = vpop.xlane.xlu0 %5886
          %5888 = vadd.xlane.f32.xlu0 %v5860
          %v5889 = vpop.xlane.xlu0 %5888
          %5890 = vadd.xlane.f32.xlu0 %v5861
          %v5891 = vpop.xlane.xlu0 %5890
          %5892 = vadd.xlane.f32.xlu0 %v5862
          %v5893 = vpop.xlane.xlu0 %5892
          %5894 = vadd.xlane.f32.xlu0 %v5863
          %v5895 = vpop.xlane.xlu0 %5894
          %v5896 = vmul.f32 %v5865, %v5815
          %v5897 = vmul.f32 %v5867, %v5815
          %v5898 = vmul.f32 %v5869, %v5815
          %v5899 = vmul.f32 %v5871, %v5815
          %v5900 = vmul.f32 %v5873, %v5815
          %v5901 = vmul.f32 %v5875, %v5815
          %v5902 = vmul.f32 %v5877, %v5815
          %v5903 = vmul.f32 %v5879, %v5815
          %v5904 = vmul.f32 %v5881, %v5815
          %v5905 = vmul.f32 %v5883, %v5815
          %v5906 = vmul.f32 %v5885, %v5815
          %v5907 = vmul.f32 %v5887, %v5815
          %v5908 = vmul.f32 %v5889, %v5815
          %v5909 = vmul.f32 %v5891, %v5815
          %v5910 = vmul.f32 %v5893, %v5815
          %v5911 = vmul.f32 %v5895, %v5815
          %v5912 = vadd.f32 %v5896, 1e-05
          %v5913 = vadd.f32 %v5897, 1e-05
          %v5914 = vadd.f32 %v5898, 1e-05
          %v5915 = vadd.f32 %v5899, 1e-05
          %v5916 = vadd.f32 %v5900, 1e-05
          %v5917 = vadd.f32 %v5901, 1e-05
          %v5918 = vadd.f32 %v5902, 1e-05
          %v5919 = vadd.f32 %v5903, 1e-05
          %v5920 = vadd.f32 %v5904, 1e-05
          %v5921 = vadd.f32 %v5905, 1e-05
          %v5922 = vadd.f32 %v5906, 1e-05
          %v5923 = vadd.f32 %v5907, 1e-05
          %v5924 = vadd.f32 %v5908, 1e-05
          %v5925 = vadd.f32 %v5909, 1e-05
          %v5926 = vadd.f32 %v5910, 1e-05
          %v5927 = vadd.f32 %v5911, 1e-05
          %v5928 = vrsqrt.pop %v5912
          %v5929 = vrsqrt.pop %v5913
          %v5930 = vrsqrt.pop %v5914
          %v5931 = vrsqrt.pop %v5915
          %v5932 = vrsqrt.pop %v5916
          %v5933 = vrsqrt.pop %v5917
          %v5934 = vrsqrt.pop %v5918
          %v5935 = vrsqrt.pop %v5919
          %v5936 = vrsqrt.pop %v5920
          %v5937 = vrsqrt.pop %v5921
          %v5938 = vrsqrt.pop %v5922
          %v5939 = vrsqrt.pop %v5923
          %v5940 = vrsqrt.pop %v5924
          %v5941 = vrsqrt.pop %v5925
          %v5942 = vrsqrt.pop %v5926
          %v5943 = vrsqrt.pop %v5927
          %v5944 = vmul.f32 %v5832, %v5928
          %v5945 = vmul.f32 %v5833, %v5929
          %v5946 = vmul.f32 %v5834, %v5930
          %v5947 = vmul.f32 %v5835, %v5931
          %v5948 = vmul.f32 %v5836, %v5932
          %v5949 = vmul.f32 %v5837, %v5933
          %v5950 = vmul.f32 %v5838, %v5934
          %v5951 = vmul.f32 %v5839, %v5935
          %v5952 = vmul.f32 %v5840, %v5936
          %v5953 = vmul.f32 %v5841, %v5937
          %v5954 = vmul.f32 %v5842, %v5938
          %v5955 = vmul.f32 %v5843, %v5939
          %v5956 = vmul.f32 %v5844, %v5940
          %v5957 = vmul.f32 %v5845, %v5941
          %v5958 = vmul.f32 %v5846, %v5942
          %v5959 = vmul.f32 %v5847, %v5943
          %v5961 = vlaneseq
          %v5962 = vshrl.u32 %v5961, 7
          %v5963 = vsub.s32 0, %v5962
          %v5964 = vrot.slane %v5781, %v5963
          %v5966 = vmul.f32 %v5944, %v5964
          %v5967 = vmul.f32 %v5945, %v5964
          %v5968 = vmul.f32 %v5946, %v5964
          %v5969 = vmul.f32 %v5947, %v5964
          %v5970 = vmul.f32 %v5948, %v5964
          %v5971 = vmul.f32 %v5949, %v5964
          %v5972 = vmul.f32 %v5950, %v5964
          %v5973 = vmul.f32 %v5951, %v5964
          %v5974 = vmul.f32 %v5952, %v5964
          %v5975 = vmul.f32 %v5953, %v5964
          %v5976 = vmul.f32 %v5954, %v5964
          %v5977 = vmul.f32 %v5955, %v5964
          %v5978 = vmul.f32 %v5956, %v5964
          %v5979 = vmul.f32 %v5957, %v5964
          %v5980 = vmul.f32 %v5958, %v5964
          %v5981 = vmul.f32 %v5959, %v5964
          %v5983 = vlaneseq
          %v5984 = vshrl.u32 %v5983, 7
          %v5985 = vsub.s32 0, %v5984
          %v5986 = vrot.slane %v5782, %v5985
          %v5988 = vadd.f32 %v5966, %v5986
          %v5989 = vadd.f32 %v5967, %v5986
          %v5990 = vadd.f32 %v5968, %v5986
          %v5991 = vadd.f32 %v5969, %v5986
          %v5992 = vadd.f32 %v5970, %v5986
          %v5993 = vadd.f32 %v5971, %v5986
          %v5994 = vadd.f32 %v5972, %v5986
          %v5995 = vadd.f32 %v5973, %v5986
          %v5996 = vadd.f32 %v5974, %v5986
          %v5997 = vadd.f32 %v5975, %v5986
          %v5998 = vadd.f32 %v5976, %v5986
          %v5999 = vadd.f32 %v5977, %v5986
          %v6000 = vadd.f32 %v5978, %v5986
          %v6001 = vadd.f32 %v5979, %v5986
          %v6002 = vadd.f32 %v5980, %v5986
          %v6003 = vadd.f32 %v5981, %v5986
          %6004 = vst [vmem:[#allocation3] sm:$0xff] %v5988
          %6005 = vst [vmem:[#allocation3 + $0x8] sm:$0xff] %v5989
          %6006 = vst [vmem:[#allocation3 + $0x10] sm:$0xff] %v5990
          %6007 = vst [vmem:[#allocation3 + $0x18] sm:$0xff] %v5991
          %6008 = vst [vmem:[#allocation3 + $0x20] sm:$0xff] %v5992
          %6009 = vst [vmem:[#allocation3 + $0x28] sm:$0xff] %v5993
          %6010 = vst [vmem:[#allocation3 + $0x30] sm:$0xff] %v5994
          %6011 = vst [vmem:[#allocation3 + $0x38] sm:$0xff] %v5995
          %6012 = vst [vmem:[#allocation3 + $0x40] sm:$0xff] %v5996
          %6013 = vst [vmem:[#allocation3 + $0x48] sm:$0xff] %v5997
          %6014 = vst [vmem:[#allocation3 + $0x50] sm:$0xff] %v5998
          %6015 = vst [vmem:[#allocation3 + $0x58] sm:$0xff] %v5999
          %6016 = vst [vmem:[#allocation3 + $0x60] sm:$0xff] %v6000
          %6017 = vst [vmem:[#allocation3 + $0x68] sm:$0xff] %v6001
          %6018 = vst [vmem:[#allocation3 + $0x70] sm:$0xff] %v6002
          %6019 = vst [vmem:[#allocation3 + $0x78] sm:$0xff] %v6003
          %v6020 = vpack.c.bf16 %v5989, %v5988
          %v6021 = vpack.c.bf16 %v5991, %v5990
          %v6022 = vpack.c.bf16 %v5993, %v5992
          %v6023 = vpack.c.bf16 %v5995, %v5994
          %v6024 = vpack.c.bf16 %v5997, %v5996
          %v6025 = vpack.c.bf16 %v5999, %v5998
          %v6026 = vpack.c.bf16 %v6001, %v6000
          %v6027 = vpack.c.bf16 %v6003, %v6002
          %6028 = vst [vmem:[#allocation4] sm:$0xff] %v6020
          %6029 = vst [vmem:[#allocation4 + $0x8] sm:$0xff] %v6021
          %6030 = vst [vmem:[#allocation4 + $0x10] sm:$0xff] %v6022
          %6031 = vst [vmem:[#allocation4 + $0x18] sm:$0xff] %v6023
          %6032 = vst [vmem:[#allocation4 + $0x20] sm:$0xff] %v6024
          %6033 = vst [vmem:[#allocation4 + $0x28] sm:$0xff] %v6025
          %6034 = vst [vmem:[#allocation4 + $0x30] sm:$0xff] %v6026
          %6035 = vst [vmem:[#allocation4 + $0x38] sm:$0xff] %v6027
          %6036 = vst [vmem:[#allocation5] sm:$0xff] 0.0
          %6037 = vst [vmem:[#allocation5 + $0x8] sm:$0xff] 0.0
          %6038 = vst [vmem:[#allocation5 + $0x10] sm:$0xff] 0.0
          %6039 = vst [vmem:[#allocation5 + $0x18] sm:$0xff] 0.0
          %6040 = vst [vmem:[#allocation5 + $0x20] sm:$0xff] 0.0
          %6041 = vst [vmem:[#allocation5 + $0x28] sm:$0xff] 0.0
          %6042 = vst [vmem:[#allocation5 + $0x30] sm:$0xff] 0.0
          %6043 = vst [vmem:[#allocation5 + $0x38] sm:$0xff] 0.0
          %6044 = vst [vmem:[#allocation5 + $0x40] sm:$0xff] 0.0
          %6045 = vst [vmem:[#allocation5 + $0x48] sm:$0xff] 0.0
          %6046 = vst [vmem:[#allocation5 + $0x50] sm:$0xff] 0.0
          %6047 = vst [vmem:[#allocation5 + $0x58] sm:$0xff] 0.0
          %6048 = vst [vmem:[#allocation5 + $0x60] sm:$0xff] 0.0
          %6049 = vst [vmem:[#allocation5 + $0x68] sm:$0xff] 0.0
          %6050 = vst [vmem:[#allocation5 + $0x70] sm:$0xff] 0.0
          %6051 = vst [vmem:[#allocation5 + $0x78] sm:$0xff] 0.0
        $region128: #{tpu_custom_call.1} parent=87 // pred_fallthru
          _
        %v6052 = vld [vmem:[#allocation4] sm:$0xff]
        %v6053 = vld [vmem:[#allocation4 + $0x8] sm:$0xff]
        %v6054 = vld [vmem:[#allocation4 + $0x10] sm:$0xff]
        %v6055 = vld [vmem:[#allocation4 + $0x18] sm:$0xff]
        %v6056 = vld [vmem:[#allocation4 + $0x20] sm:$0xff]
        %v6057 = vld [vmem:[#allocation4 + $0x28] sm:$0xff]
        %v6058 = vld [vmem:[#allocation4 + $0x30] sm:$0xff]
        %v6059 = vld [vmem:[#allocation4 + $0x38] sm:$0xff]
        %v6060 = vld [vmem:[%s721] sm:$0xff]
        %v6061 = vld [vmem:[%s721 + $0x8] sm:$0xff]
        %v6062 = vld [vmem:[%s721 + $0x10] sm:$0xff]
        %v6063 = vld [vmem:[%s721 + $0x18] sm:$0xff]
        %v6064 = vld [vmem:[%s721 + $0x20] sm:$0xff]
        %v6065 = vld [vmem:[%s721 + $0x28] sm:$0xff]
        %v6066 = vld [vmem:[%s721 + $0x30] sm:$0xff]
        %v6067 = vld [vmem:[%s721 + $0x38] sm:$0xff]
        %v6068 = vld [vmem:[%s721 + $0x40] sm:$0xff]
        %v6069 = vld [vmem:[%s721 + $0x48] sm:$0xff]
        %v6070 = vld [vmem:[%s721 + $0x50] sm:$0xff]
        %v6071 = vld [vmem:[%s721 + $0x58] sm:$0xff]
        %v6072 = vld [vmem:[%s721 + $0x60] sm:$0xff]
        %v6073 = vld [vmem:[%s721 + $0x68] sm:$0xff]
        %v6074 = vld [vmem:[%s721 + $0x70] sm:$0xff]
        %v6075 = vld [vmem:[%s721 + $0x78] sm:$0xff]
        %v6076 = vld [vmem:[%s809] sm:$0x3]
        %v6078 = vlaneseq
        %v6079 = vshrl.u32 %v6078, 7
        %v6080 = vsub.s32 0, %v6079
        %v6081 = vrot.slane %v6076, %v6080
        %v6082 = vlaneseq
        %v6083 = vshrl.u32 %v6082, 7
        %v6084 = vsub.s32 1, %v6083
        %v6085 = vrot.slane %v6076, %v6084
        %v6104 = vunpack.c.l.b16 %v6060
        %v6105 = vunpack.c.h.b16 %v6060
        %v6106 = vunpack.c.l.b16 %v6061
        %v6107 = vunpack.c.h.b16 %v6061
        %v6108 = vunpack.c.l.b16 %v6062
        %v6109 = vunpack.c.h.b16 %v6062
        %v6110 = vunpack.c.l.b16 %v6063
        %v6111 = vunpack.c.h.b16 %v6063
        %v6112 = vunpack.c.l.b16 %v6064
        %v6113 = vunpack.c.h.b16 %v6064
        %v6114 = vunpack.c.l.b16 %v6065
        %v6115 = vunpack.c.h.b16 %v6065
        %v6116 = vunpack.c.l.b16 %v6066
        %v6117 = vunpack.c.h.b16 %v6066
        %v6118 = vunpack.c.l.b16 %v6067
        %v6119 = vunpack.c.h.b16 %v6067
        %v6120 = vunpack.c.l.b16 %v6068
        %v6121 = vunpack.c.h.b16 %v6068
        %v6122 = vunpack.c.l.b16 %v6069
        %v6123 = vunpack.c.h.b16 %v6069
        %v6124 = vunpack.c.l.b16 %v6070
        %v6125 = vunpack.c.h.b16 %v6070
        %v6126 = vunpack.c.l.b16 %v6071
        %v6127 = vunpack.c.h.b16 %v6071
        %v6128 = vunpack.c.l.b16 %v6072
        %v6129 = vunpack.c.h.b16 %v6072
        %v6130 = vunpack.c.l.b16 %v6073
        %v6131 = vunpack.c.h.b16 %v6073
        %v6132 = vunpack.c.l.b16 %v6074
        %v6133 = vunpack.c.h.b16 %v6074
        %v6134 = vunpack.c.l.b16 %v6075
        %v6135 = vunpack.c.h.b16 %v6075
        %v6136 = vpack.c.b16 %v6106, %v6104
        %v6137 = vpack.c.b16 %v6107, %v6105
        %v6138 = vpack.c.b16 %v6110, %v6108
        %v6139 = vpack.c.b16 %v6111, %v6109
        %v6140 = vpack.c.b16 %v6114, %v6112
        %v6141 = vpack.c.b16 %v6115, %v6113
        %v6142 = vpack.c.b16 %v6118, %v6116
        %v6143 = vpack.c.b16 %v6119, %v6117
        %v6144 = vpack.c.b16 %v6122, %v6120
        %v6145 = vpack.c.b16 %v6123, %v6121
        %v6146 = vpack.c.b16 %v6126, %v6124
        %v6147 = vpack.c.b16 %v6127, %v6125
        %v6148 = vpack.c.b16 %v6130, %v6128
        %v6149 = vpack.c.b16 %v6131, %v6129
        %v6150 = vpack.c.b16 %v6134, %v6132
        %v6151 = vpack.c.b16 %v6135, %v6133
        %6168 = vmatprep.subr.bf16.mxu0 %v6137
        %6169 = vmatpush1.bf16.msra.mxu0 %v6136
        %6170 = vmatprep.subr.bf16.mxu0 %v6139
        %6171 = vmatpush1.bf16.msra.mxu0 %v6138
        %6172 = vmatprep.subr.bf16.mxu0 %v6141
        %6173 = vmatpush1.bf16.msra.mxu0 %v6140
        %6174 = vmatprep.subr.bf16.mxu0 %v6143
        %6175 = vmatpush1.bf16.msra.mxu0 %v6142
        %6176 = vmatprep.subr.bf16.mxu0 %v6145
        %6177 = vmatpush1.bf16.msra.mxu0 %v6144
        %6178 = vmatprep.subr.bf16.mxu0 %v6147
        %6179 = vmatpush1.bf16.msra.mxu0 %v6146
        %6180 = vmatprep.subr.bf16.mxu0 %v6149
        %6181 = vmatpush1.bf16.msra.mxu0 %v6148
        %6182 = vmatprep.subr.bf16.mxu0 %v6151
        %6183 = vmatpush1.bf16.msra.mxu0 %v6150
        %6184 = vmatprep.subr.bf16.mxu0 0
        %6185 = vmatpush1.bf16.msra.mxu0 0
        %6186 = vmatprep.subr.bf16.mxu0 0
        %6187 = vmatpush1.bf16.msra.mxu0 0
        %6188 = vmatprep.subr.bf16.mxu0 0
        %6189 = vmatpush1.bf16.msra.mxu0 0
        %6190 = vmatprep.subr.bf16.mxu0 0
        %6191 = vmatpush1.bf16.msra.mxu0 0
        %6192 = vmatprep.subr.bf16.mxu0 0
        %6193 = vmatpush1.bf16.msra.mxu0 0
        %6194 = vmatprep.subr.bf16.mxu0 0
        %6195 = vmatpush1.bf16.msra.mxu0 0
        %6196 = vmatprep.subr.bf16.mxu0 0
        %6197 = vmatpush1.bf16.msra.mxu0 0
        %6198 = vmatprep.subr.bf16.mxu0 0
        %6199 = vmatpush1.bf16.msra.mxu0 0
        %6200 = vmatprep.mubr.bf16.mxu0 0
        %6201 = vmatmul.mubr.bf16.gmra.mrb[0].mxu0 %v6052
        %v6202 = vpop.f32.mrb[0].mxu0
        %v6203 = vadd.f32 %v6081, %v6202
        %v6204 = vpop.f32.mrb[0].mxu0
        %v6205 = vadd.f32 %v6085, %v6204
        %v6206 = vpop.f32.mrb[0].mxu0
        %v6207 = vadd.f32 %v6081, %v6206
        %v6208 = vpop.f32.mrb[0].mxu0
        %v6209 = vadd.f32 %v6085, %v6208
        %6210 = vmatprep.mubr.bf16.mxu0 0
        %6211 = vmatmul.mubr.bf16.gmra.mrb[0].mxu0 %v6053
        %v6212 = vpop.f32.mrb[0].mxu0
        %v6213 = vadd.f32 %v6081, %v6212
        %v6214 = vpop.f32.mrb[0].mxu0
        %v6215 = vadd.f32 %v6085, %v6214
        %v6216 = vpop.f32.mrb[0].mxu0
        %v6217 = vadd.f32 %v6081, %v6216
        %v6218 = vpop.f32.mrb[0].mxu0
        %v6219 = vadd.f32 %v6085, %v6218
        %6220 = vmatprep.mubr.bf16.mxu0 0
        %6221 = vmatmul.mubr.bf16.gmra.mrb[0].mxu0 %v6054
        %v6222 = vpop.f32.mrb[0].mxu0
        %v6223 = vadd.f32 %v6081, %v6222
        %v6224 = vpop.f32.mrb[0].mxu0
        %v6225 = vadd.f32 %v6085, %v6224
        %v6226 = vpop.f32.mrb[0].mxu0
        %v6227 = vadd.f32 %v6081, %v6226
        %v6228 = vpop.f32.mrb[0].mxu0
        %v6229 = vadd.f32 %v6085, %v6228
        %6230 = vmatprep.mubr.bf16.mxu0 0
        %6231 = vmatmul.mubr.bf16.gmra.mrb[0].mxu0 %v6055
        %v6232 = vpop.f32.mrb[0].mxu0
        %v6233 = vadd.f32 %v6081, %v6232
        %v6234 = vpop.f32.mrb[0].mxu0
        %v6235 = vadd.f32 %v6085, %v6234
        %v6236 = vpop.f32.mrb[0].mxu0
        %v6237 = vadd.f32 %v6081, %v6236
        %v6238 = vpop.f32.mrb[0].mxu0
        %v6239 = vadd.f32 %v6085, %v6238
        %6240 = vmatprep.mubr.bf16.mxu0 0
        %6241 = vmatmul.mubr.bf16.gmra.mrb[0].mxu0 %v6056
        %v6242 = vpop.f32.mrb[0].mxu0
        %v6243 = vadd.f32 %v6081, %v6242
        %v6244 = vpop.f32.mrb[0].mxu0
        %v6245 = vadd.f32 %v6085, %v6244
        %v6246 = vpop.f32.mrb[0].mxu0
        %v6247 = vadd.f32 %v6081, %v6246
        %v6248 = vpop.f32.mrb[0].mxu0
        %v6249 = vadd.f32 %v6085, %v6248
        %6250 = vmatprep.mubr.bf16.mxu0 0
        %6251 = vmatmul.mubr.bf16.gmra.mrb[0].mxu0 %v6057
        %v6252 = vpop.f32.mrb[0].mxu0
        %v6253 = vadd.f32 %v6081, %v6252
        %v6254 = vpop.f32.mrb[0].mxu0
        %v6255 = vadd.f32 %v6085, %v6254
        %v6256 = vpop.f32.mrb[0].mxu0
        %v6257 = vadd.f32 %v6081, %v6256
        %v6258 = vpop.f32.mrb[0].mxu0
        %v6259 = vadd.f32 %v6085, %v6258
        %6260 = vmatprep.mubr.bf16.mxu0 0
        %6261 = vmatmul.mubr.bf16.gmra.mrb[0].mxu0 %v6058
        %v6262 = vpop.f32.mrb[0].mxu0
        %v6263 = vadd.f32 %v6081, %v6262
        %v6264 = vpop.f32.mrb[0].mxu0
        %v6265 = vadd.f32 %v6085, %v6264
        %v6266 = vpop.f32.mrb[0].mxu0
        %v6267 = vadd.f32 %v6081, %v6266
        %v6268 = vpop.f32.mrb[0].mxu0
        %v6269 = vadd.f32 %v6085, %v6268
        %6270 = vmatprep.mubr.bf16.mxu0 0
        %6271 = vmatmul.mubr.bf16.gmra.mrb[0].mxu0 %v6059
        %v6272 = vpop.f32.mrb[0].mxu0
        %v6273 = vadd.f32 %v6081, %v6272
        %v6274 = vpop.f32.mrb[0].mxu0
        %v6275 = vadd.f32 %v6085, %v6274
        %v6276 = vpop.f32.mrb[0].mxu0
        %v6277 = vadd.f32 %v6081, %v6276
        %v6278 = vpop.f32.mrb[0].mxu0
        %v6279 = vadd.f32 %v6085, %v6278
        %6280 = vdwg.mxu0
        %v6281 = vmax.f32 %v6203, 0.0
        %v6282 = vmax.f32 %v6205, 0.0
        %v6283 = vmax.f32 %v6207, 0.0
        %v6284 = vmax.f32 %v6209, 0.0
        %v6285 = vmax.f32 %v6213, 0.0
        %v6286 = vmax.f32 %v6215, 0.0
        %v6287 = vmax.f32 %v6217, 0.0
        %v6288 = vmax.f32 %v6219, 0.0
        %v6289 = vmax.f32 %v6223, 0.0
        %v6290 = vmax.f32 %v6225, 0.0
        %v6291 = vmax.f32 %v6227, 0.0
        %v6292 = vmax.f32 %v6229, 0.0
        %v6293 = vmax.f32 %v6233, 0.0
        %v6294 = vmax.f32 %v6235, 0.0
        %v6295 = vmax.f32 %v6237, 0.0
        %v6296 = vmax.f32 %v6239, 0.0
        %v6297 = vmax.f32 %v6243, 0.0
        %v6298 = vmax.f32 %v6245, 0.0
        %v6299 = vmax.f32 %v6247, 0.0
        %v6300 = vmax.f32 %v6249, 0.0
        %v6301 = vmax.f32 %v6253, 0.0
        %v6302 = vmax.f32 %v6255, 0.0
        %v6303 = vmax.f32 %v6257, 0.0
        %v6304 = vmax.f32 %v6259, 0.0
        %v6305 = vmax.f32 %v6263, 0.0
        %v6306 = vmax.f32 %v6265, 0.0
        %v6307 = vmax.f32 %v6267, 0.0
        %v6308 = vmax.f32 %v6269, 0.0
        %v6309 = vmax.f32 %v6273, 0.0
        %v6310 = vmax.f32 %v6275, 0.0
        %v6311 = vmax.f32 %v6277, 0.0
        %v6312 = vmax.f32 %v6279, 0.0
        %v6313 = vld [vmem:[#allocation5] sm:$0xff]
        %v6314 = vld [vmem:[#allocation5 + $0x8] sm:$0xff]
        %v6315 = vld [vmem:[#allocation5 + $0x10] sm:$0xff]
        %v6316 = vld [vmem:[#allocation5 + $0x18] sm:$0xff]
        %v6317 = vld [vmem:[#allocation5 + $0x20] sm:$0xff]
        %v6318 = vld [vmem:[#allocation5 + $0x28] sm:$0xff]
        %v6319 = vld [vmem:[#allocation5 + $0x30] sm:$0xff]
        %v6320 = vld [vmem:[#allocation5 + $0x38] sm:$0xff]
        %v6321 = vld [vmem:[#allocation5 + $0x40] sm:$0xff]
        %v6322 = vld [vmem:[#allocation5 + $0x48] sm:$0xff]
        %v6323 = vld [vmem:[#allocation5 + $0x50] sm:$0xff]
        %v6324 = vld [vmem:[#allocation5 + $0x58] sm:$0xff]
        %v6325 = vld [vmem:[#allocation5 + $0x60] sm:$0xff]
        %v6326 = vld [vmem:[#allocation5 + $0x68] sm:$0xff]
        %v6327 = vld [vmem:[#allocation5 + $0x70] sm:$0xff]
        %v6328 = vld [vmem:[#allocation5 + $0x78] sm:$0xff]
        %v6329 = vpack.c.bf16 %v6283, %v6281
        %v6330 = vpack.c.bf16 %v6284, %v6282
        %v6331 = vpack.c.bf16 %v6287, %v6285
        %v6332 = vpack.c.bf16 %v6288, %v6286
        %v6333 = vpack.c.bf16 %v6291, %v6289
        %v6334 = vpack.c.bf16 %v6292, %v6290
        %v6335 = vpack.c.bf16 %v6295, %v6293
        %v6336 = vpack.c.bf16 %v6296, %v6294
        %v6337 = vpack.c.bf16 %v6299, %v6297
        %v6338 = vpack.c.bf16 %v6300, %v6298
        %v6339 = vpack.c.bf16 %v6303, %v6301
        %v6340 = vpack.c.bf16 %v6304, %v6302
        %v6341 = vpack.c.bf16 %v6307, %v6305
        %v6342 = vpack.c.bf16 %v6308, %v6306
        %v6343 = vpack.c.bf16 %v6311, %v6309
        %v6344 = vpack.c.bf16 %v6312, %v6310
        %v6345 = vld [vmem:[%s730] sm:$0xf]
        %v6346 = vld [vmem:[%s730 + $0x4] sm:$0xf]
        %v6347 = vld [vmem:[%s730 + $0x8] sm:$0xf]
        %v6348 = vld [vmem:[%s730 + $0xc] sm:$0xf]
        %v6349 = vld [vmem:[%s730 + $0x10] sm:$0xf]
        %v6350 = vld [vmem:[%s730 + $0x14] sm:$0xf]
        %v6351 = vld [vmem:[%s730 + $0x18] sm:$0xf]
        %v6352 = vld [vmem:[%s730 + $0x1c] sm:$0xf]
        %v6353 = vld [vmem:[%s730 + $0x20] sm:$0xf]
        %v6354 = vld [vmem:[%s730 + $0x24] sm:$0xf]
        %v6355 = vld [vmem:[%s730 + $0x28] sm:$0xf]
        %v6356 = vld [vmem:[%s730 + $0x2c] sm:$0xf]
        %v6357 = vld [vmem:[%s730 + $0x30] sm:$0xf]
        %v6358 = vld [vmem:[%s730 + $0x34] sm:$0xf]
        %v6359 = vld [vmem:[%s730 + $0x38] sm:$0xf]
        %v6360 = vld [vmem:[%s730 + $0x3c] sm:$0xf]
        %v6361 = vld [vmem:[%s730 + $0x40] sm:$0xf]
        %v6362 = vld [vmem:[%s730 + $0x44] sm:$0xf]
        %v6363 = vld [vmem:[%s730 + $0x48] sm:$0xf]
        %v6364 = vld [vmem:[%s730 + $0x4c] sm:$0xf]
        %v6365 = vld [vmem:[%s730 + $0x50] sm:$0xf]
        %v6366 = vld [vmem:[%s730 + $0x54] sm:$0xf]
        %v6367 = vld [vmem:[%s730 + $0x58] sm:$0xf]
        %v6368 = vld [vmem:[%s730 + $0x5c] sm:$0xf]
        %v6369 = vld [vmem:[%s730 + $0x60] sm:$0xf]
        %v6370 = vld [vmem:[%s730 + $0x64] sm:$0xf]
        %v6371 = vld [vmem:[%s730 + $0x68] sm:$0xf]
        %v6372 = vld [vmem:[%s730 + $0x6c] sm:$0xf]
        %v6373 = vld [vmem:[%s730 + $0x70] sm:$0xf]
        %v6374 = vld [vmem:[%s730 + $0x74] sm:$0xf]
        %v6375 = vld [vmem:[%s730 + $0x78] sm:$0xf]
        %v6376 = vld [vmem:[%s730 + $0x7c] sm:$0xf]
        %v6409 = vunpack.c.l.b16 %v6345
        %v6410 = vunpack.c.l.b16 %v6346
        %v6411 = vunpack.c.l.b16 %v6347
        %v6412 = vunpack.c.l.b16 %v6348
        %v6413 = vunpack.c.l.b16 %v6349
        %v6414 = vunpack.c.l.b16 %v6350
        %v6415 = vunpack.c.l.b16 %v6351
        %v6416 = vunpack.c.l.b16 %v6352
        %v6417 = vunpack.c.l.b16 %v6353
        %v6418 = vunpack.c.l.b16 %v6354
        %v6419 = vunpack.c.l.b16 %v6355
        %v6420 = vunpack.c.l.b16 %v6356
        %v6421 = vunpack.c.l.b16 %v6357
        %v6422 = vunpack.c.l.b16 %v6358
        %v6423 = vunpack.c.l.b16 %v6359
        %v6424 = vunpack.c.l.b16 %v6360
        %v6425 = vunpack.c.l.b16 %v6361
        %v6426 = vunpack.c.l.b16 %v6362
        %v6427 = vunpack.c.l.b16 %v6363
        %v6428 = vunpack.c.l.b16 %v6364
        %v6429 = vunpack.c.l.b16 %v6365
        %v6430 = vunpack.c.l.b16 %v6366
        %v6431 = vunpack.c.l.b16 %v6367
        %v6432 = vunpack.c.l.b16 %v6368
        %v6433 = vunpack.c.l.b16 %v6369
        %v6434 = vunpack.c.l.b16 %v6370
        %v6435 = vunpack.c.l.b16 %v6371
        %v6436 = vunpack.c.l.b16 %v6372
        %v6437 = vunpack.c.l.b16 %v6373
        %v6438 = vunpack.c.l.b16 %v6374
        %v6439 = vunpack.c.l.b16 %v6375
        %v6440 = vunpack.c.l.b16 %v6376
        %v6441 = vpack.c.b16 %v6410, %v6409
        %v6442 = vpack.c.b16 %v6412, %v6411
        %v6443 = vpack.c.b16 %v6414, %v6413
        %v6444 = vpack.c.b16 %v6416, %v6415
        %v6445 = vpack.c.b16 %v6418, %v6417
        %v6446 = vpack.c.b16 %v6420, %v6419
        %v6447 = vpack.c.b16 %v6422, %v6421
        %v6448 = vpack.c.b16 %v6424, %v6423
        %v6449 = vpack.c.b16 %v6426, %v6425
        %v6450 = vpack.c.b16 %v6428, %v6427
        %v6451 = vpack.c.b16 %v6430, %v6429
        %v6452 = vpack.c.b16 %v6432, %v6431
        %v6453 = vpack.c.b16 %v6434, %v6433
        %v6454 = vpack.c.b16 %v6436, %v6435
        %v6455 = vpack.c.b16 %v6438, %v6437
        %v6456 = vpack.c.b16 %v6440, %v6439
        %6473 = vmatprep.subr.bf16.mxu0 0
        %6474 = vmatpush1.bf16.msra.mxu0 %v6441
        %6475 = vmatprep.subr.bf16.mxu0 0
        %6476 = vmatpush1.bf16.msra.mxu0 %v6442
        %6477 = vmatprep.subr.bf16.mxu0 0
        %6478 = vmatpush1.bf16.msra.mxu0 %v6443
        %6479 = vmatprep.subr.bf16.mxu0 0
        %6480 = vmatpush1.bf16.msra.mxu0 %v6444
        %6481 = vmatprep.subr.bf16.mxu0 0
        %6482 = vmatpush1.bf16.msra.mxu0 %v6445
        %6483 = vmatprep.subr.bf16.mxu0 0
        %6484 = vmatpush1.bf16.msra.mxu0 %v6446
        %6485 = vmatprep.subr.bf16.mxu0 0
        %6486 = vmatpush1.bf16.msra.mxu0 %v6447
        %6487 = vmatprep.subr.bf16.mxu0 0
        %6488 = vmatpush1.bf16.msra.mxu0 %v6448
        %6489 = vmatprep.subr.bf16.mxu0 0
        %6490 = vmatpush1.bf16.msra.mxu0 %v6449
        %6491 = vmatprep.subr.bf16.mxu0 0
        %6492 = vmatpush1.bf16.msra.mxu0 %v6450
        %6493 = vmatprep.subr.bf16.mxu0 0
        %6494 = vmatpush1.bf16.msra.mxu0 %v6451
        %6495 = vmatprep.subr.bf16.mxu0 0
        %6496 = vmatpush1.bf16.msra.mxu0 %v6452
        %6497 = vmatprep.subr.bf16.mxu0 0
        %6498 = vmatpush1.bf16.msra.mxu0 %v6453
        %6499 = vmatprep.subr.bf16.mxu0 0
        %6500 = vmatpush1.bf16.msra.mxu0 %v6454
        %6501 = vmatprep.subr.bf16.mxu0 0
        %6502 = vmatpush1.bf16.msra.mxu0 %v6455
        %6503 = vmatprep.subr.bf16.mxu0 0
        %6504 = vmatpush1.bf16.msra.mxu0 %v6456
        %6505 = vmatprep.mubr.bf16.mxu0 %v6330
        %6506 = vmatmul.mubr.bf16.gmra.mrb[0].mxu0 %v6329
        %v6507 = vpop.f32.mrb[0].mxu0
        %v6508 = vadd.f32 0.0, %v6507
        %v6509 = vpop.f32.mrb[0].mxu0
        %v6510 = vpop.f32.mrb[0].mxu0
        %v6511 = vadd.f32 0.0, %v6510
        %v6512 = vpop.f32.mrb[0].mxu0
        %6513 = vmatprep.mubr.bf16.mxu0 %v6332
        %6514 = vmatmul.mubr.bf16.gmra.mrb[0].mxu0 %v6331
        %v6515 = vpop.f32.mrb[0].mxu0
        %v6516 = vadd.f32 0.0, %v6515
        %v6517 = vpop.f32.mrb[0].mxu0
        %v6518 = vpop.f32.mrb[0].mxu0
        %v6519 = vadd.f32 0.0, %v6518
        %v6520 = vpop.f32.mrb[0].mxu0
        %6521 = vmatprep.mubr.bf16.mxu0 %v6334
        %6522 = vmatmul.mubr.bf16.gmra.mrb[0].mxu0 %v6333
        %v6523 = vpop.f32.mrb[0].mxu0
        %v6524 = vadd.f32 0.0, %v6523
        %v6525 = vpop.f32.mrb[0].mxu0
        %v6526 = vpop.f32.mrb[0].mxu0
        %v6527 = vadd.f32 0.0, %v6526
        %v6528 = vpop.f32.mrb[0].mxu0
        %6529 = vmatprep.mubr.bf16.mxu0 %v6336
        %6530 = vmatmul.mubr.bf16.gmra.mrb[0].mxu0 %v6335
        %v6531 = vpop.f32.mrb[0].mxu0
        %v6532 = vadd.f32 0.0, %v6531
        %v6533 = vpop.f32.mrb[0].mxu0
        %v6534 = vpop.f32.mrb[0].mxu0
        %v6535 = vadd.f32 0.0, %v6534
        %v6536 = vpop.f32.mrb[0].mxu0
        %6537 = vmatprep.mubr.bf16.mxu0 %v6338
        %6538 = vmatmul.mubr.bf16.gmra.mrb[0].mxu0 %v6337
        %v6539 = vpop.f32.mrb[0].mxu0
        %v6540 = vadd.f32 0.0, %v6539
        %v6541 = vpop.f32.mrb[0].mxu0
        %v6542 = vpop.f32.mrb[0].mxu0
        %v6543 = vadd.f32 0.0, %v6542
        %v6544 = vpop.f32.mrb[0].mxu0
        %6545 = vmatprep.mubr.bf16.mxu0 %v6340
        %6546 = vmatmul.mubr.bf16.gmra.mrb[0].mxu0 %v6339
        %v6547 = vpop.f32.mrb[0].mxu0
        %v6548 = vadd.f32 0.0, %v6547
        %v6549 = vpop.f32.mrb[0].mxu0
        %v6550 = vpop.f32.mrb[0].mxu0
        %v6551 = vadd.f32 0.0, %v6550
        %v6552 = vpop.f32.mrb[0].mxu0
        %6553 = vmatprep.mubr.bf16.mxu0 %v6342
        %6554 = vmatmul.mubr.bf16.gmra.mrb[0].mxu0 %v6341
        %v6555 = vpop.f32.mrb[0].mxu0
        %v6556 = vadd.f32 0.0, %v6555
        %v6557 = vpop.f32.mrb[0].mxu0
        %v6558 = vpop.f32.mrb[0].mxu0
        %v6559 = vadd.f32 0.0, %v6558
        %v6560 = vpop.f32.mrb[0].mxu0
        %6561 = vmatprep.mubr.bf16.mxu0 %v6344
        %6562 = vmatmul.mubr.bf16.gmra.mrb[0].mxu0 %v6343
        %v6563 = vpop.f32.mrb[0].mxu0
        %v6564 = vadd.f32 0.0, %v6563
        %v6565 = vpop.f32.mrb[0].mxu0
        %v6566 = vpop.f32.mrb[0].mxu0
        %v6567 = vadd.f32 0.0, %v6566
        %v6568 = vpop.f32.mrb[0].mxu0
        %6569 = vdwg.mxu0
        %v6570 = vadd.f32 %v6313, %v6508
        %v6571 = vadd.f32 %v6314, %v6511
        %v6572 = vadd.f32 %v6315, %v6516
        %v6573 = vadd.f32 %v6316, %v6519
        %v6574 = vadd.f32 %v6317, %v6524
        %v6575 = vadd.f32 %v6318, %v6527
        %v6576 = vadd.f32 %v6319, %v6532
        %v6577 = vadd.f32 %v6320, %v6535
        %v6578 = vadd.f32 %v6321, %v6540
        %v6579 = vadd.f32 %v6322, %v6543
        %v6580 = vadd.f32 %v6323, %v6548
        %v6581 = vadd.f32 %v6324, %v6551
        %v6582 = vadd.f32 %v6325, %v6556
        %v6583 = vadd.f32 %v6326, %v6559
        %v6584 = vadd.f32 %v6327, %v6564
        %v6585 = vadd.f32 %v6328, %v6567
        %6586 = vst [vmem:[#allocation5] sm:$0xff] %v6570
        %6587 = vst [vmem:[#allocation5 + $0x8] sm:$0xff] %v6571
        %6588 = vst [vmem:[#allocation5 + $0x10] sm:$0xff] %v6572
        %6589 = vst [vmem:[#allocation5 + $0x18] sm:$0xff] %v6573
        %6590 = vst [vmem:[#allocation5 + $0x20] sm:$0xff] %v6574
        %6591 = vst [vmem:[#allocation5 + $0x28] sm:$0xff] %v6575
        %6592 = vst [vmem:[#allocation5 + $0x30] sm:$0xff] %v6576
        %6593 = vst [vmem:[#allocation5 + $0x38] sm:$0xff] %v6577
        %6594 = vst [vmem:[#allocation5 + $0x40] sm:$0xff] %v6578
        %6595 = vst [vmem:[#allocation5 + $0x48] sm:$0xff] %v6579
        %6596 = vst [vmem:[#allocation5 + $0x50] sm:$0xff] %v6580
        %6597 = vst [vmem:[#allocation5 + $0x58] sm:$0xff] %v6581
        %6598 = vst [vmem:[#allocation5 + $0x60] sm:$0xff] %v6582
        %6599 = vst [vmem:[#allocation5 + $0x68] sm:$0xff] %v6583
        %6600 = vst [vmem:[#allocation5 + $0x70] sm:$0xff] %v6584
        %6601 = vst [vmem:[#allocation5 + $0x78] sm:$0xff] %v6585
        %p6602 = scmp.eq.s32.totalorder %s47, 1
        // Predicated region
        $region129: #{tpu_custom_call.1} parent=87 // pred_check
          %p6603 = pneg %p6602
        $region130: #{tpu_custom_call.1} parent=87 // pred_check_branch
          %6605 = sbr.rel (%p6603) target = $region132
        $region131: #{tpu_custom_call.1} parent=87 // pred_region
          %v6606 = vld [vmem:[#allocation5] sm:$0xff]
          %v6607 = vld [vmem:[#allocation5 + $0x8] sm:$0xff]
          %v6608 = vld [vmem:[#allocation5 + $0x10] sm:$0xff]
          %v6609 = vld [vmem:[#allocation5 + $0x18] sm:$0xff]
          %v6610 = vld [vmem:[#allocation5 + $0x20] sm:$0xff]
          %v6611 = vld [vmem:[#allocation5 + $0x28] sm:$0xff]
          %v6612 = vld [vmem:[#allocation5 + $0x30] sm:$0xff]
          %v6613 = vld [vmem:[#allocation5 + $0x38] sm:$0xff]
          %v6614 = vld [vmem:[#allocation5 + $0x40] sm:$0xff]
          %v6615 = vld [vmem:[#allocation5 + $0x48] sm:$0xff]
          %v6616 = vld [vmem:[#allocation5 + $0x50] sm:$0xff]
          %v6617 = vld [vmem:[#allocation5 + $0x58] sm:$0xff]
          %v6618 = vld [vmem:[#allocation5 + $0x60] sm:$0xff]
          %v6619 = vld [vmem:[#allocation5 + $0x68] sm:$0xff]
          %v6620 = vld [vmem:[#allocation5 + $0x70] sm:$0xff]
          %v6621 = vld [vmem:[#allocation5 + $0x78] sm:$0xff]
          %v6622 = vld [vmem:[%s14] sm:$0x1]
          %v6624 = vlaneseq
          %v6625 = vshrl.u32 %v6624, 7
          %v6626 = vsub.s32 0, %v6625
          %v6627 = vrot.slane %v6622, %v6626
          %v6629 = vadd.f32 %v6606, %v6627
          %v6630 = vadd.f32 %v6607, %v6627
          %v6631 = vadd.f32 %v6608, %v6627
          %v6632 = vadd.f32 %v6609, %v6627
          %v6633 = vadd.f32 %v6610, %v6627
          %v6634 = vadd.f32 %v6611, %v6627
          %v6635 = vadd.f32 %v6612, %v6627
          %v6636 = vadd.f32 %v6613, %v6627
          %v6637 = vadd.f32 %v6614, %v6627
          %v6638 = vadd.f32 %v6615, %v6627
          %v6639 = vadd.f32 %v6616, %v6627
          %v6640 = vadd.f32 %v6617, %v6627
          %v6641 = vadd.f32 %v6618, %v6627
          %v6642 = vadd.f32 %v6619, %v6627
          %v6643 = vadd.f32 %v6620, %v6627
          %v6644 = vadd.f32 %v6621, %v6627
          %v6645 = vld [vmem:[#allocation3] sm:$0xff]
          %v6646 = vld [vmem:[#allocation3 + $0x8] sm:$0xff]
          %v6647 = vld [vmem:[#allocation3 + $0x10] sm:$0xff]
          %v6648 = vld [vmem:[#allocation3 + $0x18] sm:$0xff]
          %v6649 = vld [vmem:[#allocation3 + $0x20] sm:$0xff]
          %v6650 = vld [vmem:[#allocation3 + $0x28] sm:$0xff]
          %v6651 = vld [vmem:[#allocation3 + $0x30] sm:$0xff]
          %v6652 = vld [vmem:[#allocation3 + $0x38] sm:$0xff]
          %v6653 = vld [vmem:[#allocation3 + $0x40] sm:$0xff]
          %v6654 = vld [vmem:[#allocation3 + $0x48] sm:$0xff]
          %v6655 = vld [vmem:[#allocation3 + $0x50] sm:$0xff]
          %v6656 = vld [vmem:[#allocation3 + $0x58] sm:$0xff]
          %v6657 = vld [vmem:[#allocation3 + $0x60] sm:$0xff]
          %v6658 = vld [vmem:[#allocation3 + $0x68] sm:$0xff]
          %v6659 = vld [vmem:[#allocation3 + $0x70] sm:$0xff]
          %v6660 = vld [vmem:[#allocation3 + $0x78] sm:$0xff]
          %v6661 = vadd.f32 %v6629, %v6645
          %v6662 = vadd.f32 %v6630, %v6646
          %v6663 = vadd.f32 %v6631, %v6647
          %v6664 = vadd.f32 %v6632, %v6648
          %v6665 = vadd.f32 %v6633, %v6649
          %v6666 = vadd.f32 %v6634, %v6650
          %v6667 = vadd.f32 %v6635, %v6651
          %v6668 = vadd.f32 %v6636, %v6652
          %v6669 = vadd.f32 %v6637, %v6653
          %v6670 = vadd.f32 %v6638, %v6654
          %v6671 = vadd.f32 %v6639, %v6655
          %v6672 = vadd.f32 %v6640, %v6656
          %v6673 = vadd.f32 %v6641, %v6657
          %v6674 = vadd.f32 %v6642, %v6658
          %v6675 = vadd.f32 %v6643, %v6659
          %v6676 = vadd.f32 %v6644, %v6660
          %v6677 = vld [vmem:[%s15] sm:$0x1]
          %v6678 = vld [vmem:[%s16] sm:$0x1]
          %6679 = vadd.xlane.f32.xlu0 %v6661
          %v6680 = vpop.xlane.xlu0 %6679
          %6681 = vadd.xlane.f32.xlu0 %v6662
          %v6682 = vpop.xlane.xlu0 %6681
          %6683 = vadd.xlane.f32.xlu0 %v6663
          %v6684 = vpop.xlane.xlu0 %6683
          %6685 = vadd.xlane.f32.xlu0 %v6664
          %v6686 = vpop.xlane.xlu0 %6685
          %6687 = vadd.xlane.f32.xlu0 %v6665
          %v6688 = vpop.xlane.xlu0 %6687
          %6689 = vadd.xlane.f32.xlu0 %v6666
          %v6690 = vpop.xlane.xlu0 %6689
          %6691 = vadd.xlane.f32.xlu0 %v6667
          %v6692 = vpop.xlane.xlu0 %6691
          %6693 = vadd.xlane.f32.xlu0 %v6668
          %v6694 = vpop.xlane.xlu0 %6693
          %6695 = vadd.xlane.f32.xlu0 %v6669
          %v6696 = vpop.xlane.xlu0 %6695
          %6697 = vadd.xlane.f32.xlu0 %v6670
          %v6698 = vpop.xlane.xlu0 %6697
          %6699 = vadd.xlane.f32.xlu0 %v6671
          %v6700 = vpop.xlane.xlu0 %6699
          %6701 = vadd.xlane.f32.xlu0 %v6672
          %v6702 = vpop.xlane.xlu0 %6701
          %6703 = vadd.xlane.f32.xlu0 %v6673
          %v6704 = vpop.xlane.xlu0 %6703
          %6705 = vadd.xlane.f32.xlu0 %v6674
          %v6706 = vpop.xlane.xlu0 %6705
          %6707 = vadd.xlane.f32.xlu0 %v6675
          %v6708 = vpop.xlane.xlu0 %6707
          %6709 = vadd.xlane.f32.xlu0 %v6676
          %v6710 = vpop.xlane.xlu0 %6709
          %v6711 = vrcp.pop 128.0
          %v6712 = vmul.f32 %v6680, %v6711
          %v6713 = vmul.f32 %v6682, %v6711
          %v6714 = vmul.f32 %v6684, %v6711
          %v6715 = vmul.f32 %v6686, %v6711
          %v6716 = vmul.f32 %v6688, %v6711
          %v6717 = vmul.f32 %v6690, %v6711
          %v6718 = vmul.f32 %v6692, %v6711
          %v6719 = vmul.f32 %v6694, %v6711
          %v6720 = vmul.f32 %v6696, %v6711
          %v6721 = vmul.f32 %v6698, %v6711
          %v6722 = vmul.f32 %v6700, %v6711
          %v6723 = vmul.f32 %v6702, %v6711
          %v6724 = vmul.f32 %v6704, %v6711
          %v6725 = vmul.f32 %v6706, %v6711
          %v6726 = vmul.f32 %v6708, %v6711
          %v6727 = vmul.f32 %v6710, %v6711
          %v6728 = vsub.f32 %v6661, %v6712
          %v6729 = vsub.f32 %v6662, %v6713
          %v6730 = vsub.f32 %v6663, %v6714
          %v6731 = vsub.f32 %v6664, %v6715
          %v6732 = vsub.f32 %v6665, %v6716
          %v6733 = vsub.f32 %v6666, %v6717
          %v6734 = vsub.f32 %v6667, %v6718
          %v6735 = vsub.f32 %v6668, %v6719
          %v6736 = vsub.f32 %v6669, %v6720
          %v6737 = vsub.f32 %v6670, %v6721
          %v6738 = vsub.f32 %v6671, %v6722
          %v6739 = vsub.f32 %v6672, %v6723
          %v6740 = vsub.f32 %v6673, %v6724
          %v6741 = vsub.f32 %v6674, %v6725
          %v6742 = vsub.f32 %v6675, %v6726
          %v6743 = vsub.f32 %v6676, %v6727
          %v6744 = vmul.f32 %v6728, %v6728
          %v6745 = vmul.f32 %v6729, %v6729
          %v6746 = vmul.f32 %v6730, %v6730
          %v6747 = vmul.f32 %v6731, %v6731
          %v6748 = vmul.f32 %v6732, %v6732
          %v6749 = vmul.f32 %v6733, %v6733
          %v6750 = vmul.f32 %v6734, %v6734
          %v6751 = vmul.f32 %v6735, %v6735
          %v6752 = vmul.f32 %v6736, %v6736
          %v6753 = vmul.f32 %v6737, %v6737
          %v6754 = vmul.f32 %v6738, %v6738
          %v6755 = vmul.f32 %v6739, %v6739
          %v6756 = vmul.f32 %v6740, %v6740
          %v6757 = vmul.f32 %v6741, %v6741
          %v6758 = vmul.f32 %v6742, %v6742
          %v6759 = vmul.f32 %v6743, %v6743
          %6760 = vadd.xlane.f32.xlu0 %v6744
          %v6761 = vpop.xlane.xlu0 %6760
          %6762 = vadd.xlane.f32.xlu0 %v6745
          %v6763 = vpop.xlane.xlu0 %6762
          %6764 = vadd.xlane.f32.xlu0 %v6746
          %v6765 = vpop.xlane.xlu0 %6764
          %6766 = vadd.xlane.f32.xlu0 %v6747
          %v6767 = vpop.xlane.xlu0 %6766
          %6768 = vadd.xlane.f32.xlu0 %v6748
          %v6769 = vpop.xlane.xlu0 %6768
          %6770 = vadd.xlane.f32.xlu0 %v6749
          %v6771 = vpop.xlane.xlu0 %6770
          %6772 = vadd.xlane.f32.xlu0 %v6750
          %v6773 = vpop.xlane.xlu0 %6772
          %6774 = vadd.xlane.f32.xlu0 %v6751
          %v6775 = vpop.xlane.xlu0 %6774
          %6776 = vadd.xlane.f32.xlu0 %v6752
          %v6777 = vpop.xlane.xlu0 %6776
          %6778 = vadd.xlane.f32.xlu0 %v6753
          %v6779 = vpop.xlane.xlu0 %6778
          %6780 = vadd.xlane.f32.xlu0 %v6754
          %v6781 = vpop.xlane.xlu0 %6780
          %6782 = vadd.xlane.f32.xlu0 %v6755
          %v6783 = vpop.xlane.xlu0 %6782
          %6784 = vadd.xlane.f32.xlu0 %v6756
          %v6785 = vpop.xlane.xlu0 %6784
          %6786 = vadd.xlane.f32.xlu0 %v6757
          %v6787 = vpop.xlane.xlu0 %6786
          %6788 = vadd.xlane.f32.xlu0 %v6758
          %v6789 = vpop.xlane.xlu0 %6788
          %6790 = vadd.xlane.f32.xlu0 %v6759
          %v6791 = vpop.xlane.xlu0 %6790
          %v6792 = vmul.f32 %v6761, %v6711
          %v6793 = vmul.f32 %v6763, %v6711
          %v6794 = vmul.f32 %v6765, %v6711
          %v6795 = vmul.f32 %v6767, %v6711
          %v6796 = vmul.f32 %v6769, %v6711
          %v6797 = vmul.f32 %v6771, %v6711
          %v6798 = vmul.f32 %v6773, %v6711
          %v6799 = vmul.f32 %v6775, %v6711
          %v6800 = vmul.f32 %v6777, %v6711
          %v6801 = vmul.f32 %v6779, %v6711
          %v6802 = vmul.f32 %v6781, %v6711
          %v6803 = vmul.f32 %v6783, %v6711
          %v6804 = vmul.f32 %v6785, %v6711
          %v6805 = vmul.f32 %v6787, %v6711
          %v6806 = vmul.f32 %v6789, %v6711
          %v6807 = vmul.f32 %v6791, %v6711
          %v6808 = vadd.f32 %v6792, 1e-05
          %v6809 = vadd.f32 %v6793, 1e-05
          %v6810 = vadd.f32 %v6794, 1e-05
          %v6811 = vadd.f32 %v6795, 1e-05
          %v6812 = vadd.f32 %v6796, 1e-05
          %v6813 = vadd.f32 %v6797, 1e-05
          %v6814 = vadd.f32 %v6798, 1e-05
          %v6815 = vadd.f32 %v6799, 1e-05
          %v6816 = vadd.f32 %v6800, 1e-05
          %v6817 = vadd.f32 %v6801, 1e-05
          %v6818 = vadd.f32 %v6802, 1e-05
          %v6819 = vadd.f32 %v6803, 1e-05
          %v6820 = vadd.f32 %v6804, 1e-05
          %v6821 = vadd.f32 %v6805, 1e-05
          %v6822 = vadd.f32 %v6806, 1e-05
          %v6823 = vadd.f32 %v6807, 1e-05
          %v6824 = vrsqrt.pop %v6808
          %v6825 = vrsqrt.pop %v6809
          %v6826 = vrsqrt.pop %v6810
          %v6827 = vrsqrt.pop %v6811
          %v6828 = vrsqrt.pop %v6812
          %v6829 = vrsqrt.pop %v6813
          %v6830 = vrsqrt.pop %v6814
          %v6831 = vrsqrt.pop %v6815
          %v6832 = vrsqrt.pop %v6816
          %v6833 = vrsqrt.pop %v6817
          %v6834 = vrsqrt.pop %v6818
          %v6835 = vrsqrt.pop %v6819
          %v6836 = vrsqrt.pop %v6820
          %v6837 = vrsqrt.pop %v6821
          %v6838 = vrsqrt.pop %v6822
          %v6839 = vrsqrt.pop %v6823
          %v6840 = vmul.f32 %v6728, %v6824
          %v6841 = vmul.f32 %v6729, %v6825
          %v6842 = vmul.f32 %v6730, %v6826
          %v6843 = vmul.f32 %v6731, %v6827
          %v6844 = vmul.f32 %v6732, %v6828
          %v6845 = vmul.f32 %v6733, %v6829
          %v6846 = vmul.f32 %v6734, %v6830
          %v6847 = vmul.f32 %v6735, %v6831
          %v6848 = vmul.f32 %v6736, %v6832
          %v6849 = vmul.f32 %v6737, %v6833
          %v6850 = vmul.f32 %v6738, %v6834
          %v6851 = vmul.f32 %v6739, %v6835
          %v6852 = vmul.f32 %v6740, %v6836
          %v6853 = vmul.f32 %v6741, %v6837
          %v6854 = vmul.f32 %v6742, %v6838
          %v6855 = vmul.f32 %v6743, %v6839
          %v6857 = vlaneseq
          %v6858 = vshrl.u32 %v6857, 7
          %v6859 = vsub.s32 0, %v6858
          %v6860 = vrot.slane %v6677, %v6859
          %v6862 = vmul.f32 %v6840, %v6860
          %v6863 = vmul.f32 %v6841, %v6860
          %v6864 = vmul.f32 %v6842, %v6860
          %v6865 = vmul.f32 %v6843, %v6860
          %v6866 = vmul.f32 %v6844, %v6860
          %v6867 = vmul.f32 %v6845, %v6860
          %v6868 = vmul.f32 %v6846, %v6860
          %v6869 = vmul.f32 %v6847, %v6860
          %v6870 = vmul.f32 %v6848, %v6860
          %v6871 = vmul.f32 %v6849, %v6860
          %v6872 = vmul.f32 %v6850, %v6860
          %v6873 = vmul.f32 %v6851, %v6860
          %v6874 = vmul.f32 %v6852, %v6860
          %v6875 = vmul.f32 %v6853, %v6860
          %v6876 = vmul.f32 %v6854, %v6860
          %v6877 = vmul.f32 %v6855, %v6860
          %v6879 = vlaneseq
          %v6880 = vshrl.u32 %v6879, 7
          %v6881 = vsub.s32 0, %v6880
          %v6882 = vrot.slane %v6678, %v6881
          %v6884 = vadd.f32 %v6862, %v6882
          %v6885 = vadd.f32 %v6863, %v6882
          %v6886 = vadd.f32 %v6864, %v6882
          %v6887 = vadd.f32 %v6865, %v6882
          %v6888 = vadd.f32 %v6866, %v6882
          %v6889 = vadd.f32 %v6867, %v6882
          %v6890 = vadd.f32 %v6868, %v6882
          %v6891 = vadd.f32 %v6869, %v6882
          %v6892 = vadd.f32 %v6870, %v6882
          %v6893 = vadd.f32 %v6871, %v6882
          %v6894 = vadd.f32 %v6872, %v6882
          %v6895 = vadd.f32 %v6873, %v6882
          %v6896 = vadd.f32 %v6874, %v6882
          %v6897 = vadd.f32 %v6875, %v6882
          %v6898 = vadd.f32 %v6876, %v6882
          %v6899 = vadd.f32 %v6877, %v6882
          %6900 = vst [vmem:[%s804] sm:$0xff] %v6884
          %6901 = vst [vmem:[%s804 + $0x8] sm:$0xff] %v6885
          %6902 = vst [vmem:[%s804 + $0x10] sm:$0xff] %v6886
          %6903 = vst [vmem:[%s804 + $0x18] sm:$0xff] %v6887
          %6904 = vst [vmem:[%s804 + $0x20] sm:$0xff] %v6888
          %6905 = vst [vmem:[%s804 + $0x28] sm:$0xff] %v6889
          %6906 = vst [vmem:[%s804 + $0x30] sm:$0xff] %v6890
          %6907 = vst [vmem:[%s804 + $0x38] sm:$0xff] %v6891
          %6908 = vst [vmem:[%s804 + $0x40] sm:$0xff] %v6892
          %6909 = vst [vmem:[%s804 + $0x48] sm:$0xff] %v6893
          %6910 = vst [vmem:[%s804 + $0x50] sm:$0xff] %v6894
          %6911 = vst [vmem:[%s804 + $0x58] sm:$0xff] %v6895
          %6912 = vst [vmem:[%s804 + $0x60] sm:$0xff] %v6896
          %6913 = vst [vmem:[%s804 + $0x68] sm:$0xff] %v6897
          %6914 = vst [vmem:[%s804 + $0x70] sm:$0xff] %v6898
          %6915 = vst [vmem:[%s804 + $0x78] sm:$0xff] %v6899
        $region132: #{tpu_custom_call.1} parent=87 // pred_fallthru
          _
        %s6916 = sand.u32 %s449, 1
        %s6917 = scalar_lea.sflag [#allocation8], %s6916
        %s6918 = sand.u32 %s449, 1
        %s6919 = smul.addr %s6918, 128
        %s6920 = scalar_lea.vmem [#allocation21], %s6919
        // Predicated region
        $region133: #{tpu_custom_call.1} parent=87 // pred_check
          %p6921 = pneg %p459
        $region134: #{tpu_custom_call.1} parent=87 // pred_check_branch
          %6923 = sbr.rel (%p6921) target = $region136
        $region135: #{tpu_custom_call.1} parent=87 // pred_region
          %s6925 = ssub.s32 2048, 2048
          %6926 = vsyncadd %s6917, %s6925
          %s6927 = smul.addr %s46, 16
          %s6928 = smul.addr %s6927, 128
          %s6929 = scalar_lea.hbm %s17, %s6928
          %s6930 = sshll.u32 %s6920, 4
          %s6931 = int_to_ptr.vmem [resolvable:$true] %s6930
          %6936 = dma.vmem_to_hbm [thread:$0]  %s6931, 2048, %s6929, %s6917, 128, 128, 8
        $region136: #{tpu_custom_call.1} parent=87 // pred_fallthru
          _
      $region88: #{tpu_custom_call.1} parent=5 // pred_fallthru
        _
      %p6937 = scmp.le.s32.totalorder 2, %s37
      // Predicated region
      $region137: #{tpu_custom_call.1} parent=5 // pred_check
        %p6938 = pneg %p6937
      $region138: #{tpu_custom_call.1} parent=5 // pred_check_branch
        %6940 = sbr.rel (%p6938) target = $region140
      $region139: #{tpu_custom_call.1} parent=5 // pred_region
        %s6941 = ssub.s32 %s37, 2
        // Predicated region
        $region141: #{tpu_custom_call.1} parent=139 // pred_check
          %p6942 = pneg %p465
        $region142: #{tpu_custom_call.1} parent=139 // pred_check_branch
          %6944 = sbr.rel (%p6942) target = $region144
        $region143: #{tpu_custom_call.1} parent=139 // pred_region
          %s6945 = sand.u32 %s450, 1
          %s6946 = scalar_lea.sflag [#allocation8], %s6945
          %s6947 = sand.u32 %s450, 1
          %s6948 = smul.addr %s6947, 128
          %s6949 = scalar_lea.vmem [#allocation21], %s6948
          %6950 = dma.done %s6946, 2048
        $region144: #{tpu_custom_call.1} parent=139 // pred_fallthru
          _
      $region140: #{tpu_custom_call.1} parent=5 // pred_fallthru
        _
    $region6: #{tpu_custom_call.1} parent=1 // loop_footer
      %s41 = sadd.s32 1, %s37
    $region7: #{tpu_custom_call.1} parent=1 // loop_footer_branch
      %36 = sbr.rel target = $region3
    $region8: #{tpu_custom_call.1} parent=1 // loop_exit
      _
    %6951 = vsyncpa [#allocation7], 1
    %s6952 = scalar_lea.sflag [#allocation7], 1
    %6953 = vsyncpa %s6952, 1
    %6954 = vsyncpa [#allocation10], 1
    %s6955 = scalar_lea.sflag [#allocation10], 1
    %6956 = vsyncpa %s6955, 1
    %6957 = vsyncpa [#allocation13], 1
    %6958 = vsyncpa [#allocation16], 1
    %6959 = vsyncpa [#allocation19], 1
    %s6960 = scalar_lea.sflag [#allocation19], 1
    %6961 = vsyncpa %s6960, 1
    %6962 = vsyncpa [#allocation8], 1
    %s6963 = scalar_lea.sflag [#allocation8], 1
    %6964 = vsyncpa %s6963, 1

</llo_original>
